<compile_context>
chip_gen: v7x
topology: tpu7x:2x2x1
jax: 0.10.0
libtpu: 0.0.40
codegen_flags: <defaults>
</compile_context>

<pallas_src>
import jax
import jax.numpy as jnp
import numpy as np
from jax.experimental import pallas as pl
from jax.experimental.pallas import tpu as pltpu


TB = 8  # images per grid step (must be a multiple of 8 for sublane alignment)


# ----------------------------------------------------------------------------
# The fused Pallas kernel (TB images per grid step)
# ----------------------------------------------------------------------------
def _rnet_fused_kernel(x_ref, t1_ref, sh1_ref, t2_ref, sh2_ref, t3_ref, sh3_ref,
                       fc_ref, fcsh_ref, hw_ref, hb_ref, o_ref,
                       s1_ref, stg2_ref, s2_ref, z_ref):
    f32 = jnp.float32
    bf16 = jnp.bfloat16
    tb = o_ref.shape[0]          # images per step
    R1 = 11 * tb                 # rows per stage-1 slab (11 pooled rows x tb images)
    R2 = 4 * tb                  # rows per stage-2 slab
    R3 = 3 * tb                  # conv3 output rows x images

    def max3(v, g):
        # max over the 3 pool-row-offset groups stacked along M
        return jnp.maximum(jnp.maximum(v[0:g], v[g:2 * g]), v[2 * g:3 * g])

    # --- stage 1: conv1(3x3, pad 1, 3->28) + BN + ReLU fused with maxpool(3,2)
    #     x_ref holds 5 contiguous slabs (conv/pool row offsets 0..4); the LHS
    #     for conv row k is slabs [k, k+1, k+2] -> one (3*R1, 78) matmul per tap.
    acc = None
    for j in range(3):                                   # pool column offset (RHS)
        s = None
        for k in range(3):                               # conv kernel row
            lhs = x_ref[k * R1:(k + 3) * R1, :]          # (3*R1, 78) bf16
            d = jnp.dot(lhs, t1_ref[j * 3 + k], preferred_element_type=f32)
            s = d if s is None else s + d
        m = max3(s, R1)                                  # max over pool-row offsets
        acc = m if acc is None else jnp.maximum(acc, m)  # max over pool-col offsets
    s1_ref[...] = jnp.maximum(acc + sh1_ref[...], 0.0).astype(bf16)   # (11*tb, 384)

    # --- restage pooled-1 rows into 5 contiguous slabs for stage 2
    #     (20 contiguous, 8-aligned (tb, 384) VMEM copies).
    for so in range(5):
        for r in range(4):
            stg2_ref[(so * 4 + r) * tb:(so * 4 + r + 1) * tb, :] = \
                s1_ref[(so + 2 * r) * tb:(so + 2 * r + 1) * tb, :]

    # --- stage 2: conv2(3x3, 28->48) + BN + ReLU fused with maxpool(3,2)
    acc = None
    for j in range(3):
        s = None
        for k in range(3):
            lhs = stg2_ref[k * R2:(k + 3) * R2, :]       # (3*R2, 384) bf16
            d = jnp.dot(lhs, t2_ref[j * 3 + k], preferred_element_type=f32)
            s = d if s is None else s + d
        m = max3(s, R2)
        acc = m if acc is None else jnp.maximum(acc, m)
    s2_ref[...] = jnp.maximum(acc + sh2_ref[...], 0.0).astype(bf16)   # (4*tb, 256)

    # --- stage 3: conv3(2x2, 48->64) + BN + ReLU
    #     the 3 source rows per output row are already contiguous -> no restaging.
    z = None
    for k in range(2):
        lhs = s2_ref[k * tb:k * tb + R3, :]              # (3*tb, 256) bf16
        d = jnp.dot(lhs, t3_ref[k], preferred_element_type=f32)
        z = d if z is None else z + d
    z_ref[...] = jnp.maximum(z + sh3_ref[...], 0.0).astype(bf16)      # (3*tb, 192)

    # --- stage 4: Linear(576->128) + BN1d + ReLU, consumed as 3 row-chunks of
    #     the conv3 output (fc rows pre-permuted at init -> no flatten/transpose)
    acc = None
    for h in range(3):
        d = jnp.dot(z_ref[h * tb:(h + 1) * tb, :], fc_ref[h],
                    preferred_element_type=f32)          # (tb, 128)
        acc = d if acc is None else acc + d
    y1 = jnp.maximum(acc + fcsh_ref[...], 0.0)           # (tb, 128)

    # --- stage 5: the three heads as ONE (128, 128) GEMM (1 + 4 + 10 + zero-pad);
    #     sigmoid applied to column 0 only (the "cond" head).
    out = jnp.dot(y1.astype(bf16), hw_ref[...], preferred_element_type=f32)
    out = out + hb_ref[...]                              # (tb, 128)
    lane = jax.lax.broadcasted_iota(jnp.int32, out.shape, 1)
    out = jnp.where(lane == 0, jax.nn.sigmoid(out), out)
    o_ref[...] = out.astype(o_ref.dtype)


def r_net_forward(x_nchw, pk):
    """x_nchw: (B, 3, 24, 24) float32 -> (cond (B,1), pos (B,4), lmk (B,10))."""
    B = x_nchw.shape[0]
    b_pad = ((B + TB - 1) // TB) * TB
    ns = b_pad // TB

    # Host-side layout plumbing (cheap relative to the kernel): NCHW -> padded
    # NHWC with (w, c) flattened on lanes, batch padded to a multiple of TB,
    # then pre-sliced into the 5 strided row-slabs each grid step consumes,
    # ordered (slab, pooled-row, image) so the kernel's LHS slices are
    # contiguous and 8-aligned.  Cast to bf16 once here (halves input DMA).
    x = jnp.transpose(x_nchw, (0, 2, 3, 1)).astype(jnp.float32)        # (B,24,24,3)
    x = jnp.pad(x, ((0, b_pad - B), (1, 1), (1, 1), (0, 0)))           # (b_pad,26,26,3)
    x = x.reshape(b_pad, 26, 78)
    slabs = jnp.stack([x[:, s:s + 21:2, :] for s in range(5)], axis=1)  # (b_pad,5,11,78)
    xs = (slabs.reshape(ns, TB, 5, 11, 78)
               .transpose(0, 2, 3, 1, 4)                               # (ns,5,11,TB,78)
               .reshape(ns * 5 * 11 * TB, 78)
               .astype(jnp.bfloat16))

    out = pl.pallas_call(
        _rnet_fused_kernel,
        out_shape=jax.ShapeDtypeStruct((b_pad, 128), jnp.float32),
        grid=(ns,),
        in_specs=[
            pl.BlockSpec((5 * 11 * TB, 78), lambda s: (s, 0)),   # input slabs (pipelined)
            pl.BlockSpec((9, 78, 384), lambda s: (0, 0, 0)),     # conv1 Toeplitz (resident)
            pl.BlockSpec((1, 384), lambda s: (0, 0)),            # conv1 shift
            pl.BlockSpec((9, 384, 256), lambda s: (0, 0, 0)),    # conv2 Toeplitz
            pl.BlockSpec((1, 256), lambda s: (0, 0)),            # conv2 shift
            pl.BlockSpec((2, 256, 192), lambda s: (0, 0, 0)),    # conv3 Toeplitz
            pl.BlockSpec((1, 192), lambda s: (0, 0)),            # conv3 shift
            pl.BlockSpec((3, 192, 128), lambda s: (0, 0, 0)),    # fc (row-permuted)
            pl.BlockSpec((1, 128), lambda s: (0, 0)),            # fc shift
            pl.BlockSpec((128, 128), lambda s: (0, 0)),          # heads, concatenated+padded
            pl.BlockSpec((1, 128), lambda s: (0, 0)),            # heads bias
        ],
        out_specs=pl.BlockSpec((TB, 128), lambda s: (s, 0)),
        scratch_shapes=[
            pltpu.VMEM((11 * TB, 384), jnp.bfloat16),   # pooled-1 output
            pltpu.VMEM((20 * TB, 384), jnp.bfloat16),   # pooled-1 restaged (5 slabs)
            pltpu.VMEM((4 * TB, 256), jnp.bfloat16),    # pooled-2 output
            pltpu.VMEM((3 * TB, 192), jnp.bfloat16),    # conv3 output
        ],
        compiler_params=pltpu.CompilerParams(dimension_semantics=("parallel",)),
    )(xs, pk["t1"], pk["sh1"], pk["t2"], pk["sh2"], pk["t3"], pk["sh3"],
      pk["fc"], pk["fcsh"], pk["hw"], pk["hb"])

    return out[:B, 0:1], out[:B, 1:5], out[:B, 5:15]


# ----------------------------------------------------------------------------
# Parameter init (PyTorch layout) and one-off packing into kernel operands
# ----------------------------------------------------------------------------
def _bn_block(keys, c):
    gamma = 1.0 + jax.random.normal(keys[0], (c,), jnp.float32) * 0.05
    beta = jax.random.normal(keys[1], (c,), jnp.float32) * 0.05
    mean = jax.random.normal(keys[2], (c,), jnp.float32) * 0.05
    var = jnp.abs(jax.random.normal(keys[3], (c,), jnp.float32)) * 0.1 + 0.9
    return gamma, beta, mean, var


def init_params(key):
    ks = jax.random.split(key, 32)
    p = {}

    def conv_bn(i, name, oc, ic, kh, kw):
        p[name + "_w"] = jax.random.normal(ks[i], (oc, ic, kh, kw), jnp.float32) * 0.1
        p[name + "_b"] = jax.random.normal(ks[i + 1], (oc,), jnp.float32) * 0.05
        (p[name + "_gamma"], p[name + "_beta"],
         p[name + "_mean"], p[name + "_var"]) = _bn_block(ks[i + 2:i + 6], oc)

    conv_bn(0, "conv1", 28, 3, 3, 3)
    conv_bn(6, "conv2", 48, 28, 3, 3)
    conv_bn(12, "conv3", 64, 48, 2, 2)

    p["fc_w"] = jax.random.normal(ks[18], (128, 576), jnp.float32) * 0.05
    p["fc_b"] = jax.random.normal(ks[19], (128,), jnp.float32) * 0.05
    (p["fc_gamma"], p["fc_beta"], p["fc_mean"], p["fc_var"]) = _bn_block(ks[20:24], 128)

    p["h1_w"] = jax.random.normal(ks[24], (1, 128), jnp.float32) * 0.05
    p["h1_b"] = jax.random.normal(ks[25], (1,), jnp.float32) * 0.05
    p["h2_w"] = jax.random.normal(ks[26], (4, 128), jnp.float32) * 0.05
    p["h2_b"] = jax.random.normal(ks[27], (4,), jnp.float32) * 0.05
    p["h3_w"] = jax.random.normal(ks[28], (10, 128), jnp.float32) * 0.05
    p["h3_b"] = jax.random.normal(ks[29], (10,), jnp.float32) * 0.05
    return p


def pack_params(p):
    """Fold BN, Toeplitz-expand conv weights, permute fc rows, cast to bf16."""
    def fold(name):
        g = np.asarray(p[name + "_gamma"], np.float32)
        b = np.asarray(p[name + "_beta"], np.float32)
        m = np.asarray(p[name + "_mean"], np.float32)
        v = np.asarray(p[name + "_var"], np.float32)
        bias = np.asarray(p[name + "_b"], np.float32)
        s = g / np.sqrt(v + 1e-5)
        return s, (bias - m) * s + b

    # conv1: in (q, c) with q the padded column (0..25); out (pw, o), o padded 28->32.
    s1, sh1 = fold("conv1")
    w1 = np.asarray(p["conv1_w"], np.float32) * s1[:, None, None, None]   # (28,3,3,3)
    t1 = np.zeros((9, 78, 384), np.float32)
    for j in range(3):
        for k in range(3):
            for pw in range(11):
                for kw in range(3):
                    q = 2 * pw + j + kw
                    t1[j * 3 + k, q * 3:q * 3 + 3, pw * 32:pw * 32 + 28] = w1[:, :, k, kw].T
    sh1r = np.zeros((1, 384), np.float32)
    for pw in range(11):
        sh1r[0, pw * 32:pw * 32 + 28] = sh1

    # conv2: in (q, c) with c padded to 32; out (pw, o), o padded 48->64.
    s2, sh2 = fold("conv2")
    w2 = np.asarray(p["conv2_w"], np.float32) * s2[:, None, None, None]   # (48,28,3,3)
    t2 = np.zeros((9, 384, 256), np.float32)
    for j in range(3):
        for k in range(3):
            for pw in range(4):
                for kw in range(3):
                    q = 2 * pw + j + kw
                    t2[j * 3 + k, q * 32:q * 32 + 28, pw * 64:pw * 64 + 48] = w2[:, :, k, kw].T
    sh2r = np.zeros((1, 256), np.float32)
    for pw in range(4):
        sh2r[0, pw * 64:pw * 64 + 48] = sh2

    # conv3: in (q, c) with c padded to 64; out (w, o), 3*64 = 192.
    s3, sh3 = fold("conv3")
    w3 = np.asarray(p["conv3_w"], np.float32) * s3[:, None, None, None]   # (64,48,2,2)
    t3 = np.zeros((2, 256, 192), np.float32)
    for k in range(2):
        for w3i in range(3):
            for kw in range(2):
                q = w3i + kw
                t3[k, q * 64:q * 64 + 48, w3i * 64:w3i * 64 + 64] = w3[:, :, k, kw].T
    sh3r = np.tile(sh3, 3)[None, :]                                        # (1, 192)

    # fc: BN1d scale folded in; rows permuted from PyTorch's (c, h, w) flatten
    # order to the kernel's (h, w*64 + c) layout -> no flatten transpose at runtime.
    sfc, shfc = fold("fc")
    wfc = np.asarray(p["fc_w"], np.float32) * sfc[:, None]                 # (128, 576)
    fc_r = wfc.reshape(128, 64, 3, 3).transpose(2, 3, 1, 0).reshape(3, 192, 128)
    fcshr = shfc[None, :]                                                  # (1, 128)

    # heads: one concatenated (128, 128) matrix: [cond | pos(4) | landmark(10) | pad]
    # (padded to 128 lanes so the per-step output store is dense).
    hw = np.zeros((128, 128), np.float32)
    hb = np.zeros((1, 128), np.float32)
    hw[:, 0:1] = np.asarray(p["h1_w"], np.float32).T
    hw[:, 1:5] = np.asarray(p["h2_w"], np.float32).T
    hw[:, 5:15] = np.asarray(p["h3_w"], np.float32).T
    hb[0, 0] = np.asarray(p["h1_b"], np.float32)[0]
    hb[0, 1:5] = np.asarray(p["h2_b"], np.float32)
    hb[0, 5:15] = np.asarray(p["h3_b"], np.float32)

    bf = jnp.bfloat16
    return {
        "t1": jnp.asarray(t1, bf), "sh1": jnp.asarray(sh1r),
        "t2": jnp.asarray(t2, bf), "sh2": jnp.asarray(sh2r),
        "t3": jnp.asarray(t3, bf), "sh3": jnp.asarray(sh3r),
        "fc": jnp.asarray(fc_r, bf), "fcsh": jnp.asarray(fcshr),
        "hw": jnp.asarray(hw, bf), "hb": jnp.asarray(hb),
    }


# ----------------------------------------------------------------------------
# Pure-JAX reference (PyTorch semantics, inference-mode BN) for validation
# ----------------------------------------------------------------------------
def ref_forward(x, p):
    def conv(y, w, b, pad):
        y = jax.lax.conv_general_dilated(
            y, w, (1, 1), ((pad, pad), (pad, pad)),
            dimension_numbers=("NCHW", "OIHW", "NCHW"))
        return y + b[None, :, None, None]

    def bn(y, name):
        s = p[name + "_gamma"] / jnp.sqrt(p[name + "_var"] + 1e-5)
        return ((y - p[name + "_mean"][None, :, None, None]) * s[None, :, None, None]
                + p[name + "_beta"][None, :, None, None])

    def pool(y):
        return jax.lax.reduce_window(y, -jnp.inf, jax.lax.max,
                                     (1, 1, 3, 3), (1, 1, 2, 2), "VALID")

    y = pool(jnp.maximum(bn(conv(x, p["conv1_w"], p["conv1_b"], 1), "conv1"), 0.0))
    y = pool(jnp.maximum(bn(conv(y, p["conv2_w"], p["conv2_b"], 0), "conv2"), 0.0))
    y = jnp.maximum(bn(conv(y, p["conv3_w"], p["conv3_b"], 0), "conv3"), 0.0)
    y = y.reshape(y.shape[0], -1)                                    # NCHW flatten
    s = p["fc_gamma"] / jnp.sqrt(p["fc_var"] + 1e-5)
    y1 = y @ p["fc_w"].T + p["fc_b"]
    y1 = jnp.maximum((y1 - p["fc_mean"]) * s + p["fc_beta"], 0.0)
    cond = jax.nn.sigmoid(y1 @ p["h1_w"].T + p["h1_b"])
    pos = y1 @ p["h2_w"].T + p["h2_b"]
    lmk = y1 @ p["h3_w"].T + p["h3_b"]
    return cond, pos, lmk


if __name__ == "__main__":
    key = jax.random.PRNGKey(0)
    k_param, k_x = jax.random.split(key)
    params = init_params(k_param)
    packed = pack_params(params)

    # Input must be 24x24 for the architecture to yield 3x3x64 before the fc.
    x = jax.random.normal(k_x, (2, 3, 24, 24), jnp.float32)

    fwd = jax.jit(r_net_forward)
    cond, pos, lmk = fwd(x, packed)
    jax.block_until_ready((cond, pos, lmk))

    assert cond.shape == (2, 1) and pos.shape == (2, 4) and lmk.shape == (2, 10)
    assert bool(jnp.all((cond >= 0.0) & (cond <= 1.0)))

    # Validate against the pure-JAX reference (bf16 MXU operands -> loose tol).
    rc, rp, rl = ref_forward(x, params)
    assert bool(jnp.allclose(cond, rc, atol=5e-2, rtol=5e-2)), "cond mismatch"
    assert bool(jnp.allclose(pos, rp, atol=5e-2, rtol=5e-2)), "pos mismatch"
    assert bool(jnp.allclose(lmk, rl, atol=5e-2, rtol=5e-2)), "landmark mismatch"

    print("KERNEL_OK")
</pallas_src>

<mosaic_0001>
module attributes {stable_mosaic.version = 11 : i64} {
  func.func @_rnet_fused_kernel(%arg0: i32, %arg1: memref<440x78xbf16, #tpu.memory_space<vmem>>, %arg2: memref<9x78x384xbf16, #tpu.memory_space<vmem>>, %arg3: memref<1x384xf32, #tpu.memory_space<vmem>>, %arg4: memref<9x384x256xbf16, #tpu.memory_space<vmem>>, %arg5: memref<1x256xf32, #tpu.memory_space<vmem>>, %arg6: memref<2x256x192xbf16, #tpu.memory_space<vmem>>, %arg7: memref<1x192xf32, #tpu.memory_space<vmem>>, %arg8: memref<3x192x128xbf16, #tpu.memory_space<vmem>>, %arg9: memref<1x128xf32, #tpu.memory_space<vmem>>, %arg10: memref<128x128xbf16, #tpu.memory_space<vmem>>, %arg11: memref<1x128xf32, #tpu.memory_space<vmem>>, %arg12: memref<8x128xf32, #tpu.memory_space<vmem>>, %arg13: memref<88x384xbf16, #tpu.memory_space<vmem>>, %arg14: memref<160x384xbf16, #tpu.memory_space<vmem>>, %arg15: memref<32x256xbf16, #tpu.memory_space<vmem>>, %arg16: memref<24x192xbf16, #tpu.memory_space<vmem>>) attributes {dimension_semantics = [#tpu.dimension_semantics<parallel>], iteration_bounds = array<i64: 1>, scalar_prefetch = 0 : i64, scratch_operands = 4 : i64, tpu.core_type = #tpu.core_type<tc>, window_params = [{transform_indices = @transform_0, window_bounds = array<i64: 440, 78>}, {pipeline_mode = #tpu.pipeline_mode<synchronous>, transform_indices = @transform_1, window_bounds = array<i64: 9, 78, 384>}, {pipeline_mode = #tpu.pipeline_mode<synchronous>, transform_indices = @transform_2, window_bounds = array<i64: 1, 384>}, {pipeline_mode = #tpu.pipeline_mode<synchronous>, transform_indices = @transform_3, window_bounds = array<i64: 9, 384, 256>}, {pipeline_mode = #tpu.pipeline_mode<synchronous>, transform_indices = @transform_4, window_bounds = array<i64: 1, 256>}, {pipeline_mode = #tpu.pipeline_mode<synchronous>, transform_indices = @transform_5, window_bounds = array<i64: 2, 256, 192>}, {pipeline_mode = #tpu.pipeline_mode<synchronous>, transform_indices = @transform_6, window_bounds = array<i64: 1, 192>}, {pipeline_mode = #tpu.pipeline_mode<synchronous>, transform_indices = @transform_7, window_bounds = array<i64: 3, 192, 128>}, {pipeline_mode = #tpu.pipeline_mode<synchronous>, transform_indices = @transform_8, window_bounds = array<i64: 1, 128>}, {pipeline_mode = #tpu.pipeline_mode<synchronous>, transform_indices = @transform_9, window_bounds = array<i64: 128, 128>}, {pipeline_mode = #tpu.pipeline_mode<synchronous>, transform_indices = @transform_10, window_bounds = array<i64: 1, 128>}, {transform_indices = @transform_11, window_bounds = array<i64: 8, 128>}]} {
    %c0 = arith.constant 0 : index
    %c0_0 = arith.constant 0 : index
    %0 = vector.load %arg1[%c0, %c0_0] : memref<440x78xbf16, #tpu.memory_space<vmem>>, vector<264x78xbf16>
    %c0_1 = arith.constant 0 : index
    %c0_2 = arith.constant 0 : index
    %c0_3 = arith.constant 0 : index
    %1 = vector.load %arg2[%c0_1, %c0_2, %c0_3] : memref<9x78x384xbf16, #tpu.memory_space<vmem>>, vector<1x78x384xbf16>
    %2 = vector.shape_cast %1 : vector<1x78x384xbf16> to vector<78x384xbf16>
    %cst = arith.constant dense<0.000000e+00> : vector<264x384xf32>
    %3 = tpu.matmul %0, %2, %cst {dimension_numbers = #tpu.dot_dimension_numbers<[1], [0], [0], [1], [0, 0, 1, 1], [], []>} : vector<264x78xbf16>, vector<78x384xbf16>, vector<264x384xf32> -> vector<264x384xf32>
    %c88 = arith.constant 88 : index
    %c0_4 = arith.constant 0 : index
    %4 = vector.load %arg1[%c88, %c0_4] : memref<440x78xbf16, #tpu.memory_space<vmem>>, vector<264x78xbf16>
    %c1 = arith.constant 1 : index
    %c0_5 = arith.constant 0 : index
    %c0_6 = arith.constant 0 : index
    %5 = vector.load %arg2[%c1, %c0_5, %c0_6] : memref<9x78x384xbf16, #tpu.memory_space<vmem>>, vector<1x78x384xbf16>
    %6 = vector.shape_cast %5 : vector<1x78x384xbf16> to vector<78x384xbf16>
    %cst_7 = arith.constant dense<0.000000e+00> : vector<264x384xf32>
    %7 = tpu.matmul %4, %6, %cst_7 {dimension_numbers = #tpu.dot_dimension_numbers<[1], [0], [0], [1], [0, 0, 1, 1], [], []>} : vector<264x78xbf16>, vector<78x384xbf16>, vector<264x384xf32> -> vector<264x384xf32>
    %8 = arith.addf %3, %7 : vector<264x384xf32>
    %c176 = arith.constant 176 : index
    %c0_8 = arith.constant 0 : index
    %9 = vector.load %arg1[%c176, %c0_8] : memref<440x78xbf16, #tpu.memory_space<vmem>>, vector<264x78xbf16>
    %c2 = arith.constant 2 : index
    %c0_9 = arith.constant 0 : index
    %c0_10 = arith.constant 0 : index
    %10 = vector.load %arg2[%c2, %c0_9, %c0_10] : memref<9x78x384xbf16, #tpu.memory_space<vmem>>, vector<1x78x384xbf16>
    %11 = vector.shape_cast %10 : vector<1x78x384xbf16> to vector<78x384xbf16>
    %cst_11 = arith.constant dense<0.000000e+00> : vector<264x384xf32>
    %12 = tpu.matmul %9, %11, %cst_11 {dimension_numbers = #tpu.dot_dimension_numbers<[1], [0], [0], [1], [0, 0, 1, 1], [], []>} : vector<264x78xbf16>, vector<78x384xbf16>, vector<264x384xf32> -> vector<264x384xf32>
    %13 = arith.addf %8, %12 : vector<264x384xf32>
    %14 = vector.extract_strided_slice %13 {offsets = [0, 0], sizes = [88, 384], strides = [1, 1]} : vector<264x384xf32> to vector<88x384xf32>
    %15 = vector.extract_strided_slice %13 {offsets = [88, 0], sizes = [88, 384], strides = [1, 1]} : vector<264x384xf32> to vector<88x384xf32>
    %16 = arith.maximumf %14, %15 : vector<88x384xf32>
    %17 = vector.extract_strided_slice %13 {offsets = [176, 0], sizes = [88, 384], strides = [1, 1]} : vector<264x384xf32> to vector<88x384xf32>
    %18 = arith.maximumf %16, %17 : vector<88x384xf32>
    %c0_12 = arith.constant 0 : index
    %c0_13 = arith.constant 0 : index
    %19 = vector.load %arg1[%c0_12, %c0_13] : memref<440x78xbf16, #tpu.memory_space<vmem>>, vector<264x78xbf16>
    %c3 = arith.constant 3 : index
    %c0_14 = arith.constant 0 : index
    %c0_15 = arith.constant 0 : index
    %20 = vector.load %arg2[%c3, %c0_14, %c0_15] : memref<9x78x384xbf16, #tpu.memory_space<vmem>>, vector<1x78x384xbf16>
    %21 = vector.shape_cast %20 : vector<1x78x384xbf16> to vector<78x384xbf16>
    %cst_16 = arith.constant dense<0.000000e+00> : vector<264x384xf32>
    %22 = tpu.matmul %19, %21, %cst_16 {dimension_numbers = #tpu.dot_dimension_numbers<[1], [0], [0], [1], [0, 0, 1, 1], [], []>} : vector<264x78xbf16>, vector<78x384xbf16>, vector<264x384xf32> -> vector<264x384xf32>
    %c88_17 = arith.constant 88 : index
    %c0_18 = arith.constant 0 : index
    %23 = vector.load %arg1[%c88_17, %c0_18] : memref<440x78xbf16, #tpu.memory_space<vmem>>, vector<264x78xbf16>
    %c4 = arith.constant 4 : index
    %c0_19 = arith.constant 0 : index
    %c0_20 = arith.constant 0 : index
    %24 = vector.load %arg2[%c4, %c0_19, %c0_20] : memref<9x78x384xbf16, #tpu.memory_space<vmem>>, vector<1x78x384xbf16>
    %25 = vector.shape_cast %24 : vector<1x78x384xbf16> to vector<78x384xbf16>
    %cst_21 = arith.constant dense<0.000000e+00> : vector<264x384xf32>
    %26 = tpu.matmul %23, %25, %cst_21 {dimension_numbers = #tpu.dot_dimension_numbers<[1], [0], [0], [1], [0, 0, 1, 1], [], []>} : vector<264x78xbf16>, vector<78x384xbf16>, vector<264x384xf32> -> vector<264x384xf32>
    %27 = arith.addf %22, %26 : vector<264x384xf32>
    %c176_22 = arith.constant 176 : index
    %c0_23 = arith.constant 0 : index
    %28 = vector.load %arg1[%c176_22, %c0_23] : memref<440x78xbf16, #tpu.memory_space<vmem>>, vector<264x78xbf16>
    %c5 = arith.constant 5 : index
    %c0_24 = arith.constant 0 : index
    %c0_25 = arith.constant 0 : index
    %29 = vector.load %arg2[%c5, %c0_24, %c0_25] : memref<9x78x384xbf16, #tpu.memory_space<vmem>>, vector<1x78x384xbf16>
    %30 = vector.shape_cast %29 : vector<1x78x384xbf16> to vector<78x384xbf16>
    %cst_26 = arith.constant dense<0.000000e+00> : vector<264x384xf32>
    %31 = tpu.matmul %28, %30, %cst_26 {dimension_numbers = #tpu.dot_dimension_numbers<[1], [0], [0], [1], [0, 0, 1, 1], [], []>} : vector<264x78xbf16>, vector<78x384xbf16>, vector<264x384xf32> -> vector<264x384xf32>
    %32 = arith.addf %27, %31 : vector<264x384xf32>
    %33 = vector.extract_strided_slice %32 {offsets = [0, 0], sizes = [88, 384], strides = [1, 1]} : vector<264x384xf32> to vector<88x384xf32>
    %34 = vector.extract_strided_slice %32 {offsets = [88, 0], sizes = [88, 384], strides = [1, 1]} : vector<264x384xf32> to vector<88x384xf32>
    %35 = arith.maximumf %33, %34 : vector<88x384xf32>
    %36 = vector.extract_strided_slice %32 {offsets = [176, 0], sizes = [88, 384], strides = [1, 1]} : vector<264x384xf32> to vector<88x384xf32>
    %37 = arith.maximumf %35, %36 : vector<88x384xf32>
    %38 = arith.maximumf %18, %37 : vector<88x384xf32>
    %c0_27 = arith.constant 0 : index
    %c0_28 = arith.constant 0 : index
    %39 = vector.load %arg1[%c0_27, %c0_28] : memref<440x78xbf16, #tpu.memory_space<vmem>>, vector<264x78xbf16>
    %c6 = arith.constant 6 : index
    %c0_29 = arith.constant 0 : index
    %c0_30 = arith.constant 0 : index
    %40 = vector.load %arg2[%c6, %c0_29, %c0_30] : memref<9x78x384xbf16, #tpu.memory_space<vmem>>, vector<1x78x384xbf16>
    %41 = vector.shape_cast %40 : vector<1x78x384xbf16> to vector<78x384xbf16>
    %cst_31 = arith.constant dense<0.000000e+00> : vector<264x384xf32>
    %42 = tpu.matmul %39, %41, %cst_31 {dimension_numbers = #tpu.dot_dimension_numbers<[1], [0], [0], [1], [0, 0, 1, 1], [], []>} : vector<264x78xbf16>, vector<78x384xbf16>, vector<264x384xf32> -> vector<264x384xf32>
    %c88_32 = arith.constant 88 : index
    %c0_33 = arith.constant 0 : index
    %43 = vector.load %arg1[%c88_32, %c0_33] : memref<440x78xbf16, #tpu.memory_space<vmem>>, vector<264x78xbf16>
    %c7 = arith.constant 7 : index
    %c0_34 = arith.constant 0 : index
    %c0_35 = arith.constant 0 : index
    %44 = vector.load %arg2[%c7, %c0_34, %c0_35] : memref<9x78x384xbf16, #tpu.memory_space<vmem>>, vector<1x78x384xbf16>
    %45 = vector.shape_cast %44 : vector<1x78x384xbf16> to vector<78x384xbf16>
    %cst_36 = arith.constant dense<0.000000e+00> : vector<264x384xf32>
    %46 = tpu.matmul %43, %45, %cst_36 {dimension_numbers = #tpu.dot_dimension_numbers<[1], [0], [0], [1], [0, 0, 1, 1], [], []>} : vector<264x78xbf16>, vector<78x384xbf16>, vector<264x384xf32> -> vector<264x384xf32>
    %47 = arith.addf %42, %46 : vector<264x384xf32>
    %c176_37 = arith.constant 176 : index
    %c0_38 = arith.constant 0 : index
    %48 = vector.load %arg1[%c176_37, %c0_38] : memref<440x78xbf16, #tpu.memory_space<vmem>>, vector<264x78xbf16>
    %c8 = arith.constant 8 : index
    %c0_39 = arith.constant 0 : index
    %c0_40 = arith.constant 0 : index
    %49 = vector.load %arg2[%c8, %c0_39, %c0_40] : memref<9x78x384xbf16, #tpu.memory_space<vmem>>, vector<1x78x384xbf16>
    %50 = vector.shape_cast %49 : vector<1x78x384xbf16> to vector<78x384xbf16>
    %cst_41 = arith.constant dense<0.000000e+00> : vector<264x384xf32>
    %51 = tpu.matmul %48, %50, %cst_41 {dimension_numbers = #tpu.dot_dimension_numbers<[1], [0], [0], [1], [0, 0, 1, 1], [], []>} : vector<264x78xbf16>, vector<78x384xbf16>, vector<264x384xf32> -> vector<264x384xf32>
    %52 = arith.addf %47, %51 : vector<264x384xf32>
    %53 = vector.extract_strided_slice %52 {offsets = [0, 0], sizes = [88, 384], strides = [1, 1]} : vector<264x384xf32> to vector<88x384xf32>
    %54 = vector.extract_strided_slice %52 {offsets = [88, 0], sizes = [88, 384], strides = [1, 1]} : vector<264x384xf32> to vector<88x384xf32>
    %55 = arith.maximumf %53, %54 : vector<88x384xf32>
    %56 = vector.extract_strided_slice %52 {offsets = [176, 0], sizes = [88, 384], strides = [1, 1]} : vector<264x384xf32> to vector<88x384xf32>
    %57 = arith.maximumf %55, %56 : vector<88x384xf32>
    %58 = arith.maximumf %38, %57 : vector<88x384xf32>
    %c0_42 = arith.constant 0 : index
    %c0_43 = arith.constant 0 : index
    %59 = vector.load %arg3[%c0_42, %c0_43] : memref<1x384xf32, #tpu.memory_space<vmem>>, vector<1x384xf32>
    %60 = vector.broadcast %59 : vector<1x384xf32> to vector<88x384xf32>
    %61 = arith.addf %58, %60 : vector<88x384xf32>
    %cst_44 = arith.constant 0.000000e+00 : f32
    %62 = vector.broadcast %cst_44 : f32 to vector<88x384xf32>
    %63 = arith.maximumf %61, %62 : vector<88x384xf32>
    %64 = arith.truncf %63 : vector<88x384xf32> to vector<88x384xbf16>
    %c0_45 = arith.constant 0 : index
    %c0_46 = arith.constant 0 : index
    %65 = vector.load %arg13[%c0_45, %c0_46] : memref<88x384xbf16, #tpu.memory_space<vmem>>, vector<88x384xbf16>
    tpu.vector_store %arg13[%c0_45, %c0_46], %64 {strides = array<i32>} : memref<88x384xbf16, #tpu.memory_space<vmem>>, vector<88x384xbf16>,
    %c0_47 = arith.constant 0 : index
    %c0_48 = arith.constant 0 : index
    %66 = vector.load %arg13[%c0_47, %c0_48] : memref<88x384xbf16, #tpu.memory_space<vmem>>, vector<8x384xbf16>
    %c0_49 = arith.constant 0 : index
    %c0_50 = arith.constant 0 : index
    %67 = vector.load %arg14[%c0_49, %c0_50] : memref<160x384xbf16, #tpu.memory_space<vmem>>, vector<8x384xbf16>
    tpu.vector_store %arg14[%c0_49, %c0_50], %66 {strides = array<i32>} : memref<160x384xbf16, #tpu.memory_space<vmem>>, vector<8x384xbf16>,
    %c16 = arith.constant 16 : index
    %c0_51 = arith.constant 0 : index
    %68 = vector.load %arg13[%c16, %c0_51] : memref<88x384xbf16, #tpu.memory_space<vmem>>, vector<8x384xbf16>
    %c8_52 = arith.constant 8 : index
    %c0_53 = arith.constant 0 : index
    %69 = vector.load %arg14[%c8_52, %c0_53] : memref<160x384xbf16, #tpu.memory_space<vmem>>, vector<8x384xbf16>
    tpu.vector_store %arg14[%c8_52, %c0_53], %68 {strides = array<i32>} : memref<160x384xbf16, #tpu.memory_space<vmem>>, vector<8x384xbf16>,
    %c32 = arith.constant 32 : index
    %c0_54 = arith.constant 0 : index
    %70 = vector.load %arg13[%c32, %c0_54] : memref<88x384xbf16, #tpu.memory_space<vmem>>, vector<8x384xbf16>
    %c16_55 = arith.constant 16 : index
    %c0_56 = arith.constant 0 : index
    %71 = vector.load %arg14[%c16_55, %c0_56] : memref<160x384xbf16, #tpu.memory_space<vmem>>, vector<8x384xbf16>
    tpu.vector_store %arg14[%c16_55, %c0_56], %70 {strides = array<i32>} : memref<160x384xbf16, #tpu.memory_space<vmem>>, vector<8x384xbf16>,
    %c48 = arith.constant 48 : index
    %c0_57 = arith.constant 0 : index
    %72 = vector.load %arg13[%c48, %c0_57] : memref<88x384xbf16, #tpu.memory_space<vmem>>, vector<8x384xbf16>
    %c24 = arith.constant 24 : index
    %c0_58 = arith.constant 0 : index
    %73 = vector.load %arg14[%c24, %c0_58] : memref<160x384xbf16, #tpu.memory_space<vmem>>, vector<8x384xbf16>
    tpu.vector_store %arg14[%c24, %c0_58], %72 {strides = array<i32>} : memref<160x384xbf16, #tpu.memory_space<vmem>>, vector<8x384xbf16>,
    %c8_59 = arith.constant 8 : index
    %c0_60 = arith.constant 0 : index
    %74 = vector.load %arg13[%c8_59, %c0_60] : memref<88x384xbf16, #tpu.memory_space<vmem>>, vector<8x384xbf16>
    %c32_61 = arith.constant 32 : index
    %c0_62 = arith.constant 0 : index
    %75 = vector.load %arg14[%c32_61, %c0_62] : memref<160x384xbf16, #tpu.memory_space<vmem>>, vector<8x384xbf16>
    tpu.vector_store %arg14[%c32_61, %c0_62], %74 {strides = array<i32>} : memref<160x384xbf16, #tpu.memory_space<vmem>>, vector<8x384xbf16>,
    %c24_63 = arith.constant 24 : index
    %c0_64 = arith.constant 0 : index
    %76 = vector.load %arg13[%c24_63, %c0_64] : memref<88x384xbf16, #tpu.memory_space<vmem>>, vector<8x384xbf16>
    %c40 = arith.constant 40 : index
    %c0_65 = arith.constant 0 : index
    %77 = vector.load %arg14[%c40, %c0_65] : memref<160x384xbf16, #tpu.memory_space<vmem>>, vector<8x384xbf16>
    tpu.vector_store %arg14[%c40, %c0_65], %76 {strides = array<i32>} : memref<160x384xbf16, #tpu.memory_space<vmem>>, vector<8x384xbf16>,
    %c40_66 = arith.constant 40 : index
    %c0_67 = arith.constant 0 : index
    %78 = vector.load %arg13[%c40_66, %c0_67] : memref<88x384xbf16, #tpu.memory_space<vmem>>, vector<8x384xbf16>
    %c48_68 = arith.constant 48 : index
    %c0_69 = arith.constant 0 : index
    %79 = vector.load %arg14[%c48_68, %c0_69] : memref<160x384xbf16, #tpu.memory_space<vmem>>, vector<8x384xbf16>
    tpu.vector_store %arg14[%c48_68, %c0_69], %78 {strides = array<i32>} : memref<160x384xbf16, #tpu.memory_space<vmem>>, vector<8x384xbf16>,
    %c56 = arith.constant 56 : index
    %c0_70 = arith.constant 0 : index
    %80 = vector.load %arg13[%c56, %c0_70] : memref<88x384xbf16, #tpu.memory_space<vmem>>, vector<8x384xbf16>
    %c56_71 = arith.constant 56 : index
    %c0_72 = arith.constant 0 : index
    %81 = vector.load %arg14[%c56_71, %c0_72] : memref<160x384xbf16, #tpu.memory_space<vmem>>, vector<8x384xbf16>
    tpu.vector_store %arg14[%c56_71, %c0_72], %80 {strides = array<i32>} : memref<160x384xbf16, #tpu.memory_space<vmem>>, vector<8x384xbf16>,
    %c16_73 = arith.constant 16 : index
    %c0_74 = arith.constant 0 : index
    %82 = vector.load %arg13[%c16_73, %c0_74] : memref<88x384xbf16, #tpu.memory_space<vmem>>, vector<8x384xbf16>
    %c64 = arith.constant 64 : index
    %c0_75 = arith.constant 0 : index
    %83 = vector.load %arg14[%c64, %c0_75] : memref<160x384xbf16, #tpu.memory_space<vmem>>, vector<8x384xbf16>
    tpu.vector_store %arg14[%c64, %c0_75], %82 {strides = array<i32>} : memref<160x384xbf16, #tpu.memory_space<vmem>>, vector<8x384xbf16>,
    %c32_76 = arith.constant 32 : index
    %c0_77 = arith.constant 0 : index
    %84 = vector.load %arg13[%c32_76, %c0_77] : memref<88x384xbf16, #tpu.memory_space<vmem>>, vector<8x384xbf16>
    %c72 = arith.constant 72 : index
    %c0_78 = arith.constant 0 : index
    %85 = vector.load %arg14[%c72, %c0_78] : memref<160x384xbf16, #tpu.memory_space<vmem>>, vector<8x384xbf16>
    tpu.vector_store %arg14[%c72, %c0_78], %84 {strides = array<i32>} : memref<160x384xbf16, #tpu.memory_space<vmem>>, vector<8x384xbf16>,
    %c48_79 = arith.constant 48 : index
    %c0_80 = arith.constant 0 : index
    %86 = vector.load %arg13[%c48_79, %c0_80] : memref<88x384xbf16, #tpu.memory_space<vmem>>, vector<8x384xbf16>
    %c80 = arith.constant 80 : index
    %c0_81 = arith.constant 0 : index
    %87 = vector.load %arg14[%c80, %c0_81] : memref<160x384xbf16, #tpu.memory_space<vmem>>, vector<8x384xbf16>
    tpu.vector_store %arg14[%c80, %c0_81], %86 {strides = array<i32>} : memref<160x384xbf16, #tpu.memory_space<vmem>>, vector<8x384xbf16>,
    %c64_82 = arith.constant 64 : index
    %c0_83 = arith.constant 0 : index
    %88 = vector.load %arg13[%c64_82, %c0_83] : memref<88x384xbf16, #tpu.memory_space<vmem>>, vector<8x384xbf16>
    %c88_84 = arith.constant 88 : index
    %c0_85 = arith.constant 0 : index
    %89 = vector.load %arg14[%c88_84, %c0_85] : memref<160x384xbf16, #tpu.memory_space<vmem>>, vector<8x384xbf16>
    tpu.vector_store %arg14[%c88_84, %c0_85], %88 {strides = array<i32>} : memref<160x384xbf16, #tpu.memory_space<vmem>>, vector<8x384xbf16>,
    %c24_86 = arith.constant 24 : index
    %c0_87 = arith.constant 0 : index
    %90 = vector.load %arg13[%c24_86, %c0_87] : memref<88x384xbf16, #tpu.memory_space<vmem>>, vector<8x384xbf16>
    %c96 = arith.constant 96 : index
    %c0_88 = arith.constant 0 : index
    %91 = vector.load %arg14[%c96, %c0_88] : memref<160x384xbf16, #tpu.memory_space<vmem>>, vector<8x384xbf16>
    tpu.vector_store %arg14[%c96, %c0_88], %90 {strides = array<i32>} : memref<160x384xbf16, #tpu.memory_space<vmem>>, vector<8x384xbf16>,
    %c40_89 = arith.constant 40 : index
    %c0_90 = arith.constant 0 : index
    %92 = vector.load %arg13[%c40_89, %c0_90] : memref<88x384xbf16, #tpu.memory_space<vmem>>, vector<8x384xbf16>
    %c104 = arith.constant 104 : index
    %c0_91 = arith.constant 0 : index
    %93 = vector.load %arg14[%c104, %c0_91] : memref<160x384xbf16, #tpu.memory_space<vmem>>, vector<8x384xbf16>
    tpu.vector_store %arg14[%c104, %c0_91], %92 {strides = array<i32>} : memref<160x384xbf16, #tpu.memory_space<vmem>>, vector<8x384xbf16>,
    %c56_92 = arith.constant 56 : index
    %c0_93 = arith.constant 0 : index
    %94 = vector.load %arg13[%c56_92, %c0_93] : memref<88x384xbf16, #tpu.memory_space<vmem>>, vector<8x384xbf16>
    %c112 = arith.constant 112 : index
    %c0_94 = arith.constant 0 : index
    %95 = vector.load %arg14[%c112, %c0_94] : memref<160x384xbf16, #tpu.memory_space<vmem>>, vector<8x384xbf16>
    tpu.vector_store %arg14[%c112, %c0_94], %94 {strides = array<i32>} : memref<160x384xbf16, #tpu.memory_space<vmem>>, vector<8x384xbf16>,
    %c72_95 = arith.constant 72 : index
    %c0_96 = arith.constant 0 : index
    %96 = vector.load %arg13[%c72_95, %c0_96] : memref<88x384xbf16, #tpu.memory_space<vmem>>, vector<8x384xbf16>
    %c120 = arith.constant 120 : index
    %c0_97 = arith.constant 0 : index
    %97 = vector.load %arg14[%c120, %c0_97] : memref<160x384xbf16, #tpu.memory_space<vmem>>, vector<8x384xbf16>
    tpu.vector_store %arg14[%c120, %c0_97], %96 {strides = array<i32>} : memref<160x384xbf16, #tpu.memory_space<vmem>>, vector<8x384xbf16>,
    %c32_98 = arith.constant 32 : index
    %c0_99 = arith.constant 0 : index
    %98 = vector.load %arg13[%c32_98, %c0_99] : memref<88x384xbf16, #tpu.memory_space<vmem>>, vector<8x384xbf16>
    %c128 = arith.constant 128 : index
    %c0_100 = arith.constant 0 : index
    %99 = vector.load %arg14[%c128, %c0_100] : memref<160x384xbf16, #tpu.memory_space<vmem>>, vector<8x384xbf16>
    tpu.vector_store %arg14[%c128, %c0_100], %98 {strides = array<i32>} : memref<160x384xbf16, #tpu.memory_space<vmem>>, vector<8x384xbf16>,
    %c48_101 = arith.constant 48 : index
    %c0_102 = arith.constant 0 : index
    %100 = vector.load %arg13[%c48_101, %c0_102] : memref<88x384xbf16, #tpu.memory_space<vmem>>, vector<8x384xbf16>
    %c136 = arith.constant 136 : index
    %c0_103 = arith.constant 0 : index
    %101 = vector.load %arg14[%c136, %c0_103] : memref<160x384xbf16, #tpu.memory_space<vmem>>, vector<8x384xbf16>
    tpu.vector_store %arg14[%c136, %c0_103], %100 {strides = array<i32>} : memref<160x384xbf16, #tpu.memory_space<vmem>>, vector<8x384xbf16>,
    %c64_104 = arith.constant 64 : index
    %c0_105 = arith.constant 0 : index
    %102 = vector.load %arg13[%c64_104, %c0_105] : memref<88x384xbf16, #tpu.memory_space<vmem>>, vector<8x384xbf16>
    %c144 = arith.constant 144 : index
    %c0_106 = arith.constant 0 : index
    %103 = vector.load %arg14[%c144, %c0_106] : memref<160x384xbf16, #tpu.memory_space<vmem>>, vector<8x384xbf16>
    tpu.vector_store %arg14[%c144, %c0_106], %102 {strides = array<i32>} : memref<160x384xbf16, #tpu.memory_space<vmem>>, vector<8x384xbf16>,
    %c80_107 = arith.constant 80 : index
    %c0_108 = arith.constant 0 : index
    %104 = vector.load %arg13[%c80_107, %c0_108] : memref<88x384xbf16, #tpu.memory_space<vmem>>, vector<8x384xbf16>
    %c152 = arith.constant 152 : index
    %c0_109 = arith.constant 0 : index
    %105 = vector.load %arg14[%c152, %c0_109] : memref<160x384xbf16, #tpu.memory_space<vmem>>, vector<8x384xbf16>
    tpu.vector_store %arg14[%c152, %c0_109], %104 {strides = array<i32>} : memref<160x384xbf16, #tpu.memory_space<vmem>>, vector<8x384xbf16>,
    %c0_110 = arith.constant 0 : index
    %c0_111 = arith.constant 0 : index
    %106 = vector.load %arg14[%c0_110, %c0_111] : memref<160x384xbf16, #tpu.memory_space<vmem>>, vector<96x384xbf16>
    %c0_112 = arith.constant 0 : index
    %c0_113 = arith.constant 0 : index
    %c0_114 = arith.constant 0 : index
    %107 = vector.load %arg4[%c0_112, %c0_113, %c0_114] : memref<9x384x256xbf16, #tpu.memory_space<vmem>>, vector<1x384x256xbf16>
    %108 = vector.shape_cast %107 : vector<1x384x256xbf16> to vector<384x256xbf16>
    %cst_115 = arith.constant dense<0.000000e+00> : vector<96x256xf32>
    %109 = tpu.matmul %106, %108, %cst_115 {dimension_numbers = #tpu.dot_dimension_numbers<[1], [0], [0], [1], [0, 0, 1, 1], [], []>} : vector<96x384xbf16>, vector<384x256xbf16>, vector<96x256xf32> -> vector<96x256xf32>
    %c32_116 = arith.constant 32 : index
    %c0_117 = arith.constant 0 : index
    %110 = vector.load %arg14[%c32_116, %c0_117] : memref<160x384xbf16, #tpu.memory_space<vmem>>, vector<96x384xbf16>
    %c1_118 = arith.constant 1 : index
    %c0_119 = arith.constant 0 : index
    %c0_120 = arith.constant 0 : index
    %111 = vector.load %arg4[%c1_118, %c0_119, %c0_120] : memref<9x384x256xbf16, #tpu.memory_space<vmem>>, vector<1x384x256xbf16>
    %112 = vector.shape_cast %111 : vector<1x384x256xbf16> to vector<384x256xbf16>
    %cst_121 = arith.constant dense<0.000000e+00> : vector<96x256xf32>
    %113 = tpu.matmul %110, %112, %cst_121 {dimension_numbers = #tpu.dot_dimension_numbers<[1], [0], [0], [1], [0, 0, 1, 1], [], []>} : vector<96x384xbf16>, vector<384x256xbf16>, vector<96x256xf32> -> vector<96x256xf32>
    %114 = arith.addf %109, %113 : vector<96x256xf32>
    %c64_122 = arith.constant 64 : index
    %c0_123 = arith.constant 0 : index
    %115 = vector.load %arg14[%c64_122, %c0_123] : memref<160x384xbf16, #tpu.memory_space<vmem>>, vector<96x384xbf16>
    %c2_124 = arith.constant 2 : index
    %c0_125 = arith.constant 0 : index
    %c0_126 = arith.constant 0 : index
    %116 = vector.load %arg4[%c2_124, %c0_125, %c0_126] : memref<9x384x256xbf16, #tpu.memory_space<vmem>>, vector<1x384x256xbf16>
    %117 = vector.shape_cast %116 : vector<1x384x256xbf16> to vector<384x256xbf16>
    %cst_127 = arith.constant dense<0.000000e+00> : vector<96x256xf32>
    %118 = tpu.matmul %115, %117, %cst_127 {dimension_numbers = #tpu.dot_dimension_numbers<[1], [0], [0], [1], [0, 0, 1, 1], [], []>} : vector<96x384xbf16>, vector<384x256xbf16>, vector<96x256xf32> -> vector<96x256xf32>
    %119 = arith.addf %114, %118 : vector<96x256xf32>
    %120 = vector.extract_strided_slice %119 {offsets = [0, 0], sizes = [32, 256], strides = [1, 1]} : vector<96x256xf32> to vector<32x256xf32>
    %121 = vector.extract_strided_slice %119 {offsets = [32, 0], sizes = [32, 256], strides = [1, 1]} : vector<96x256xf32> to vector<32x256xf32>
    %122 = arith.maximumf %120, %121 : vector<32x256xf32>
    %123 = vector.extract_strided_slice %119 {offsets = [64, 0], sizes = [32, 256], strides = [1, 1]} : vector<96x256xf32> to vector<32x256xf32>
    %124 = arith.maximumf %122, %123 : vector<32x256xf32>
    %c0_128 = arith.constant 0 : index
    %c0_129 = arith.constant 0 : index
    %125 = vector.load %arg14[%c0_128, %c0_129] : memref<160x384xbf16, #tpu.memory_space<vmem>>, vector<96x384xbf16>
    %c3_130 = arith.constant 3 : index
    %c0_131 = arith.constant 0 : index
    %c0_132 = arith.constant 0 : index
    %126 = vector.load %arg4[%c3_130, %c0_131, %c0_132] : memref<9x384x256xbf16, #tpu.memory_space<vmem>>, vector<1x384x256xbf16>
    %127 = vector.shape_cast %126 : vector<1x384x256xbf16> to vector<384x256xbf16>
    %cst_133 = arith.constant dense<0.000000e+00> : vector<96x256xf32>
    %128 = tpu.matmul %125, %127, %cst_133 {dimension_numbers = #tpu.dot_dimension_numbers<[1], [0], [0], [1], [0, 0, 1, 1], [], []>} : vector<96x384xbf16>, vector<384x256xbf16>, vector<96x256xf32> -> vector<96x256xf32>
    %c32_134 = arith.constant 32 : index
    %c0_135 = arith.constant 0 : index
    %129 = vector.load %arg14[%c32_134, %c0_135] : memref<160x384xbf16, #tpu.memory_space<vmem>>, vector<96x384xbf16>
    %c4_136 = arith.constant 4 : index
    %c0_137 = arith.constant 0 : index
    %c0_138 = arith.constant 0 : index
    %130 = vector.load %arg4[%c4_136, %c0_137, %c0_138] : memref<9x384x256xbf16, #tpu.memory_space<vmem>>, vector<1x384x256xbf16>
    %131 = vector.shape_cast %130 : vector<1x384x256xbf16> to vector<384x256xbf16>
    %cst_139 = arith.constant dense<0.000000e+00> : vector<96x256xf32>
    %132 = tpu.matmul %129, %131, %cst_139 {dimension_numbers = #tpu.dot_dimension_numbers<[1], [0], [0], [1], [0, 0, 1, 1], [], []>} : vector<96x384xbf16>, vector<384x256xbf16>, vector<96x256xf32> -> vector<96x256xf32>
    %133 = arith.addf %128, %132 : vector<96x256xf32>
    %c64_140 = arith.constant 64 : index
    %c0_141 = arith.constant 0 : index
    %134 = vector.load %arg14[%c64_140, %c0_141] : memref<160x384xbf16, #tpu.memory_space<vmem>>, vector<96x384xbf16>
    %c5_142 = arith.constant 5 : index
    %c0_143 = arith.constant 0 : index
    %c0_144 = arith.constant 0 : index
    %135 = vector.load %arg4[%c5_142, %c0_143, %c0_144] : memref<9x384x256xbf16, #tpu.memory_space<vmem>>, vector<1x384x256xbf16>
    %136 = vector.shape_cast %135 : vector<1x384x256xbf16> to vector<384x256xbf16>
    %cst_145 = arith.constant dense<0.000000e+00> : vector<96x256xf32>
    %137 = tpu.matmul %134, %136, %cst_145 {dimension_numbers = #tpu.dot_dimension_numbers<[1], [0], [0], [1], [0, 0, 1, 1], [], []>} : vector<96x384xbf16>, vector<384x256xbf16>, vector<96x256xf32> -> vector<96x256xf32>
    %138 = arith.addf %133, %137 : vector<96x256xf32>
    %139 = vector.extract_strided_slice %138 {offsets = [0, 0], sizes = [32, 256], strides = [1, 1]} : vector<96x256xf32> to vector<32x256xf32>
    %140 = vector.extract_strided_slice %138 {offsets = [32, 0], sizes = [32, 256], strides = [1, 1]} : vector<96x256xf32> to vector<32x256xf32>
    %141 = arith.maximumf %139, %140 : vector<32x256xf32>
    %142 = vector.extract_strided_slice %138 {offsets = [64, 0], sizes = [32, 256], strides = [1, 1]} : vector<96x256xf32> to vector<32x256xf32>
    %143 = arith.maximumf %141, %142 : vector<32x256xf32>
    %144 = arith.maximumf %124, %143 : vector<32x256xf32>
    %c0_146 = arith.constant 0 : index
    %c0_147 = arith.constant 0 : index
    %145 = vector.load %arg14[%c0_146, %c0_147] : memref<160x384xbf16, #tpu.memory_space<vmem>>, vector<96x384xbf16>
    %c6_148 = arith.constant 6 : index
    %c0_149 = arith.constant 0 : index
    %c0_150 = arith.constant 0 : index
    %146 = vector.load %arg4[%c6_148, %c0_149, %c0_150] : memref<9x384x256xbf16, #tpu.memory_space<vmem>>, vector<1x384x256xbf16>
    %147 = vector.shape_cast %146 : vector<1x384x256xbf16> to vector<384x256xbf16>
    %cst_151 = arith.constant dense<0.000000e+00> : vector<96x256xf32>
    %148 = tpu.matmul %145, %147, %cst_151 {dimension_numbers = #tpu.dot_dimension_numbers<[1], [0], [0], [1], [0, 0, 1, 1], [], []>} : vector<96x384xbf16>, vector<384x256xbf16>, vector<96x256xf32> -> vector<96x256xf32>
    %c32_152 = arith.constant 32 : index
    %c0_153 = arith.constant 0 : index
    %149 = vector.load %arg14[%c32_152, %c0_153] : memref<160x384xbf16, #tpu.memory_space<vmem>>, vector<96x384xbf16>
    %c7_154 = arith.constant 7 : index
    %c0_155 = arith.constant 0 : index
    %c0_156 = arith.constant 0 : index
    %150 = vector.load %arg4[%c7_154, %c0_155, %c0_156] : memref<9x384x256xbf16, #tpu.memory_space<vmem>>, vector<1x384x256xbf16>
    %151 = vector.shape_cast %150 : vector<1x384x256xbf16> to vector<384x256xbf16>
    %cst_157 = arith.constant dense<0.000000e+00> : vector<96x256xf32>
    %152 = tpu.matmul %149, %151, %cst_157 {dimension_numbers = #tpu.dot_dimension_numbers<[1], [0], [0], [1], [0, 0, 1, 1], [], []>} : vector<96x384xbf16>, vector<384x256xbf16>, vector<96x256xf32> -> vector<96x256xf32>
    %153 = arith.addf %148, %152 : vector<96x256xf32>
    %c64_158 = arith.constant 64 : index
    %c0_159 = arith.constant 0 : index
    %154 = vector.load %arg14[%c64_158, %c0_159] : memref<160x384xbf16, #tpu.memory_space<vmem>>, vector<96x384xbf16>
    %c8_160 = arith.constant 8 : index
    %c0_161 = arith.constant 0 : index
    %c0_162 = arith.constant 0 : index
    %155 = vector.load %arg4[%c8_160, %c0_161, %c0_162] : memref<9x384x256xbf16, #tpu.memory_space<vmem>>, vector<1x384x256xbf16>
    %156 = vector.shape_cast %155 : vector<1x384x256xbf16> to vector<384x256xbf16>
    %cst_163 = arith.constant dense<0.000000e+00> : vector<96x256xf32>
    %157 = tpu.matmul %154, %156, %cst_163 {dimension_numbers = #tpu.dot_dimension_numbers<[1], [0], [0], [1], [0, 0, 1, 1], [], []>} : vector<96x384xbf16>, vector<384x256xbf16>, vector<96x256xf32> -> vector<96x256xf32>
    %158 = arith.addf %153, %157 : vector<96x256xf32>
    %159 = vector.extract_strided_slice %158 {offsets = [0, 0], sizes = [32, 256], strides = [1, 1]} : vector<96x256xf32> to vector<32x256xf32>
    %160 = vector.extract_strided_slice %158 {offsets = [32, 0], sizes = [32, 256], strides = [1, 1]} : vector<96x256xf32> to vector<32x256xf32>
    %161 = arith.maximumf %159, %160 : vector<32x256xf32>
    %162 = vector.extract_strided_slice %158 {offsets = [64, 0], sizes = [32, 256], strides = [1, 1]} : vector<96x256xf32> to vector<32x256xf32>
    %163 = arith.maximumf %161, %162 : vector<32x256xf32>
    %164 = arith.maximumf %144, %163 : vector<32x256xf32>
    %c0_164 = arith.constant 0 : index
    %c0_165 = arith.constant 0 : index
    %165 = vector.load %arg5[%c0_164, %c0_165] : memref<1x256xf32, #tpu.memory_space<vmem>>, vector<1x256xf32>
    %166 = vector.broadcast %165 : vector<1x256xf32> to vector<32x256xf32>
    %167 = arith.addf %164, %166 : vector<32x256xf32>
    %cst_166 = arith.constant 0.000000e+00 : f32
    %168 = vector.broadcast %cst_166 : f32 to vector<32x256xf32>
    %169 = arith.maximumf %167, %168 : vector<32x256xf32>
    %170 = arith.truncf %169 : vector<32x256xf32> to vector<32x256xbf16>
    %c0_167 = arith.constant 0 : index
    %c0_168 = arith.constant 0 : index
    %171 = vector.load %arg15[%c0_167, %c0_168] : memref<32x256xbf16, #tpu.memory_space<vmem>>, vector<32x256xbf16>
    tpu.vector_store %arg15[%c0_167, %c0_168], %170 {strides = array<i32>} : memref<32x256xbf16, #tpu.memory_space<vmem>>, vector<32x256xbf16>,
    %c0_169 = arith.constant 0 : index
    %c0_170 = arith.constant 0 : index
    %172 = vector.load %arg15[%c0_169, %c0_170] : memref<32x256xbf16, #tpu.memory_space<vmem>>, vector<24x256xbf16>
    %c0_171 = arith.constant 0 : index
    %c0_172 = arith.constant 0 : index
    %c0_173 = arith.constant 0 : index
    %173 = vector.load %arg6[%c0_171, %c0_172, %c0_173] : memref<2x256x192xbf16, #tpu.memory_space<vmem>>, vector<1x256x192xbf16>
    %174 = vector.shape_cast %173 : vector<1x256x192xbf16> to vector<256x192xbf16>
    %cst_174 = arith.constant dense<0.000000e+00> : vector<24x192xf32>
    %175 = tpu.matmul %172, %174, %cst_174 {dimension_numbers = #tpu.dot_dimension_numbers<[1], [0], [0], [1], [0, 0, 1, 1], [], []>} : vector<24x256xbf16>, vector<256x192xbf16>, vector<24x192xf32> -> vector<24x192xf32>
    %c8_175 = arith.constant 8 : index
    %c0_176 = arith.constant 0 : index
    %176 = vector.load %arg15[%c8_175, %c0_176] : memref<32x256xbf16, #tpu.memory_space<vmem>>, vector<24x256xbf16>
    %c1_177 = arith.constant 1 : index
    %c0_178 = arith.constant 0 : index
    %c0_179 = arith.constant 0 : index
    %177 = vector.load %arg6[%c1_177, %c0_178, %c0_179] : memref<2x256x192xbf16, #tpu.memory_space<vmem>>, vector<1x256x192xbf16>
    %178 = vector.shape_cast %177 : vector<1x256x192xbf16> to vector<256x192xbf16>
    %cst_180 = arith.constant dense<0.000000e+00> : vector<24x192xf32>
    %179 = tpu.matmul %176, %178, %cst_180 {dimension_numbers = #tpu.dot_dimension_numbers<[1], [0], [0], [1], [0, 0, 1, 1], [], []>} : vector<24x256xbf16>, vector<256x192xbf16>, vector<24x192xf32> -> vector<24x192xf32>
    %180 = arith.addf %175, %179 : vector<24x192xf32>
    %c0_181 = arith.constant 0 : index
    %c0_182 = arith.constant 0 : index
    %181 = vector.load %arg7[%c0_181, %c0_182] : memref<1x192xf32, #tpu.memory_space<vmem>>, vector<1x192xf32>
    %182 = vector.broadcast %181 : vector<1x192xf32> to vector<24x192xf32>
    %183 = arith.addf %180, %182 : vector<24x192xf32>
    %cst_183 = arith.constant 0.000000e+00 : f32
    %184 = vector.broadcast %cst_183 : f32 to vector<24x192xf32>
    %185 = arith.maximumf %183, %184 : vector<24x192xf32>
    %186 = arith.truncf %185 : vector<24x192xf32> to vector<24x192xbf16>
    %c0_184 = arith.constant 0 : index
    %c0_185 = arith.constant 0 : index
    %187 = vector.load %arg16[%c0_184, %c0_185] : memref<24x192xbf16, #tpu.memory_space<vmem>>, vector<24x192xbf16>
    tpu.vector_store %arg16[%c0_184, %c0_185], %186 {strides = array<i32>} : memref<24x192xbf16, #tpu.memory_space<vmem>>, vector<24x192xbf16>,
    %c0_186 = arith.constant 0 : index
    %c0_187 = arith.constant 0 : index
    %188 = vector.load %arg16[%c0_186, %c0_187] : memref<24x192xbf16, #tpu.memory_space<vmem>>, vector<8x192xbf16>
    %c0_188 = arith.constant 0 : index
    %c0_189 = arith.constant 0 : index
    %c0_190 = arith.constant 0 : index
    %189 = vector.load %arg8[%c0_188, %c0_189, %c0_190] : memref<3x192x128xbf16, #tpu.memory_space<vmem>>, vector<1x192x128xbf16>
    %190 = vector.shape_cast %189 : vector<1x192x128xbf16> to vector<192x128xbf16>
    %cst_191 = arith.constant dense<0.000000e+00> : vector<8x128xf32>
    %191 = tpu.matmul %188, %190, %cst_191 {dimension_numbers = #tpu.dot_dimension_numbers<[1], [0], [0], [1], [0, 0, 1, 1], [], []>} : vector<8x192xbf16>, vector<192x128xbf16>, vector<8x128xf32> -> vector<8x128xf32>
    %c8_192 = arith.constant 8 : index
    %c0_193 = arith.constant 0 : index
    %192 = vector.load %arg16[%c8_192, %c0_193] : memref<24x192xbf16, #tpu.memory_space<vmem>>, vector<8x192xbf16>
    %c1_194 = arith.constant 1 : index
    %c0_195 = arith.constant 0 : index
    %c0_196 = arith.constant 0 : index
    %193 = vector.load %arg8[%c1_194, %c0_195, %c0_196] : memref<3x192x128xbf16, #tpu.memory_space<vmem>>, vector<1x192x128xbf16>
    %194 = vector.shape_cast %193 : vector<1x192x128xbf16> to vector<192x128xbf16>
    %cst_197 = arith.constant dense<0.000000e+00> : vector<8x128xf32>
    %195 = tpu.matmul %192, %194, %cst_197 {dimension_numbers = #tpu.dot_dimension_numbers<[1], [0], [0], [1], [0, 0, 1, 1], [], []>} : vector<8x192xbf16>, vector<192x128xbf16>, vector<8x128xf32> -> vector<8x128xf32>
    %196 = arith.addf %191, %195 : vector<8x128xf32>
    %c16_198 = arith.constant 16 : index
    %c0_199 = arith.constant 0 : index
    %197 = vector.load %arg16[%c16_198, %c0_199] : memref<24x192xbf16, #tpu.memory_space<vmem>>, vector<8x192xbf16>
    %c2_200 = arith.constant 2 : index
    %c0_201 = arith.constant 0 : index
    %c0_202 = arith.constant 0 : index
    %198 = vector.load %arg8[%c2_200, %c0_201, %c0_202] : memref<3x192x128xbf16, #tpu.memory_space<vmem>>, vector<1x192x128xbf16>
    %199 = vector.shape_cast %198 : vector<1x192x128xbf16> to vector<192x128xbf16>
    %cst_203 = arith.constant dense<0.000000e+00> : vector<8x128xf32>
    %200 = tpu.matmul %197, %199, %cst_203 {dimension_numbers = #tpu.dot_dimension_numbers<[1], [0], [0], [1], [0, 0, 1, 1], [], []>} : vector<8x192xbf16>, vector<192x128xbf16>, vector<8x128xf32> -> vector<8x128xf32>
    %201 = arith.addf %196, %200 : vector<8x128xf32>
    %c0_204 = arith.constant 0 : index
    %c0_205 = arith.constant 0 : index
    %202 = vector.load %arg9[%c0_204, %c0_205] : memref<1x128xf32, #tpu.memory_space<vmem>>, vector<1x128xf32>
    %203 = vector.broadcast %202 : vector<1x128xf32> to vector<8x128xf32>
    %204 = arith.addf %201, %203 : vector<8x128xf32>
    %cst_206 = arith.constant 0.000000e+00 : f32
    %205 = vector.broadcast %cst_206 : f32 to vector<8x128xf32>
    %206 = arith.maximumf %204, %205 : vector<8x128xf32>
    %207 = arith.truncf %206 : vector<8x128xf32> to vector<8x128xbf16>
    %c0_207 = arith.constant 0 : index
    %c0_208 = arith.constant 0 : index
    %208 = vector.load %arg10[%c0_207, %c0_208] : memref<128x128xbf16, #tpu.memory_space<vmem>>, vector<128x128xbf16>
    %cst_209 = arith.constant dense<0.000000e+00> : vector<8x128xf32>
    %209 = tpu.matmul %207, %208, %cst_209 {dimension_numbers = #tpu.dot_dimension_numbers<[1], [0], [0], [1], [0, 0, 1, 1], [], []>} : vector<8x128xbf16>, vector<128x128xbf16>, vector<8x128xf32> -> vector<8x128xf32>
    %c0_210 = arith.constant 0 : index
    %c0_211 = arith.constant 0 : index
    %210 = vector.load %arg11[%c0_210, %c0_211] : memref<1x128xf32, #tpu.memory_space<vmem>>, vector<1x128xf32>
    %211 = vector.broadcast %210 : vector<1x128xf32> to vector<8x128xf32>
    %212 = arith.addf %209, %211 : vector<8x128xf32>
    %213 = tpu.iota {dimensions = array<i32: 1>} : vector<8x128xi32>
    %c0_i32 = arith.constant 0 : i32
    %214 = vector.broadcast %c0_i32 : i32 to vector<8x128xi32>
    %215 = arith.cmpi eq, %213, %214 : vector<8x128xi32>
    %216 = arith.negf %212 : vector<8x128xf32>
    %217 = math.exp %216 : vector<8x128xf32>
    %cst_212 = arith.constant 1.000000e+00 : f32
    %218 = vector.broadcast %cst_212 : f32 to vector<8x128xf32>
    %219 = arith.addf %218, %217 : vector<8x128xf32>
    %220 = arith.divf %218, %219 : vector<8x128xf32>
    %221 = arith.select %215, %220, %212 : vector<8x128xi1>, vector<8x128xf32>
    %c0_213 = arith.constant 0 : index
    %c0_214 = arith.constant 0 : index
    %222 = vector.load %arg12[%c0_213, %c0_214] : memref<8x128xf32, #tpu.memory_space<vmem>>, vector<8x128xf32>
    tpu.vector_store %arg12[%c0_213, %c0_214], %221 {strides = array<i32>} : memref<8x128xf32, #tpu.memory_space<vmem>>, vector<8x128xf32>,
    return
  }
  func.func @transform_0(%arg0: i32) -> (i32, i32) {
    %c0_i32 = arith.constant 0 : i32
    %c0_i32_0 = arith.constant 0 : i32
    return %arg0, %c0_i32 : i32, i32
  }
  func.func @transform_1(%arg0: i32) -> (i32, i32, i32) {
    %c0_i32 = arith.constant 0 : i32
    %c0_i32_0 = arith.constant 0 : i32
    %c0_i32_1 = arith.constant 0 : i32
    %c0_i32_2 = arith.constant 0 : i32
    return %c0_i32, %c0_i32_0, %c0_i32_1 : i32, i32, i32
  }
  func.func @transform_2(%arg0: i32) -> (i32, i32) {
    %c0_i32 = arith.constant 0 : i32
    %c0_i32_0 = arith.constant 0 : i32
    %c0_i32_1 = arith.constant 0 : i32
    return %c0_i32, %c0_i32_0 : i32, i32
  }
  func.func @transform_3(%arg0: i32) -> (i32, i32, i32) {
    %c0_i32 = arith.constant 0 : i32
    %c0_i32_0 = arith.constant 0 : i32
    %c0_i32_1 = arith.constant 0 : i32
    %c0_i32_2 = arith.constant 0 : i32
    return %c0_i32, %c0_i32_0, %c0_i32_1 : i32, i32, i32
  }
  func.func @transform_4(%arg0: i32) -> (i32, i32) {
    %c0_i32 = arith.constant 0 : i32
    %c0_i32_0 = arith.constant 0 : i32
    %c0_i32_1 = arith.constant 0 : i32
    return %c0_i32, %c0_i32_0 : i32, i32
  }
  func.func @transform_5(%arg0: i32) -> (i32, i32, i32) {
    %c0_i32 = arith.constant 0 : i32
    %c0_i32_0 = arith.constant 0 : i32
    %c0_i32_1 = arith.constant 0 : i32
    %c0_i32_2 = arith.constant 0 : i32
    return %c0_i32, %c0_i32_0, %c0_i32_1 : i32, i32, i32
  }
  func.func @transform_6(%arg0: i32) -> (i32, i32) {
    %c0_i32 = arith.constant 0 : i32
    %c0_i32_0 = arith.constant 0 : i32
    %c0_i32_1 = arith.constant 0 : i32
    return %c0_i32, %c0_i32_0 : i32, i32
  }
  func.func @transform_7(%arg0: i32) -> (i32, i32, i32) {
    %c0_i32 = arith.constant 0 : i32
    %c0_i32_0 = arith.constant 0 : i32
    %c0_i32_1 = arith.constant 0 : i32
    %c0_i32_2 = arith.constant 0 : i32
    return %c0_i32, %c0_i32_0, %c0_i32_1 : i32, i32, i32
  }
  func.func @transform_8(%arg0: i32) -> (i32, i32) {
    %c0_i32 = arith.constant 0 : i32
    %c0_i32_0 = arith.constant 0 : i32
    %c0_i32_1 = arith.constant 0 : i32
    return %c0_i32, %c0_i32_0 : i32, i32
  }
  func.func @transform_9(%arg0: i32) -> (i32, i32) {
    %c0_i32 = arith.constant 0 : i32
    %c0_i32_0 = arith.constant 0 : i32
    %c0_i32_1 = arith.constant 0 : i32
    return %c0_i32, %c0_i32_0 : i32, i32
  }
  func.func @transform_10(%arg0: i32) -> (i32, i32) {
    %c0_i32 = arith.constant 0 : i32
    %c0_i32_0 = arith.constant 0 : i32
    %c0_i32_1 = arith.constant 0 : i32
    return %c0_i32, %c0_i32_0 : i32, i32
  }
  func.func @transform_11(%arg0: i32) -> (i32, i32) {
    %c0_i32 = arith.constant 0 : i32
    %c0_i32_0 = arith.constant 0 : i32
    return %arg0, %c0_i32 : i32, i32
  }
}

</mosaic_0001>

<llo_original>
// kernel: r_net_forward.1
$region0: #{r_net_forward.1}
  #allocation0 [shape = 'u32[]', space=smem, size = 0x4, offset = 0x4, fixed_abs, tag = 'smem constant byte address 0x4 - core index']
  #allocation1 [shape = 'u32[144,128]{1,0:T(1,128)}', space=vmem, size = 0x12000, scoped, tag = 'internal scratch']
  #allocation2 [shape = 'bf16[88,384]{1,0:T(8,128)(2,1)}', space=vmem, size = 0x10800, scoped, tag = 'scratch operand']
  #allocation3 [shape = 'bf16[160,384]{1,0:T(16,128)(2,1)}', space=vmem, size = 0x1e000, scoped, tag = 'scratch operand']
  #allocation4 [shape = 'bf16[32,256]{1,0:T(16,128)(2,1)}', space=vmem, size = 0x4000, scoped, tag = 'scratch operand']
  #allocation5 [shape = 'bf16[24,192]{1,0:T(8,128)(2,1)}', space=vmem, size = 0x3000, scoped, tag = 'scratch operand']
  %s0 = inlined_call_operand.vmem [shape: bf16[440,78], index: 0, kind: input, shape index: {}]
  %s1 = inlined_call_operand.vmem [shape: bf16[9,78,384], index: 1, kind: input, shape index: {}]
  %s2 = inlined_call_operand.vmem [shape: f32[1,384], index: 2, kind: input, shape index: {}]
  %s3 = inlined_call_operand.vmem [shape: bf16[9,384,256], index: 3, kind: input, shape index: {}]
  %s4 = inlined_call_operand.vmem [shape: f32[1,256], index: 4, kind: input, shape index: {}]
  %s5 = inlined_call_operand.vmem [shape: bf16[2,256,192], index: 5, kind: input, shape index: {}]
  %s6 = inlined_call_operand.vmem [shape: f32[1,192], index: 6, kind: input, shape index: {}]
  %s7 = inlined_call_operand.vmem [shape: bf16[3,192,128], index: 7, kind: input, shape index: {}]
  %s8 = inlined_call_operand.vmem [shape: f32[1,128], index: 8, kind: input, shape index: {}]
  %s9 = inlined_call_operand.vmem [shape: bf16[128,128], index: 9, kind: input, shape index: {}]
  %s10 = inlined_call_operand.vmem [shape: f32[1,128], index: 10, kind: input, shape index: {}]
  %s11 = inlined_call_operand.vmem [shape: f32[8,128], index: 11, kind: output, shape index: {}]
  %s12 = sld [smem:[#allocation0]]
  $region54: #{r_net_forward.1} parent=0
    _
  %s14 = ssub.s32 1, %s12
  %s15 = scalar_select 0, %s14, %s12
  // Predicated region
  $region2: #{r_net_forward.1} parent=0 // pred_check
    _
  $region3: #{r_net_forward.1} parent=0 // pred_check_branch
    %17 = sbr.rel (0) target = $region5
  $region4: #{r_net_forward.1} parent=0 // pred_region
    _
  $region5: #{r_net_forward.1} parent=0 // pred_fallthru
    _
  // Predicated region
  $region6: #{r_net_forward.1} parent=0 // pred_check
    _
  $region7: #{r_net_forward.1} parent=0 // pred_check_branch
    %19 = sbr.rel (0) target = $region9
  $region8: #{r_net_forward.1} parent=0 // pred_region
    _
  $region9: #{r_net_forward.1} parent=0 // pred_fallthru
    _
  // Predicated region
  $region10: #{r_net_forward.1} parent=0 // pred_check
    _
  $region11: #{r_net_forward.1} parent=0 // pred_check_branch
    %21 = sbr.rel (0) target = $region13
  $region12: #{r_net_forward.1} parent=0 // pred_region
    _
  $region13: #{r_net_forward.1} parent=0 // pred_fallthru
    _
  // Predicated region
  $region14: #{r_net_forward.1} parent=0 // pred_check
    _
  $region15: #{r_net_forward.1} parent=0 // pred_check_branch
    %23 = sbr.rel (0) target = $region17
  $region16: #{r_net_forward.1} parent=0 // pred_region
    _
  $region17: #{r_net_forward.1} parent=0 // pred_fallthru
    _
  // Predicated region
  $region18: #{r_net_forward.1} parent=0 // pred_check
    _
  $region19: #{r_net_forward.1} parent=0 // pred_check_branch
    %25 = sbr.rel (0) target = $region21
  $region20: #{r_net_forward.1} parent=0 // pred_region
    _
  $region21: #{r_net_forward.1} parent=0 // pred_fallthru
    _
  // Predicated region
  $region22: #{r_net_forward.1} parent=0 // pred_check
    _
  $region23: #{r_net_forward.1} parent=0 // pred_check_branch
    %27 = sbr.rel (0) target = $region25
  $region24: #{r_net_forward.1} parent=0 // pred_region
    _
  $region25: #{r_net_forward.1} parent=0 // pred_fallthru
    _
  // Predicated region
  $region26: #{r_net_forward.1} parent=0 // pred_check
    _
  $region27: #{r_net_forward.1} parent=0 // pred_check_branch
    %29 = sbr.rel (0) target = $region29
  $region28: #{r_net_forward.1} parent=0 // pred_region
    _
  $region29: #{r_net_forward.1} parent=0 // pred_fallthru
    _
  // Predicated region
  $region30: #{r_net_forward.1} parent=0 // pred_check
    _
  $region31: #{r_net_forward.1} parent=0 // pred_check_branch
    %31 = sbr.rel (0) target = $region33
  $region32: #{r_net_forward.1} parent=0 // pred_region
    _
  $region33: #{r_net_forward.1} parent=0 // pred_fallthru
    _
  // Predicated region
  $region34: #{r_net_forward.1} parent=0 // pred_check
    _
  $region35: #{r_net_forward.1} parent=0 // pred_check_branch
    %33 = sbr.rel (0) target = $region37
  $region36: #{r_net_forward.1} parent=0 // pred_region
    _
  $region37: #{r_net_forward.1} parent=0 // pred_fallthru
    _
  // Predicated region
  $region38: #{r_net_forward.1} parent=0 // pred_check
    _
  $region39: #{r_net_forward.1} parent=0 // pred_check_branch
    %35 = sbr.rel (0) target = $region41
  $region40: #{r_net_forward.1} parent=0 // pred_region
    _
  $region41: #{r_net_forward.1} parent=0 // pred_fallthru
    _
  // Predicated region
  $region42: #{r_net_forward.1} parent=0 // pred_check
    _
  $region43: #{r_net_forward.1} parent=0 // pred_check_branch
    %37 = sbr.rel (0) target = $region45
  $region44: #{r_net_forward.1} parent=0 // pred_region
    _
  $region45: #{r_net_forward.1} parent=0 // pred_fallthru
    _
  %v39 = vld [vmem:[%s0] sm:$0xf]
  %v40 = vld [vmem:[%s0 + $0x4] sm:$0xf]
  %v41 = vld [vmem:[%s0 + $0x8] sm:$0xf]
  %v42 = vld [vmem:[%s0 + $0xc] sm:$0xf]
  %v43 = vld [vmem:[%s0 + $0x10] sm:$0xf]
  %v44 = vld [vmem:[%s0 + $0x14] sm:$0xf]
  %v45 = vld [vmem:[%s0 + $0x18] sm:$0xf]
  %v46 = vld [vmem:[%s0 + $0x1c] sm:$0xf]
  %v47 = vld [vmem:[%s0 + $0x20] sm:$0xf]
  %v48 = vld [vmem:[%s0 + $0x24] sm:$0xf]
  %v49 = vld [vmem:[%s0 + $0x28] sm:$0xf]
  %v50 = vld [vmem:[%s0 + $0x2c] sm:$0xf]
  %v51 = vld [vmem:[%s0 + $0x30] sm:$0xf]
  %v52 = vld [vmem:[%s0 + $0x34] sm:$0xf]
  %v53 = vld [vmem:[%s0 + $0x38] sm:$0xf]
  %v54 = vld [vmem:[%s0 + $0x3c] sm:$0xf]
  %v55 = vld [vmem:[%s0 + $0x40] sm:$0xf]
  %v56 = vld [vmem:[%s0 + $0x44] sm:$0xf]
  %v57 = vld [vmem:[%s0 + $0x48] sm:$0xf]
  %v58 = vld [vmem:[%s0 + $0x4c] sm:$0xf]
  %v59 = vld [vmem:[%s0 + $0x50] sm:$0xf]
  %v60 = vld [vmem:[%s0 + $0x54] sm:$0xf]
  %v61 = vld [vmem:[%s0 + $0x58] sm:$0xf]
  %v62 = vld [vmem:[%s0 + $0x5c] sm:$0xf]
  %v63 = vld [vmem:[%s0 + $0x60] sm:$0xf]
  %v64 = vld [vmem:[%s0 + $0x64] sm:$0xf]
  %v65 = vld [vmem:[%s0 + $0x68] sm:$0xf]
  %v66 = vld [vmem:[%s0 + $0x6c] sm:$0xf]
  %v67 = vld [vmem:[%s0 + $0x70] sm:$0xf]
  %v68 = vld [vmem:[%s0 + $0x74] sm:$0xf]
  %v69 = vld [vmem:[%s0 + $0x78] sm:$0xf]
  %v70 = vld [vmem:[%s0 + $0x7c] sm:$0xf]
  %v71 = vld [vmem:[%s0 + $0x80] sm:$0xf]
  %v72 = vld [vmem:[%s1] sm:$0xff]
  %v73 = vld [vmem:[%s1 + $0x8] sm:$0xf]
  %v74 = vld [vmem:[%s1 + $0xc] sm:$0xff]
  %v75 = vld [vmem:[%s1 + $0x14] sm:$0xf]
  %v76 = vld [vmem:[%s1 + $0x18] sm:$0xff]
  %v77 = vld [vmem:[%s1 + $0x20] sm:$0xf]
  %v78 = vld [vmem:[%s1 + $0x24] sm:$0xff]
  %v79 = vld [vmem:[%s1 + $0x2c] sm:$0xf]
  %v80 = vld [vmem:[%s1 + $0x30] sm:$0xff]
  %v81 = vld [vmem:[%s1 + $0x38] sm:$0xf]
  %v82 = vld [vmem:[%s1 + $0x3c] sm:$0xff]
  %v83 = vld [vmem:[%s1 + $0x44] sm:$0xf]
  %v84 = vld [vmem:[%s1 + $0x48] sm:$0xff]
  %v85 = vld [vmem:[%s1 + $0x50] sm:$0xf]
  %v86 = vld [vmem:[%s1 + $0x54] sm:$0xff]
  %v87 = vld [vmem:[%s1 + $0x5c] sm:$0xf]
  %v88 = vld [vmem:[%s1 + $0x60] sm:$0xff]
  %v89 = vld [vmem:[%s1 + $0x68] sm:$0xf]
  %v90 = vld [vmem:[%s1 + $0x6c] sm:$0x77]
  %v91 = vld [vmem:[%s1 + $0x74] sm:$0x7]
  %v92 = vld [vmem:[%s0 + $0x84] sm:$0xf]
  %v93 = vld [vmem:[%s0 + $0x88] sm:$0xf]
  %v94 = vld [vmem:[%s0 + $0x8c] sm:$0xf]
  %v95 = vld [vmem:[%s0 + $0x90] sm:$0xf]
  %v96 = vld [vmem:[%s0 + $0x94] sm:$0xf]
  %v97 = vld [vmem:[%s0 + $0x98] sm:$0xf]
  %v98 = vld [vmem:[%s0 + $0x9c] sm:$0xf]
  %v99 = vld [vmem:[%s0 + $0xa0] sm:$0xf]
  %v100 = vld [vmem:[%s0 + $0xa4] sm:$0xf]
  %v101 = vld [vmem:[%s0 + $0xa8] sm:$0xf]
  %v102 = vld [vmem:[%s0 + $0xac] sm:$0xf]
  %s103 = scalar_lea.vmem %s1, 120
  %v104 = vld [vmem:[%s103] sm:$0xff]
  %v105 = vld [vmem:[%s103 + $0x8] sm:$0xf]
  %v106 = vld [vmem:[%s103 + $0xc] sm:$0xff]
  %v107 = vld [vmem:[%s103 + $0x14] sm:$0xf]
  %v108 = vld [vmem:[%s103 + $0x18] sm:$0xff]
  %v109 = vld [vmem:[%s103 + $0x20] sm:$0xf]
  %v110 = vld [vmem:[%s103 + $0x24] sm:$0xff]
  %v111 = vld [vmem:[%s103 + $0x2c] sm:$0xf]
  %v112 = vld [vmem:[%s103 + $0x30] sm:$0xff]
  %v113 = vld [vmem:[%s103 + $0x38] sm:$0xf]
  %v114 = vld [vmem:[%s103 + $0x3c] sm:$0xff]
  %v115 = vld [vmem:[%s103 + $0x44] sm:$0xf]
  %v116 = vld [vmem:[%s103 + $0x48] sm:$0xff]
  %v117 = vld [vmem:[%s103 + $0x50] sm:$0xf]
  %v118 = vld [vmem:[%s103 + $0x54] sm:$0xff]
  %v119 = vld [vmem:[%s103 + $0x5c] sm:$0xf]
  %v120 = vld [vmem:[%s103 + $0x60] sm:$0xff]
  %v121 = vld [vmem:[%s103 + $0x68] sm:$0xf]
  %v122 = vld [vmem:[%s103 + $0x6c] sm:$0x77]
  %v123 = vld [vmem:[%s103 + $0x74] sm:$0x7]
  %v157 = vunpack.c.l.b16 %v50
  %v158 = vunpack.c.l.b16 %v51
  %v159 = vunpack.c.l.b16 %v52
  %v160 = vunpack.c.l.b16 %v53
  %v161 = vunpack.c.l.b16 %v54
  %v162 = vunpack.c.l.b16 %v55
  %v163 = vunpack.c.l.b16 %v56
  %v164 = vunpack.c.l.b16 %v57
  %v165 = vunpack.c.l.b16 %v58
  %v166 = vunpack.c.l.b16 %v59
  %v167 = vunpack.c.l.b16 %v60
  %v168 = vunpack.c.l.b16 %v61
  %v169 = vunpack.c.l.b16 %v62
  %v170 = vunpack.c.l.b16 %v63
  %v171 = vunpack.c.l.b16 %v64
  %v172 = vunpack.c.l.b16 %v65
  %v173 = vunpack.c.l.b16 %v66
  %v174 = vunpack.c.l.b16 %v67
  %v175 = vunpack.c.l.b16 %v68
  %v176 = vunpack.c.l.b16 %v69
  %v177 = vunpack.c.l.b16 %v70
  %v178 = vunpack.c.l.b16 %v71
  %v179 = vunpack.c.l.b16 %v92
  %v180 = vunpack.c.l.b16 %v93
  %v181 = vunpack.c.l.b16 %v94
  %v182 = vunpack.c.l.b16 %v95
  %v183 = vunpack.c.l.b16 %v96
  %v184 = vunpack.c.l.b16 %v97
  %v185 = vunpack.c.l.b16 %v98
  %v186 = vunpack.c.l.b16 %v99
  %v187 = vunpack.c.l.b16 %v100
  %v188 = vunpack.c.l.b16 %v101
  %v189 = vunpack.c.l.b16 %v102
  %v190 = vpack.c.b16 %v158, %v157
  %v191 = vpack.c.b16 %v160, %v159
  %v192 = vpack.c.b16 %v162, %v161
  %v193 = vpack.c.b16 %v164, %v163
  %v194 = vpack.c.b16 %v166, %v165
  %v195 = vpack.c.b16 %v168, %v167
  %v196 = vpack.c.b16 %v170, %v169
  %v197 = vpack.c.b16 %v172, %v171
  %v198 = vpack.c.b16 %v174, %v173
  %v199 = vpack.c.b16 %v176, %v175
  %v200 = vpack.c.b16 %v178, %v177
  %v201 = vpack.c.b16 %v180, %v179
  %v202 = vpack.c.b16 %v182, %v181
  %v203 = vpack.c.b16 %v184, %v183
  %v204 = vpack.c.b16 %v186, %v185
  %v205 = vpack.c.b16 %v188, %v187
  %v206 = vpack.c.b16 %v189, %v189
  %v227 = vunpack.c.l.b16 %v104
  %v228 = vunpack.c.h.b16 %v104
  %v229 = vunpack.c.l.b16 %v105
  %v230 = vunpack.c.l.b16 %v106
  %v231 = vunpack.c.h.b16 %v106
  %v232 = vunpack.c.l.b16 %v107
  %v233 = vunpack.c.l.b16 %v108
  %v234 = vunpack.c.h.b16 %v108
  %v235 = vunpack.c.l.b16 %v109
  %v236 = vunpack.c.l.b16 %v110
  %v237 = vunpack.c.h.b16 %v110
  %v238 = vunpack.c.l.b16 %v111
  %v239 = vunpack.c.l.b16 %v112
  %v240 = vunpack.c.h.b16 %v112
  %v241 = vunpack.c.l.b16 %v113
  %v242 = vunpack.c.l.b16 %v114
  %v243 = vunpack.c.h.b16 %v114
  %v244 = vunpack.c.l.b16 %v115
  %v245 = vunpack.c.l.b16 %v116
  %v246 = vunpack.c.h.b16 %v116
  %v247 = vunpack.c.l.b16 %v117
  %v248 = vunpack.c.l.b16 %v118
  %v249 = vunpack.c.h.b16 %v118
  %v250 = vunpack.c.l.b16 %v119
  %v251 = vunpack.c.l.b16 %v120
  %v252 = vunpack.c.h.b16 %v120
  %v253 = vunpack.c.l.b16 %v121
  %v254 = vunpack.c.l.b16 %v122
  %v255 = vunpack.c.h.b16 %v122
  %v256 = vunpack.c.l.b16 %v123
  %v257 = vpack.c.b16 %v230, %v227
  %v258 = vpack.c.b16 %v231, %v228
  %v259 = vpack.c.b16 %v232, %v229
  %v260 = vpack.c.b16 %v236, %v233
  %v261 = vpack.c.b16 %v237, %v234
  %v262 = vpack.c.b16 %v238, %v235
  %v263 = vpack.c.b16 %v242, %v239
  %v264 = vpack.c.b16 %v243, %v240
  %v265 = vpack.c.b16 %v244, %v241
  %v266 = vpack.c.b16 %v248, %v245
  %v267 = vpack.c.b16 %v249, %v246
  %v268 = vpack.c.b16 %v250, %v247
  %v269 = vpack.c.b16 %v254, %v251
  %v270 = vpack.c.b16 %v255, %v252
  %v271 = vpack.c.b16 %v256, %v253
  %vm284 = vcmask 637952
  %v286 = vsel %vm284, %v190, 0
  %v289 = vsel %vm284, %v191, 0
  %v292 = vsel %vm284, %v192, 0
  %v295 = vsel %vm284, %v193, 0
  %v298 = vsel %vm284, %v194, 0
  %v301 = vsel %vm284, %v195, 0
  %v304 = vsel %vm284, %v196, 0
  %v307 = vsel %vm284, %v197, 0
  %v310 = vsel %vm284, %v198, 0
  %v313 = vsel %vm284, %v199, 0
  %v316 = vsel %vm284, %v200, 0
  %v319 = vsel %vm284, %v201, 0
  %v322 = vsel %vm284, %v202, 0
  %v325 = vsel %vm284, %v203, 0
  %v328 = vsel %vm284, %v204, 0
  %v331 = vsel %vm284, %v205, 0
  %v334 = vsel %vm284, %v206, 0
  %vm336 = vcmask 1046528
  %v338 = vsel %vm336, %v269, 0
  %v341 = vsel %vm336, %v270, 0
  %v344 = vsel %vm336, %v271, 0
  %346 = vmatprep.subr.bf16.mxu0 %v258
  %347 = vmatpush1.bf16.msra.mxu0 %v257
  %348 = vmatprep.subr.bf16.mxu0 %v261
  %349 = vmatpush1.bf16.msra.mxu0 %v260
  %350 = vmatprep.subr.bf16.mxu0 %v264
  %351 = vmatpush1.bf16.msra.mxu0 %v263
  %352 = vmatprep.subr.bf16.mxu0 %v267
  %353 = vmatpush1.bf16.msra.mxu0 %v266
  %354 = vmatprep.subr.bf16.mxu0 %v341
  %355 = vmatpush1.bf16.msra.mxu0 %v338
  %356 = vmatprep.subr.bf16.mxu0 0
  %357 = vmatpush1.bf16.msra.mxu0 0
  %358 = vmatprep.subr.bf16.mxu0 0
  %359 = vmatpush1.bf16.msra.mxu0 0
  %360 = vmatprep.subr.bf16.mxu0 0
  %361 = vmatpush1.bf16.msra.mxu0 0
  %362 = vmatprep.subr.bf16.mxu0 0
  %363 = vmatpush1.bf16.msra.mxu0 0
  %364 = vmatprep.subr.bf16.mxu0 0
  %365 = vmatpush1.bf16.msra.mxu0 0
  %366 = vmatprep.subr.bf16.mxu0 0
  %367 = vmatpush1.bf16.msra.mxu0 0
  %368 = vmatprep.subr.bf16.mxu0 0
  %369 = vmatpush1.bf16.msra.mxu0 0
  %370 = vmatprep.subr.bf16.mxu0 0
  %371 = vmatpush1.bf16.msra.mxu0 0
  %372 = vmatprep.subr.bf16.mxu0 0
  %373 = vmatpush1.bf16.msra.mxu0 0
  %374 = vmatprep.subr.bf16.mxu0 0
  %375 = vmatpush1.bf16.msra.mxu0 0
  %376 = vmatprep.subr.bf16.mxu0 0
  %377 = vmatpush1.bf16.msra.mxu0 0
  %378 = vmatprep.mubr.bf16.mxu0 0
  %379 = vmatmul.mubr.bf16.gmra.mrb[0].mxu0 %v286
  %v380 = vpop.f32.mrb[0].mxu0
  %v381 = vadd.f32 0.0, %v380
  %v382 = vpop.f32.mrb[0].mxu0
  %v383 = vadd.f32 0.0, %v382
  %v384 = vpop.f32.mrb[0].mxu0
  %v385 = vadd.f32 0.0, %v384
  %v386 = vpop.f32.mrb[0].mxu0
  %v387 = vadd.f32 0.0, %v386
  %388 = vmatprep.mubr.bf16.mxu0 0
  %389 = vmatmul.mubr.bf16.gmra.mrb[0].mxu0 %v289
  %v390 = vpop.f32.mrb[0].mxu0
  %v391 = vadd.f32 0.0, %v390
  %v392 = vpop.f32.mrb[0].mxu0
  %v393 = vadd.f32 0.0, %v392
  %v394 = vpop.f32.mrb[0].mxu0
  %v395 = vadd.f32 0.0, %v394
  %v396 = vpop.f32.mrb[0].mxu0
  %v397 = vadd.f32 0.0, %v396
  %398 = vmatprep.mubr.bf16.mxu0 0
  %399 = vmatmul.mubr.bf16.gmra.mrb[0].mxu0 %v292
  %v400 = vpop.f32.mrb[0].mxu0
  %v401 = vadd.f32 0.0, %v400
  %v402 = vpop.f32.mrb[0].mxu0
  %v403 = vadd.f32 0.0, %v402
  %v404 = vpop.f32.mrb[0].mxu0
  %v405 = vadd.f32 0.0, %v404
  %v406 = vpop.f32.mrb[0].mxu0
  %v407 = vadd.f32 0.0, %v406
  %408 = vmatprep.mubr.bf16.mxu0 0
  %409 = vmatmul.mubr.bf16.gmra.mrb[0].mxu0 %v295
  %v410 = vpop.f32.mrb[0].mxu0
  %v411 = vadd.f32 0.0, %v410
  %v412 = vpop.f32.mrb[0].mxu0
  %v413 = vadd.f32 0.0, %v412
  %v414 = vpop.f32.mrb[0].mxu0
  %v415 = vadd.f32 0.0, %v414
  %v416 = vpop.f32.mrb[0].mxu0
  %v417 = vadd.f32 0.0, %v416
  %418 = vmatprep.mubr.bf16.mxu0 0
  %419 = vmatmul.mubr.bf16.gmra.mrb[0].mxu0 %v298
  %v420 = vpop.f32.mrb[0].mxu0
  %v421 = vadd.f32 0.0, %v420
  %v422 = vpop.f32.mrb[0].mxu0
  %v423 = vadd.f32 0.0, %v422
  %v424 = vpop.f32.mrb[0].mxu0
  %v425 = vadd.f32 0.0, %v424
  %v426 = vpop.f32.mrb[0].mxu0
  %v427 = vadd.f32 0.0, %v426
  %428 = vmatprep.mubr.bf16.mxu0 0
  %429 = vmatmul.mubr.bf16.gmra.mrb[0].mxu0 %v301
  %v430 = vpop.f32.mrb[0].mxu0
  %v431 = vadd.f32 0.0, %v430
  %v432 = vpop.f32.mrb[0].mxu0
  %v433 = vadd.f32 0.0, %v432
  %v434 = vpop.f32.mrb[0].mxu0
  %v435 = vadd.f32 0.0, %v434
  %v436 = vpop.f32.mrb[0].mxu0
  %v437 = vadd.f32 0.0, %v436
  %438 = vmatprep.mubr.bf16.mxu0 0
  %439 = vmatmul.mubr.bf16.gmra.mrb[0].mxu0 %v304
  %v440 = vpop.f32.mrb[0].mxu0
  %v441 = vadd.f32 0.0, %v440
  %v442 = vpop.f32.mrb[0].mxu0
  %v443 = vadd.f32 0.0, %v442
  %v444 = vpop.f32.mrb[0].mxu0
  %v445 = vadd.f32 0.0, %v444
  %v446 = vpop.f32.mrb[0].mxu0
  %v447 = vadd.f32 0.0, %v446
  %448 = vmatprep.mubr.bf16.mxu0 0
  %449 = vmatmul.mubr.bf16.gmra.mrb[0].mxu0 %v307
  %v450 = vpop.f32.mrb[0].mxu0
  %v451 = vadd.f32 0.0, %v450
  %v452 = vpop.f32.mrb[0].mxu0
  %v453 = vadd.f32 0.0, %v452
  %v454 = vpop.f32.mrb[0].mxu0
  %v455 = vadd.f32 0.0, %v454
  %v456 = vpop.f32.mrb[0].mxu0
  %v457 = vadd.f32 0.0, %v456
  %458 = vmatprep.mubr.bf16.mxu0 0
  %459 = vmatmul.mubr.bf16.gmra.mrb[0].mxu0 %v310
  %v460 = vpop.f32.mrb[0].mxu0
  %v461 = vadd.f32 0.0, %v460
  %v462 = vpop.f32.mrb[0].mxu0
  %v463 = vadd.f32 0.0, %v462
  %v464 = vpop.f32.mrb[0].mxu0
  %v465 = vadd.f32 0.0, %v464
  %v466 = vpop.f32.mrb[0].mxu0
  %v467 = vadd.f32 0.0, %v466
  %468 = vmatprep.mubr.bf16.mxu0 0
  %469 = vmatmul.mubr.bf16.gmra.mrb[0].mxu0 %v313
  %v470 = vpop.f32.mrb[0].mxu0
  %v471 = vadd.f32 0.0, %v470
  %v472 = vpop.f32.mrb[0].mxu0
  %v473 = vadd.f32 0.0, %v472
  %v474 = vpop.f32.mrb[0].mxu0
  %v475 = vadd.f32 0.0, %v474
  %v476 = vpop.f32.mrb[0].mxu0
  %v477 = vadd.f32 0.0, %v476
  %478 = vmatprep.mubr.bf16.mxu0 0
  %479 = vmatmul.mubr.bf16.gmra.mrb[0].mxu0 %v316
  %v480 = vpop.f32.mrb[0].mxu0
  %v481 = vadd.f32 0.0, %v480
  %v482 = vpop.f32.mrb[0].mxu0
  %v483 = vadd.f32 0.0, %v482
  %v484 = vpop.f32.mrb[0].mxu0
  %v485 = vadd.f32 0.0, %v484
  %v486 = vpop.f32.mrb[0].mxu0
  %v487 = vadd.f32 0.0, %v486
  %488 = vmatprep.mubr.bf16.mxu0 0
  %489 = vmatmul.mubr.bf16.gmra.mrb[0].mxu0 %v319
  %v490 = vpop.f32.mrb[0].mxu0
  %v491 = vadd.f32 0.0, %v490
  %v492 = vpop.f32.mrb[0].mxu0
  %v493 = vadd.f32 0.0, %v492
  %v494 = vpop.f32.mrb[0].mxu0
  %v495 = vadd.f32 0.0, %v494
  %v496 = vpop.f32.mrb[0].mxu0
  %v497 = vadd.f32 0.0, %v496
  %498 = vmatprep.mubr.bf16.mxu0 0
  %499 = vmatmul.mubr.bf16.gmra.mrb[0].mxu0 %v322
  %v500 = vpop.f32.mrb[0].mxu0
  %v501 = vadd.f32 0.0, %v500
  %v502 = vpop.f32.mrb[0].mxu0
  %v503 = vadd.f32 0.0, %v502
  %v504 = vpop.f32.mrb[0].mxu0
  %v505 = vadd.f32 0.0, %v504
  %v506 = vpop.f32.mrb[0].mxu0
  %v507 = vadd.f32 0.0, %v506
  %508 = vmatprep.mubr.bf16.mxu0 0
  %509 = vmatmul.mubr.bf16.gmra.mrb[0].mxu0 %v325
  %v510 = vpop.f32.mrb[0].mxu0
  %v511 = vadd.f32 0.0, %v510
  %v512 = vpop.f32.mrb[0].mxu0
  %v513 = vadd.f32 0.0, %v512
  %v514 = vpop.f32.mrb[0].mxu0
  %v515 = vadd.f32 0.0, %v514
  %v516 = vpop.f32.mrb[0].mxu0
  %v517 = vadd.f32 0.0, %v516
  %518 = vmatprep.mubr.bf16.mxu0 0
  %519 = vmatmul.mubr.bf16.gmra.mrb[0].mxu0 %v328
  %v520 = vpop.f32.mrb[0].mxu0
  %v521 = vadd.f32 0.0, %v520
  %v522 = vpop.f32.mrb[0].mxu0
  %v523 = vadd.f32 0.0, %v522
  %v524 = vpop.f32.mrb[0].mxu0
  %v525 = vadd.f32 0.0, %v524
  %v526 = vpop.f32.mrb[0].mxu0
  %v527 = vadd.f32 0.0, %v526
  %528 = vmatprep.mubr.bf16.mxu0 0
  %529 = vmatmul.mubr.bf16.gmra.mrb[0].mxu0 %v331
  %v530 = vpop.f32.mrb[0].mxu0
  %v531 = vadd.f32 0.0, %v530
  %v532 = vpop.f32.mrb[0].mxu0
  %v533 = vadd.f32 0.0, %v532
  %v534 = vpop.f32.mrb[0].mxu0
  %v535 = vadd.f32 0.0, %v534
  %v536 = vpop.f32.mrb[0].mxu0
  %v537 = vadd.f32 0.0, %v536
  %538 = vmatprep.mubr.bf16.mxu0 0
  %539 = vmatmul.mubr.bf16.gmra.mrb[0].mxu0 %v334
  %v540 = vpop.f32.mrb[0].mxu0
  %v541 = vadd.f32 0.0, %v540
  %v542 = vpop.f32.mrb[0].mxu0
  %v543 = vadd.f32 0.0, %v542
  %v544 = vpop.f32.mrb[0].mxu0
  %v545 = vpop.f32.mrb[0].mxu0
  %546 = vdwg.mxu0
  %547 = vmatprep.subr.bf16.mxu0 0
  %548 = vmatpush1.bf16.msra.mxu0 %v259
  %549 = vmatprep.subr.bf16.mxu0 0
  %550 = vmatpush1.bf16.msra.mxu0 %v262
  %551 = vmatprep.subr.bf16.mxu0 0
  %552 = vmatpush1.bf16.msra.mxu0 %v265
  %553 = vmatprep.subr.bf16.mxu0 0
  %554 = vmatpush1.bf16.msra.mxu0 %v268
  %555 = vmatprep.subr.bf16.mxu0 0
  %556 = vmatpush1.bf16.msra.mxu0 %v344
  %557 = vmatprep.subr.bf16.mxu0 0
  %558 = vmatpush1.bf16.msra.mxu0 0
  %559 = vmatprep.subr.bf16.mxu0 0
  %560 = vmatpush1.bf16.msra.mxu0 0
  %561 = vmatprep.subr.bf16.mxu0 0
  %562 = vmatpush1.bf16.msra.mxu0 0
  %563 = vmatprep.subr.bf16.mxu0 0
  %564 = vmatpush1.bf16.msra.mxu0 0
  %565 = vmatprep.subr.bf16.mxu0 0
  %566 = vmatpush1.bf16.msra.mxu0 0
  %567 = vmatprep.subr.bf16.mxu0 0
  %568 = vmatpush1.bf16.msra.mxu0 0
  %569 = vmatprep.subr.bf16.mxu0 0
  %570 = vmatpush1.bf16.msra.mxu0 0
  %571 = vmatprep.subr.bf16.mxu0 0
  %572 = vmatpush1.bf16.msra.mxu0 0
  %573 = vmatprep.subr.bf16.mxu0 0
  %574 = vmatpush1.bf16.msra.mxu0 0
  %575 = vmatprep.subr.bf16.mxu0 0
  %576 = vmatpush1.bf16.msra.mxu0 0
  %577 = vmatprep.subr.bf16.mxu0 0
  %578 = vmatpush1.bf16.msra.mxu0 0
  %579 = vmatprep.mubr.bf16.mxu0 0
  %580 = vmatmul.mubr.bf16.gmra.mrb[0].mxu0 %v286
  %v581 = vpop.f32.mrb[0].mxu0
  %v582 = vadd.f32 0.0, %v581
  %v583 = vpop.f32.mrb[0].mxu0
  %v584 = vpop.f32.mrb[0].mxu0
  %v585 = vadd.f32 0.0, %v584
  %v586 = vpop.f32.mrb[0].mxu0
  %587 = vmatprep.mubr.bf16.mxu0 0
  %588 = vmatmul.mubr.bf16.gmra.mrb[0].mxu0 %v289
  %v589 = vpop.f32.mrb[0].mxu0
  %v590 = vadd.f32 0.0, %v589
  %v591 = vpop.f32.mrb[0].mxu0
  %v592 = vpop.f32.mrb[0].mxu0
  %v593 = vadd.f32 0.0, %v592
  %v594 = vpop.f32.mrb[0].mxu0
  %595 = vmatprep.mubr.bf16.mxu0 0
  %596 = vmatmul.mubr.bf16.gmra.mrb[0].mxu0 %v292
  %v597 = vpop.f32.mrb[0].mxu0
  %v598 = vadd.f32 0.0, %v597
  %v599 = vpop.f32.mrb[0].mxu0
  %v600 = vpop.f32.mrb[0].mxu0
  %v601 = vadd.f32 0.0, %v600
  %v602 = vpop.f32.mrb[0].mxu0
  %603 = vmatprep.mubr.bf16.mxu0 0
  %604 = vmatmul.mubr.bf16.gmra.mrb[0].mxu0 %v295
  %v605 = vpop.f32.mrb[0].mxu0
  %v606 = vadd.f32 0.0, %v605
  %v607 = vpop.f32.mrb[0].mxu0
  %v608 = vpop.f32.mrb[0].mxu0
  %v609 = vadd.f32 0.0, %v608
  %v610 = vpop.f32.mrb[0].mxu0
  %611 = vmatprep.mubr.bf16.mxu0 0
  %612 = vmatmul.mubr.bf16.gmra.mrb[0].mxu0 %v298
  %v613 = vpop.f32.mrb[0].mxu0
  %v614 = vadd.f32 0.0, %v613
  %v615 = vpop.f32.mrb[0].mxu0
  %v616 = vpop.f32.mrb[0].mxu0
  %v617 = vadd.f32 0.0, %v616
  %v618 = vpop.f32.mrb[0].mxu0
  %619 = vmatprep.mubr.bf16.mxu0 0
  %620 = vmatmul.mubr.bf16.gmra.mrb[0].mxu0 %v301
  %v621 = vpop.f32.mrb[0].mxu0
  %v622 = vadd.f32 0.0, %v621
  %v623 = vpop.f32.mrb[0].mxu0
  %v624 = vpop.f32.mrb[0].mxu0
  %v625 = vadd.f32 0.0, %v624
  %v626 = vpop.f32.mrb[0].mxu0
  %627 = vmatprep.mubr.bf16.mxu0 0
  %628 = vmatmul.mubr.bf16.gmra.mrb[0].mxu0 %v304
  %v629 = vpop.f32.mrb[0].mxu0
  %v630 = vadd.f32 0.0, %v629
  %v631 = vpop.f32.mrb[0].mxu0
  %v632 = vpop.f32.mrb[0].mxu0
  %v633 = vadd.f32 0.0, %v632
  %v634 = vpop.f32.mrb[0].mxu0
  %635 = vmatprep.mubr.bf16.mxu0 0
  %636 = vmatmul.mubr.bf16.gmra.mrb[0].mxu0 %v307
  %v637 = vpop.f32.mrb[0].mxu0
  %v638 = vadd.f32 0.0, %v637
  %v639 = vpop.f32.mrb[0].mxu0
  %v640 = vpop.f32.mrb[0].mxu0
  %v641 = vadd.f32 0.0, %v640
  %v642 = vpop.f32.mrb[0].mxu0
  %643 = vmatprep.mubr.bf16.mxu0 0
  %644 = vmatmul.mubr.bf16.gmra.mrb[0].mxu0 %v310
  %v645 = vpop.f32.mrb[0].mxu0
  %v646 = vadd.f32 0.0, %v645
  %v647 = vpop.f32.mrb[0].mxu0
  %v648 = vpop.f32.mrb[0].mxu0
  %v649 = vadd.f32 0.0, %v648
  %v650 = vpop.f32.mrb[0].mxu0
  %651 = vmatprep.mubr.bf16.mxu0 0
  %652 = vmatmul.mubr.bf16.gmra.mrb[0].mxu0 %v313
  %v653 = vpop.f32.mrb[0].mxu0
  %v654 = vadd.f32 0.0, %v653
  %v655 = vpop.f32.mrb[0].mxu0
  %v656 = vpop.f32.mrb[0].mxu0
  %v657 = vadd.f32 0.0, %v656
  %v658 = vpop.f32.mrb[0].mxu0
  %659 = vmatprep.mubr.bf16.mxu0 0
  %660 = vmatmul.mubr.bf16.gmra.mrb[0].mxu0 %v316
  %v661 = vpop.f32.mrb[0].mxu0
  %v662 = vadd.f32 0.0, %v661
  %v663 = vpop.f32.mrb[0].mxu0
  %v664 = vpop.f32.mrb[0].mxu0
  %v665 = vadd.f32 0.0, %v664
  %v666 = vpop.f32.mrb[0].mxu0
  %667 = vmatprep.mubr.bf16.mxu0 0
  %668 = vmatmul.mubr.bf16.gmra.mrb[0].mxu0 %v319
  %v669 = vpop.f32.mrb[0].mxu0
  %v670 = vadd.f32 0.0, %v669
  %v671 = vpop.f32.mrb[0].mxu0
  %v672 = vpop.f32.mrb[0].mxu0
  %v673 = vadd.f32 0.0, %v672
  %v674 = vpop.f32.mrb[0].mxu0
  %675 = vmatprep.mubr.bf16.mxu0 0
  %676 = vmatmul.mubr.bf16.gmra.mrb[0].mxu0 %v322
  %v677 = vpop.f32.mrb[0].mxu0
  %v678 = vadd.f32 0.0, %v677
  %v679 = vpop.f32.mrb[0].mxu0
  %v680 = vpop.f32.mrb[0].mxu0
  %v681 = vadd.f32 0.0, %v680
  %v682 = vpop.f32.mrb[0].mxu0
  %683 = vmatprep.mubr.bf16.mxu0 0
  %684 = vmatmul.mubr.bf16.gmra.mrb[0].mxu0 %v325
  %v685 = vpop.f32.mrb[0].mxu0
  %v686 = vadd.f32 0.0, %v685
  %v687 = vpop.f32.mrb[0].mxu0
  %v688 = vpop.f32.mrb[0].mxu0
  %v689 = vadd.f32 0.0, %v688
  %v690 = vpop.f32.mrb[0].mxu0
  %691 = vmatprep.mubr.bf16.mxu0 0
  %692 = vmatmul.mubr.bf16.gmra.mrb[0].mxu0 %v328
  %v693 = vpop.f32.mrb[0].mxu0
  %v694 = vadd.f32 0.0, %v693
  %v695 = vpop.f32.mrb[0].mxu0
  %v696 = vpop.f32.mrb[0].mxu0
  %v697 = vadd.f32 0.0, %v696
  %v698 = vpop.f32.mrb[0].mxu0
  %699 = vmatprep.mubr.bf16.mxu0 0
  %700 = vmatmul.mubr.bf16.gmra.mrb[0].mxu0 %v331
  %v701 = vpop.f32.mrb[0].mxu0
  %v702 = vadd.f32 0.0, %v701
  %v703 = vpop.f32.mrb[0].mxu0
  %v704 = vpop.f32.mrb[0].mxu0
  %v705 = vadd.f32 0.0, %v704
  %v706 = vpop.f32.mrb[0].mxu0
  %707 = vmatprep.mubr.bf16.mxu0 0
  %708 = vmatmul.mubr.bf16.gmra.mrb[0].mxu0 %v334
  %v709 = vpop.f32.mrb[0].mxu0
  %v710 = vadd.f32 0.0, %v709
  %v711 = vpop.f32.mrb[0].mxu0
  %v712 = vpop.f32.mrb[0].mxu0
  %v713 = vpop.f32.mrb[0].mxu0
  %714 = vdwg.mxu0
  %v726 = vunpack.c.l.b16 %v39
  %v727 = vunpack.c.l.b16 %v40
  %v728 = vunpack.c.l.b16 %v41
  %v729 = vunpack.c.l.b16 %v42
  %v730 = vunpack.c.l.b16 %v43
  %v731 = vunpack.c.l.b16 %v44
  %v732 = vunpack.c.l.b16 %v45
  %v733 = vunpack.c.l.b16 %v46
  %v734 = vunpack.c.l.b16 %v47
  %v735 = vunpack.c.l.b16 %v48
  %v736 = vunpack.c.l.b16 %v49
  %v737 = vpack.c.b16 %v727, %v726
  %v738 = vpack.c.b16 %v729, %v728
  %v739 = vpack.c.b16 %v731, %v730
  %v740 = vpack.c.b16 %v733, %v732
  %v741 = vpack.c.b16 %v735, %v734
  %v742 = vpack.c.b16 %v157, %v736
  %v743 = vpack.c.b16 %v159, %v158
  %v744 = vpack.c.b16 %v161, %v160
  %v745 = vpack.c.b16 %v163, %v162
  %v746 = vpack.c.b16 %v165, %v164
  %v747 = vpack.c.b16 %v167, %v166
  %v748 = vpack.c.b16 %v169, %v168
  %v749 = vpack.c.b16 %v171, %v170
  %v750 = vpack.c.b16 %v173, %v172
  %v751 = vpack.c.b16 %v175, %v174
  %v752 = vpack.c.b16 %v177, %v176
  %v753 = vpack.c.b16 %v178, %v178
  %v774 = vunpack.c.l.b16 %v72
  %v775 = vunpack.c.h.b16 %v72
  %v776 = vunpack.c.l.b16 %v73
  %v777 = vunpack.c.l.b16 %v74
  %v778 = vunpack.c.h.b16 %v74
  %v779 = vunpack.c.l.b16 %v75
  %v780 = vunpack.c.l.b16 %v76
  %v781 = vunpack.c.h.b16 %v76
  %v782 = vunpack.c.l.b16 %v77
  %v783 = vunpack.c.l.b16 %v78
  %v784 = vunpack.c.h.b16 %v78
  %v785 = vunpack.c.l.b16 %v79
  %v786 = vunpack.c.l.b16 %v80
  %v787 = vunpack.c.h.b16 %v80
  %v788 = vunpack.c.l.b16 %v81
  %v789 = vunpack.c.l.b16 %v82
  %v790 = vunpack.c.h.b16 %v82
  %v791 = vunpack.c.l.b16 %v83
  %v792 = vunpack.c.l.b16 %v84
  %v793 = vunpack.c.h.b16 %v84
  %v794 = vunpack.c.l.b16 %v85
  %v795 = vunpack.c.l.b16 %v86
  %v796 = vunpack.c.h.b16 %v86
  %v797 = vunpack.c.l.b16 %v87
  %v798 = vunpack.c.l.b16 %v88
  %v799 = vunpack.c.h.b16 %v88
  %v800 = vunpack.c.l.b16 %v89
  %v801 = vunpack.c.l.b16 %v90
  %v802 = vunpack.c.h.b16 %v90
  %v803 = vunpack.c.l.b16 %v91
  %v804 = vpack.c.b16 %v777, %v774
  %v805 = vpack.c.b16 %v778, %v775
  %v806 = vpack.c.b16 %v779, %v776
  %v807 = vpack.c.b16 %v783, %v780
  %v808 = vpack.c.b16 %v784, %v781
  %v809 = vpack.c.b16 %v785, %v782
  %v810 = vpack.c.b16 %v789, %v786
  %v811 = vpack.c.b16 %v790, %v787
  %v812 = vpack.c.b16 %v791, %v788
  %v813 = vpack.c.b16 %v795, %v792
  %v814 = vpack.c.b16 %v796, %v793
  %v815 = vpack.c.b16 %v797, %v794
  %v816 = vpack.c.b16 %v801, %v798
  %v817 = vpack.c.b16 %v802, %v799
  %v818 = vpack.c.b16 %v803, %v800
  %v832 = vsel %vm284, %v737, 0
  %v835 = vsel %vm284, %v738, 0
  %v838 = vsel %vm284, %v739, 0
  %v841 = vsel %vm284, %v740, 0
  %v844 = vsel %vm284, %v741, 0
  %v847 = vsel %vm284, %v742, 0
  %v850 = vsel %vm284, %v743, 0
  %v853 = vsel %vm284, %v744, 0
  %v856 = vsel %vm284, %v745, 0
  %v859 = vsel %vm284, %v746, 0
  %v862 = vsel %vm284, %v747, 0
  %v865 = vsel %vm284, %v748, 0
  %v868 = vsel %vm284, %v749, 0
  %v871 = vsel %vm284, %v750, 0
  %v874 = vsel %vm284, %v751, 0
  %v877 = vsel %vm284, %v752, 0
  %v880 = vsel %vm284, %v753, 0
  %v883 = vsel %vm336, %v816, 0
  %v886 = vsel %vm336, %v817, 0
  %v889 = vsel %vm336, %v818, 0
  %891 = vmatprep.subr.bf16.mxu0 %v805
  %892 = vmatpush1.bf16.msra.mxu0 %v804
  %893 = vmatprep.subr.bf16.mxu0 %v808
  %894 = vmatpush1.bf16.msra.mxu0 %v807
  %895 = vmatprep.subr.bf16.mxu0 %v811
  %896 = vmatpush1.bf16.msra.mxu0 %v810
  %897 = vmatprep.subr.bf16.mxu0 %v814
  %898 = vmatpush1.bf16.msra.mxu0 %v813
  %899 = vmatprep.subr.bf16.mxu0 %v886
  %900 = vmatpush1.bf16.msra.mxu0 %v883
  %901 = vmatprep.subr.bf16.mxu0 0
  %902 = vmatpush1.bf16.msra.mxu0 0
  %903 = vmatprep.subr.bf16.mxu0 0
  %904 = vmatpush1.bf16.msra.mxu0 0
  %905 = vmatprep.subr.bf16.mxu0 0
  %906 = vmatpush1.bf16.msra.mxu0 0
  %907 = vmatprep.subr.bf16.mxu0 0
  %908 = vmatpush1.bf16.msra.mxu0 0
  %909 = vmatprep.subr.bf16.mxu0 0
  %910 = vmatpush1.bf16.msra.mxu0 0
  %911 = vmatprep.subr.bf16.mxu0 0
  %912 = vmatpush1.bf16.msra.mxu0 0
  %913 = vmatprep.subr.bf16.mxu0 0
  %914 = vmatpush1.bf16.msra.mxu0 0
  %915 = vmatprep.subr.bf16.mxu0 0
  %916 = vmatpush1.bf16.msra.mxu0 0
  %917 = vmatprep.subr.bf16.mxu0 0
  %918 = vmatpush1.bf16.msra.mxu0 0
  %919 = vmatprep.subr.bf16.mxu0 0
  %920 = vmatpush1.bf16.msra.mxu0 0
  %921 = vmatprep.subr.bf16.mxu0 0
  %922 = vmatpush1.bf16.msra.mxu0 0
  %923 = vmatprep.mubr.bf16.mxu0 0
  %924 = vmatmul.mubr.bf16.gmra.mrb[0].mxu0 %v832
  %v925 = vpop.f32.mrb[0].mxu0
  %v926 = vadd.f32 %v381, %v925
  %v927 = vpop.f32.mrb[0].mxu0
  %v928 = vadd.f32 %v383, %v927
  %v929 = vpop.f32.mrb[0].mxu0
  %v930 = vadd.f32 %v385, %v929
  %v931 = vpop.f32.mrb[0].mxu0
  %v932 = vadd.f32 %v387, %v931
  %933 = vmatprep.mubr.bf16.mxu0 0
  %934 = vmatmul.mubr.bf16.gmra.mrb[0].mxu0 %v835
  %v935 = vpop.f32.mrb[0].mxu0
  %v936 = vadd.f32 %v391, %v935
  %v937 = vpop.f32.mrb[0].mxu0
  %v938 = vadd.f32 %v393, %v937
  %v939 = vpop.f32.mrb[0].mxu0
  %v940 = vadd.f32 %v395, %v939
  %v941 = vpop.f32.mrb[0].mxu0
  %v942 = vadd.f32 %v397, %v941
  %943 = vmatprep.mubr.bf16.mxu0 0
  %944 = vmatmul.mubr.bf16.gmra.mrb[0].mxu0 %v838
  %v945 = vpop.f32.mrb[0].mxu0
  %v946 = vadd.f32 %v401, %v945
  %v947 = vpop.f32.mrb[0].mxu0
  %v948 = vadd.f32 %v403, %v947
  %v949 = vpop.f32.mrb[0].mxu0
  %v950 = vadd.f32 %v405, %v949
  %v951 = vpop.f32.mrb[0].mxu0
  %v952 = vadd.f32 %v407, %v951
  %953 = vmatprep.mubr.bf16.mxu0 0
  %954 = vmatmul.mubr.bf16.gmra.mrb[0].mxu0 %v841
  %v955 = vpop.f32.mrb[0].mxu0
  %v956 = vadd.f32 %v411, %v955
  %v957 = vpop.f32.mrb[0].mxu0
  %v958 = vadd.f32 %v413, %v957
  %v959 = vpop.f32.mrb[0].mxu0
  %v960 = vadd.f32 %v415, %v959
  %v961 = vpop.f32.mrb[0].mxu0
  %v962 = vadd.f32 %v417, %v961
  %963 = vmatprep.mubr.bf16.mxu0 0
  %964 = vmatmul.mubr.bf16.gmra.mrb[0].mxu0 %v844
  %v965 = vpop.f32.mrb[0].mxu0
  %v966 = vadd.f32 %v421, %v965
  %v967 = vpop.f32.mrb[0].mxu0
  %v968 = vadd.f32 %v423, %v967
  %v969 = vpop.f32.mrb[0].mxu0
  %v970 = vadd.f32 %v425, %v969
  %v971 = vpop.f32.mrb[0].mxu0
  %v972 = vadd.f32 %v427, %v971
  %973 = vmatprep.mubr.bf16.mxu0 0
  %974 = vmatmul.mubr.bf16.gmra.mrb[0].mxu0 %v847
  %v975 = vpop.f32.mrb[0].mxu0
  %v976 = vadd.f32 %v431, %v975
  %v977 = vpop.f32.mrb[0].mxu0
  %v978 = vadd.f32 %v433, %v977
  %v979 = vpop.f32.mrb[0].mxu0
  %v980 = vadd.f32 %v435, %v979
  %v981 = vpop.f32.mrb[0].mxu0
  %v982 = vadd.f32 %v437, %v981
  %983 = vmatprep.mubr.bf16.mxu0 0
  %984 = vmatmul.mubr.bf16.gmra.mrb[0].mxu0 %v850
  %v985 = vpop.f32.mrb[0].mxu0
  %v986 = vadd.f32 %v441, %v985
  %v987 = vpop.f32.mrb[0].mxu0
  %v988 = vadd.f32 %v443, %v987
  %v989 = vpop.f32.mrb[0].mxu0
  %v990 = vadd.f32 %v445, %v989
  %v991 = vpop.f32.mrb[0].mxu0
  %v992 = vadd.f32 %v447, %v991
  %993 = vmatprep.mubr.bf16.mxu0 0
  %994 = vmatmul.mubr.bf16.gmra.mrb[0].mxu0 %v853
  %v995 = vpop.f32.mrb[0].mxu0
  %v996 = vadd.f32 %v451, %v995
  %v997 = vpop.f32.mrb[0].mxu0
  %v998 = vadd.f32 %v453, %v997
  %v999 = vpop.f32.mrb[0].mxu0
  %v1000 = vadd.f32 %v455, %v999
  %v1001 = vpop.f32.mrb[0].mxu0
  %v1002 = vadd.f32 %v457, %v1001
  %1003 = vmatprep.mubr.bf16.mxu0 0
  %1004 = vmatmul.mubr.bf16.gmra.mrb[0].mxu0 %v856
  %v1005 = vpop.f32.mrb[0].mxu0
  %v1006 = vadd.f32 %v461, %v1005
  %v1007 = vpop.f32.mrb[0].mxu0
  %v1008 = vadd.f32 %v463, %v1007
  %v1009 = vpop.f32.mrb[0].mxu0
  %v1010 = vadd.f32 %v465, %v1009
  %v1011 = vpop.f32.mrb[0].mxu0
  %v1012 = vadd.f32 %v467, %v1011
  %1013 = vmatprep.mubr.bf16.mxu0 0
  %1014 = vmatmul.mubr.bf16.gmra.mrb[0].mxu0 %v859
  %v1015 = vpop.f32.mrb[0].mxu0
  %v1016 = vadd.f32 %v471, %v1015
  %v1017 = vpop.f32.mrb[0].mxu0
  %v1018 = vadd.f32 %v473, %v1017
  %v1019 = vpop.f32.mrb[0].mxu0
  %v1020 = vadd.f32 %v475, %v1019
  %v1021 = vpop.f32.mrb[0].mxu0
  %v1022 = vadd.f32 %v477, %v1021
  %1023 = vmatprep.mubr.bf16.mxu0 0
  %1024 = vmatmul.mubr.bf16.gmra.mrb[0].mxu0 %v862
  %v1025 = vpop.f32.mrb[0].mxu0
  %v1026 = vadd.f32 %v481, %v1025
  %v1027 = vpop.f32.mrb[0].mxu0
  %v1028 = vadd.f32 %v483, %v1027
  %v1029 = vpop.f32.mrb[0].mxu0
  %v1030 = vadd.f32 %v485, %v1029
  %v1031 = vpop.f32.mrb[0].mxu0
  %v1032 = vadd.f32 %v487, %v1031
  %1033 = vmatprep.mubr.bf16.mxu0 0
  %1034 = vmatmul.mubr.bf16.gmra.mrb[0].mxu0 %v865
  %v1035 = vpop.f32.mrb[0].mxu0
  %v1036 = vadd.f32 %v491, %v1035
  %v1037 = vpop.f32.mrb[0].mxu0
  %v1038 = vadd.f32 %v493, %v1037
  %v1039 = vpop.f32.mrb[0].mxu0
  %v1040 = vadd.f32 %v495, %v1039
  %v1041 = vpop.f32.mrb[0].mxu0
  %v1042 = vadd.f32 %v497, %v1041
  %1043 = vmatprep.mubr.bf16.mxu0 0
  %1044 = vmatmul.mubr.bf16.gmra.mrb[0].mxu0 %v868
  %v1045 = vpop.f32.mrb[0].mxu0
  %v1046 = vadd.f32 %v501, %v1045
  %v1047 = vpop.f32.mrb[0].mxu0
  %v1048 = vadd.f32 %v503, %v1047
  %v1049 = vpop.f32.mrb[0].mxu0
  %v1050 = vadd.f32 %v505, %v1049
  %v1051 = vpop.f32.mrb[0].mxu0
  %v1052 = vadd.f32 %v507, %v1051
  %1053 = vmatprep.mubr.bf16.mxu0 0
  %1054 = vmatmul.mubr.bf16.gmra.mrb[0].mxu0 %v871
  %v1055 = vpop.f32.mrb[0].mxu0
  %v1056 = vadd.f32 %v511, %v1055
  %v1057 = vpop.f32.mrb[0].mxu0
  %v1058 = vadd.f32 %v513, %v1057
  %v1059 = vpop.f32.mrb[0].mxu0
  %v1060 = vadd.f32 %v515, %v1059
  %v1061 = vpop.f32.mrb[0].mxu0
  %v1062 = vadd.f32 %v517, %v1061
  %1063 = vmatprep.mubr.bf16.mxu0 0
  %1064 = vmatmul.mubr.bf16.gmra.mrb[0].mxu0 %v874
  %v1065 = vpop.f32.mrb[0].mxu0
  %v1066 = vadd.f32 %v521, %v1065
  %v1067 = vpop.f32.mrb[0].mxu0
  %v1068 = vadd.f32 %v523, %v1067
  %v1069 = vpop.f32.mrb[0].mxu0
  %v1070 = vadd.f32 %v525, %v1069
  %v1071 = vpop.f32.mrb[0].mxu0
  %v1072 = vadd.f32 %v527, %v1071
  %1073 = vmatprep.mubr.bf16.mxu0 0
  %1074 = vmatmul.mubr.bf16.gmra.mrb[0].mxu0 %v877
  %v1075 = vpop.f32.mrb[0].mxu0
  %v1076 = vadd.f32 %v531, %v1075
  %v1077 = vpop.f32.mrb[0].mxu0
  %v1078 = vadd.f32 %v533, %v1077
  %v1079 = vpop.f32.mrb[0].mxu0
  %v1080 = vadd.f32 %v535, %v1079
  %v1081 = vpop.f32.mrb[0].mxu0
  %v1082 = vadd.f32 %v537, %v1081
  %1083 = vmatprep.mubr.bf16.mxu0 0
  %1084 = vmatmul.mubr.bf16.gmra.mrb[0].mxu0 %v880
  %v1085 = vpop.f32.mrb[0].mxu0
  %v1086 = vadd.f32 %v541, %v1085
  %v1087 = vpop.f32.mrb[0].mxu0
  %v1088 = vadd.f32 %v543, %v1087
  %v1089 = vpop.f32.mrb[0].mxu0
  %v1090 = vpop.f32.mrb[0].mxu0
  %1091 = vdwg.mxu0
  %1092 = vmatprep.subr.bf16.mxu0 0
  %1093 = vmatpush1.bf16.msra.mxu0 %v806
  %1094 = vmatprep.subr.bf16.mxu0 0
  %1095 = vmatpush1.bf16.msra.mxu0 %v809
  %1096 = vmatprep.subr.bf16.mxu0 0
  %1097 = vmatpush1.bf16.msra.mxu0 %v812
  %1098 = vmatprep.subr.bf16.mxu0 0
  %1099 = vmatpush1.bf16.msra.mxu0 %v815
  %1100 = vmatprep.subr.bf16.mxu0 0
  %1101 = vmatpush1.bf16.msra.mxu0 %v889
  %1102 = vmatprep.subr.bf16.mxu0 0
  %1103 = vmatpush1.bf16.msra.mxu0 0
  %1104 = vmatprep.subr.bf16.mxu0 0
  %1105 = vmatpush1.bf16.msra.mxu0 0
  %1106 = vmatprep.subr.bf16.mxu0 0
  %1107 = vmatpush1.bf16.msra.mxu0 0
  %1108 = vmatprep.subr.bf16.mxu0 0
  %1109 = vmatpush1.bf16.msra.mxu0 0
  %1110 = vmatprep.subr.bf16.mxu0 0
  %1111 = vmatpush1.bf16.msra.mxu0 0
  %1112 = vmatprep.subr.bf16.mxu0 0
  %1113 = vmatpush1.bf16.msra.mxu0 0
  %1114 = vmatprep.subr.bf16.mxu0 0
  %1115 = vmatpush1.bf16.msra.mxu0 0
  %1116 = vmatprep.subr.bf16.mxu0 0
  %1117 = vmatpush1.bf16.msra.mxu0 0
  %1118 = vmatprep.subr.bf16.mxu0 0
  %1119 = vmatpush1.bf16.msra.mxu0 0
  %1120 = vmatprep.subr.bf16.mxu0 0
  %1121 = vmatpush1.bf16.msra.mxu0 0
  %1122 = vmatprep.subr.bf16.mxu0 0
  %1123 = vmatpush1.bf16.msra.mxu0 0
  %1124 = vmatprep.mubr.bf16.mxu0 0
  %1125 = vmatmul.mubr.bf16.gmra.mrb[0].mxu0 %v832
  %v1126 = vpop.f32.mrb[0].mxu0
  %v1127 = vadd.f32 %v582, %v1126
  %v1128 = vpop.f32.mrb[0].mxu0
  %v1129 = vpop.f32.mrb[0].mxu0
  %v1130 = vadd.f32 %v585, %v1129
  %v1131 = vpop.f32.mrb[0].mxu0
  %1132 = vmatprep.mubr.bf16.mxu0 0
  %1133 = vmatmul.mubr.bf16.gmra.mrb[0].mxu0 %v835
  %v1134 = vpop.f32.mrb[0].mxu0
  %v1135 = vadd.f32 %v590, %v1134
  %v1136 = vpop.f32.mrb[0].mxu0
  %v1137 = vpop.f32.mrb[0].mxu0
  %v1138 = vadd.f32 %v593, %v1137
  %v1139 = vpop.f32.mrb[0].mxu0
  %1140 = vmatprep.mubr.bf16.mxu0 0
  %1141 = vmatmul.mubr.bf16.gmra.mrb[0].mxu0 %v838
  %v1142 = vpop.f32.mrb[0].mxu0
  %v1143 = vadd.f32 %v598, %v1142
  %v1144 = vpop.f32.mrb[0].mxu0
  %v1145 = vpop.f32.mrb[0].mxu0
  %v1146 = vadd.f32 %v601, %v1145
  %v1147 = vpop.f32.mrb[0].mxu0
  %1148 = vmatprep.mubr.bf16.mxu0 0
  %1149 = vmatmul.mubr.bf16.gmra.mrb[0].mxu0 %v841
  %v1150 = vpop.f32.mrb[0].mxu0
  %v1151 = vadd.f32 %v606, %v1150
  %v1152 = vpop.f32.mrb[0].mxu0
  %v1153 = vpop.f32.mrb[0].mxu0
  %v1154 = vadd.f32 %v609, %v1153
  %v1155 = vpop.f32.mrb[0].mxu0
  %1156 = vmatprep.mubr.bf16.mxu0 0
  %1157 = vmatmul.mubr.bf16.gmra.mrb[0].mxu0 %v844
  %v1158 = vpop.f32.mrb[0].mxu0
  %v1159 = vadd.f32 %v614, %v1158
  %v1160 = vpop.f32.mrb[0].mxu0
  %v1161 = vpop.f32.mrb[0].mxu0
  %v1162 = vadd.f32 %v617, %v1161
  %v1163 = vpop.f32.mrb[0].mxu0
  %1164 = vmatprep.mubr.bf16.mxu0 0
  %1165 = vmatmul.mubr.bf16.gmra.mrb[0].mxu0 %v847
  %v1166 = vpop.f32.mrb[0].mxu0
  %v1167 = vadd.f32 %v622, %v1166
  %v1168 = vpop.f32.mrb[0].mxu0
  %v1169 = vpop.f32.mrb[0].mxu0
  %v1170 = vadd.f32 %v625, %v1169
  %v1171 = vpop.f32.mrb[0].mxu0
  %1172 = vmatprep.mubr.bf16.mxu0 0
  %1173 = vmatmul.mubr.bf16.gmra.mrb[0].mxu0 %v850
  %v1174 = vpop.f32.mrb[0].mxu0
  %v1175 = vadd.f32 %v630, %v1174
  %v1176 = vpop.f32.mrb[0].mxu0
  %v1177 = vpop.f32.mrb[0].mxu0
  %v1178 = vadd.f32 %v633, %v1177
  %v1179 = vpop.f32.mrb[0].mxu0
  %1180 = vmatprep.mubr.bf16.mxu0 0
  %1181 = vmatmul.mubr.bf16.gmra.mrb[0].mxu0 %v853
  %v1182 = vpop.f32.mrb[0].mxu0
  %v1183 = vadd.f32 %v638, %v1182
  %v1184 = vpop.f32.mrb[0].mxu0
  %v1185 = vpop.f32.mrb[0].mxu0
  %v1186 = vadd.f32 %v641, %v1185
  %v1187 = vpop.f32.mrb[0].mxu0
  %1188 = vmatprep.mubr.bf16.mxu0 0
  %1189 = vmatmul.mubr.bf16.gmra.mrb[0].mxu0 %v856
  %v1190 = vpop.f32.mrb[0].mxu0
  %v1191 = vadd.f32 %v646, %v1190
  %v1192 = vpop.f32.mrb[0].mxu0
  %v1193 = vpop.f32.mrb[0].mxu0
  %v1194 = vadd.f32 %v649, %v1193
  %v1195 = vpop.f32.mrb[0].mxu0
  %1196 = vmatprep.mubr.bf16.mxu0 0
  %1197 = vmatmul.mubr.bf16.gmra.mrb[0].mxu0 %v859
  %v1198 = vpop.f32.mrb[0].mxu0
  %v1199 = vadd.f32 %v654, %v1198
  %v1200 = vpop.f32.mrb[0].mxu0
  %v1201 = vpop.f32.mrb[0].mxu0
  %v1202 = vadd.f32 %v657, %v1201
  %v1203 = vpop.f32.mrb[0].mxu0
  %1204 = vmatprep.mubr.bf16.mxu0 0
  %1205 = vmatmul.mubr.bf16.gmra.mrb[0].mxu0 %v862
  %v1206 = vpop.f32.mrb[0].mxu0
  %v1207 = vadd.f32 %v662, %v1206
  %v1208 = vpop.f32.mrb[0].mxu0
  %v1209 = vpop.f32.mrb[0].mxu0
  %v1210 = vadd.f32 %v665, %v1209
  %v1211 = vpop.f32.mrb[0].mxu0
  %1212 = vmatprep.mubr.bf16.mxu0 0
  %1213 = vmatmul.mubr.bf16.gmra.mrb[0].mxu0 %v865
  %v1214 = vpop.f32.mrb[0].mxu0
  %v1215 = vadd.f32 %v670, %v1214
  %v1216 = vpop.f32.mrb[0].mxu0
  %v1217 = vpop.f32.mrb[0].mxu0
  %v1218 = vadd.f32 %v673, %v1217
  %v1219 = vpop.f32.mrb[0].mxu0
  %1220 = vmatprep.mubr.bf16.mxu0 0
  %1221 = vmatmul.mubr.bf16.gmra.mrb[0].mxu0 %v868
  %v1222 = vpop.f32.mrb[0].mxu0
  %v1223 = vadd.f32 %v678, %v1222
  %v1224 = vpop.f32.mrb[0].mxu0
  %v1225 = vpop.f32.mrb[0].mxu0
  %v1226 = vadd.f32 %v681, %v1225
  %v1227 = vpop.f32.mrb[0].mxu0
  %1228 = vmatprep.mubr.bf16.mxu0 0
  %1229 = vmatmul.mubr.bf16.gmra.mrb[0].mxu0 %v871
  %v1230 = vpop.f32.mrb[0].mxu0
  %v1231 = vadd.f32 %v686, %v1230
  %v1232 = vpop.f32.mrb[0].mxu0
  %v1233 = vpop.f32.mrb[0].mxu0
  %v1234 = vadd.f32 %v689, %v1233
  %v1235 = vpop.f32.mrb[0].mxu0
  %1236 = vmatprep.mubr.bf16.mxu0 0
  %1237 = vmatmul.mubr.bf16.gmra.mrb[0].mxu0 %v874
  %v1238 = vpop.f32.mrb[0].mxu0
  %v1239 = vadd.f32 %v694, %v1238
  %v1240 = vpop.f32.mrb[0].mxu0
  %v1241 = vpop.f32.mrb[0].mxu0
  %v1242 = vadd.f32 %v697, %v1241
  %v1243 = vpop.f32.mrb[0].mxu0
  %1244 = vmatprep.mubr.bf16.mxu0 0
  %1245 = vmatmul.mubr.bf16.gmra.mrb[0].mxu0 %v877
  %v1246 = vpop.f32.mrb[0].mxu0
  %v1247 = vadd.f32 %v702, %v1246
  %v1248 = vpop.f32.mrb[0].mxu0
  %v1249 = vpop.f32.mrb[0].mxu0
  %v1250 = vadd.f32 %v705, %v1249
  %v1251 = vpop.f32.mrb[0].mxu0
  %1252 = vmatprep.mubr.bf16.mxu0 0
  %1253 = vmatmul.mubr.bf16.gmra.mrb[0].mxu0 %v880
  %v1254 = vpop.f32.mrb[0].mxu0
  %v1255 = vadd.f32 %v710, %v1254
  %v1256 = vpop.f32.mrb[0].mxu0
  %v1257 = vpop.f32.mrb[0].mxu0
  %v1258 = vpop.f32.mrb[0].mxu0
  %1259 = vdwg.mxu0
  %v1260 = vld [vmem:[%s0 + $0x58] sm:$0xf]
  %v1261 = vld [vmem:[%s0 + $0x5c] sm:$0xf]
  %v1262 = vld [vmem:[%s0 + $0x60] sm:$0xf]
  %v1263 = vld [vmem:[%s0 + $0x64] sm:$0xf]
  %v1264 = vld [vmem:[%s0 + $0x68] sm:$0xf]
  %v1265 = vld [vmem:[%s0 + $0x6c] sm:$0xf]
  %v1266 = vld [vmem:[%s0 + $0x70] sm:$0xf]
  %v1267 = vld [vmem:[%s0 + $0x74] sm:$0xf]
  %v1268 = vld [vmem:[%s0 + $0x78] sm:$0xf]
  %v1269 = vld [vmem:[%s0 + $0x7c] sm:$0xf]
  %v1270 = vld [vmem:[%s0 + $0x80] sm:$0xf]
  %v1271 = vld [vmem:[%s0 + $0x84] sm:$0xf]
  %v1272 = vld [vmem:[%s0 + $0x88] sm:$0xf]
  %v1273 = vld [vmem:[%s0 + $0x8c] sm:$0xf]
  %v1274 = vld [vmem:[%s0 + $0x90] sm:$0xf]
  %v1275 = vld [vmem:[%s0 + $0x94] sm:$0xf]
  %v1276 = vld [vmem:[%s0 + $0x98] sm:$0xf]
  %v1277 = vld [vmem:[%s0 + $0x9c] sm:$0xf]
  %v1278 = vld [vmem:[%s0 + $0xa0] sm:$0xf]
  %v1279 = vld [vmem:[%s0 + $0xa4] sm:$0xf]
  %v1280 = vld [vmem:[%s0 + $0xa8] sm:$0xf]
  %v1281 = vld [vmem:[%s0 + $0xac] sm:$0xf]
  %v1282 = vld [vmem:[%s0 + $0xb0] sm:$0xf]
  %v1283 = vld [vmem:[%s0 + $0xb4] sm:$0xf]
  %v1284 = vld [vmem:[%s0 + $0xb8] sm:$0xf]
  %v1285 = vld [vmem:[%s0 + $0xbc] sm:$0xf]
  %v1286 = vld [vmem:[%s0 + $0xc0] sm:$0xf]
  %v1287 = vld [vmem:[%s0 + $0xc4] sm:$0xf]
  %v1288 = vld [vmem:[%s0 + $0xc8] sm:$0xf]
  %v1289 = vld [vmem:[%s0 + $0xcc] sm:$0xf]
  %v1290 = vld [vmem:[%s0 + $0xd0] sm:$0xf]
  %v1291 = vld [vmem:[%s0 + $0xd4] sm:$0xf]
  %v1292 = vld [vmem:[%s0 + $0xd8] sm:$0xf]
  %s1293 = scalar_lea.vmem %s1, 240
  %v1294 = vld [vmem:[%s1293] sm:$0xff]
  %v1295 = vld [vmem:[%s1293 + $0x8] sm:$0xf]
  %v1296 = vld [vmem:[%s1293 + $0xc] sm:$0xff]
  %v1297 = vld [vmem:[%s1293 + $0x14] sm:$0xf]
  %v1298 = vld [vmem:[%s1293 + $0x18] sm:$0xff]
  %v1299 = vld [vmem:[%s1293 + $0x20] sm:$0xf]
  %v1300 = vld [vmem:[%s1293 + $0x24] sm:$0xff]
  %v1301 = vld [vmem:[%s1293 + $0x2c] sm:$0xf]
  %v1302 = vld [vmem:[%s1293 + $0x30] sm:$0xff]
  %v1303 = vld [vmem:[%s1293 + $0x38] sm:$0xf]
  %v1304 = vld [vmem:[%s1293 + $0x3c] sm:$0xff]
  %v1305 = vld [vmem:[%s1293 + $0x44] sm:$0xf]
  %v1306 = vld [vmem:[%s1293 + $0x48] sm:$0xff]
  %v1307 = vld [vmem:[%s1293 + $0x50] sm:$0xf]
  %v1308 = vld [vmem:[%s1293 + $0x54] sm:$0xff]
  %v1309 = vld [vmem:[%s1293 + $0x5c] sm:$0xf]
  %v1310 = vld [vmem:[%s1293 + $0x60] sm:$0xff]
  %v1311 = vld [vmem:[%s1293 + $0x68] sm:$0xf]
  %v1312 = vld [vmem:[%s1293 + $0x6c] sm:$0x77]
  %v1313 = vld [vmem:[%s1293 + $0x74] sm:$0x7]
  %v1347 = vunpack.c.l.b16 %v1260
  %v1348 = vunpack.c.l.b16 %v1261
  %v1349 = vunpack.c.l.b16 %v1262
  %v1350 = vunpack.c.l.b16 %v1263
  %v1351 = vunpack.c.l.b16 %v1264
  %v1352 = vunpack.c.l.b16 %v1265
  %v1353 = vunpack.c.l.b16 %v1266
  %v1354 = vunpack.c.l.b16 %v1267
  %v1355 = vunpack.c.l.b16 %v1268
  %v1356 = vunpack.c.l.b16 %v1269
  %v1357 = vunpack.c.l.b16 %v1270
  %v1358 = vunpack.c.l.b16 %v1271
  %v1359 = vunpack.c.l.b16 %v1272
  %v1360 = vunpack.c.l.b16 %v1273
  %v1361 = vunpack.c.l.b16 %v1274
  %v1362 = vunpack.c.l.b16 %v1275
  %v1363 = vunpack.c.l.b16 %v1276
  %v1364 = vunpack.c.l.b16 %v1277
  %v1365 = vunpack.c.l.b16 %v1278
  %v1366 = vunpack.c.l.b16 %v1279
  %v1367 = vunpack.c.l.b16 %v1280
  %v1368 = vunpack.c.l.b16 %v1281
  %v1369 = vunpack.c.l.b16 %v1282
  %v1370 = vunpack.c.l.b16 %v1283
  %v1371 = vunpack.c.l.b16 %v1284
  %v1372 = vunpack.c.l.b16 %v1285
  %v1373 = vunpack.c.l.b16 %v1286
  %v1374 = vunpack.c.l.b16 %v1287
  %v1375 = vunpack.c.l.b16 %v1288
  %v1376 = vunpack.c.l.b16 %v1289
  %v1377 = vunpack.c.l.b16 %v1290
  %v1378 = vunpack.c.l.b16 %v1291
  %v1379 = vunpack.c.l.b16 %v1292
  %v1380 = vpack.c.b16 %v1348, %v1347
  %v1381 = vpack.c.b16 %v1350, %v1349
  %v1382 = vpack.c.b16 %v1352, %v1351
  %v1383 = vpack.c.b16 %v1354, %v1353
  %v1384 = vpack.c.b16 %v1356, %v1355
  %v1385 = vpack.c.b16 %v1358, %v1357
  %v1386 = vpack.c.b16 %v1360, %v1359
  %v1387 = vpack.c.b16 %v1362, %v1361
  %v1388 = vpack.c.b16 %v1364, %v1363
  %v1389 = vpack.c.b16 %v1366, %v1365
  %v1390 = vpack.c.b16 %v1368, %v1367
  %v1391 = vpack.c.b16 %v1370, %v1369
  %v1392 = vpack.c.b16 %v1372, %v1371
  %v1393 = vpack.c.b16 %v1374, %v1373
  %v1394 = vpack.c.b16 %v1376, %v1375
  %v1395 = vpack.c.b16 %v1378, %v1377
  %v1396 = vpack.c.b16 %v1379, %v1379
  %v1417 = vunpack.c.l.b16 %v1294
  %v1418 = vunpack.c.h.b16 %v1294
  %v1419 = vunpack.c.l.b16 %v1295
  %v1420 = vunpack.c.l.b16 %v1296
  %v1421 = vunpack.c.h.b16 %v1296
  %v1422 = vunpack.c.l.b16 %v1297
  %v1423 = vunpack.c.l.b16 %v1298
  %v1424 = vunpack.c.h.b16 %v1298
  %v1425 = vunpack.c.l.b16 %v1299
  %v1426 = vunpack.c.l.b16 %v1300
  %v1427 = vunpack.c.h.b16 %v1300
  %v1428 = vunpack.c.l.b16 %v1301
  %v1429 = vunpack.c.l.b16 %v1302
  %v1430 = vunpack.c.h.b16 %v1302
  %v1431 = vunpack.c.l.b16 %v1303
  %v1432 = vunpack.c.l.b16 %v1304
  %v1433 = vunpack.c.h.b16 %v1304
  %v1434 = vunpack.c.l.b16 %v1305
  %v1435 = vunpack.c.l.b16 %v1306
  %v1436 = vunpack.c.h.b16 %v1306
  %v1437 = vunpack.c.l.b16 %v1307
  %v1438 = vunpack.c.l.b16 %v1308
  %v1439 = vunpack.c.h.b16 %v1308
  %v1440 = vunpack.c.l.b16 %v1309
  %v1441 = vunpack.c.l.b16 %v1310
  %v1442 = vunpack.c.h.b16 %v1310
  %v1443 = vunpack.c.l.b16 %v1311
  %v1444 = vunpack.c.l.b16 %v1312
  %v1445 = vunpack.c.h.b16 %v1312
  %v1446 = vunpack.c.l.b16 %v1313
  %v1447 = vpack.c.b16 %v1420, %v1417
  %v1448 = vpack.c.b16 %v1421, %v1418
  %v1449 = vpack.c.b16 %v1422, %v1419
  %v1450 = vpack.c.b16 %v1426, %v1423
  %v1451 = vpack.c.b16 %v1427, %v1424
  %v1452 = vpack.c.b16 %v1428, %v1425
  %v1453 = vpack.c.b16 %v1432, %v1429
  %v1454 = vpack.c.b16 %v1433, %v1430
  %v1455 = vpack.c.b16 %v1434, %v1431
  %v1456 = vpack.c.b16 %v1438, %v1435
  %v1457 = vpack.c.b16 %v1439, %v1436
  %v1458 = vpack.c.b16 %v1440, %v1437
  %v1459 = vpack.c.b16 %v1444, %v1441
  %v1460 = vpack.c.b16 %v1445, %v1442
  %v1461 = vpack.c.b16 %v1446, %v1443
  %v1475 = vsel %vm284, %v1380, 0
  %v1478 = vsel %vm284, %v1381, 0
  %v1481 = vsel %vm284, %v1382, 0
  %v1484 = vsel %vm284, %v1383, 0
  %v1487 = vsel %vm284, %v1384, 0
  %v1490 = vsel %vm284, %v1385, 0
  %v1493 = vsel %vm284, %v1386, 0
  %v1496 = vsel %vm284, %v1387, 0
  %v1499 = vsel %vm284, %v1388, 0
  %v1502 = vsel %vm284, %v1389, 0
  %v1505 = vsel %vm284, %v1390, 0
  %v1508 = vsel %vm284, %v1391, 0
  %v1511 = vsel %vm284, %v1392, 0
  %v1514 = vsel %vm284, %v1393, 0
  %v1517 = vsel %vm284, %v1394, 0
  %v1520 = vsel %vm284, %v1395, 0
  %v1523 = vsel %vm284, %v1396, 0
  %v1526 = vsel %vm336, %v1459, 0
  %v1529 = vsel %vm336, %v1460, 0
  %v1532 = vsel %vm336, %v1461, 0
  %1534 = vmatprep.subr.bf16.mxu0 %v1448
  %1535 = vmatpush1.bf16.msra.mxu0 %v1447
  %1536 = vmatprep.subr.bf16.mxu0 %v1451
  %1537 = vmatpush1.bf16.msra.mxu0 %v1450
  %1538 = vmatprep.subr.bf16.mxu0 %v1454
  %1539 = vmatpush1.bf16.msra.mxu0 %v1453
  %1540 = vmatprep.subr.bf16.mxu0 %v1457
  %1541 = vmatpush1.bf16.msra.mxu0 %v1456
  %1542 = vmatprep.subr.bf16.mxu0 %v1529
  %1543 = vmatpush1.bf16.msra.mxu0 %v1526
  %1544 = vmatprep.subr.bf16.mxu0 0
  %1545 = vmatpush1.bf16.msra.mxu0 0
  %1546 = vmatprep.subr.bf16.mxu0 0
  %1547 = vmatpush1.bf16.msra.mxu0 0
  %1548 = vmatprep.subr.bf16.mxu0 0
  %1549 = vmatpush1.bf16.msra.mxu0 0
  %1550 = vmatprep.subr.bf16.mxu0 0
  %1551 = vmatpush1.bf16.msra.mxu0 0
  %1552 = vmatprep.subr.bf16.mxu0 0
  %1553 = vmatpush1.bf16.msra.mxu0 0
  %1554 = vmatprep.subr.bf16.mxu0 0
  %1555 = vmatpush1.bf16.msra.mxu0 0
  %1556 = vmatprep.subr.bf16.mxu0 0
  %1557 = vmatpush1.bf16.msra.mxu0 0
  %1558 = vmatprep.subr.bf16.mxu0 0
  %1559 = vmatpush1.bf16.msra.mxu0 0
  %1560 = vmatprep.subr.bf16.mxu0 0
  %1561 = vmatpush1.bf16.msra.mxu0 0
  %1562 = vmatprep.subr.bf16.mxu0 0
  %1563 = vmatpush1.bf16.msra.mxu0 0
  %1564 = vmatprep.subr.bf16.mxu0 0
  %1565 = vmatpush1.bf16.msra.mxu0 0
  %1566 = vmatprep.mubr.bf16.mxu0 0
  %1567 = vmatmul.mubr.bf16.gmra.mrb[0].mxu0 %v1475
  %v1568 = vpop.f32.mrb[0].mxu0
  %v1569 = vadd.f32 0.0, %v1568
  %v1570 = vpop.f32.mrb[0].mxu0
  %v1571 = vadd.f32 0.0, %v1570
  %v1572 = vpop.f32.mrb[0].mxu0
  %v1573 = vadd.f32 0.0, %v1572
  %v1574 = vpop.f32.mrb[0].mxu0
  %v1575 = vadd.f32 0.0, %v1574
  %1576 = vmatprep.mubr.bf16.mxu0 0
  %1577 = vmatmul.mubr.bf16.gmra.mrb[0].mxu0 %v1478
  %v1578 = vpop.f32.mrb[0].mxu0
  %v1579 = vadd.f32 0.0, %v1578
  %v1580 = vpop.f32.mrb[0].mxu0
  %v1581 = vadd.f32 0.0, %v1580
  %v1582 = vpop.f32.mrb[0].mxu0
  %v1583 = vadd.f32 0.0, %v1582
  %v1584 = vpop.f32.mrb[0].mxu0
  %v1585 = vadd.f32 0.0, %v1584
  %1586 = vmatprep.mubr.bf16.mxu0 0
  %1587 = vmatmul.mubr.bf16.gmra.mrb[0].mxu0 %v1481
  %v1588 = vpop.f32.mrb[0].mxu0
  %v1589 = vadd.f32 0.0, %v1588
  %v1590 = vpop.f32.mrb[0].mxu0
  %v1591 = vadd.f32 0.0, %v1590
  %v1592 = vpop.f32.mrb[0].mxu0
  %v1593 = vadd.f32 0.0, %v1592
  %v1594 = vpop.f32.mrb[0].mxu0
  %v1595 = vadd.f32 0.0, %v1594
  %1596 = vmatprep.mubr.bf16.mxu0 0
  %1597 = vmatmul.mubr.bf16.gmra.mrb[0].mxu0 %v1484
  %v1598 = vpop.f32.mrb[0].mxu0
  %v1599 = vadd.f32 0.0, %v1598
  %v1600 = vpop.f32.mrb[0].mxu0
  %v1601 = vadd.f32 0.0, %v1600
  %v1602 = vpop.f32.mrb[0].mxu0
  %v1603 = vadd.f32 0.0, %v1602
  %v1604 = vpop.f32.mrb[0].mxu0
  %v1605 = vadd.f32 0.0, %v1604
  %1606 = vmatprep.mubr.bf16.mxu0 0
  %1607 = vmatmul.mubr.bf16.gmra.mrb[0].mxu0 %v1487
  %v1608 = vpop.f32.mrb[0].mxu0
  %v1609 = vadd.f32 0.0, %v1608
  %v1610 = vpop.f32.mrb[0].mxu0
  %v1611 = vadd.f32 0.0, %v1610
  %v1612 = vpop.f32.mrb[0].mxu0
  %v1613 = vadd.f32 0.0, %v1612
  %v1614 = vpop.f32.mrb[0].mxu0
  %v1615 = vadd.f32 0.0, %v1614
  %1616 = vmatprep.mubr.bf16.mxu0 0
  %1617 = vmatmul.mubr.bf16.gmra.mrb[0].mxu0 %v1490
  %v1618 = vpop.f32.mrb[0].mxu0
  %v1619 = vadd.f32 0.0, %v1618
  %v1620 = vpop.f32.mrb[0].mxu0
  %v1621 = vadd.f32 0.0, %v1620
  %v1622 = vpop.f32.mrb[0].mxu0
  %v1623 = vadd.f32 0.0, %v1622
  %v1624 = vpop.f32.mrb[0].mxu0
  %v1625 = vadd.f32 0.0, %v1624
  %1626 = vmatprep.mubr.bf16.mxu0 0
  %1627 = vmatmul.mubr.bf16.gmra.mrb[0].mxu0 %v1493
  %v1628 = vpop.f32.mrb[0].mxu0
  %v1629 = vadd.f32 0.0, %v1628
  %v1630 = vpop.f32.mrb[0].mxu0
  %v1631 = vadd.f32 0.0, %v1630
  %v1632 = vpop.f32.mrb[0].mxu0
  %v1633 = vadd.f32 0.0, %v1632
  %v1634 = vpop.f32.mrb[0].mxu0
  %v1635 = vadd.f32 0.0, %v1634
  %1636 = vmatprep.mubr.bf16.mxu0 0
  %1637 = vmatmul.mubr.bf16.gmra.mrb[0].mxu0 %v1496
  %v1638 = vpop.f32.mrb[0].mxu0
  %v1639 = vadd.f32 0.0, %v1638
  %v1640 = vpop.f32.mrb[0].mxu0
  %v1641 = vadd.f32 0.0, %v1640
  %v1642 = vpop.f32.mrb[0].mxu0
  %v1643 = vadd.f32 0.0, %v1642
  %v1644 = vpop.f32.mrb[0].mxu0
  %v1645 = vadd.f32 0.0, %v1644
  %1646 = vmatprep.mubr.bf16.mxu0 0
  %1647 = vmatmul.mubr.bf16.gmra.mrb[0].mxu0 %v1499
  %v1648 = vpop.f32.mrb[0].mxu0
  %v1649 = vadd.f32 0.0, %v1648
  %v1650 = vpop.f32.mrb[0].mxu0
  %v1651 = vadd.f32 0.0, %v1650
  %v1652 = vpop.f32.mrb[0].mxu0
  %v1653 = vadd.f32 0.0, %v1652
  %v1654 = vpop.f32.mrb[0].mxu0
  %v1655 = vadd.f32 0.0, %v1654
  %1656 = vmatprep.mubr.bf16.mxu0 0
  %1657 = vmatmul.mubr.bf16.gmra.mrb[0].mxu0 %v1502
  %v1658 = vpop.f32.mrb[0].mxu0
  %v1659 = vadd.f32 0.0, %v1658
  %v1660 = vpop.f32.mrb[0].mxu0
  %v1661 = vadd.f32 0.0, %v1660
  %v1662 = vpop.f32.mrb[0].mxu0
  %v1663 = vadd.f32 0.0, %v1662
  %v1664 = vpop.f32.mrb[0].mxu0
  %v1665 = vadd.f32 0.0, %v1664
  %1666 = vmatprep.mubr.bf16.mxu0 0
  %1667 = vmatmul.mubr.bf16.gmra.mrb[0].mxu0 %v1505
  %v1668 = vpop.f32.mrb[0].mxu0
  %v1669 = vadd.f32 0.0, %v1668
  %v1670 = vpop.f32.mrb[0].mxu0
  %v1671 = vadd.f32 0.0, %v1670
  %v1672 = vpop.f32.mrb[0].mxu0
  %v1673 = vadd.f32 0.0, %v1672
  %v1674 = vpop.f32.mrb[0].mxu0
  %v1675 = vadd.f32 0.0, %v1674
  %1676 = vmatprep.mubr.bf16.mxu0 0
  %1677 = vmatmul.mubr.bf16.gmra.mrb[0].mxu0 %v1508
  %v1678 = vpop.f32.mrb[0].mxu0
  %v1679 = vadd.f32 0.0, %v1678
  %v1680 = vpop.f32.mrb[0].mxu0
  %v1681 = vadd.f32 0.0, %v1680
  %v1682 = vpop.f32.mrb[0].mxu0
  %v1683 = vadd.f32 0.0, %v1682
  %v1684 = vpop.f32.mrb[0].mxu0
  %v1685 = vadd.f32 0.0, %v1684
  %1686 = vmatprep.mubr.bf16.mxu0 0
  %1687 = vmatmul.mubr.bf16.gmra.mrb[0].mxu0 %v1511
  %v1688 = vpop.f32.mrb[0].mxu0
  %v1689 = vadd.f32 0.0, %v1688
  %v1690 = vpop.f32.mrb[0].mxu0
  %v1691 = vadd.f32 0.0, %v1690
  %v1692 = vpop.f32.mrb[0].mxu0
  %v1693 = vadd.f32 0.0, %v1692
  %v1694 = vpop.f32.mrb[0].mxu0
  %v1695 = vadd.f32 0.0, %v1694
  %1696 = vmatprep.mubr.bf16.mxu0 0
  %1697 = vmatmul.mubr.bf16.gmra.mrb[0].mxu0 %v1514
  %v1698 = vpop.f32.mrb[0].mxu0
  %v1699 = vadd.f32 0.0, %v1698
  %v1700 = vpop.f32.mrb[0].mxu0
  %v1701 = vadd.f32 0.0, %v1700
  %v1702 = vpop.f32.mrb[0].mxu0
  %v1703 = vadd.f32 0.0, %v1702
  %v1704 = vpop.f32.mrb[0].mxu0
  %v1705 = vadd.f32 0.0, %v1704
  %1706 = vmatprep.mubr.bf16.mxu0 0
  %1707 = vmatmul.mubr.bf16.gmra.mrb[0].mxu0 %v1517
  %v1708 = vpop.f32.mrb[0].mxu0
  %v1709 = vadd.f32 0.0, %v1708
  %v1710 = vpop.f32.mrb[0].mxu0
  %v1711 = vadd.f32 0.0, %v1710
  %v1712 = vpop.f32.mrb[0].mxu0
  %v1713 = vadd.f32 0.0, %v1712
  %v1714 = vpop.f32.mrb[0].mxu0
  %v1715 = vadd.f32 0.0, %v1714
  %1716 = vmatprep.mubr.bf16.mxu0 0
  %1717 = vmatmul.mubr.bf16.gmra.mrb[0].mxu0 %v1520
  %v1718 = vpop.f32.mrb[0].mxu0
  %v1719 = vadd.f32 0.0, %v1718
  %v1720 = vpop.f32.mrb[0].mxu0
  %v1721 = vadd.f32 0.0, %v1720
  %v1722 = vpop.f32.mrb[0].mxu0
  %v1723 = vadd.f32 0.0, %v1722
  %v1724 = vpop.f32.mrb[0].mxu0
  %v1725 = vadd.f32 0.0, %v1724
  %1726 = vmatprep.mubr.bf16.mxu0 0
  %1727 = vmatmul.mubr.bf16.gmra.mrb[0].mxu0 %v1523
  %v1728 = vpop.f32.mrb[0].mxu0
  %v1729 = vadd.f32 0.0, %v1728
  %v1730 = vpop.f32.mrb[0].mxu0
  %v1731 = vadd.f32 0.0, %v1730
  %v1732 = vpop.f32.mrb[0].mxu0
  %v1733 = vpop.f32.mrb[0].mxu0
  %1734 = vdwg.mxu0
  %1735 = vmatprep.subr.bf16.mxu0 0
  %1736 = vmatpush1.bf16.msra.mxu0 %v1449
  %1737 = vmatprep.subr.bf16.mxu0 0
  %1738 = vmatpush1.bf16.msra.mxu0 %v1452
  %1739 = vmatprep.subr.bf16.mxu0 0
  %1740 = vmatpush1.bf16.msra.mxu0 %v1455
  %1741 = vmatprep.subr.bf16.mxu0 0
  %1742 = vmatpush1.bf16.msra.mxu0 %v1458
  %1743 = vmatprep.subr.bf16.mxu0 0
  %1744 = vmatpush1.bf16.msra.mxu0 %v1532
  %1745 = vmatprep.subr.bf16.mxu0 0
  %1746 = vmatpush1.bf16.msra.mxu0 0
  %1747 = vmatprep.subr.bf16.mxu0 0
  %1748 = vmatpush1.bf16.msra.mxu0 0
  %1749 = vmatprep.subr.bf16.mxu0 0
  %1750 = vmatpush1.bf16.msra.mxu0 0
  %1751 = vmatprep.subr.bf16.mxu0 0
  %1752 = vmatpush1.bf16.msra.mxu0 0
  %1753 = vmatprep.subr.bf16.mxu0 0
  %1754 = vmatpush1.bf16.msra.mxu0 0
  %1755 = vmatprep.subr.bf16.mxu0 0
  %1756 = vmatpush1.bf16.msra.mxu0 0
  %1757 = vmatprep.subr.bf16.mxu0 0
  %1758 = vmatpush1.bf16.msra.mxu0 0
  %1759 = vmatprep.subr.bf16.mxu0 0
  %1760 = vmatpush1.bf16.msra.mxu0 0
  %1761 = vmatprep.subr.bf16.mxu0 0
  %1762 = vmatpush1.bf16.msra.mxu0 0
  %1763 = vmatprep.subr.bf16.mxu0 0
  %1764 = vmatpush1.bf16.msra.mxu0 0
  %1765 = vmatprep.subr.bf16.mxu0 0
  %1766 = vmatpush1.bf16.msra.mxu0 0
  %1767 = vmatprep.mubr.bf16.mxu0 0
  %1768 = vmatmul.mubr.bf16.gmra.mrb[0].mxu0 %v1475
  %v1769 = vpop.f32.mrb[0].mxu0
  %v1770 = vadd.f32 0.0, %v1769
  %v1771 = vpop.f32.mrb[0].mxu0
  %v1772 = vpop.f32.mrb[0].mxu0
  %v1773 = vadd.f32 0.0, %v1772
  %v1774 = vpop.f32.mrb[0].mxu0
  %1775 = vmatprep.mubr.bf16.mxu0 0
  %1776 = vmatmul.mubr.bf16.gmra.mrb[0].mxu0 %v1478
  %v1777 = vpop.f32.mrb[0].mxu0
  %v1778 = vadd.f32 0.0, %v1777
  %v1779 = vpop.f32.mrb[0].mxu0
  %v1780 = vpop.f32.mrb[0].mxu0
  %v1781 = vadd.f32 0.0, %v1780
  %v1782 = vpop.f32.mrb[0].mxu0
  %1783 = vmatprep.mubr.bf16.mxu0 0
  %1784 = vmatmul.mubr.bf16.gmra.mrb[0].mxu0 %v1481
  %v1785 = vpop.f32.mrb[0].mxu0
  %v1786 = vadd.f32 0.0, %v1785
  %v1787 = vpop.f32.mrb[0].mxu0
  %v1788 = vpop.f32.mrb[0].mxu0
  %v1789 = vadd.f32 0.0, %v1788
  %v1790 = vpop.f32.mrb[0].mxu0
  %1791 = vmatprep.mubr.bf16.mxu0 0
  %1792 = vmatmul.mubr.bf16.gmra.mrb[0].mxu0 %v1484
  %v1793 = vpop.f32.mrb[0].mxu0
  %v1794 = vadd.f32 0.0, %v1793
  %v1795 = vpop.f32.mrb[0].mxu0
  %v1796 = vpop.f32.mrb[0].mxu0
  %v1797 = vadd.f32 0.0, %v1796
  %v1798 = vpop.f32.mrb[0].mxu0
  %1799 = vmatprep.mubr.bf16.mxu0 0
  %1800 = vmatmul.mubr.bf16.gmra.mrb[0].mxu0 %v1487
  %v1801 = vpop.f32.mrb[0].mxu0
  %v1802 = vadd.f32 0.0, %v1801
  %v1803 = vpop.f32.mrb[0].mxu0
  %v1804 = vpop.f32.mrb[0].mxu0
  %v1805 = vadd.f32 0.0, %v1804
  %v1806 = vpop.f32.mrb[0].mxu0
  %1807 = vmatprep.mubr.bf16.mxu0 0
  %1808 = vmatmul.mubr.bf16.gmra.mrb[0].mxu0 %v1490
  %v1809 = vpop.f32.mrb[0].mxu0
  %v1810 = vadd.f32 0.0, %v1809
  %v1811 = vpop.f32.mrb[0].mxu0
  %v1812 = vpop.f32.mrb[0].mxu0
  %v1813 = vadd.f32 0.0, %v1812
  %v1814 = vpop.f32.mrb[0].mxu0
  %1815 = vmatprep.mubr.bf16.mxu0 0
  %1816 = vmatmul.mubr.bf16.gmra.mrb[0].mxu0 %v1493
  %v1817 = vpop.f32.mrb[0].mxu0
  %v1818 = vadd.f32 0.0, %v1817
  %v1819 = vpop.f32.mrb[0].mxu0
  %v1820 = vpop.f32.mrb[0].mxu0
  %v1821 = vadd.f32 0.0, %v1820
  %v1822 = vpop.f32.mrb[0].mxu0
  %1823 = vmatprep.mubr.bf16.mxu0 0
  %1824 = vmatmul.mubr.bf16.gmra.mrb[0].mxu0 %v1496
  %v1825 = vpop.f32.mrb[0].mxu0
  %v1826 = vadd.f32 0.0, %v1825
  %v1827 = vpop.f32.mrb[0].mxu0
  %v1828 = vpop.f32.mrb[0].mxu0
  %v1829 = vadd.f32 0.0, %v1828
  %v1830 = vpop.f32.mrb[0].mxu0
  %1831 = vmatprep.mubr.bf16.mxu0 0
  %1832 = vmatmul.mubr.bf16.gmra.mrb[0].mxu0 %v1499
  %v1833 = vpop.f32.mrb[0].mxu0
  %v1834 = vadd.f32 0.0, %v1833
  %v1835 = vpop.f32.mrb[0].mxu0
  %v1836 = vpop.f32.mrb[0].mxu0
  %v1837 = vadd.f32 0.0, %v1836
  %v1838 = vpop.f32.mrb[0].mxu0
  %1839 = vmatprep.mubr.bf16.mxu0 0
  %1840 = vmatmul.mubr.bf16.gmra.mrb[0].mxu0 %v1502
  %v1841 = vpop.f32.mrb[0].mxu0
  %v1842 = vadd.f32 0.0, %v1841
  %v1843 = vpop.f32.mrb[0].mxu0
  %v1844 = vpop.f32.mrb[0].mxu0
  %v1845 = vadd.f32 0.0, %v1844
  %v1846 = vpop.f32.mrb[0].mxu0
  %1847 = vmatprep.mubr.bf16.mxu0 0
  %1848 = vmatmul.mubr.bf16.gmra.mrb[0].mxu0 %v1505
  %v1849 = vpop.f32.mrb[0].mxu0
  %v1850 = vadd.f32 0.0, %v1849
  %v1851 = vpop.f32.mrb[0].mxu0
  %v1852 = vpop.f32.mrb[0].mxu0
  %v1853 = vadd.f32 0.0, %v1852
  %v1854 = vpop.f32.mrb[0].mxu0
  %1855 = vmatprep.mubr.bf16.mxu0 0
  %1856 = vmatmul.mubr.bf16.gmra.mrb[0].mxu0 %v1508
  %v1857 = vpop.f32.mrb[0].mxu0
  %v1858 = vadd.f32 0.0, %v1857
  %v1859 = vpop.f32.mrb[0].mxu0
  %v1860 = vpop.f32.mrb[0].mxu0
  %v1861 = vadd.f32 0.0, %v1860
  %v1862 = vpop.f32.mrb[0].mxu0
  %1863 = vmatprep.mubr.bf16.mxu0 0
  %1864 = vmatmul.mubr.bf16.gmra.mrb[0].mxu0 %v1511
  %v1865 = vpop.f32.mrb[0].mxu0
  %v1866 = vadd.f32 0.0, %v1865
  %v1867 = vpop.f32.mrb[0].mxu0
  %v1868 = vpop.f32.mrb[0].mxu0
  %v1869 = vadd.f32 0.0, %v1868
  %v1870 = vpop.f32.mrb[0].mxu0
  %1871 = vmatprep.mubr.bf16.mxu0 0
  %1872 = vmatmul.mubr.bf16.gmra.mrb[0].mxu0 %v1514
  %v1873 = vpop.f32.mrb[0].mxu0
  %v1874 = vadd.f32 0.0, %v1873
  %v1875 = vpop.f32.mrb[0].mxu0
  %v1876 = vpop.f32.mrb[0].mxu0
  %v1877 = vadd.f32 0.0, %v1876
  %v1878 = vpop.f32.mrb[0].mxu0
  %1879 = vmatprep.mubr.bf16.mxu0 0
  %1880 = vmatmul.mubr.bf16.gmra.mrb[0].mxu0 %v1517
  %v1881 = vpop.f32.mrb[0].mxu0
  %v1882 = vadd.f32 0.0, %v1881
  %v1883 = vpop.f32.mrb[0].mxu0
  %v1884 = vpop.f32.mrb[0].mxu0
  %v1885 = vadd.f32 0.0, %v1884
  %v1886 = vpop.f32.mrb[0].mxu0
  %1887 = vmatprep.mubr.bf16.mxu0 0
  %1888 = vmatmul.mubr.bf16.gmra.mrb[0].mxu0 %v1520
  %v1889 = vpop.f32.mrb[0].mxu0
  %v1890 = vadd.f32 0.0, %v1889
  %v1891 = vpop.f32.mrb[0].mxu0
  %v1892 = vpop.f32.mrb[0].mxu0
  %v1893 = vadd.f32 0.0, %v1892
  %v1894 = vpop.f32.mrb[0].mxu0
  %1895 = vmatprep.mubr.bf16.mxu0 0
  %1896 = vmatmul.mubr.bf16.gmra.mrb[0].mxu0 %v1523
  %v1897 = vpop.f32.mrb[0].mxu0
  %v1898 = vadd.f32 0.0, %v1897
  %v1899 = vpop.f32.mrb[0].mxu0
  %v1900 = vpop.f32.mrb[0].mxu0
  %v1901 = vpop.f32.mrb[0].mxu0
  %1902 = vdwg.mxu0
  %v1903 = vadd.f32 %v926, %v1569
  %v1904 = vadd.f32 %v928, %v1571
  %v1905 = vadd.f32 %v1127, %v1770
  %v1906 = vadd.f32 %v930, %v1573
  %v1907 = vadd.f32 %v932, %v1575
  %v1908 = vadd.f32 %v1130, %v1773
  %v1909 = vadd.f32 %v936, %v1579
  %v1910 = vadd.f32 %v938, %v1581
  %v1911 = vadd.f32 %v1135, %v1778
  %v1912 = vadd.f32 %v940, %v1583
  %v1913 = vadd.f32 %v942, %v1585
  %v1914 = vadd.f32 %v1138, %v1781
  %v1915 = vadd.f32 %v946, %v1589
  %v1916 = vadd.f32 %v948, %v1591
  %v1917 = vadd.f32 %v1143, %v1786
  %v1918 = vadd.f32 %v950, %v1593
  %v1919 = vadd.f32 %v952, %v1595
  %v1920 = vadd.f32 %v1146, %v1789
  %v1921 = vadd.f32 %v956, %v1599
  %v1922 = vadd.f32 %v958, %v1601
  %v1923 = vadd.f32 %v1151, %v1794
  %v1924 = vadd.f32 %v960, %v1603
  %v1925 = vadd.f32 %v962, %v1605
  %v1926 = vadd.f32 %v1154, %v1797
  %v1927 = vadd.f32 %v966, %v1609
  %v1928 = vadd.f32 %v968, %v1611
  %v1929 = vadd.f32 %v1159, %v1802
  %v1930 = vadd.f32 %v970, %v1613
  %v1931 = vadd.f32 %v972, %v1615
  %v1932 = vadd.f32 %v1162, %v1805
  %v1933 = vadd.f32 %v976, %v1619
  %v1934 = vadd.f32 %v978, %v1621
  %v1935 = vadd.f32 %v1167, %v1810
  %v1936 = vadd.f32 %v980, %v1623
  %v1937 = vadd.f32 %v982, %v1625
  %v1938 = vadd.f32 %v1170, %v1813
  %v1939 = vadd.f32 %v986, %v1629
  %v1940 = vadd.f32 %v988, %v1631
  %v1941 = vadd.f32 %v1175, %v1818
  %v1942 = vadd.f32 %v990, %v1633
  %v1943 = vadd.f32 %v992, %v1635
  %v1944 = vadd.f32 %v1178, %v1821
  %v1945 = vadd.f32 %v996, %v1639
  %v1946 = vadd.f32 %v998, %v1641
  %v1947 = vadd.f32 %v1183, %v1826
  %v1948 = vadd.f32 %v1000, %v1643
  %v1949 = vadd.f32 %v1002, %v1645
  %v1950 = vadd.f32 %v1186, %v1829
  %v1951 = vadd.f32 %v1006, %v1649
  %v1952 = vadd.f32 %v1008, %v1651
  %v1953 = vadd.f32 %v1191, %v1834
  %v1954 = vadd.f32 %v1010, %v1653
  %v1955 = vadd.f32 %v1012, %v1655
  %v1956 = vadd.f32 %v1194, %v1837
  %v1957 = vadd.f32 %v1016, %v1659
  %v1958 = vadd.f32 %v1018, %v1661
  %v1959 = vadd.f32 %v1199, %v1842
  %v1960 = vadd.f32 %v1020, %v1663
  %v1961 = vadd.f32 %v1022, %v1665
  %v1962 = vadd.f32 %v1202, %v1845
  %v1963 = vadd.f32 %v1026, %v1669
  %v1964 = vadd.f32 %v1028, %v1671
  %v1965 = vadd.f32 %v1207, %v1850
  %v1966 = vadd.f32 %v1030, %v1673
  %v1967 = vadd.f32 %v1032, %v1675
  %v1968 = vadd.f32 %v1210, %v1853
  %v1969 = vadd.f32 %v1036, %v1679
  %v1970 = vadd.f32 %v1038, %v1681
  %v1971 = vadd.f32 %v1215, %v1858
  %v1972 = vadd.f32 %v1040, %v1683
  %v1973 = vadd.f32 %v1042, %v1685
  %v1974 = vadd.f32 %v1218, %v1861
  %v1975 = vadd.f32 %v1046, %v1689
  %v1976 = vadd.f32 %v1048, %v1691
  %v1977 = vadd.f32 %v1223, %v1866
  %v1978 = vadd.f32 %v1050, %v1693
  %v1979 = vadd.f32 %v1052, %v1695
  %v1980 = vadd.f32 %v1226, %v1869
  %v1981 = vadd.f32 %v1056, %v1699
  %v1982 = vadd.f32 %v1058, %v1701
  %v1983 = vadd.f32 %v1231, %v1874
  %v1984 = vadd.f32 %v1060, %v1703
  %v1985 = vadd.f32 %v1062, %v1705
  %v1986 = vadd.f32 %v1234, %v1877
  %v1987 = vadd.f32 %v1066, %v1709
  %v1988 = vadd.f32 %v1068, %v1711
  %v1989 = vadd.f32 %v1239, %v1882
  %v1990 = vadd.f32 %v1070, %v1713
  %v1991 = vadd.f32 %v1072, %v1715
  %v1992 = vadd.f32 %v1242, %v1885
  %v1993 = vadd.f32 %v1076, %v1719
  %v1994 = vadd.f32 %v1078, %v1721
  %v1995 = vadd.f32 %v1247, %v1890
  %v1996 = vadd.f32 %v1080, %v1723
  %v1997 = vadd.f32 %v1082, %v1725
  %v1998 = vadd.f32 %v1250, %v1893
  %v1999 = vadd.f32 %v1086, %v1729
  %v2000 = vadd.f32 %v1088, %v1731
  %v2001 = vadd.f32 %v1255, %v1898
  %v2002 = vmax.f32 %v1903, %v1936
  %v2003 = vmax.f32 %v1904, %v1937
  %v2004 = vmax.f32 %v1905, %v1938
  %v2005 = vmax.f32 %v1906, %v1939
  %v2006 = vmax.f32 %v1907, %v1940
  %v2007 = vmax.f32 %v1908, %v1941
  %v2008 = vmax.f32 %v1909, %v1942
  %v2009 = vmax.f32 %v1910, %v1943
  %v2010 = vmax.f32 %v1911, %v1944
  %v2011 = vmax.f32 %v1912, %v1945
  %v2012 = vmax.f32 %v1913, %v1946
  %v2013 = vmax.f32 %v1914, %v1947
  %v2014 = vmax.f32 %v1915, %v1948
  %v2015 = vmax.f32 %v1916, %v1949
  %v2016 = vmax.f32 %v1917, %v1950
  %v2017 = vmax.f32 %v1918, %v1951
  %v2018 = vmax.f32 %v1919, %v1952
  %v2019 = vmax.f32 %v1920, %v1953
  %v2020 = vmax.f32 %v1921, %v1954
  %v2021 = vmax.f32 %v1922, %v1955
  %v2022 = vmax.f32 %v1923, %v1956
  %v2023 = vmax.f32 %v1924, %v1957
  %v2024 = vmax.f32 %v1925, %v1958
  %v2025 = vmax.f32 %v1926, %v1959
  %v2026 = vmax.f32 %v1927, %v1960
  %v2027 = vmax.f32 %v1928, %v1961
  %v2028 = vmax.f32 %v1929, %v1962
  %v2029 = vmax.f32 %v1930, %v1963
  %v2030 = vmax.f32 %v1931, %v1964
  %v2031 = vmax.f32 %v1932, %v1965
  %v2032 = vmax.f32 %v1933, %v1966
  %v2033 = vmax.f32 %v1934, %v1967
  %v2034 = vmax.f32 %v1935, %v1968
  %v2035 = vmax.f32 %v2002, %v1969
  %v2036 = vmax.f32 %v2003, %v1970
  %v2037 = vmax.f32 %v2004, %v1971
  %v2038 = vmax.f32 %v2005, %v1972
  %v2039 = vmax.f32 %v2006, %v1973
  %v2040 = vmax.f32 %v2007, %v1974
  %v2041 = vmax.f32 %v2008, %v1975
  %v2042 = vmax.f32 %v2009, %v1976
  %v2043 = vmax.f32 %v2010, %v1977
  %v2044 = vmax.f32 %v2011, %v1978
  %v2045 = vmax.f32 %v2012, %v1979
  %v2046 = vmax.f32 %v2013, %v1980
  %v2047 = vmax.f32 %v2014, %v1981
  %v2048 = vmax.f32 %v2015, %v1982
  %v2049 = vmax.f32 %v2016, %v1983
  %v2050 = vmax.f32 %v2017, %v1984
  %v2051 = vmax.f32 %v2018, %v1985
  %v2052 = vmax.f32 %v2019, %v1986
  %v2053 = vmax.f32 %v2020, %v1987
  %v2054 = vmax.f32 %v2021, %v1988
  %v2055 = vmax.f32 %v2022, %v1989
  %v2056 = vmax.f32 %v2023, %v1990
  %v2057 = vmax.f32 %v2024, %v1991
  %v2058 = vmax.f32 %v2025, %v1992
  %v2059 = vmax.f32 %v2026, %v1993
  %v2060 = vmax.f32 %v2027, %v1994
  %v2061 = vmax.f32 %v2028, %v1995
  %v2062 = vmax.f32 %v2029, %v1996
  %v2063 = vmax.f32 %v2030, %v1997
  %v2064 = vmax.f32 %v2031, %v1998
  %v2065 = vmax.f32 %v2032, %v1999
  %v2066 = vmax.f32 %v2033, %v2000
  %v2067 = vmax.f32 %v2034, %v2001
  %s2068 = scalar_lea.vmem %s1, 360
  %v2069 = vld [vmem:[%s2068] sm:$0xff]
  %v2070 = vld [vmem:[%s2068 + $0x8] sm:$0xf]
  %v2071 = vld [vmem:[%s2068 + $0xc] sm:$0xff]
  %v2072 = vld [vmem:[%s2068 + $0x14] sm:$0xf]
  %v2073 = vld [vmem:[%s2068 + $0x18] sm:$0xff]
  %v2074 = vld [vmem:[%s2068 + $0x20] sm:$0xf]
  %v2075 = vld [vmem:[%s2068 + $0x24] sm:$0xff]
  %v2076 = vld [vmem:[%s2068 + $0x2c] sm:$0xf]
  %v2077 = vld [vmem:[%s2068 + $0x30] sm:$0xff]
  %v2078 = vld [vmem:[%s2068 + $0x38] sm:$0xf]
  %v2079 = vld [vmem:[%s2068 + $0x3c] sm:$0xff]
  %v2080 = vld [vmem:[%s2068 + $0x44] sm:$0xf]
  %v2081 = vld [vmem:[%s2068 + $0x48] sm:$0xff]
  %v2082 = vld [vmem:[%s2068 + $0x50] sm:$0xf]
  %v2083 = vld [vmem:[%s2068 + $0x54] sm:$0xff]
  %v2084 = vld [vmem:[%s2068 + $0x5c] sm:$0xf]
  %v2085 = vld [vmem:[%s2068 + $0x60] sm:$0xff]
  %v2086 = vld [vmem:[%s2068 + $0x68] sm:$0xf]
  %v2087 = vld [vmem:[%s2068 + $0x6c] sm:$0x77]
  %v2088 = vld [vmem:[%s2068 + $0x74] sm:$0x7]
  %s2089 = scalar_lea.vmem %s1, 480
  %v2090 = vld [vmem:[%s2089] sm:$0xff]
  %v2091 = vld [vmem:[%s2089 + $0x8] sm:$0xf]
  %v2092 = vld [vmem:[%s2089 + $0xc] sm:$0xff]
  %v2093 = vld [vmem:[%s2089 + $0x14] sm:$0xf]
  %v2094 = vld [vmem:[%s2089 + $0x18] sm:$0xff]
  %v2095 = vld [vmem:[%s2089 + $0x20] sm:$0xf]
  %v2096 = vld [vmem:[%s2089 + $0x24] sm:$0xff]
  %v2097 = vld [vmem:[%s2089 + $0x2c] sm:$0xf]
  %v2098 = vld [vmem:[%s2089 + $0x30] sm:$0xff]
  %v2099 = vld [vmem:[%s2089 + $0x38] sm:$0xf]
  %v2100 = vld [vmem:[%s2089 + $0x3c] sm:$0xff]
  %v2101 = vld [vmem:[%s2089 + $0x44] sm:$0xf]
  %v2102 = vld [vmem:[%s2089 + $0x48] sm:$0xff]
  %v2103 = vld [vmem:[%s2089 + $0x50] sm:$0xf]
  %v2104 = vld [vmem:[%s2089 + $0x54] sm:$0xff]
  %v2105 = vld [vmem:[%s2089 + $0x5c] sm:$0xf]
  %v2106 = vld [vmem:[%s2089 + $0x60] sm:$0xff]
  %v2107 = vld [vmem:[%s2089 + $0x68] sm:$0xf]
  %v2108 = vld [vmem:[%s2089 + $0x6c] sm:$0x77]
  %v2109 = vld [vmem:[%s2089 + $0x74] sm:$0x7]
  %v2130 = vunpack.c.l.b16 %v2090
  %v2131 = vunpack.c.h.b16 %v2090
  %v2132 = vunpack.c.l.b16 %v2091
  %v2133 = vunpack.c.l.b16 %v2092
  %v2134 = vunpack.c.h.b16 %v2092
  %v2135 = vunpack.c.l.b16 %v2093
  %v2136 = vunpack.c.l.b16 %v2094
  %v2137 = vunpack.c.h.b16 %v2094
  %v2138 = vunpack.c.l.b16 %v2095
  %v2139 = vunpack.c.l.b16 %v2096
  %v2140 = vunpack.c.h.b16 %v2096
  %v2141 = vunpack.c.l.b16 %v2097
  %v2142 = vunpack.c.l.b16 %v2098
  %v2143 = vunpack.c.h.b16 %v2098
  %v2144 = vunpack.c.l.b16 %v2099
  %v2145 = vunpack.c.l.b16 %v2100
  %v2146 = vunpack.c.h.b16 %v2100
  %v2147 = vunpack.c.l.b16 %v2101
  %v2148 = vunpack.c.l.b16 %v2102
  %v2149 = vunpack.c.h.b16 %v2102
  %v2150 = vunpack.c.l.b16 %v2103
  %v2151 = vunpack.c.l.b16 %v2104
  %v2152 = vunpack.c.h.b16 %v2104
  %v2153 = vunpack.c.l.b16 %v2105
  %v2154 = vunpack.c.l.b16 %v2106
  %v2155 = vunpack.c.h.b16 %v2106
  %v2156 = vunpack.c.l.b16 %v2107
  %v2157 = vunpack.c.l.b16 %v2108
  %v2158 = vunpack.c.h.b16 %v2108
  %v2159 = vunpack.c.l.b16 %v2109
  %v2160 = vpack.c.b16 %v2133, %v2130
  %v2161 = vpack.c.b16 %v2134, %v2131
  %v2162 = vpack.c.b16 %v2135, %v2132
  %v2163 = vpack.c.b16 %v2139, %v2136
  %v2164 = vpack.c.b16 %v2140, %v2137
  %v2165 = vpack.c.b16 %v2141, %v2138
  %v2166 = vpack.c.b16 %v2145, %v2142
  %v2167 = vpack.c.b16 %v2146, %v2143
  %v2168 = vpack.c.b16 %v2147, %v2144
  %v2169 = vpack.c.b16 %v2151, %v2148
  %v2170 = vpack.c.b16 %v2152, %v2149
  %v2171 = vpack.c.b16 %v2153, %v2150
  %v2172 = vpack.c.b16 %v2157, %v2154
  %v2173 = vpack.c.b16 %v2158, %v2155
  %v2174 = vpack.c.b16 %v2159, %v2156
  %v2188 = vsel %vm336, %v2172, 0
  %v2191 = vsel %vm336, %v2173, 0
  %v2194 = vsel %vm336, %v2174, 0
  %2196 = vmatprep.subr.bf16.mxu0 %v2161
  %2197 = vmatpush1.bf16.msra.mxu0 %v2160
  %2198 = vmatprep.subr.bf16.mxu0 %v2164
  %2199 = vmatpush1.bf16.msra.mxu0 %v2163
  %2200 = vmatprep.subr.bf16.mxu0 %v2167
  %2201 = vmatpush1.bf16.msra.mxu0 %v2166
  %2202 = vmatprep.subr.bf16.mxu0 %v2170
  %2203 = vmatpush1.bf16.msra.mxu0 %v2169
  %2204 = vmatprep.subr.bf16.mxu0 %v2191
  %2205 = vmatpush1.bf16.msra.mxu0 %v2188
  %2206 = vmatprep.subr.bf16.mxu0 0
  %2207 = vmatpush1.bf16.msra.mxu0 0
  %2208 = vmatprep.subr.bf16.mxu0 0
  %2209 = vmatpush1.bf16.msra.mxu0 0
  %2210 = vmatprep.subr.bf16.mxu0 0
  %2211 = vmatpush1.bf16.msra.mxu0 0
  %2212 = vmatprep.subr.bf16.mxu0 0
  %2213 = vmatpush1.bf16.msra.mxu0 0
  %2214 = vmatprep.subr.bf16.mxu0 0
  %2215 = vmatpush1.bf16.msra.mxu0 0
  %2216 = vmatprep.subr.bf16.mxu0 0
  %2217 = vmatpush1.bf16.msra.mxu0 0
  %2218 = vmatprep.subr.bf16.mxu0 0
  %2219 = vmatpush1.bf16.msra.mxu0 0
  %2220 = vmatprep.subr.bf16.mxu0 0
  %2221 = vmatpush1.bf16.msra.mxu0 0
  %2222 = vmatprep.subr.bf16.mxu0 0
  %2223 = vmatpush1.bf16.msra.mxu0 0
  %2224 = vmatprep.subr.bf16.mxu0 0
  %2225 = vmatpush1.bf16.msra.mxu0 0
  %2226 = vmatprep.subr.bf16.mxu0 0
  %2227 = vmatpush1.bf16.msra.mxu0 0
  %2228 = vmatprep.mubr.bf16.mxu0 0
  %2229 = vmatmul.mubr.bf16.gmra.mrb[0].mxu0 %v286
  %v2230 = vpop.f32.mrb[0].mxu0
  %v2231 = vadd.f32 0.0, %v2230
  %v2232 = vpop.f32.mrb[0].mxu0
  %v2233 = vadd.f32 0.0, %v2232
  %v2234 = vpop.f32.mrb[0].mxu0
  %v2235 = vadd.f32 0.0, %v2234
  %v2236 = vpop.f32.mrb[0].mxu0
  %v2237 = vadd.f32 0.0, %v2236
  %2238 = vmatprep.mubr.bf16.mxu0 0
  %2239 = vmatmul.mubr.bf16.gmra.mrb[0].mxu0 %v289
  %v2240 = vpop.f32.mrb[0].mxu0
  %v2241 = vadd.f32 0.0, %v2240
  %v2242 = vpop.f32.mrb[0].mxu0
  %v2243 = vadd.f32 0.0, %v2242
  %v2244 = vpop.f32.mrb[0].mxu0
  %v2245 = vadd.f32 0.0, %v2244
  %v2246 = vpop.f32.mrb[0].mxu0
  %v2247 = vadd.f32 0.0, %v2246
  %2248 = vmatprep.mubr.bf16.mxu0 0
  %2249 = vmatmul.mubr.bf16.gmra.mrb[0].mxu0 %v292
  %v2250 = vpop.f32.mrb[0].mxu0
  %v2251 = vadd.f32 0.0, %v2250
  %v2252 = vpop.f32.mrb[0].mxu0
  %v2253 = vadd.f32 0.0, %v2252
  %v2254 = vpop.f32.mrb[0].mxu0
  %v2255 = vadd.f32 0.0, %v2254
  %v2256 = vpop.f32.mrb[0].mxu0
  %v2257 = vadd.f32 0.0, %v2256
  %2258 = vmatprep.mubr.bf16.mxu0 0
  %2259 = vmatmul.mubr.bf16.gmra.mrb[0].mxu0 %v295
  %v2260 = vpop.f32.mrb[0].mxu0
  %v2261 = vadd.f32 0.0, %v2260
  %v2262 = vpop.f32.mrb[0].mxu0
  %v2263 = vadd.f32 0.0, %v2262
  %v2264 = vpop.f32.mrb[0].mxu0
  %v2265 = vadd.f32 0.0, %v2264
  %v2266 = vpop.f32.mrb[0].mxu0
  %v2267 = vadd.f32 0.0, %v2266
  %2268 = vmatprep.mubr.bf16.mxu0 0
  %2269 = vmatmul.mubr.bf16.gmra.mrb[0].mxu0 %v298
  %v2270 = vpop.f32.mrb[0].mxu0
  %v2271 = vadd.f32 0.0, %v2270
  %v2272 = vpop.f32.mrb[0].mxu0
  %v2273 = vadd.f32 0.0, %v2272
  %v2274 = vpop.f32.mrb[0].mxu0
  %v2275 = vadd.f32 0.0, %v2274
  %v2276 = vpop.f32.mrb[0].mxu0
  %v2277 = vadd.f32 0.0, %v2276
  %2278 = vmatprep.mubr.bf16.mxu0 0
  %2279 = vmatmul.mubr.bf16.gmra.mrb[0].mxu0 %v301
  %v2280 = vpop.f32.mrb[0].mxu0
  %v2281 = vadd.f32 0.0, %v2280
  %v2282 = vpop.f32.mrb[0].mxu0
  %v2283 = vadd.f32 0.0, %v2282
  %v2284 = vpop.f32.mrb[0].mxu0
  %v2285 = vadd.f32 0.0, %v2284
  %v2286 = vpop.f32.mrb[0].mxu0
  %v2287 = vadd.f32 0.0, %v2286
  %2288 = vmatprep.mubr.bf16.mxu0 0
  %2289 = vmatmul.mubr.bf16.gmra.mrb[0].mxu0 %v304
  %v2290 = vpop.f32.mrb[0].mxu0
  %v2291 = vadd.f32 0.0, %v2290
  %v2292 = vpop.f32.mrb[0].mxu0
  %v2293 = vadd.f32 0.0, %v2292
  %v2294 = vpop.f32.mrb[0].mxu0
  %v2295 = vadd.f32 0.0, %v2294
  %v2296 = vpop.f32.mrb[0].mxu0
  %v2297 = vadd.f32 0.0, %v2296
  %2298 = vmatprep.mubr.bf16.mxu0 0
  %2299 = vmatmul.mubr.bf16.gmra.mrb[0].mxu0 %v307
  %v2300 = vpop.f32.mrb[0].mxu0
  %v2301 = vadd.f32 0.0, %v2300
  %v2302 = vpop.f32.mrb[0].mxu0
  %v2303 = vadd.f32 0.0, %v2302
  %v2304 = vpop.f32.mrb[0].mxu0
  %v2305 = vadd.f32 0.0, %v2304
  %v2306 = vpop.f32.mrb[0].mxu0
  %v2307 = vadd.f32 0.0, %v2306
  %2308 = vmatprep.mubr.bf16.mxu0 0
  %2309 = vmatmul.mubr.bf16.gmra.mrb[0].mxu0 %v310
  %v2310 = vpop.f32.mrb[0].mxu0
  %v2311 = vadd.f32 0.0, %v2310
  %v2312 = vpop.f32.mrb[0].mxu0
  %v2313 = vadd.f32 0.0, %v2312
  %v2314 = vpop.f32.mrb[0].mxu0
  %v2315 = vadd.f32 0.0, %v2314
  %v2316 = vpop.f32.mrb[0].mxu0
  %v2317 = vadd.f32 0.0, %v2316
  %2318 = vmatprep.mubr.bf16.mxu0 0
  %2319 = vmatmul.mubr.bf16.gmra.mrb[0].mxu0 %v313
  %v2320 = vpop.f32.mrb[0].mxu0
  %v2321 = vadd.f32 0.0, %v2320
  %v2322 = vpop.f32.mrb[0].mxu0
  %v2323 = vadd.f32 0.0, %v2322
  %v2324 = vpop.f32.mrb[0].mxu0
  %v2325 = vadd.f32 0.0, %v2324
  %v2326 = vpop.f32.mrb[0].mxu0
  %v2327 = vadd.f32 0.0, %v2326
  %2328 = vmatprep.mubr.bf16.mxu0 0
  %2329 = vmatmul.mubr.bf16.gmra.mrb[0].mxu0 %v316
  %v2330 = vpop.f32.mrb[0].mxu0
  %v2331 = vadd.f32 0.0, %v2330
  %v2332 = vpop.f32.mrb[0].mxu0
  %v2333 = vadd.f32 0.0, %v2332
  %v2334 = vpop.f32.mrb[0].mxu0
  %v2335 = vadd.f32 0.0, %v2334
  %v2336 = vpop.f32.mrb[0].mxu0
  %v2337 = vadd.f32 0.0, %v2336
  %2338 = vmatprep.mubr.bf16.mxu0 0
  %2339 = vmatmul.mubr.bf16.gmra.mrb[0].mxu0 %v319
  %v2340 = vpop.f32.mrb[0].mxu0
  %v2341 = vadd.f32 0.0, %v2340
  %v2342 = vpop.f32.mrb[0].mxu0
  %v2343 = vadd.f32 0.0, %v2342
  %v2344 = vpop.f32.mrb[0].mxu0
  %v2345 = vadd.f32 0.0, %v2344
  %v2346 = vpop.f32.mrb[0].mxu0
  %v2347 = vadd.f32 0.0, %v2346
  %2348 = vmatprep.mubr.bf16.mxu0 0
  %2349 = vmatmul.mubr.bf16.gmra.mrb[0].mxu0 %v322
  %v2350 = vpop.f32.mrb[0].mxu0
  %v2351 = vadd.f32 0.0, %v2350
  %v2352 = vpop.f32.mrb[0].mxu0
  %v2353 = vadd.f32 0.0, %v2352
  %v2354 = vpop.f32.mrb[0].mxu0
  %v2355 = vadd.f32 0.0, %v2354
  %v2356 = vpop.f32.mrb[0].mxu0
  %v2357 = vadd.f32 0.0, %v2356
  %2358 = vmatprep.mubr.bf16.mxu0 0
  %2359 = vmatmul.mubr.bf16.gmra.mrb[0].mxu0 %v325
  %v2360 = vpop.f32.mrb[0].mxu0
  %v2361 = vadd.f32 0.0, %v2360
  %v2362 = vpop.f32.mrb[0].mxu0
  %v2363 = vadd.f32 0.0, %v2362
  %v2364 = vpop.f32.mrb[0].mxu0
  %v2365 = vadd.f32 0.0, %v2364
  %v2366 = vpop.f32.mrb[0].mxu0
  %v2367 = vadd.f32 0.0, %v2366
  %2368 = vmatprep.mubr.bf16.mxu0 0
  %2369 = vmatmul.mubr.bf16.gmra.mrb[0].mxu0 %v328
  %v2370 = vpop.f32.mrb[0].mxu0
  %v2371 = vadd.f32 0.0, %v2370
  %v2372 = vpop.f32.mrb[0].mxu0
  %v2373 = vadd.f32 0.0, %v2372
  %v2374 = vpop.f32.mrb[0].mxu0
  %v2375 = vadd.f32 0.0, %v2374
  %v2376 = vpop.f32.mrb[0].mxu0
  %v2377 = vadd.f32 0.0, %v2376
  %2378 = vmatprep.mubr.bf16.mxu0 0
  %2379 = vmatmul.mubr.bf16.gmra.mrb[0].mxu0 %v331
  %v2380 = vpop.f32.mrb[0].mxu0
  %v2381 = vadd.f32 0.0, %v2380
  %v2382 = vpop.f32.mrb[0].mxu0
  %v2383 = vadd.f32 0.0, %v2382
  %v2384 = vpop.f32.mrb[0].mxu0
  %v2385 = vadd.f32 0.0, %v2384
  %v2386 = vpop.f32.mrb[0].mxu0
  %v2387 = vadd.f32 0.0, %v2386
  %2388 = vmatprep.mubr.bf16.mxu0 0
  %2389 = vmatmul.mubr.bf16.gmra.mrb[0].mxu0 %v334
  %v2390 = vpop.f32.mrb[0].mxu0
  %v2391 = vadd.f32 0.0, %v2390
  %v2392 = vpop.f32.mrb[0].mxu0
  %v2393 = vadd.f32 0.0, %v2392
  %v2394 = vpop.f32.mrb[0].mxu0
  %v2395 = vpop.f32.mrb[0].mxu0
  %2396 = vdwg.mxu0
  %2397 = vmatprep.subr.bf16.mxu0 0
  %2398 = vmatpush1.bf16.msra.mxu0 %v2162
  %2399 = vmatprep.subr.bf16.mxu0 0
  %2400 = vmatpush1.bf16.msra.mxu0 %v2165
  %2401 = vmatprep.subr.bf16.mxu0 0
  %2402 = vmatpush1.bf16.msra.mxu0 %v2168
  %2403 = vmatprep.subr.bf16.mxu0 0
  %2404 = vmatpush1.bf16.msra.mxu0 %v2171
  %2405 = vmatprep.subr.bf16.mxu0 0
  %2406 = vmatpush1.bf16.msra.mxu0 %v2194
  %2407 = vmatprep.subr.bf16.mxu0 0
  %2408 = vmatpush1.bf16.msra.mxu0 0
  %2409 = vmatprep.subr.bf16.mxu0 0
  %2410 = vmatpush1.bf16.msra.mxu0 0
  %2411 = vmatprep.subr.bf16.mxu0 0
  %2412 = vmatpush1.bf16.msra.mxu0 0
  %2413 = vmatprep.subr.bf16.mxu0 0
  %2414 = vmatpush1.bf16.msra.mxu0 0
  %2415 = vmatprep.subr.bf16.mxu0 0
  %2416 = vmatpush1.bf16.msra.mxu0 0
  %2417 = vmatprep.subr.bf16.mxu0 0
  %2418 = vmatpush1.bf16.msra.mxu0 0
  %2419 = vmatprep.subr.bf16.mxu0 0
  %2420 = vmatpush1.bf16.msra.mxu0 0
  %2421 = vmatprep.subr.bf16.mxu0 0
  %2422 = vmatpush1.bf16.msra.mxu0 0
  %2423 = vmatprep.subr.bf16.mxu0 0
  %2424 = vmatpush1.bf16.msra.mxu0 0
  %2425 = vmatprep.subr.bf16.mxu0 0
  %2426 = vmatpush1.bf16.msra.mxu0 0
  %2427 = vmatprep.subr.bf16.mxu0 0
  %2428 = vmatpush1.bf16.msra.mxu0 0
  %2429 = vmatprep.mubr.bf16.mxu0 0
  %2430 = vmatmul.mubr.bf16.gmra.mrb[0].mxu0 %v286
  %v2431 = vpop.f32.mrb[0].mxu0
  %v2432 = vadd.f32 0.0, %v2431
  %v2433 = vpop.f32.mrb[0].mxu0
  %v2434 = vpop.f32.mrb[0].mxu0
  %v2435 = vadd.f32 0.0, %v2434
  %v2436 = vpop.f32.mrb[0].mxu0
  %2437 = vmatprep.mubr.bf16.mxu0 0
  %2438 = vmatmul.mubr.bf16.gmra.mrb[0].mxu0 %v289
  %v2439 = vpop.f32.mrb[0].mxu0
  %v2440 = vadd.f32 0.0, %v2439
  %v2441 = vpop.f32.mrb[0].mxu0
  %v2442 = vpop.f32.mrb[0].mxu0
  %v2443 = vadd.f32 0.0, %v2442
  %v2444 = vpop.f32.mrb[0].mxu0
  %2445 = vmatprep.mubr.bf16.mxu0 0
  %2446 = vmatmul.mubr.bf16.gmra.mrb[0].mxu0 %v292
  %v2447 = vpop.f32.mrb[0].mxu0
  %v2448 = vadd.f32 0.0, %v2447
  %v2449 = vpop.f32.mrb[0].mxu0
  %v2450 = vpop.f32.mrb[0].mxu0
  %v2451 = vadd.f32 0.0, %v2450
  %v2452 = vpop.f32.mrb[0].mxu0
  %2453 = vmatprep.mubr.bf16.mxu0 0
  %2454 = vmatmul.mubr.bf16.gmra.mrb[0].mxu0 %v295
  %v2455 = vpop.f32.mrb[0].mxu0
  %v2456 = vadd.f32 0.0, %v2455
  %v2457 = vpop.f32.mrb[0].mxu0
  %v2458 = vpop.f32.mrb[0].mxu0
  %v2459 = vadd.f32 0.0, %v2458
  %v2460 = vpop.f32.mrb[0].mxu0
  %2461 = vmatprep.mubr.bf16.mxu0 0
  %2462 = vmatmul.mubr.bf16.gmra.mrb[0].mxu0 %v298
  %v2463 = vpop.f32.mrb[0].mxu0
  %v2464 = vadd.f32 0.0, %v2463
  %v2465 = vpop.f32.mrb[0].mxu0
  %v2466 = vpop.f32.mrb[0].mxu0
  %v2467 = vadd.f32 0.0, %v2466
  %v2468 = vpop.f32.mrb[0].mxu0
  %2469 = vmatprep.mubr.bf16.mxu0 0
  %2470 = vmatmul.mubr.bf16.gmra.mrb[0].mxu0 %v301
  %v2471 = vpop.f32.mrb[0].mxu0
  %v2472 = vadd.f32 0.0, %v2471
  %v2473 = vpop.f32.mrb[0].mxu0
  %v2474 = vpop.f32.mrb[0].mxu0
  %v2475 = vadd.f32 0.0, %v2474
  %v2476 = vpop.f32.mrb[0].mxu0
  %2477 = vmatprep.mubr.bf16.mxu0 0
  %2478 = vmatmul.mubr.bf16.gmra.mrb[0].mxu0 %v304
  %v2479 = vpop.f32.mrb[0].mxu0
  %v2480 = vadd.f32 0.0, %v2479
  %v2481 = vpop.f32.mrb[0].mxu0
  %v2482 = vpop.f32.mrb[0].mxu0
  %v2483 = vadd.f32 0.0, %v2482
  %v2484 = vpop.f32.mrb[0].mxu0
  %2485 = vmatprep.mubr.bf16.mxu0 0
  %2486 = vmatmul.mubr.bf16.gmra.mrb[0].mxu0 %v307
  %v2487 = vpop.f32.mrb[0].mxu0
  %v2488 = vadd.f32 0.0, %v2487
  %v2489 = vpop.f32.mrb[0].mxu0
  %v2490 = vpop.f32.mrb[0].mxu0
  %v2491 = vadd.f32 0.0, %v2490
  %v2492 = vpop.f32.mrb[0].mxu0
  %2493 = vmatprep.mubr.bf16.mxu0 0
  %2494 = vmatmul.mubr.bf16.gmra.mrb[0].mxu0 %v310
  %v2495 = vpop.f32.mrb[0].mxu0
  %v2496 = vadd.f32 0.0, %v2495
  %v2497 = vpop.f32.mrb[0].mxu0
  %v2498 = vpop.f32.mrb[0].mxu0
  %v2499 = vadd.f32 0.0, %v2498
  %v2500 = vpop.f32.mrb[0].mxu0
  %2501 = vmatprep.mubr.bf16.mxu0 0
  %2502 = vmatmul.mubr.bf16.gmra.mrb[0].mxu0 %v313
  %v2503 = vpop.f32.mrb[0].mxu0
  %v2504 = vadd.f32 0.0, %v2503
  %v2505 = vpop.f32.mrb[0].mxu0
  %v2506 = vpop.f32.mrb[0].mxu0
  %v2507 = vadd.f32 0.0, %v2506
  %v2508 = vpop.f32.mrb[0].mxu0
  %2509 = vmatprep.mubr.bf16.mxu0 0
  %2510 = vmatmul.mubr.bf16.gmra.mrb[0].mxu0 %v316
  %v2511 = vpop.f32.mrb[0].mxu0
  %v2512 = vadd.f32 0.0, %v2511
  %v2513 = vpop.f32.mrb[0].mxu0
  %v2514 = vpop.f32.mrb[0].mxu0
  %v2515 = vadd.f32 0.0, %v2514
  %v2516 = vpop.f32.mrb[0].mxu0
  %2517 = vmatprep.mubr.bf16.mxu0 0
  %2518 = vmatmul.mubr.bf16.gmra.mrb[0].mxu0 %v319
  %v2519 = vpop.f32.mrb[0].mxu0
  %v2520 = vadd.f32 0.0, %v2519
  %v2521 = vpop.f32.mrb[0].mxu0
  %v2522 = vpop.f32.mrb[0].mxu0
  %v2523 = vadd.f32 0.0, %v2522
  %v2524 = vpop.f32.mrb[0].mxu0
  %2525 = vmatprep.mubr.bf16.mxu0 0
  %2526 = vmatmul.mubr.bf16.gmra.mrb[0].mxu0 %v322
  %v2527 = vpop.f32.mrb[0].mxu0
  %v2528 = vadd.f32 0.0, %v2527
  %v2529 = vpop.f32.mrb[0].mxu0
  %v2530 = vpop.f32.mrb[0].mxu0
  %v2531 = vadd.f32 0.0, %v2530
  %v2532 = vpop.f32.mrb[0].mxu0
  %2533 = vmatprep.mubr.bf16.mxu0 0
  %2534 = vmatmul.mubr.bf16.gmra.mrb[0].mxu0 %v325
  %v2535 = vpop.f32.mrb[0].mxu0
  %v2536 = vadd.f32 0.0, %v2535
  %v2537 = vpop.f32.mrb[0].mxu0
  %v2538 = vpop.f32.mrb[0].mxu0
  %v2539 = vadd.f32 0.0, %v2538
  %v2540 = vpop.f32.mrb[0].mxu0
  %2541 = vmatprep.mubr.bf16.mxu0 0
  %2542 = vmatmul.mubr.bf16.gmra.mrb[0].mxu0 %v328
  %v2543 = vpop.f32.mrb[0].mxu0
  %v2544 = vadd.f32 0.0, %v2543
  %v2545 = vpop.f32.mrb[0].mxu0
  %v2546 = vpop.f32.mrb[0].mxu0
  %v2547 = vadd.f32 0.0, %v2546
  %v2548 = vpop.f32.mrb[0].mxu0
  %2549 = vmatprep.mubr.bf16.mxu0 0
  %2550 = vmatmul.mubr.bf16.gmra.mrb[0].mxu0 %v331
  %v2551 = vpop.f32.mrb[0].mxu0
  %v2552 = vadd.f32 0.0, %v2551
  %v2553 = vpop.f32.mrb[0].mxu0
  %v2554 = vpop.f32.mrb[0].mxu0
  %v2555 = vadd.f32 0.0, %v2554
  %v2556 = vpop.f32.mrb[0].mxu0
  %2557 = vmatprep.mubr.bf16.mxu0 0
  %2558 = vmatmul.mubr.bf16.gmra.mrb[0].mxu0 %v334
  %v2559 = vpop.f32.mrb[0].mxu0
  %v2560 = vadd.f32 0.0, %v2559
  %v2561 = vpop.f32.mrb[0].mxu0
  %v2562 = vpop.f32.mrb[0].mxu0
  %v2563 = vpop.f32.mrb[0].mxu0
  %2564 = vdwg.mxu0
  %v2585 = vunpack.c.l.b16 %v2069
  %v2586 = vunpack.c.h.b16 %v2069
  %v2587 = vunpack.c.l.b16 %v2070
  %v2588 = vunpack.c.l.b16 %v2071
  %v2589 = vunpack.c.h.b16 %v2071
  %v2590 = vunpack.c.l.b16 %v2072
  %v2591 = vunpack.c.l.b16 %v2073
  %v2592 = vunpack.c.h.b16 %v2073
  %v2593 = vunpack.c.l.b16 %v2074
  %v2594 = vunpack.c.l.b16 %v2075
  %v2595 = vunpack.c.h.b16 %v2075
  %v2596 = vunpack.c.l.b16 %v2076
  %v2597 = vunpack.c.l.b16 %v2077
  %v2598 = vunpack.c.h.b16 %v2077
  %v2599 = vunpack.c.l.b16 %v2078
  %v2600 = vunpack.c.l.b16 %v2079
  %v2601 = vunpack.c.h.b16 %v2079
  %v2602 = vunpack.c.l.b16 %v2080
  %v2603 = vunpack.c.l.b16 %v2081
  %v2604 = vunpack.c.h.b16 %v2081
  %v2605 = vunpack.c.l.b16 %v2082
  %v2606 = vunpack.c.l.b16 %v2083
  %v2607 = vunpack.c.h.b16 %v2083
  %v2608 = vunpack.c.l.b16 %v2084
  %v2609 = vunpack.c.l.b16 %v2085
  %v2610 = vunpack.c.h.b16 %v2085
  %v2611 = vunpack.c.l.b16 %v2086
  %v2612 = vunpack.c.l.b16 %v2087
  %v2613 = vunpack.c.h.b16 %v2087
  %v2614 = vunpack.c.l.b16 %v2088
  %v2615 = vpack.c.b16 %v2588, %v2585
  %v2616 = vpack.c.b16 %v2589, %v2586
  %v2617 = vpack.c.b16 %v2590, %v2587
  %v2618 = vpack.c.b16 %v2594, %v2591
  %v2619 = vpack.c.b16 %v2595, %v2592
  %v2620 = vpack.c.b16 %v2596, %v2593
  %v2621 = vpack.c.b16 %v2600, %v2597
  %v2622 = vpack.c.b16 %v2601, %v2598
  %v2623 = vpack.c.b16 %v2602, %v2599
  %v2624 = vpack.c.b16 %v2606, %v2603
  %v2625 = vpack.c.b16 %v2607, %v2604
  %v2626 = vpack.c.b16 %v2608, %v2605
  %v2627 = vpack.c.b16 %v2612, %v2609
  %v2628 = vpack.c.b16 %v2613, %v2610
  %v2629 = vpack.c.b16 %v2614, %v2611
  %v2643 = vsel %vm336, %v2627, 0
  %v2646 = vsel %vm336, %v2628, 0
  %v2649 = vsel %vm336, %v2629, 0
  %2651 = vmatprep.subr.bf16.mxu0 %v2616
  %2652 = vmatpush1.bf16.msra.mxu0 %v2615
  %2653 = vmatprep.subr.bf16.mxu0 %v2619
  %2654 = vmatpush1.bf16.msra.mxu0 %v2618
  %2655 = vmatprep.subr.bf16.mxu0 %v2622
  %2656 = vmatpush1.bf16.msra.mxu0 %v2621
  %2657 = vmatprep.subr.bf16.mxu0 %v2625
  %2658 = vmatpush1.bf16.msra.mxu0 %v2624
  %2659 = vmatprep.subr.bf16.mxu0 %v2646
  %2660 = vmatpush1.bf16.msra.mxu0 %v2643
  %2661 = vmatprep.subr.bf16.mxu0 0
  %2662 = vmatpush1.bf16.msra.mxu0 0
  %2663 = vmatprep.subr.bf16.mxu0 0
  %2664 = vmatpush1.bf16.msra.mxu0 0
  %2665 = vmatprep.subr.bf16.mxu0 0
  %2666 = vmatpush1.bf16.msra.mxu0 0
  %2667 = vmatprep.subr.bf16.mxu0 0
  %2668 = vmatpush1.bf16.msra.mxu0 0
  %2669 = vmatprep.subr.bf16.mxu0 0
  %2670 = vmatpush1.bf16.msra.mxu0 0
  %2671 = vmatprep.subr.bf16.mxu0 0
  %2672 = vmatpush1.bf16.msra.mxu0 0
  %2673 = vmatprep.subr.bf16.mxu0 0
  %2674 = vmatpush1.bf16.msra.mxu0 0
  %2675 = vmatprep.subr.bf16.mxu0 0
  %2676 = vmatpush1.bf16.msra.mxu0 0
  %2677 = vmatprep.subr.bf16.mxu0 0
  %2678 = vmatpush1.bf16.msra.mxu0 0
  %2679 = vmatprep.subr.bf16.mxu0 0
  %2680 = vmatpush1.bf16.msra.mxu0 0
  %2681 = vmatprep.subr.bf16.mxu0 0
  %2682 = vmatpush1.bf16.msra.mxu0 0
  %2683 = vmatprep.mubr.bf16.mxu0 0
  %2684 = vmatmul.mubr.bf16.gmra.mrb[0].mxu0 %v832
  %v2685 = vpop.f32.mrb[0].mxu0
  %v2686 = vadd.f32 %v2231, %v2685
  %v2687 = vpop.f32.mrb[0].mxu0
  %v2688 = vadd.f32 %v2233, %v2687
  %v2689 = vpop.f32.mrb[0].mxu0
  %v2690 = vadd.f32 %v2235, %v2689
  %v2691 = vpop.f32.mrb[0].mxu0
  %v2692 = vadd.f32 %v2237, %v2691
  %2693 = vmatprep.mubr.bf16.mxu0 0
  %2694 = vmatmul.mubr.bf16.gmra.mrb[0].mxu0 %v835
  %v2695 = vpop.f32.mrb[0].mxu0
  %v2696 = vadd.f32 %v2241, %v2695
  %v2697 = vpop.f32.mrb[0].mxu0
  %v2698 = vadd.f32 %v2243, %v2697
  %v2699 = vpop.f32.mrb[0].mxu0
  %v2700 = vadd.f32 %v2245, %v2699
  %v2701 = vpop.f32.mrb[0].mxu0
  %v2702 = vadd.f32 %v2247, %v2701
  %2703 = vmatprep.mubr.bf16.mxu0 0
  %2704 = vmatmul.mubr.bf16.gmra.mrb[0].mxu0 %v838
  %v2705 = vpop.f32.mrb[0].mxu0
  %v2706 = vadd.f32 %v2251, %v2705
  %v2707 = vpop.f32.mrb[0].mxu0
  %v2708 = vadd.f32 %v2253, %v2707
  %v2709 = vpop.f32.mrb[0].mxu0
  %v2710 = vadd.f32 %v2255, %v2709
  %v2711 = vpop.f32.mrb[0].mxu0
  %v2712 = vadd.f32 %v2257, %v2711
  %2713 = vmatprep.mubr.bf16.mxu0 0
  %2714 = vmatmul.mubr.bf16.gmra.mrb[0].mxu0 %v841
  %v2715 = vpop.f32.mrb[0].mxu0
  %v2716 = vadd.f32 %v2261, %v2715
  %v2717 = vpop.f32.mrb[0].mxu0
  %v2718 = vadd.f32 %v2263, %v2717
  %v2719 = vpop.f32.mrb[0].mxu0
  %v2720 = vadd.f32 %v2265, %v2719
  %v2721 = vpop.f32.mrb[0].mxu0
  %v2722 = vadd.f32 %v2267, %v2721
  %2723 = vmatprep.mubr.bf16.mxu0 0
  %2724 = vmatmul.mubr.bf16.gmra.mrb[0].mxu0 %v844
  %v2725 = vpop.f32.mrb[0].mxu0
  %v2726 = vadd.f32 %v2271, %v2725
  %v2727 = vpop.f32.mrb[0].mxu0
  %v2728 = vadd.f32 %v2273, %v2727
  %v2729 = vpop.f32.mrb[0].mxu0
  %v2730 = vadd.f32 %v2275, %v2729
  %v2731 = vpop.f32.mrb[0].mxu0
  %v2732 = vadd.f32 %v2277, %v2731
  %2733 = vmatprep.mubr.bf16.mxu0 0
  %2734 = vmatmul.mubr.bf16.gmra.mrb[0].mxu0 %v847
  %v2735 = vpop.f32.mrb[0].mxu0
  %v2736 = vadd.f32 %v2281, %v2735
  %v2737 = vpop.f32.mrb[0].mxu0
  %v2738 = vadd.f32 %v2283, %v2737
  %v2739 = vpop.f32.mrb[0].mxu0
  %v2740 = vadd.f32 %v2285, %v2739
  %v2741 = vpop.f32.mrb[0].mxu0
  %v2742 = vadd.f32 %v2287, %v2741
  %2743 = vmatprep.mubr.bf16.mxu0 0
  %2744 = vmatmul.mubr.bf16.gmra.mrb[0].mxu0 %v850
  %v2745 = vpop.f32.mrb[0].mxu0
  %v2746 = vadd.f32 %v2291, %v2745
  %v2747 = vpop.f32.mrb[0].mxu0
  %v2748 = vadd.f32 %v2293, %v2747
  %v2749 = vpop.f32.mrb[0].mxu0
  %v2750 = vadd.f32 %v2295, %v2749
  %v2751 = vpop.f32.mrb[0].mxu0
  %v2752 = vadd.f32 %v2297, %v2751
  %2753 = vmatprep.mubr.bf16.mxu0 0
  %2754 = vmatmul.mubr.bf16.gmra.mrb[0].mxu0 %v853
  %v2755 = vpop.f32.mrb[0].mxu0
  %v2756 = vadd.f32 %v2301, %v2755
  %v2757 = vpop.f32.mrb[0].mxu0
  %v2758 = vadd.f32 %v2303, %v2757
  %v2759 = vpop.f32.mrb[0].mxu0
  %v2760 = vadd.f32 %v2305, %v2759
  %v2761 = vpop.f32.mrb[0].mxu0
  %v2762 = vadd.f32 %v2307, %v2761
  %2763 = vmatprep.mubr.bf16.mxu0 0
  %2764 = vmatmul.mubr.bf16.gmra.mrb[0].mxu0 %v856
  %v2765 = vpop.f32.mrb[0].mxu0
  %v2766 = vadd.f32 %v2311, %v2765
  %v2767 = vpop.f32.mrb[0].mxu0
  %v2768 = vadd.f32 %v2313, %v2767
  %v2769 = vpop.f32.mrb[0].mxu0
  %v2770 = vadd.f32 %v2315, %v2769
  %v2771 = vpop.f32.mrb[0].mxu0
  %v2772 = vadd.f32 %v2317, %v2771
  %2773 = vmatprep.mubr.bf16.mxu0 0
  %2774 = vmatmul.mubr.bf16.gmra.mrb[0].mxu0 %v859
  %v2775 = vpop.f32.mrb[0].mxu0
  %v2776 = vadd.f32 %v2321, %v2775
  %v2777 = vpop.f32.mrb[0].mxu0
  %v2778 = vadd.f32 %v2323, %v2777
  %v2779 = vpop.f32.mrb[0].mxu0
  %v2780 = vadd.f32 %v2325, %v2779
  %v2781 = vpop.f32.mrb[0].mxu0
  %v2782 = vadd.f32 %v2327, %v2781
  %2783 = vmatprep.mubr.bf16.mxu0 0
  %2784 = vmatmul.mubr.bf16.gmra.mrb[0].mxu0 %v862
  %v2785 = vpop.f32.mrb[0].mxu0
  %v2786 = vadd.f32 %v2331, %v2785
  %v2787 = vpop.f32.mrb[0].mxu0
  %v2788 = vadd.f32 %v2333, %v2787
  %v2789 = vpop.f32.mrb[0].mxu0
  %v2790 = vadd.f32 %v2335, %v2789
  %v2791 = vpop.f32.mrb[0].mxu0
  %v2792 = vadd.f32 %v2337, %v2791
  %2793 = vmatprep.mubr.bf16.mxu0 0
  %2794 = vmatmul.mubr.bf16.gmra.mrb[0].mxu0 %v865
  %v2795 = vpop.f32.mrb[0].mxu0
  %v2796 = vadd.f32 %v2341, %v2795
  %v2797 = vpop.f32.mrb[0].mxu0
  %v2798 = vadd.f32 %v2343, %v2797
  %v2799 = vpop.f32.mrb[0].mxu0
  %v2800 = vadd.f32 %v2345, %v2799
  %v2801 = vpop.f32.mrb[0].mxu0
  %v2802 = vadd.f32 %v2347, %v2801
  %2803 = vmatprep.mubr.bf16.mxu0 0
  %2804 = vmatmul.mubr.bf16.gmra.mrb[0].mxu0 %v868
  %v2805 = vpop.f32.mrb[0].mxu0
  %v2806 = vadd.f32 %v2351, %v2805
  %v2807 = vpop.f32.mrb[0].mxu0
  %v2808 = vadd.f32 %v2353, %v2807
  %v2809 = vpop.f32.mrb[0].mxu0
  %v2810 = vadd.f32 %v2355, %v2809
  %v2811 = vpop.f32.mrb[0].mxu0
  %v2812 = vadd.f32 %v2357, %v2811
  %2813 = vmatprep.mubr.bf16.mxu0 0
  %2814 = vmatmul.mubr.bf16.gmra.mrb[0].mxu0 %v871
  %v2815 = vpop.f32.mrb[0].mxu0
  %v2816 = vadd.f32 %v2361, %v2815
  %v2817 = vpop.f32.mrb[0].mxu0
  %v2818 = vadd.f32 %v2363, %v2817
  %v2819 = vpop.f32.mrb[0].mxu0
  %v2820 = vadd.f32 %v2365, %v2819
  %v2821 = vpop.f32.mrb[0].mxu0
  %v2822 = vadd.f32 %v2367, %v2821
  %2823 = vmatprep.mubr.bf16.mxu0 0
  %2824 = vmatmul.mubr.bf16.gmra.mrb[0].mxu0 %v874
  %v2825 = vpop.f32.mrb[0].mxu0
  %v2826 = vadd.f32 %v2371, %v2825
  %v2827 = vpop.f32.mrb[0].mxu0
  %v2828 = vadd.f32 %v2373, %v2827
  %v2829 = vpop.f32.mrb[0].mxu0
  %v2830 = vadd.f32 %v2375, %v2829
  %v2831 = vpop.f32.mrb[0].mxu0
  %v2832 = vadd.f32 %v2377, %v2831
  %2833 = vmatprep.mubr.bf16.mxu0 0
  %2834 = vmatmul.mubr.bf16.gmra.mrb[0].mxu0 %v877
  %v2835 = vpop.f32.mrb[0].mxu0
  %v2836 = vadd.f32 %v2381, %v2835
  %v2837 = vpop.f32.mrb[0].mxu0
  %v2838 = vadd.f32 %v2383, %v2837
  %v2839 = vpop.f32.mrb[0].mxu0
  %v2840 = vadd.f32 %v2385, %v2839
  %v2841 = vpop.f32.mrb[0].mxu0
  %v2842 = vadd.f32 %v2387, %v2841
  %2843 = vmatprep.mubr.bf16.mxu0 0
  %2844 = vmatmul.mubr.bf16.gmra.mrb[0].mxu0 %v880
  %v2845 = vpop.f32.mrb[0].mxu0
  %v2846 = vadd.f32 %v2391, %v2845
  %v2847 = vpop.f32.mrb[0].mxu0
  %v2848 = vadd.f32 %v2393, %v2847
  %v2849 = vpop.f32.mrb[0].mxu0
  %v2850 = vpop.f32.mrb[0].mxu0
  %2851 = vdwg.mxu0
  %2852 = vmatprep.subr.bf16.mxu0 0
  %2853 = vmatpush1.bf16.msra.mxu0 %v2617
  %2854 = vmatprep.subr.bf16.mxu0 0
  %2855 = vmatpush1.bf16.msra.mxu0 %v2620
  %2856 = vmatprep.subr.bf16.mxu0 0
  %2857 = vmatpush1.bf16.msra.mxu0 %v2623
  %2858 = vmatprep.subr.bf16.mxu0 0
  %2859 = vmatpush1.bf16.msra.mxu0 %v2626
  %2860 = vmatprep.subr.bf16.mxu0 0
  %2861 = vmatpush1.bf16.msra.mxu0 %v2649
  %2862 = vmatprep.subr.bf16.mxu0 0
  %2863 = vmatpush1.bf16.msra.mxu0 0
  %2864 = vmatprep.subr.bf16.mxu0 0
  %2865 = vmatpush1.bf16.msra.mxu0 0
  %2866 = vmatprep.subr.bf16.mxu0 0
  %2867 = vmatpush1.bf16.msra.mxu0 0
  %2868 = vmatprep.subr.bf16.mxu0 0
  %2869 = vmatpush1.bf16.msra.mxu0 0
  %2870 = vmatprep.subr.bf16.mxu0 0
  %2871 = vmatpush1.bf16.msra.mxu0 0
  %2872 = vmatprep.subr.bf16.mxu0 0
  %2873 = vmatpush1.bf16.msra.mxu0 0
  %2874 = vmatprep.subr.bf16.mxu0 0
  %2875 = vmatpush1.bf16.msra.mxu0 0
  %2876 = vmatprep.subr.bf16.mxu0 0
  %2877 = vmatpush1.bf16.msra.mxu0 0
  %2878 = vmatprep.subr.bf16.mxu0 0
  %2879 = vmatpush1.bf16.msra.mxu0 0
  %2880 = vmatprep.subr.bf16.mxu0 0
  %2881 = vmatpush1.bf16.msra.mxu0 0
  %2882 = vmatprep.subr.bf16.mxu0 0
  %2883 = vmatpush1.bf16.msra.mxu0 0
  %2884 = vmatprep.mubr.bf16.mxu0 0
  %2885 = vmatmul.mubr.bf16.gmra.mrb[0].mxu0 %v832
  %v2886 = vpop.f32.mrb[0].mxu0
  %v2887 = vadd.f32 %v2432, %v2886
  %v2888 = vpop.f32.mrb[0].mxu0
  %v2889 = vpop.f32.mrb[0].mxu0
  %v2890 = vadd.f32 %v2435, %v2889
  %v2891 = vpop.f32.mrb[0].mxu0
  %2892 = vmatprep.mubr.bf16.mxu0 0
  %2893 = vmatmul.mubr.bf16.gmra.mrb[0].mxu0 %v835
  %v2894 = vpop.f32.mrb[0].mxu0
  %v2895 = vadd.f32 %v2440, %v2894
  %v2896 = vpop.f32.mrb[0].mxu0
  %v2897 = vpop.f32.mrb[0].mxu0
  %v2898 = vadd.f32 %v2443, %v2897
  %v2899 = vpop.f32.mrb[0].mxu0
  %2900 = vmatprep.mubr.bf16.mxu0 0
  %2901 = vmatmul.mubr.bf16.gmra.mrb[0].mxu0 %v838
  %v2902 = vpop.f32.mrb[0].mxu0
  %v2903 = vadd.f32 %v2448, %v2902
  %v2904 = vpop.f32.mrb[0].mxu0
  %v2905 = vpop.f32.mrb[0].mxu0
  %v2906 = vadd.f32 %v2451, %v2905
  %v2907 = vpop.f32.mrb[0].mxu0
  %2908 = vmatprep.mubr.bf16.mxu0 0
  %2909 = vmatmul.mubr.bf16.gmra.mrb[0].mxu0 %v841
  %v2910 = vpop.f32.mrb[0].mxu0
  %v2911 = vadd.f32 %v2456, %v2910
  %v2912 = vpop.f32.mrb[0].mxu0
  %v2913 = vpop.f32.mrb[0].mxu0
  %v2914 = vadd.f32 %v2459, %v2913
  %v2915 = vpop.f32.mrb[0].mxu0
  %2916 = vmatprep.mubr.bf16.mxu0 0
  %2917 = vmatmul.mubr.bf16.gmra.mrb[0].mxu0 %v844
  %v2918 = vpop.f32.mrb[0].mxu0
  %v2919 = vadd.f32 %v2464, %v2918
  %v2920 = vpop.f32.mrb[0].mxu0
  %v2921 = vpop.f32.mrb[0].mxu0
  %v2922 = vadd.f32 %v2467, %v2921
  %v2923 = vpop.f32.mrb[0].mxu0
  %2924 = vmatprep.mubr.bf16.mxu0 0
  %2925 = vmatmul.mubr.bf16.gmra.mrb[0].mxu0 %v847
  %v2926 = vpop.f32.mrb[0].mxu0
  %v2927 = vadd.f32 %v2472, %v2926
  %v2928 = vpop.f32.mrb[0].mxu0
  %v2929 = vpop.f32.mrb[0].mxu0
  %v2930 = vadd.f32 %v2475, %v2929
  %v2931 = vpop.f32.mrb[0].mxu0
  %2932 = vmatprep.mubr.bf16.mxu0 0
  %2933 = vmatmul.mubr.bf16.gmra.mrb[0].mxu0 %v850
  %v2934 = vpop.f32.mrb[0].mxu0
  %v2935 = vadd.f32 %v2480, %v2934
  %v2936 = vpop.f32.mrb[0].mxu0
  %v2937 = vpop.f32.mrb[0].mxu0
  %v2938 = vadd.f32 %v2483, %v2937
  %v2939 = vpop.f32.mrb[0].mxu0
  %2940 = vmatprep.mubr.bf16.mxu0 0
  %2941 = vmatmul.mubr.bf16.gmra.mrb[0].mxu0 %v853
  %v2942 = vpop.f32.mrb[0].mxu0
  %v2943 = vadd.f32 %v2488, %v2942
  %v2944 = vpop.f32.mrb[0].mxu0
  %v2945 = vpop.f32.mrb[0].mxu0
  %v2946 = vadd.f32 %v2491, %v2945
  %v2947 = vpop.f32.mrb[0].mxu0
  %2948 = vmatprep.mubr.bf16.mxu0 0
  %2949 = vmatmul.mubr.bf16.gmra.mrb[0].mxu0 %v856
  %v2950 = vpop.f32.mrb[0].mxu0
  %v2951 = vadd.f32 %v2496, %v2950
  %v2952 = vpop.f32.mrb[0].mxu0
  %v2953 = vpop.f32.mrb[0].mxu0
  %v2954 = vadd.f32 %v2499, %v2953
  %v2955 = vpop.f32.mrb[0].mxu0
  %2956 = vmatprep.mubr.bf16.mxu0 0
  %2957 = vmatmul.mubr.bf16.gmra.mrb[0].mxu0 %v859
  %v2958 = vpop.f32.mrb[0].mxu0
  %v2959 = vadd.f32 %v2504, %v2958
  %v2960 = vpop.f32.mrb[0].mxu0
  %v2961 = vpop.f32.mrb[0].mxu0
  %v2962 = vadd.f32 %v2507, %v2961
  %v2963 = vpop.f32.mrb[0].mxu0
  %2964 = vmatprep.mubr.bf16.mxu0 0
  %2965 = vmatmul.mubr.bf16.gmra.mrb[0].mxu0 %v862
  %v2966 = vpop.f32.mrb[0].mxu0
  %v2967 = vadd.f32 %v2512, %v2966
  %v2968 = vpop.f32.mrb[0].mxu0
  %v2969 = vpop.f32.mrb[0].mxu0
  %v2970 = vadd.f32 %v2515, %v2969
  %v2971 = vpop.f32.mrb[0].mxu0
  %2972 = vmatprep.mubr.bf16.mxu0 0
  %2973 = vmatmul.mubr.bf16.gmra.mrb[0].mxu0 %v865
  %v2974 = vpop.f32.mrb[0].mxu0
  %v2975 = vadd.f32 %v2520, %v2974
  %v2976 = vpop.f32.mrb[0].mxu0
  %v2977 = vpop.f32.mrb[0].mxu0
  %v2978 = vadd.f32 %v2523, %v2977
  %v2979 = vpop.f32.mrb[0].mxu0
  %2980 = vmatprep.mubr.bf16.mxu0 0
  %2981 = vmatmul.mubr.bf16.gmra.mrb[0].mxu0 %v868
  %v2982 = vpop.f32.mrb[0].mxu0
  %v2983 = vadd.f32 %v2528, %v2982
  %v2984 = vpop.f32.mrb[0].mxu0
  %v2985 = vpop.f32.mrb[0].mxu0
  %v2986 = vadd.f32 %v2531, %v2985
  %v2987 = vpop.f32.mrb[0].mxu0
  %2988 = vmatprep.mubr.bf16.mxu0 0
  %2989 = vmatmul.mubr.bf16.gmra.mrb[0].mxu0 %v871
  %v2990 = vpop.f32.mrb[0].mxu0
  %v2991 = vadd.f32 %v2536, %v2990
  %v2992 = vpop.f32.mrb[0].mxu0
  %v2993 = vpop.f32.mrb[0].mxu0
  %v2994 = vadd.f32 %v2539, %v2993
  %v2995 = vpop.f32.mrb[0].mxu0
  %2996 = vmatprep.mubr.bf16.mxu0 0
  %2997 = vmatmul.mubr.bf16.gmra.mrb[0].mxu0 %v874
  %v2998 = vpop.f32.mrb[0].mxu0
  %v2999 = vadd.f32 %v2544, %v2998
  %v3000 = vpop.f32.mrb[0].mxu0
  %v3001 = vpop.f32.mrb[0].mxu0
  %v3002 = vadd.f32 %v2547, %v3001
  %v3003 = vpop.f32.mrb[0].mxu0
  %3004 = vmatprep.mubr.bf16.mxu0 0
  %3005 = vmatmul.mubr.bf16.gmra.mrb[0].mxu0 %v877
  %v3006 = vpop.f32.mrb[0].mxu0
  %v3007 = vadd.f32 %v2552, %v3006
  %v3008 = vpop.f32.mrb[0].mxu0
  %v3009 = vpop.f32.mrb[0].mxu0
  %v3010 = vadd.f32 %v2555, %v3009
  %v3011 = vpop.f32.mrb[0].mxu0
  %3012 = vmatprep.mubr.bf16.mxu0 0
  %3013 = vmatmul.mubr.bf16.gmra.mrb[0].mxu0 %v880
  %v3014 = vpop.f32.mrb[0].mxu0
  %v3015 = vadd.f32 %v2560, %v3014
  %v3016 = vpop.f32.mrb[0].mxu0
  %v3017 = vpop.f32.mrb[0].mxu0
  %v3018 = vpop.f32.mrb[0].mxu0
  %3019 = vdwg.mxu0
  %s3020 = scalar_lea.vmem %s1, 600
  %v3021 = vld [vmem:[%s3020] sm:$0xff]
  %v3022 = vld [vmem:[%s3020 + $0x8] sm:$0xf]
  %v3023 = vld [vmem:[%s3020 + $0xc] sm:$0xff]
  %v3024 = vld [vmem:[%s3020 + $0x14] sm:$0xf]
  %v3025 = vld [vmem:[%s3020 + $0x18] sm:$0xff]
  %v3026 = vld [vmem:[%s3020 + $0x20] sm:$0xf]
  %v3027 = vld [vmem:[%s3020 + $0x24] sm:$0xff]
  %v3028 = vld [vmem:[%s3020 + $0x2c] sm:$0xf]
  %v3029 = vld [vmem:[%s3020 + $0x30] sm:$0xff]
  %v3030 = vld [vmem:[%s3020 + $0x38] sm:$0xf]
  %v3031 = vld [vmem:[%s3020 + $0x3c] sm:$0xff]
  %v3032 = vld [vmem:[%s3020 + $0x44] sm:$0xf]
  %v3033 = vld [vmem:[%s3020 + $0x48] sm:$0xff]
  %v3034 = vld [vmem:[%s3020 + $0x50] sm:$0xf]
  %v3035 = vld [vmem:[%s3020 + $0x54] sm:$0xff]
  %v3036 = vld [vmem:[%s3020 + $0x5c] sm:$0xf]
  %v3037 = vld [vmem:[%s3020 + $0x60] sm:$0xff]
  %v3038 = vld [vmem:[%s3020 + $0x68] sm:$0xf]
  %v3039 = vld [vmem:[%s3020 + $0x6c] sm:$0x77]
  %v3040 = vld [vmem:[%s3020 + $0x74] sm:$0x7]
  %v3061 = vunpack.c.l.b16 %v3021
  %v3062 = vunpack.c.h.b16 %v3021
  %v3063 = vunpack.c.l.b16 %v3022
  %v3064 = vunpack.c.l.b16 %v3023
  %v3065 = vunpack.c.h.b16 %v3023
  %v3066 = vunpack.c.l.b16 %v3024
  %v3067 = vunpack.c.l.b16 %v3025
  %v3068 = vunpack.c.h.b16 %v3025
  %v3069 = vunpack.c.l.b16 %v3026
  %v3070 = vunpack.c.l.b16 %v3027
  %v3071 = vunpack.c.h.b16 %v3027
  %v3072 = vunpack.c.l.b16 %v3028
  %v3073 = vunpack.c.l.b16 %v3029
  %v3074 = vunpack.c.h.b16 %v3029
  %v3075 = vunpack.c.l.b16 %v3030
  %v3076 = vunpack.c.l.b16 %v3031
  %v3077 = vunpack.c.h.b16 %v3031
  %v3078 = vunpack.c.l.b16 %v3032
  %v3079 = vunpack.c.l.b16 %v3033
  %v3080 = vunpack.c.h.b16 %v3033
  %v3081 = vunpack.c.l.b16 %v3034
  %v3082 = vunpack.c.l.b16 %v3035
  %v3083 = vunpack.c.h.b16 %v3035
  %v3084 = vunpack.c.l.b16 %v3036
  %v3085 = vunpack.c.l.b16 %v3037
  %v3086 = vunpack.c.h.b16 %v3037
  %v3087 = vunpack.c.l.b16 %v3038
  %v3088 = vunpack.c.l.b16 %v3039
  %v3089 = vunpack.c.h.b16 %v3039
  %v3090 = vunpack.c.l.b16 %v3040
  %v3091 = vpack.c.b16 %v3064, %v3061
  %v3092 = vpack.c.b16 %v3065, %v3062
  %v3093 = vpack.c.b16 %v3066, %v3063
  %v3094 = vpack.c.b16 %v3070, %v3067
  %v3095 = vpack.c.b16 %v3071, %v3068
  %v3096 = vpack.c.b16 %v3072, %v3069
  %v3097 = vpack.c.b16 %v3076, %v3073
  %v3098 = vpack.c.b16 %v3077, %v3074
  %v3099 = vpack.c.b16 %v3078, %v3075
  %v3100 = vpack.c.b16 %v3082, %v3079
  %v3101 = vpack.c.b16 %v3083, %v3080
  %v3102 = vpack.c.b16 %v3084, %v3081
  %v3103 = vpack.c.b16 %v3088, %v3085
  %v3104 = vpack.c.b16 %v3089, %v3086
  %v3105 = vpack.c.b16 %v3090, %v3087
  %v3119 = vsel %vm336, %v3103, 0
  %v3122 = vsel %vm336, %v3104, 0
  %v3125 = vsel %vm336, %v3105, 0
  %3127 = vmatprep.subr.bf16.mxu0 %v3092
  %3128 = vmatpush1.bf16.msra.mxu0 %v3091
  %3129 = vmatprep.subr.bf16.mxu0 %v3095
  %3130 = vmatpush1.bf16.msra.mxu0 %v3094
  %3131 = vmatprep.subr.bf16.mxu0 %v3098
  %3132 = vmatpush1.bf16.msra.mxu0 %v3097
  %3133 = vmatprep.subr.bf16.mxu0 %v3101
  %3134 = vmatpush1.bf16.msra.mxu0 %v3100
  %3135 = vmatprep.subr.bf16.mxu0 %v3122
  %3136 = vmatpush1.bf16.msra.mxu0 %v3119
  %3137 = vmatprep.subr.bf16.mxu0 0
  %3138 = vmatpush1.bf16.msra.mxu0 0
  %3139 = vmatprep.subr.bf16.mxu0 0
  %3140 = vmatpush1.bf16.msra.mxu0 0
  %3141 = vmatprep.subr.bf16.mxu0 0
  %3142 = vmatpush1.bf16.msra.mxu0 0
  %3143 = vmatprep.subr.bf16.mxu0 0
  %3144 = vmatpush1.bf16.msra.mxu0 0
  %3145 = vmatprep.subr.bf16.mxu0 0
  %3146 = vmatpush1.bf16.msra.mxu0 0
  %3147 = vmatprep.subr.bf16.mxu0 0
  %3148 = vmatpush1.bf16.msra.mxu0 0
  %3149 = vmatprep.subr.bf16.mxu0 0
  %3150 = vmatpush1.bf16.msra.mxu0 0
  %3151 = vmatprep.subr.bf16.mxu0 0
  %3152 = vmatpush1.bf16.msra.mxu0 0
  %3153 = vmatprep.subr.bf16.mxu0 0
  %3154 = vmatpush1.bf16.msra.mxu0 0
  %3155 = vmatprep.subr.bf16.mxu0 0
  %3156 = vmatpush1.bf16.msra.mxu0 0
  %3157 = vmatprep.subr.bf16.mxu0 0
  %3158 = vmatpush1.bf16.msra.mxu0 0
  %3159 = vmatprep.mubr.bf16.mxu0 0
  %3160 = vmatmul.mubr.bf16.gmra.mrb[0].mxu0 %v1475
  %v3161 = vpop.f32.mrb[0].mxu0
  %v3162 = vadd.f32 0.0, %v3161
  %v3163 = vpop.f32.mrb[0].mxu0
  %v3164 = vadd.f32 0.0, %v3163
  %v3165 = vpop.f32.mrb[0].mxu0
  %v3166 = vadd.f32 0.0, %v3165
  %v3167 = vpop.f32.mrb[0].mxu0
  %v3168 = vadd.f32 0.0, %v3167
  %3169 = vmatprep.mubr.bf16.mxu0 0
  %3170 = vmatmul.mubr.bf16.gmra.mrb[0].mxu0 %v1478
  %v3171 = vpop.f32.mrb[0].mxu0
  %v3172 = vadd.f32 0.0, %v3171
  %v3173 = vpop.f32.mrb[0].mxu0
  %v3174 = vadd.f32 0.0, %v3173
  %v3175 = vpop.f32.mrb[0].mxu0
  %v3176 = vadd.f32 0.0, %v3175
  %v3177 = vpop.f32.mrb[0].mxu0
  %v3178 = vadd.f32 0.0, %v3177
  %3179 = vmatprep.mubr.bf16.mxu0 0
  %3180 = vmatmul.mubr.bf16.gmra.mrb[0].mxu0 %v1481
  %v3181 = vpop.f32.mrb[0].mxu0
  %v3182 = vadd.f32 0.0, %v3181
  %v3183 = vpop.f32.mrb[0].mxu0
  %v3184 = vadd.f32 0.0, %v3183
  %v3185 = vpop.f32.mrb[0].mxu0
  %v3186 = vadd.f32 0.0, %v3185
  %v3187 = vpop.f32.mrb[0].mxu0
  %v3188 = vadd.f32 0.0, %v3187
  %3189 = vmatprep.mubr.bf16.mxu0 0
  %3190 = vmatmul.mubr.bf16.gmra.mrb[0].mxu0 %v1484
  %v3191 = vpop.f32.mrb[0].mxu0
  %v3192 = vadd.f32 0.0, %v3191
  %v3193 = vpop.f32.mrb[0].mxu0
  %v3194 = vadd.f32 0.0, %v3193
  %v3195 = vpop.f32.mrb[0].mxu0
  %v3196 = vadd.f32 0.0, %v3195
  %v3197 = vpop.f32.mrb[0].mxu0
  %v3198 = vadd.f32 0.0, %v3197
  %3199 = vmatprep.mubr.bf16.mxu0 0
  %3200 = vmatmul.mubr.bf16.gmra.mrb[0].mxu0 %v1487
  %v3201 = vpop.f32.mrb[0].mxu0
  %v3202 = vadd.f32 0.0, %v3201
  %v3203 = vpop.f32.mrb[0].mxu0
  %v3204 = vadd.f32 0.0, %v3203
  %v3205 = vpop.f32.mrb[0].mxu0
  %v3206 = vadd.f32 0.0, %v3205
  %v3207 = vpop.f32.mrb[0].mxu0
  %v3208 = vadd.f32 0.0, %v3207
  %3209 = vmatprep.mubr.bf16.mxu0 0
  %3210 = vmatmul.mubr.bf16.gmra.mrb[0].mxu0 %v1490
  %v3211 = vpop.f32.mrb[0].mxu0
  %v3212 = vadd.f32 0.0, %v3211
  %v3213 = vpop.f32.mrb[0].mxu0
  %v3214 = vadd.f32 0.0, %v3213
  %v3215 = vpop.f32.mrb[0].mxu0
  %v3216 = vadd.f32 0.0, %v3215
  %v3217 = vpop.f32.mrb[0].mxu0
  %v3218 = vadd.f32 0.0, %v3217
  %3219 = vmatprep.mubr.bf16.mxu0 0
  %3220 = vmatmul.mubr.bf16.gmra.mrb[0].mxu0 %v1493
  %v3221 = vpop.f32.mrb[0].mxu0
  %v3222 = vadd.f32 0.0, %v3221
  %v3223 = vpop.f32.mrb[0].mxu0
  %v3224 = vadd.f32 0.0, %v3223
  %v3225 = vpop.f32.mrb[0].mxu0
  %v3226 = vadd.f32 0.0, %v3225
  %v3227 = vpop.f32.mrb[0].mxu0
  %v3228 = vadd.f32 0.0, %v3227
  %3229 = vmatprep.mubr.bf16.mxu0 0
  %3230 = vmatmul.mubr.bf16.gmra.mrb[0].mxu0 %v1496
  %v3231 = vpop.f32.mrb[0].mxu0
  %v3232 = vadd.f32 0.0, %v3231
  %v3233 = vpop.f32.mrb[0].mxu0
  %v3234 = vadd.f32 0.0, %v3233
  %v3235 = vpop.f32.mrb[0].mxu0
  %v3236 = vadd.f32 0.0, %v3235
  %v3237 = vpop.f32.mrb[0].mxu0
  %v3238 = vadd.f32 0.0, %v3237
  %3239 = vmatprep.mubr.bf16.mxu0 0
  %3240 = vmatmul.mubr.bf16.gmra.mrb[0].mxu0 %v1499
  %v3241 = vpop.f32.mrb[0].mxu0
  %v3242 = vadd.f32 0.0, %v3241
  %v3243 = vpop.f32.mrb[0].mxu0
  %v3244 = vadd.f32 0.0, %v3243
  %v3245 = vpop.f32.mrb[0].mxu0
  %v3246 = vadd.f32 0.0, %v3245
  %v3247 = vpop.f32.mrb[0].mxu0
  %v3248 = vadd.f32 0.0, %v3247
  %3249 = vmatprep.mubr.bf16.mxu0 0
  %3250 = vmatmul.mubr.bf16.gmra.mrb[0].mxu0 %v1502
  %v3251 = vpop.f32.mrb[0].mxu0
  %v3252 = vadd.f32 0.0, %v3251
  %v3253 = vpop.f32.mrb[0].mxu0
  %v3254 = vadd.f32 0.0, %v3253
  %v3255 = vpop.f32.mrb[0].mxu0
  %v3256 = vadd.f32 0.0, %v3255
  %v3257 = vpop.f32.mrb[0].mxu0
  %v3258 = vadd.f32 0.0, %v3257
  %3259 = vmatprep.mubr.bf16.mxu0 0
  %3260 = vmatmul.mubr.bf16.gmra.mrb[0].mxu0 %v1505
  %v3261 = vpop.f32.mrb[0].mxu0
  %v3262 = vadd.f32 0.0, %v3261
  %v3263 = vpop.f32.mrb[0].mxu0
  %v3264 = vadd.f32 0.0, %v3263
  %v3265 = vpop.f32.mrb[0].mxu0
  %v3266 = vadd.f32 0.0, %v3265
  %v3267 = vpop.f32.mrb[0].mxu0
  %v3268 = vadd.f32 0.0, %v3267
  %3269 = vmatprep.mubr.bf16.mxu0 0
  %3270 = vmatmul.mubr.bf16.gmra.mrb[0].mxu0 %v1508
  %v3271 = vpop.f32.mrb[0].mxu0
  %v3272 = vadd.f32 0.0, %v3271
  %v3273 = vpop.f32.mrb[0].mxu0
  %v3274 = vadd.f32 0.0, %v3273
  %v3275 = vpop.f32.mrb[0].mxu0
  %v3276 = vadd.f32 0.0, %v3275
  %v3277 = vpop.f32.mrb[0].mxu0
  %v3278 = vadd.f32 0.0, %v3277
  %3279 = vmatprep.mubr.bf16.mxu0 0
  %3280 = vmatmul.mubr.bf16.gmra.mrb[0].mxu0 %v1511
  %v3281 = vpop.f32.mrb[0].mxu0
  %v3282 = vadd.f32 0.0, %v3281
  %v3283 = vpop.f32.mrb[0].mxu0
  %v3284 = vadd.f32 0.0, %v3283
  %v3285 = vpop.f32.mrb[0].mxu0
  %v3286 = vadd.f32 0.0, %v3285
  %v3287 = vpop.f32.mrb[0].mxu0
  %v3288 = vadd.f32 0.0, %v3287
  %3289 = vmatprep.mubr.bf16.mxu0 0
  %3290 = vmatmul.mubr.bf16.gmra.mrb[0].mxu0 %v1514
  %v3291 = vpop.f32.mrb[0].mxu0
  %v3292 = vadd.f32 0.0, %v3291
  %v3293 = vpop.f32.mrb[0].mxu0
  %v3294 = vadd.f32 0.0, %v3293
  %v3295 = vpop.f32.mrb[0].mxu0
  %v3296 = vadd.f32 0.0, %v3295
  %v3297 = vpop.f32.mrb[0].mxu0
  %v3298 = vadd.f32 0.0, %v3297
  %3299 = vmatprep.mubr.bf16.mxu0 0
  %3300 = vmatmul.mubr.bf16.gmra.mrb[0].mxu0 %v1517
  %v3301 = vpop.f32.mrb[0].mxu0
  %v3302 = vadd.f32 0.0, %v3301
  %v3303 = vpop.f32.mrb[0].mxu0
  %v3304 = vadd.f32 0.0, %v3303
  %v3305 = vpop.f32.mrb[0].mxu0
  %v3306 = vadd.f32 0.0, %v3305
  %v3307 = vpop.f32.mrb[0].mxu0
  %v3308 = vadd.f32 0.0, %v3307
  %3309 = vmatprep.mubr.bf16.mxu0 0
  %3310 = vmatmul.mubr.bf16.gmra.mrb[0].mxu0 %v1520
  %v3311 = vpop.f32.mrb[0].mxu0
  %v3312 = vadd.f32 0.0, %v3311
  %v3313 = vpop.f32.mrb[0].mxu0
  %v3314 = vadd.f32 0.0, %v3313
  %v3315 = vpop.f32.mrb[0].mxu0
  %v3316 = vadd.f32 0.0, %v3315
  %v3317 = vpop.f32.mrb[0].mxu0
  %v3318 = vadd.f32 0.0, %v3317
  %3319 = vmatprep.mubr.bf16.mxu0 0
  %3320 = vmatmul.mubr.bf16.gmra.mrb[0].mxu0 %v1523
  %v3321 = vpop.f32.mrb[0].mxu0
  %v3322 = vadd.f32 0.0, %v3321
  %v3323 = vpop.f32.mrb[0].mxu0
  %v3324 = vadd.f32 0.0, %v3323
  %v3325 = vpop.f32.mrb[0].mxu0
  %v3326 = vpop.f32.mrb[0].mxu0
  %3327 = vdwg.mxu0
  %3328 = vmatprep.subr.bf16.mxu0 0
  %3329 = vmatpush1.bf16.msra.mxu0 %v3093
  %3330 = vmatprep.subr.bf16.mxu0 0
  %3331 = vmatpush1.bf16.msra.mxu0 %v3096
  %3332 = vmatprep.subr.bf16.mxu0 0
  %3333 = vmatpush1.bf16.msra.mxu0 %v3099
  %3334 = vmatprep.subr.bf16.mxu0 0
  %3335 = vmatpush1.bf16.msra.mxu0 %v3102
  %3336 = vmatprep.subr.bf16.mxu0 0
  %3337 = vmatpush1.bf16.msra.mxu0 %v3125
  %3338 = vmatprep.subr.bf16.mxu0 0
  %3339 = vmatpush1.bf16.msra.mxu0 0
  %3340 = vmatprep.subr.bf16.mxu0 0
  %3341 = vmatpush1.bf16.msra.mxu0 0
  %3342 = vmatprep.subr.bf16.mxu0 0
  %3343 = vmatpush1.bf16.msra.mxu0 0
  %3344 = vmatprep.subr.bf16.mxu0 0
  %3345 = vmatpush1.bf16.msra.mxu0 0
  %3346 = vmatprep.subr.bf16.mxu0 0
  %3347 = vmatpush1.bf16.msra.mxu0 0
  %3348 = vmatprep.subr.bf16.mxu0 0
  %3349 = vmatpush1.bf16.msra.mxu0 0
  %3350 = vmatprep.subr.bf16.mxu0 0
  %3351 = vmatpush1.bf16.msra.mxu0 0
  %3352 = vmatprep.subr.bf16.mxu0 0
  %3353 = vmatpush1.bf16.msra.mxu0 0
  %3354 = vmatprep.subr.bf16.mxu0 0
  %3355 = vmatpush1.bf16.msra.mxu0 0
  %3356 = vmatprep.subr.bf16.mxu0 0
  %3357 = vmatpush1.bf16.msra.mxu0 0
  %3358 = vmatprep.subr.bf16.mxu0 0
  %3359 = vmatpush1.bf16.msra.mxu0 0
  %3360 = vmatprep.mubr.bf16.mxu0 0
  %3361 = vmatmul.mubr.bf16.gmra.mrb[0].mxu0 %v1475
  %v3362 = vpop.f32.mrb[0].mxu0
  %v3363 = vadd.f32 0.0, %v3362
  %v3364 = vpop.f32.mrb[0].mxu0
  %v3365 = vpop.f32.mrb[0].mxu0
  %v3366 = vadd.f32 0.0, %v3365
  %v3367 = vpop.f32.mrb[0].mxu0
  %3368 = vmatprep.mubr.bf16.mxu0 0
  %3369 = vmatmul.mubr.bf16.gmra.mrb[0].mxu0 %v1478
  %v3370 = vpop.f32.mrb[0].mxu0
  %v3371 = vadd.f32 0.0, %v3370
  %v3372 = vpop.f32.mrb[0].mxu0
  %v3373 = vpop.f32.mrb[0].mxu0
  %v3374 = vadd.f32 0.0, %v3373
  %v3375 = vpop.f32.mrb[0].mxu0
  %3376 = vmatprep.mubr.bf16.mxu0 0
  %3377 = vmatmul.mubr.bf16.gmra.mrb[0].mxu0 %v1481
  %v3378 = vpop.f32.mrb[0].mxu0
  %v3379 = vadd.f32 0.0, %v3378
  %v3380 = vpop.f32.mrb[0].mxu0
  %v3381 = vpop.f32.mrb[0].mxu0
  %v3382 = vadd.f32 0.0, %v3381
  %v3383 = vpop.f32.mrb[0].mxu0
  %3384 = vmatprep.mubr.bf16.mxu0 0
  %3385 = vmatmul.mubr.bf16.gmra.mrb[0].mxu0 %v1484
  %v3386 = vpop.f32.mrb[0].mxu0
  %v3387 = vadd.f32 0.0, %v3386
  %v3388 = vpop.f32.mrb[0].mxu0
  %v3389 = vpop.f32.mrb[0].mxu0
  %v3390 = vadd.f32 0.0, %v3389
  %v3391 = vpop.f32.mrb[0].mxu0
  %3392 = vmatprep.mubr.bf16.mxu0 0
  %3393 = vmatmul.mubr.bf16.gmra.mrb[0].mxu0 %v1487
  %v3394 = vpop.f32.mrb[0].mxu0
  %v3395 = vadd.f32 0.0, %v3394
  %v3396 = vpop.f32.mrb[0].mxu0
  %v3397 = vpop.f32.mrb[0].mxu0
  %v3398 = vadd.f32 0.0, %v3397
  %v3399 = vpop.f32.mrb[0].mxu0
  %3400 = vmatprep.mubr.bf16.mxu0 0
  %3401 = vmatmul.mubr.bf16.gmra.mrb[0].mxu0 %v1490
  %v3402 = vpop.f32.mrb[0].mxu0
  %v3403 = vadd.f32 0.0, %v3402
  %v3404 = vpop.f32.mrb[0].mxu0
  %v3405 = vpop.f32.mrb[0].mxu0
  %v3406 = vadd.f32 0.0, %v3405
  %v3407 = vpop.f32.mrb[0].mxu0
  %3408 = vmatprep.mubr.bf16.mxu0 0
  %3409 = vmatmul.mubr.bf16.gmra.mrb[0].mxu0 %v1493
  %v3410 = vpop.f32.mrb[0].mxu0
  %v3411 = vadd.f32 0.0, %v3410
  %v3412 = vpop.f32.mrb[0].mxu0
  %v3413 = vpop.f32.mrb[0].mxu0
  %v3414 = vadd.f32 0.0, %v3413
  %v3415 = vpop.f32.mrb[0].mxu0
  %3416 = vmatprep.mubr.bf16.mxu0 0
  %3417 = vmatmul.mubr.bf16.gmra.mrb[0].mxu0 %v1496
  %v3418 = vpop.f32.mrb[0].mxu0
  %v3419 = vadd.f32 0.0, %v3418
  %v3420 = vpop.f32.mrb[0].mxu0
  %v3421 = vpop.f32.mrb[0].mxu0
  %v3422 = vadd.f32 0.0, %v3421
  %v3423 = vpop.f32.mrb[0].mxu0
  %3424 = vmatprep.mubr.bf16.mxu0 0
  %3425 = vmatmul.mubr.bf16.gmra.mrb[0].mxu0 %v1499
  %v3426 = vpop.f32.mrb[0].mxu0
  %v3427 = vadd.f32 0.0, %v3426
  %v3428 = vpop.f32.mrb[0].mxu0
  %v3429 = vpop.f32.mrb[0].mxu0
  %v3430 = vadd.f32 0.0, %v3429
  %v3431 = vpop.f32.mrb[0].mxu0
  %3432 = vmatprep.mubr.bf16.mxu0 0
  %3433 = vmatmul.mubr.bf16.gmra.mrb[0].mxu0 %v1502
  %v3434 = vpop.f32.mrb[0].mxu0
  %v3435 = vadd.f32 0.0, %v3434
  %v3436 = vpop.f32.mrb[0].mxu0
  %v3437 = vpop.f32.mrb[0].mxu0
  %v3438 = vadd.f32 0.0, %v3437
  %v3439 = vpop.f32.mrb[0].mxu0
  %3440 = vmatprep.mubr.bf16.mxu0 0
  %3441 = vmatmul.mubr.bf16.gmra.mrb[0].mxu0 %v1505
  %v3442 = vpop.f32.mrb[0].mxu0
  %v3443 = vadd.f32 0.0, %v3442
  %v3444 = vpop.f32.mrb[0].mxu0
  %v3445 = vpop.f32.mrb[0].mxu0
  %v3446 = vadd.f32 0.0, %v3445
  %v3447 = vpop.f32.mrb[0].mxu0
  %3448 = vmatprep.mubr.bf16.mxu0 0
  %3449 = vmatmul.mubr.bf16.gmra.mrb[0].mxu0 %v1508
  %v3450 = vpop.f32.mrb[0].mxu0
  %v3451 = vadd.f32 0.0, %v3450
  %v3452 = vpop.f32.mrb[0].mxu0
  %v3453 = vpop.f32.mrb[0].mxu0
  %v3454 = vadd.f32 0.0, %v3453
  %v3455 = vpop.f32.mrb[0].mxu0
  %3456 = vmatprep.mubr.bf16.mxu0 0
  %3457 = vmatmul.mubr.bf16.gmra.mrb[0].mxu0 %v1511
  %v3458 = vpop.f32.mrb[0].mxu0
  %v3459 = vadd.f32 0.0, %v3458
  %v3460 = vpop.f32.mrb[0].mxu0
  %v3461 = vpop.f32.mrb[0].mxu0
  %v3462 = vadd.f32 0.0, %v3461
  %v3463 = vpop.f32.mrb[0].mxu0
  %3464 = vmatprep.mubr.bf16.mxu0 0
  %3465 = vmatmul.mubr.bf16.gmra.mrb[0].mxu0 %v1514
  %v3466 = vpop.f32.mrb[0].mxu0
  %v3467 = vadd.f32 0.0, %v3466
  %v3468 = vpop.f32.mrb[0].mxu0
  %v3469 = vpop.f32.mrb[0].mxu0
  %v3470 = vadd.f32 0.0, %v3469
  %v3471 = vpop.f32.mrb[0].mxu0
  %3472 = vmatprep.mubr.bf16.mxu0 0
  %3473 = vmatmul.mubr.bf16.gmra.mrb[0].mxu0 %v1517
  %v3474 = vpop.f32.mrb[0].mxu0
  %v3475 = vadd.f32 0.0, %v3474
  %v3476 = vpop.f32.mrb[0].mxu0
  %v3477 = vpop.f32.mrb[0].mxu0
  %v3478 = vadd.f32 0.0, %v3477
  %v3479 = vpop.f32.mrb[0].mxu0
  %3480 = vmatprep.mubr.bf16.mxu0 0
  %3481 = vmatmul.mubr.bf16.gmra.mrb[0].mxu0 %v1520
  %v3482 = vpop.f32.mrb[0].mxu0
  %v3483 = vadd.f32 0.0, %v3482
  %v3484 = vpop.f32.mrb[0].mxu0
  %v3485 = vpop.f32.mrb[0].mxu0
  %v3486 = vadd.f32 0.0, %v3485
  %v3487 = vpop.f32.mrb[0].mxu0
  %3488 = vmatprep.mubr.bf16.mxu0 0
  %3489 = vmatmul.mubr.bf16.gmra.mrb[0].mxu0 %v1523
  %v3490 = vpop.f32.mrb[0].mxu0
  %v3491 = vadd.f32 0.0, %v3490
  %v3492 = vpop.f32.mrb[0].mxu0
  %v3493 = vpop.f32.mrb[0].mxu0
  %v3494 = vpop.f32.mrb[0].mxu0
  %3495 = vdwg.mxu0
  %v3496 = vadd.f32 %v2686, %v3162
  %v3497 = vadd.f32 %v2688, %v3164
  %v3498 = vadd.f32 %v2887, %v3363
  %v3499 = vadd.f32 %v2690, %v3166
  %v3500 = vadd.f32 %v2692, %v3168
  %v3501 = vadd.f32 %v2890, %v3366
  %v3502 = vadd.f32 %v2696, %v3172
  %v3503 = vadd.f32 %v2698, %v3174
  %v3504 = vadd.f32 %v2895, %v3371
  %v3505 = vadd.f32 %v2700, %v3176
  %v3506 = vadd.f32 %v2702, %v3178
  %v3507 = vadd.f32 %v2898, %v3374
  %v3508 = vadd.f32 %v2706, %v3182
  %v3509 = vadd.f32 %v2708, %v3184
  %v3510 = vadd.f32 %v2903, %v3379
  %v3511 = vadd.f32 %v2710, %v3186
  %v3512 = vadd.f32 %v2712, %v3188
  %v3513 = vadd.f32 %v2906, %v3382
  %v3514 = vadd.f32 %v2716, %v3192
  %v3515 = vadd.f32 %v2718, %v3194
  %v3516 = vadd.f32 %v2911, %v3387
  %v3517 = vadd.f32 %v2720, %v3196
  %v3518 = vadd.f32 %v2722, %v3198
  %v3519 = vadd.f32 %v2914, %v3390
  %v3520 = vadd.f32 %v2726, %v3202
  %v3521 = vadd.f32 %v2728, %v3204
  %v3522 = vadd.f32 %v2919, %v3395
  %v3523 = vadd.f32 %v2730, %v3206
  %v3524 = vadd.f32 %v2732, %v3208
  %v3525 = vadd.f32 %v2922, %v3398
  %v3526 = vadd.f32 %v2736, %v3212
  %v3527 = vadd.f32 %v2738, %v3214
  %v3528 = vadd.f32 %v2927, %v3403
  %v3529 = vadd.f32 %v2740, %v3216
  %v3530 = vadd.f32 %v2742, %v3218
  %v3531 = vadd.f32 %v2930, %v3406
  %v3532 = vadd.f32 %v2746, %v3222
  %v3533 = vadd.f32 %v2748, %v3224
  %v3534 = vadd.f32 %v2935, %v3411
  %v3535 = vadd.f32 %v2750, %v3226
  %v3536 = vadd.f32 %v2752, %v3228
  %v3537 = vadd.f32 %v2938, %v3414
  %v3538 = vadd.f32 %v2756, %v3232
  %v3539 = vadd.f32 %v2758, %v3234
  %v3540 = vadd.f32 %v2943, %v3419
  %v3541 = vadd.f32 %v2760, %v3236
  %v3542 = vadd.f32 %v2762, %v3238
  %v3543 = vadd.f32 %v2946, %v3422
  %v3544 = vadd.f32 %v2766, %v3242
  %v3545 = vadd.f32 %v2768, %v3244
  %v3546 = vadd.f32 %v2951, %v3427
  %v3547 = vadd.f32 %v2770, %v3246
  %v3548 = vadd.f32 %v2772, %v3248
  %v3549 = vadd.f32 %v2954, %v3430
  %v3550 = vadd.f32 %v2776, %v3252
  %v3551 = vadd.f32 %v2778, %v3254
  %v3552 = vadd.f32 %v2959, %v3435
  %v3553 = vadd.f32 %v2780, %v3256
  %v3554 = vadd.f32 %v2782, %v3258
  %v3555 = vadd.f32 %v2962, %v3438
  %v3556 = vadd.f32 %v2786, %v3262
  %v3557 = vadd.f32 %v2788, %v3264
  %v3558 = vadd.f32 %v2967, %v3443
  %v3559 = vadd.f32 %v2790, %v3266
  %v3560 = vadd.f32 %v2792, %v3268
  %v3561 = vadd.f32 %v2970, %v3446
  %v3562 = vadd.f32 %v2796, %v3272
  %v3563 = vadd.f32 %v2798, %v3274
  %v3564 = vadd.f32 %v2975, %v3451
  %v3565 = vadd.f32 %v2800, %v3276
  %v3566 = vadd.f32 %v2802, %v3278
  %v3567 = vadd.f32 %v2978, %v3454
  %v3568 = vadd.f32 %v2806, %v3282
  %v3569 = vadd.f32 %v2808, %v3284
  %v3570 = vadd.f32 %v2983, %v3459
  %v3571 = vadd.f32 %v2810, %v3286
  %v3572 = vadd.f32 %v2812, %v3288
  %v3573 = vadd.f32 %v2986, %v3462
  %v3574 = vadd.f32 %v2816, %v3292
  %v3575 = vadd.f32 %v2818, %v3294
  %v3576 = vadd.f32 %v2991, %v3467
  %v3577 = vadd.f32 %v2820, %v3296
  %v3578 = vadd.f32 %v2822, %v3298
  %v3579 = vadd.f32 %v2994, %v3470
  %v3580 = vadd.f32 %v2826, %v3302
  %v3581 = vadd.f32 %v2828, %v3304
  %v3582 = vadd.f32 %v2999, %v3475
  %v3583 = vadd.f32 %v2830, %v3306
  %v3584 = vadd.f32 %v2832, %v3308
  %v3585 = vadd.f32 %v3002, %v3478
  %v3586 = vadd.f32 %v2836, %v3312
  %v3587 = vadd.f32 %v2838, %v3314
  %v3588 = vadd.f32 %v3007, %v3483
  %v3589 = vadd.f32 %v2840, %v3316
  %v3590 = vadd.f32 %v2842, %v3318
  %v3591 = vadd.f32 %v3010, %v3486
  %v3592 = vadd.f32 %v2846, %v3322
  %v3593 = vadd.f32 %v2848, %v3324
  %v3594 = vadd.f32 %v3015, %v3491
  %v3595 = vmax.f32 %v3496, %v3529
  %v3596 = vmax.f32 %v3497, %v3530
  %v3597 = vmax.f32 %v3498, %v3531
  %v3598 = vmax.f32 %v3499, %v3532
  %v3599 = vmax.f32 %v3500, %v3533
  %v3600 = vmax.f32 %v3501, %v3534
  %v3601 = vmax.f32 %v3502, %v3535
  %v3602 = vmax.f32 %v3503, %v3536
  %v3603 = vmax.f32 %v3504, %v3537
  %v3604 = vmax.f32 %v3505, %v3538
  %v3605 = vmax.f32 %v3506, %v3539
  %v3606 = vmax.f32 %v3507, %v3540
  %v3607 = vmax.f32 %v3508, %v3541
  %v3608 = vmax.f32 %v3509, %v3542
  %v3609 = vmax.f32 %v3510, %v3543
  %v3610 = vmax.f32 %v3511, %v3544
  %v3611 = vmax.f32 %v3512, %v3545
  %v3612 = vmax.f32 %v3513, %v3546
  %v3613 = vmax.f32 %v3514, %v3547
  %v3614 = vmax.f32 %v3515, %v3548
  %v3615 = vmax.f32 %v3516, %v3549
  %v3616 = vmax.f32 %v3517, %v3550
  %v3617 = vmax.f32 %v3518, %v3551
  %v3618 = vmax.f32 %v3519, %v3552
  %v3619 = vmax.f32 %v3520, %v3553
  %v3620 = vmax.f32 %v3521, %v3554
  %v3621 = vmax.f32 %v3522, %v3555
  %v3622 = vmax.f32 %v3523, %v3556
  %v3623 = vmax.f32 %v3524, %v3557
  %v3624 = vmax.f32 %v3525, %v3558
  %v3625 = vmax.f32 %v3526, %v3559
  %v3626 = vmax.f32 %v3527, %v3560
  %v3627 = vmax.f32 %v3528, %v3561
  %v3628 = vmax.f32 %v3595, %v3562
  %v3629 = vmax.f32 %v3596, %v3563
  %v3630 = vmax.f32 %v3597, %v3564
  %v3631 = vmax.f32 %v3598, %v3565
  %v3632 = vmax.f32 %v3599, %v3566
  %v3633 = vmax.f32 %v3600, %v3567
  %v3634 = vmax.f32 %v3601, %v3568
  %v3635 = vmax.f32 %v3602, %v3569
  %v3636 = vmax.f32 %v3603, %v3570
  %v3637 = vmax.f32 %v3604, %v3571
  %v3638 = vmax.f32 %v3605, %v3572
  %v3639 = vmax.f32 %v3606, %v3573
  %v3640 = vmax.f32 %v3607, %v3574
  %v3641 = vmax.f32 %v3608, %v3575
  %v3642 = vmax.f32 %v3609, %v3576
  %v3643 = vmax.f32 %v3610, %v3577
  %v3644 = vmax.f32 %v3611, %v3578
  %v3645 = vmax.f32 %v3612, %v3579
  %v3646 = vmax.f32 %v3613, %v3580
  %v3647 = vmax.f32 %v3614, %v3581
  %v3648 = vmax.f32 %v3615, %v3582
  %v3649 = vmax.f32 %v3616, %v3583
  %v3650 = vmax.f32 %v3617, %v3584
  %v3651 = vmax.f32 %v3618, %v3585
  %v3652 = vmax.f32 %v3619, %v3586
  %v3653 = vmax.f32 %v3620, %v3587
  %v3654 = vmax.f32 %v3621, %v3588
  %v3655 = vmax.f32 %v3622, %v3589
  %v3656 = vmax.f32 %v3623, %v3590
  %v3657 = vmax.f32 %v3624, %v3591
  %v3658 = vmax.f32 %v3625, %v3592
  %v3659 = vmax.f32 %v3626, %v3593
  %v3660 = vmax.f32 %v3627, %v3594
  %v3661 = vmax.f32 %v2035, %v3628
  %v3662 = vmax.f32 %v2036, %v3629
  %v3663 = vmax.f32 %v2037, %v3630
  %v3664 = vmax.f32 %v2038, %v3631
  %v3665 = vmax.f32 %v2039, %v3632
  %v3666 = vmax.f32 %v2040, %v3633
  %v3667 = vmax.f32 %v2041, %v3634
  %v3668 = vmax.f32 %v2042, %v3635
  %v3669 = vmax.f32 %v2043, %v3636
  %v3670 = vmax.f32 %v2044, %v3637
  %v3671 = vmax.f32 %v2045, %v3638
  %v3672 = vmax.f32 %v2046, %v3639
  %v3673 = vmax.f32 %v2047, %v3640
  %v3674 = vmax.f32 %v2048, %v3641
  %v3675 = vmax.f32 %v2049, %v3642
  %v3676 = vmax.f32 %v2050, %v3643
  %v3677 = vmax.f32 %v2051, %v3644
  %v3678 = vmax.f32 %v2052, %v3645
  %v3679 = vmax.f32 %v2053, %v3646
  %v3680 = vmax.f32 %v2054, %v3647
  %v3681 = vmax.f32 %v2055, %v3648
  %v3682 = vmax.f32 %v2056, %v3649
  %v3683 = vmax.f32 %v2057, %v3650
  %v3684 = vmax.f32 %v2058, %v3651
  %v3685 = vmax.f32 %v2059, %v3652
  %v3686 = vmax.f32 %v2060, %v3653
  %v3687 = vmax.f32 %v2061, %v3654
  %v3688 = vmax.f32 %v2062, %v3655
  %v3689 = vmax.f32 %v2063, %v3656
  %v3690 = vmax.f32 %v2064, %v3657
  %v3691 = vmax.f32 %v2065, %v3658
  %v3692 = vmax.f32 %v2066, %v3659
  %v3693 = vmax.f32 %v2067, %v3660
  %s3694 = scalar_lea.vmem %s1, 720
  %v3695 = vld [vmem:[%s3694] sm:$0xff]
  %v3696 = vld [vmem:[%s3694 + $0x8] sm:$0xf]
  %v3697 = vld [vmem:[%s3694 + $0xc] sm:$0xff]
  %v3698 = vld [vmem:[%s3694 + $0x14] sm:$0xf]
  %v3699 = vld [vmem:[%s3694 + $0x18] sm:$0xff]
  %v3700 = vld [vmem:[%s3694 + $0x20] sm:$0xf]
  %v3701 = vld [vmem:[%s3694 + $0x24] sm:$0xff]
  %v3702 = vld [vmem:[%s3694 + $0x2c] sm:$0xf]
  %v3703 = vld [vmem:[%s3694 + $0x30] sm:$0xff]
  %v3704 = vld [vmem:[%s3694 + $0x38] sm:$0xf]
  %v3705 = vld [vmem:[%s3694 + $0x3c] sm:$0xff]
  %v3706 = vld [vmem:[%s3694 + $0x44] sm:$0xf]
  %v3707 = vld [vmem:[%s3694 + $0x48] sm:$0xff]
  %v3708 = vld [vmem:[%s3694 + $0x50] sm:$0xf]
  %v3709 = vld [vmem:[%s3694 + $0x54] sm:$0xff]
  %v3710 = vld [vmem:[%s3694 + $0x5c] sm:$0xf]
  %v3711 = vld [vmem:[%s3694 + $0x60] sm:$0xff]
  %v3712 = vld [vmem:[%s3694 + $0x68] sm:$0xf]
  %v3713 = vld [vmem:[%s3694 + $0x6c] sm:$0x77]
  %v3714 = vld [vmem:[%s3694 + $0x74] sm:$0x7]
  %s3715 = scalar_lea.vmem %s1, 840
  %v3716 = vld [vmem:[%s3715] sm:$0xff]
  %v3717 = vld [vmem:[%s3715 + $0x8] sm:$0xf]
  %v3718 = vld [vmem:[%s3715 + $0xc] sm:$0xff]
  %v3719 = vld [vmem:[%s3715 + $0x14] sm:$0xf]
  %v3720 = vld [vmem:[%s3715 + $0x18] sm:$0xff]
  %v3721 = vld [vmem:[%s3715 + $0x20] sm:$0xf]
  %v3722 = vld [vmem:[%s3715 + $0x24] sm:$0xff]
  %v3723 = vld [vmem:[%s3715 + $0x2c] sm:$0xf]
  %v3724 = vld [vmem:[%s3715 + $0x30] sm:$0xff]
  %v3725 = vld [vmem:[%s3715 + $0x38] sm:$0xf]
  %v3726 = vld [vmem:[%s3715 + $0x3c] sm:$0xff]
  %v3727 = vld [vmem:[%s3715 + $0x44] sm:$0xf]
  %v3728 = vld [vmem:[%s3715 + $0x48] sm:$0xff]
  %v3729 = vld [vmem:[%s3715 + $0x50] sm:$0xf]
  %v3730 = vld [vmem:[%s3715 + $0x54] sm:$0xff]
  %v3731 = vld [vmem:[%s3715 + $0x5c] sm:$0xf]
  %v3732 = vld [vmem:[%s3715 + $0x60] sm:$0xff]
  %v3733 = vld [vmem:[%s3715 + $0x68] sm:$0xf]
  %v3734 = vld [vmem:[%s3715 + $0x6c] sm:$0x77]
  %v3735 = vld [vmem:[%s3715 + $0x74] sm:$0x7]
  %v3756 = vunpack.c.l.b16 %v3716
  %v3757 = vunpack.c.h.b16 %v3716
  %v3758 = vunpack.c.l.b16 %v3717
  %v3759 = vunpack.c.l.b16 %v3718
  %v3760 = vunpack.c.h.b16 %v3718
  %v3761 = vunpack.c.l.b16 %v3719
  %v3762 = vunpack.c.l.b16 %v3720
  %v3763 = vunpack.c.h.b16 %v3720
  %v3764 = vunpack.c.l.b16 %v3721
  %v3765 = vunpack.c.l.b16 %v3722
  %v3766 = vunpack.c.h.b16 %v3722
  %v3767 = vunpack.c.l.b16 %v3723
  %v3768 = vunpack.c.l.b16 %v3724
  %v3769 = vunpack.c.h.b16 %v3724
  %v3770 = vunpack.c.l.b16 %v3725
  %v3771 = vunpack.c.l.b16 %v3726
  %v3772 = vunpack.c.h.b16 %v3726
  %v3773 = vunpack.c.l.b16 %v3727
  %v3774 = vunpack.c.l.b16 %v3728
  %v3775 = vunpack.c.h.b16 %v3728
  %v3776 = vunpack.c.l.b16 %v3729
  %v3777 = vunpack.c.l.b16 %v3730
  %v3778 = vunpack.c.h.b16 %v3730
  %v3779 = vunpack.c.l.b16 %v3731
  %v3780 = vunpack.c.l.b16 %v3732
  %v3781 = vunpack.c.h.b16 %v3732
  %v3782 = vunpack.c.l.b16 %v3733
  %v3783 = vunpack.c.l.b16 %v3734
  %v3784 = vunpack.c.h.b16 %v3734
  %v3785 = vunpack.c.l.b16 %v3735
  %v3786 = vpack.c.b16 %v3759, %v3756
  %v3787 = vpack.c.b16 %v3760, %v3757
  %v3788 = vpack.c.b16 %v3761, %v3758
  %v3789 = vpack.c.b16 %v3765, %v3762
  %v3790 = vpack.c.b16 %v3766, %v3763
  %v3791 = vpack.c.b16 %v3767, %v3764
  %v3792 = vpack.c.b16 %v3771, %v3768
  %v3793 = vpack.c.b16 %v3772, %v3769
  %v3794 = vpack.c.b16 %v3773, %v3770
  %v3795 = vpack.c.b16 %v3777, %v3774
  %v3796 = vpack.c.b16 %v3778, %v3775
  %v3797 = vpack.c.b16 %v3779, %v3776
  %v3798 = vpack.c.b16 %v3783, %v3780
  %v3799 = vpack.c.b16 %v3784, %v3781
  %v3800 = vpack.c.b16 %v3785, %v3782
  %v3814 = vsel %vm336, %v3798, 0
  %v3817 = vsel %vm336, %v3799, 0
  %v3820 = vsel %vm336, %v3800, 0
  %3822 = vmatprep.subr.bf16.mxu0 %v3787
  %3823 = vmatpush1.bf16.msra.mxu0 %v3786
  %3824 = vmatprep.subr.bf16.mxu0 %v3790
  %3825 = vmatpush1.bf16.msra.mxu0 %v3789
  %3826 = vmatprep.subr.bf16.mxu0 %v3793
  %3827 = vmatpush1.bf16.msra.mxu0 %v3792
  %3828 = vmatprep.subr.bf16.mxu0 %v3796
  %3829 = vmatpush1.bf16.msra.mxu0 %v3795
  %3830 = vmatprep.subr.bf16.mxu0 %v3817
  %3831 = vmatpush1.bf16.msra.mxu0 %v3814
  %3832 = vmatprep.subr.bf16.mxu0 0
  %3833 = vmatpush1.bf16.msra.mxu0 0
  %3834 = vmatprep.subr.bf16.mxu0 0
  %3835 = vmatpush1.bf16.msra.mxu0 0
  %3836 = vmatprep.subr.bf16.mxu0 0
  %3837 = vmatpush1.bf16.msra.mxu0 0
  %3838 = vmatprep.subr.bf16.mxu0 0
  %3839 = vmatpush1.bf16.msra.mxu0 0
  %3840 = vmatprep.subr.bf16.mxu0 0
  %3841 = vmatpush1.bf16.msra.mxu0 0
  %3842 = vmatprep.subr.bf16.mxu0 0
  %3843 = vmatpush1.bf16.msra.mxu0 0
  %3844 = vmatprep.subr.bf16.mxu0 0
  %3845 = vmatpush1.bf16.msra.mxu0 0
  %3846 = vmatprep.subr.bf16.mxu0 0
  %3847 = vmatpush1.bf16.msra.mxu0 0
  %3848 = vmatprep.subr.bf16.mxu0 0
  %3849 = vmatpush1.bf16.msra.mxu0 0
  %3850 = vmatprep.subr.bf16.mxu0 0
  %3851 = vmatpush1.bf16.msra.mxu0 0
  %3852 = vmatprep.subr.bf16.mxu0 0
  %3853 = vmatpush1.bf16.msra.mxu0 0
  %3854 = vmatprep.mubr.bf16.mxu0 0
  %3855 = vmatmul.mubr.bf16.gmra.mrb[0].mxu0 %v286
  %v3856 = vpop.f32.mrb[0].mxu0
  %v3857 = vadd.f32 0.0, %v3856
  %v3858 = vpop.f32.mrb[0].mxu0
  %v3859 = vadd.f32 0.0, %v3858
  %v3860 = vpop.f32.mrb[0].mxu0
  %v3861 = vadd.f32 0.0, %v3860
  %v3862 = vpop.f32.mrb[0].mxu0
  %v3863 = vadd.f32 0.0, %v3862
  %3864 = vmatprep.mubr.bf16.mxu0 0
  %3865 = vmatmul.mubr.bf16.gmra.mrb[0].mxu0 %v289
  %v3866 = vpop.f32.mrb[0].mxu0
  %v3867 = vadd.f32 0.0, %v3866
  %v3868 = vpop.f32.mrb[0].mxu0
  %v3869 = vadd.f32 0.0, %v3868
  %v3870 = vpop.f32.mrb[0].mxu0
  %v3871 = vadd.f32 0.0, %v3870
  %v3872 = vpop.f32.mrb[0].mxu0
  %v3873 = vadd.f32 0.0, %v3872
  %3874 = vmatprep.mubr.bf16.mxu0 0
  %3875 = vmatmul.mubr.bf16.gmra.mrb[0].mxu0 %v292
  %v3876 = vpop.f32.mrb[0].mxu0
  %v3877 = vadd.f32 0.0, %v3876
  %v3878 = vpop.f32.mrb[0].mxu0
  %v3879 = vadd.f32 0.0, %v3878
  %v3880 = vpop.f32.mrb[0].mxu0
  %v3881 = vadd.f32 0.0, %v3880
  %v3882 = vpop.f32.mrb[0].mxu0
  %v3883 = vadd.f32 0.0, %v3882
  %3884 = vmatprep.mubr.bf16.mxu0 0
  %3885 = vmatmul.mubr.bf16.gmra.mrb[0].mxu0 %v295
  %v3886 = vpop.f32.mrb[0].mxu0
  %v3887 = vadd.f32 0.0, %v3886
  %v3888 = vpop.f32.mrb[0].mxu0
  %v3889 = vadd.f32 0.0, %v3888
  %v3890 = vpop.f32.mrb[0].mxu0
  %v3891 = vadd.f32 0.0, %v3890
  %v3892 = vpop.f32.mrb[0].mxu0
  %v3893 = vadd.f32 0.0, %v3892
  %3894 = vmatprep.mubr.bf16.mxu0 0
  %3895 = vmatmul.mubr.bf16.gmra.mrb[0].mxu0 %v298
  %v3896 = vpop.f32.mrb[0].mxu0
  %v3897 = vadd.f32 0.0, %v3896
  %v3898 = vpop.f32.mrb[0].mxu0
  %v3899 = vadd.f32 0.0, %v3898
  %v3900 = vpop.f32.mrb[0].mxu0
  %v3901 = vadd.f32 0.0, %v3900
  %v3902 = vpop.f32.mrb[0].mxu0
  %v3903 = vadd.f32 0.0, %v3902
  %3904 = vmatprep.mubr.bf16.mxu0 0
  %3905 = vmatmul.mubr.bf16.gmra.mrb[0].mxu0 %v301
  %v3906 = vpop.f32.mrb[0].mxu0
  %v3907 = vadd.f32 0.0, %v3906
  %v3908 = vpop.f32.mrb[0].mxu0
  %v3909 = vadd.f32 0.0, %v3908
  %v3910 = vpop.f32.mrb[0].mxu0
  %v3911 = vadd.f32 0.0, %v3910
  %v3912 = vpop.f32.mrb[0].mxu0
  %v3913 = vadd.f32 0.0, %v3912
  %3914 = vmatprep.mubr.bf16.mxu0 0
  %3915 = vmatmul.mubr.bf16.gmra.mrb[0].mxu0 %v304
  %v3916 = vpop.f32.mrb[0].mxu0
  %v3917 = vadd.f32 0.0, %v3916
  %v3918 = vpop.f32.mrb[0].mxu0
  %v3919 = vadd.f32 0.0, %v3918
  %v3920 = vpop.f32.mrb[0].mxu0
  %v3921 = vadd.f32 0.0, %v3920
  %v3922 = vpop.f32.mrb[0].mxu0
  %v3923 = vadd.f32 0.0, %v3922
  %3924 = vmatprep.mubr.bf16.mxu0 0
  %3925 = vmatmul.mubr.bf16.gmra.mrb[0].mxu0 %v307
  %v3926 = vpop.f32.mrb[0].mxu0
  %v3927 = vadd.f32 0.0, %v3926
  %v3928 = vpop.f32.mrb[0].mxu0
  %v3929 = vadd.f32 0.0, %v3928
  %v3930 = vpop.f32.mrb[0].mxu0
  %v3931 = vadd.f32 0.0, %v3930
  %v3932 = vpop.f32.mrb[0].mxu0
  %v3933 = vadd.f32 0.0, %v3932
  %3934 = vmatprep.mubr.bf16.mxu0 0
  %3935 = vmatmul.mubr.bf16.gmra.mrb[0].mxu0 %v310
  %v3936 = vpop.f32.mrb[0].mxu0
  %v3937 = vadd.f32 0.0, %v3936
  %v3938 = vpop.f32.mrb[0].mxu0
  %v3939 = vadd.f32 0.0, %v3938
  %v3940 = vpop.f32.mrb[0].mxu0
  %v3941 = vadd.f32 0.0, %v3940
  %v3942 = vpop.f32.mrb[0].mxu0
  %v3943 = vadd.f32 0.0, %v3942
  %3944 = vmatprep.mubr.bf16.mxu0 0
  %3945 = vmatmul.mubr.bf16.gmra.mrb[0].mxu0 %v313
  %v3946 = vpop.f32.mrb[0].mxu0
  %v3947 = vadd.f32 0.0, %v3946
  %v3948 = vpop.f32.mrb[0].mxu0
  %v3949 = vadd.f32 0.0, %v3948
  %v3950 = vpop.f32.mrb[0].mxu0
  %v3951 = vadd.f32 0.0, %v3950
  %v3952 = vpop.f32.mrb[0].mxu0
  %v3953 = vadd.f32 0.0, %v3952
  %3954 = vmatprep.mubr.bf16.mxu0 0
  %3955 = vmatmul.mubr.bf16.gmra.mrb[0].mxu0 %v316
  %v3956 = vpop.f32.mrb[0].mxu0
  %v3957 = vadd.f32 0.0, %v3956
  %v3958 = vpop.f32.mrb[0].mxu0
  %v3959 = vadd.f32 0.0, %v3958
  %v3960 = vpop.f32.mrb[0].mxu0
  %v3961 = vadd.f32 0.0, %v3960
  %v3962 = vpop.f32.mrb[0].mxu0
  %v3963 = vadd.f32 0.0, %v3962
  %3964 = vmatprep.mubr.bf16.mxu0 0
  %3965 = vmatmul.mubr.bf16.gmra.mrb[0].mxu0 %v319
  %v3966 = vpop.f32.mrb[0].mxu0
  %v3967 = vadd.f32 0.0, %v3966
  %v3968 = vpop.f32.mrb[0].mxu0
  %v3969 = vadd.f32 0.0, %v3968
  %v3970 = vpop.f32.mrb[0].mxu0
  %v3971 = vadd.f32 0.0, %v3970
  %v3972 = vpop.f32.mrb[0].mxu0
  %v3973 = vadd.f32 0.0, %v3972
  %3974 = vmatprep.mubr.bf16.mxu0 0
  %3975 = vmatmul.mubr.bf16.gmra.mrb[0].mxu0 %v322
  %v3976 = vpop.f32.mrb[0].mxu0
  %v3977 = vadd.f32 0.0, %v3976
  %v3978 = vpop.f32.mrb[0].mxu0
  %v3979 = vadd.f32 0.0, %v3978
  %v3980 = vpop.f32.mrb[0].mxu0
  %v3981 = vadd.f32 0.0, %v3980
  %v3982 = vpop.f32.mrb[0].mxu0
  %v3983 = vadd.f32 0.0, %v3982
  %3984 = vmatprep.mubr.bf16.mxu0 0
  %3985 = vmatmul.mubr.bf16.gmra.mrb[0].mxu0 %v325
  %v3986 = vpop.f32.mrb[0].mxu0
  %v3987 = vadd.f32 0.0, %v3986
  %v3988 = vpop.f32.mrb[0].mxu0
  %v3989 = vadd.f32 0.0, %v3988
  %v3990 = vpop.f32.mrb[0].mxu0
  %v3991 = vadd.f32 0.0, %v3990
  %v3992 = vpop.f32.mrb[0].mxu0
  %v3993 = vadd.f32 0.0, %v3992
  %3994 = vmatprep.mubr.bf16.mxu0 0
  %3995 = vmatmul.mubr.bf16.gmra.mrb[0].mxu0 %v328
  %v3996 = vpop.f32.mrb[0].mxu0
  %v3997 = vadd.f32 0.0, %v3996
  %v3998 = vpop.f32.mrb[0].mxu0
  %v3999 = vadd.f32 0.0, %v3998
  %v4000 = vpop.f32.mrb[0].mxu0
  %v4001 = vadd.f32 0.0, %v4000
  %v4002 = vpop.f32.mrb[0].mxu0
  %v4003 = vadd.f32 0.0, %v4002
  %4004 = vmatprep.mubr.bf16.mxu0 0
  %4005 = vmatmul.mubr.bf16.gmra.mrb[0].mxu0 %v331
  %v4006 = vpop.f32.mrb[0].mxu0
  %v4007 = vadd.f32 0.0, %v4006
  %v4008 = vpop.f32.mrb[0].mxu0
  %v4009 = vadd.f32 0.0, %v4008
  %v4010 = vpop.f32.mrb[0].mxu0
  %v4011 = vadd.f32 0.0, %v4010
  %v4012 = vpop.f32.mrb[0].mxu0
  %v4013 = vadd.f32 0.0, %v4012
  %4014 = vmatprep.mubr.bf16.mxu0 0
  %4015 = vmatmul.mubr.bf16.gmra.mrb[0].mxu0 %v334
  %v4016 = vpop.f32.mrb[0].mxu0
  %v4017 = vadd.f32 0.0, %v4016
  %v4018 = vpop.f32.mrb[0].mxu0
  %v4019 = vadd.f32 0.0, %v4018
  %v4020 = vpop.f32.mrb[0].mxu0
  %v4021 = vpop.f32.mrb[0].mxu0
  %4022 = vdwg.mxu0
  %4023 = vmatprep.subr.bf16.mxu0 0
  %4024 = vmatpush1.bf16.msra.mxu0 %v3788
  %4025 = vmatprep.subr.bf16.mxu0 0
  %4026 = vmatpush1.bf16.msra.mxu0 %v3791
  %4027 = vmatprep.subr.bf16.mxu0 0
  %4028 = vmatpush1.bf16.msra.mxu0 %v3794
  %4029 = vmatprep.subr.bf16.mxu0 0
  %4030 = vmatpush1.bf16.msra.mxu0 %v3797
  %4031 = vmatprep.subr.bf16.mxu0 0
  %4032 = vmatpush1.bf16.msra.mxu0 %v3820
  %4033 = vmatprep.subr.bf16.mxu0 0
  %4034 = vmatpush1.bf16.msra.mxu0 0
  %4035 = vmatprep.subr.bf16.mxu0 0
  %4036 = vmatpush1.bf16.msra.mxu0 0
  %4037 = vmatprep.subr.bf16.mxu0 0
  %4038 = vmatpush1.bf16.msra.mxu0 0
  %4039 = vmatprep.subr.bf16.mxu0 0
  %4040 = vmatpush1.bf16.msra.mxu0 0
  %4041 = vmatprep.subr.bf16.mxu0 0
  %4042 = vmatpush1.bf16.msra.mxu0 0
  %4043 = vmatprep.subr.bf16.mxu0 0
  %4044 = vmatpush1.bf16.msra.mxu0 0
  %4045 = vmatprep.subr.bf16.mxu0 0
  %4046 = vmatpush1.bf16.msra.mxu0 0
  %4047 = vmatprep.subr.bf16.mxu0 0
  %4048 = vmatpush1.bf16.msra.mxu0 0
  %4049 = vmatprep.subr.bf16.mxu0 0
  %4050 = vmatpush1.bf16.msra.mxu0 0
  %4051 = vmatprep.subr.bf16.mxu0 0
  %4052 = vmatpush1.bf16.msra.mxu0 0
  %4053 = vmatprep.subr.bf16.mxu0 0
  %4054 = vmatpush1.bf16.msra.mxu0 0
  %4055 = vmatprep.mubr.bf16.mxu0 0
  %4056 = vmatmul.mubr.bf16.gmra.mrb[0].mxu0 %v286
  %v4057 = vpop.f32.mrb[0].mxu0
  %v4058 = vadd.f32 0.0, %v4057
  %v4059 = vpop.f32.mrb[0].mxu0
  %v4060 = vpop.f32.mrb[0].mxu0
  %v4061 = vadd.f32 0.0, %v4060
  %v4062 = vpop.f32.mrb[0].mxu0
  %4063 = vmatprep.mubr.bf16.mxu0 0
  %4064 = vmatmul.mubr.bf16.gmra.mrb[0].mxu0 %v289
  %v4065 = vpop.f32.mrb[0].mxu0
  %v4066 = vadd.f32 0.0, %v4065
  %v4067 = vpop.f32.mrb[0].mxu0
  %v4068 = vpop.f32.mrb[0].mxu0
  %v4069 = vadd.f32 0.0, %v4068
  %v4070 = vpop.f32.mrb[0].mxu0
  %4071 = vmatprep.mubr.bf16.mxu0 0
  %4072 = vmatmul.mubr.bf16.gmra.mrb[0].mxu0 %v292
  %v4073 = vpop.f32.mrb[0].mxu0
  %v4074 = vadd.f32 0.0, %v4073
  %v4075 = vpop.f32.mrb[0].mxu0
  %v4076 = vpop.f32.mrb[0].mxu0
  %v4077 = vadd.f32 0.0, %v4076
  %v4078 = vpop.f32.mrb[0].mxu0
  %4079 = vmatprep.mubr.bf16.mxu0 0
  %4080 = vmatmul.mubr.bf16.gmra.mrb[0].mxu0 %v295
  %v4081 = vpop.f32.mrb[0].mxu0
  %v4082 = vadd.f32 0.0, %v4081
  %v4083 = vpop.f32.mrb[0].mxu0
  %v4084 = vpop.f32.mrb[0].mxu0
  %v4085 = vadd.f32 0.0, %v4084
  %v4086 = vpop.f32.mrb[0].mxu0
  %4087 = vmatprep.mubr.bf16.mxu0 0
  %4088 = vmatmul.mubr.bf16.gmra.mrb[0].mxu0 %v298
  %v4089 = vpop.f32.mrb[0].mxu0
  %v4090 = vadd.f32 0.0, %v4089
  %v4091 = vpop.f32.mrb[0].mxu0
  %v4092 = vpop.f32.mrb[0].mxu0
  %v4093 = vadd.f32 0.0, %v4092
  %v4094 = vpop.f32.mrb[0].mxu0
  %4095 = vmatprep.mubr.bf16.mxu0 0
  %4096 = vmatmul.mubr.bf16.gmra.mrb[0].mxu0 %v301
  %v4097 = vpop.f32.mrb[0].mxu0
  %v4098 = vadd.f32 0.0, %v4097
  %v4099 = vpop.f32.mrb[0].mxu0
  %v4100 = vpop.f32.mrb[0].mxu0
  %v4101 = vadd.f32 0.0, %v4100
  %v4102 = vpop.f32.mrb[0].mxu0
  %4103 = vmatprep.mubr.bf16.mxu0 0
  %4104 = vmatmul.mubr.bf16.gmra.mrb[0].mxu0 %v304
  %v4105 = vpop.f32.mrb[0].mxu0
  %v4106 = vadd.f32 0.0, %v4105
  %v4107 = vpop.f32.mrb[0].mxu0
  %v4108 = vpop.f32.mrb[0].mxu0
  %v4109 = vadd.f32 0.0, %v4108
  %v4110 = vpop.f32.mrb[0].mxu0
  %4111 = vmatprep.mubr.bf16.mxu0 0
  %4112 = vmatmul.mubr.bf16.gmra.mrb[0].mxu0 %v307
  %v4113 = vpop.f32.mrb[0].mxu0
  %v4114 = vadd.f32 0.0, %v4113
  %v4115 = vpop.f32.mrb[0].mxu0
  %v4116 = vpop.f32.mrb[0].mxu0
  %v4117 = vadd.f32 0.0, %v4116
  %v4118 = vpop.f32.mrb[0].mxu0
  %4119 = vmatprep.mubr.bf16.mxu0 0
  %4120 = vmatmul.mubr.bf16.gmra.mrb[0].mxu0 %v310
  %v4121 = vpop.f32.mrb[0].mxu0
  %v4122 = vadd.f32 0.0, %v4121
  %v4123 = vpop.f32.mrb[0].mxu0
  %v4124 = vpop.f32.mrb[0].mxu0
  %v4125 = vadd.f32 0.0, %v4124
  %v4126 = vpop.f32.mrb[0].mxu0
  %4127 = vmatprep.mubr.bf16.mxu0 0
  %4128 = vmatmul.mubr.bf16.gmra.mrb[0].mxu0 %v313
  %v4129 = vpop.f32.mrb[0].mxu0
  %v4130 = vadd.f32 0.0, %v4129
  %v4131 = vpop.f32.mrb[0].mxu0
  %v4132 = vpop.f32.mrb[0].mxu0
  %v4133 = vadd.f32 0.0, %v4132
  %v4134 = vpop.f32.mrb[0].mxu0
  %4135 = vmatprep.mubr.bf16.mxu0 0
  %4136 = vmatmul.mubr.bf16.gmra.mrb[0].mxu0 %v316
  %v4137 = vpop.f32.mrb[0].mxu0
  %v4138 = vadd.f32 0.0, %v4137
  %v4139 = vpop.f32.mrb[0].mxu0
  %v4140 = vpop.f32.mrb[0].mxu0
  %v4141 = vadd.f32 0.0, %v4140
  %v4142 = vpop.f32.mrb[0].mxu0
  %4143 = vmatprep.mubr.bf16.mxu0 0
  %4144 = vmatmul.mubr.bf16.gmra.mrb[0].mxu0 %v319
  %v4145 = vpop.f32.mrb[0].mxu0
  %v4146 = vadd.f32 0.0, %v4145
  %v4147 = vpop.f32.mrb[0].mxu0
  %v4148 = vpop.f32.mrb[0].mxu0
  %v4149 = vadd.f32 0.0, %v4148
  %v4150 = vpop.f32.mrb[0].mxu0
  %4151 = vmatprep.mubr.bf16.mxu0 0
  %4152 = vmatmul.mubr.bf16.gmra.mrb[0].mxu0 %v322
  %v4153 = vpop.f32.mrb[0].mxu0
  %v4154 = vadd.f32 0.0, %v4153
  %v4155 = vpop.f32.mrb[0].mxu0
  %v4156 = vpop.f32.mrb[0].mxu0
  %v4157 = vadd.f32 0.0, %v4156
  %v4158 = vpop.f32.mrb[0].mxu0
  %4159 = vmatprep.mubr.bf16.mxu0 0
  %4160 = vmatmul.mubr.bf16.gmra.mrb[0].mxu0 %v325
  %v4161 = vpop.f32.mrb[0].mxu0
  %v4162 = vadd.f32 0.0, %v4161
  %v4163 = vpop.f32.mrb[0].mxu0
  %v4164 = vpop.f32.mrb[0].mxu0
  %v4165 = vadd.f32 0.0, %v4164
  %v4166 = vpop.f32.mrb[0].mxu0
  %4167 = vmatprep.mubr.bf16.mxu0 0
  %4168 = vmatmul.mubr.bf16.gmra.mrb[0].mxu0 %v328
  %v4169 = vpop.f32.mrb[0].mxu0
  %v4170 = vadd.f32 0.0, %v4169
  %v4171 = vpop.f32.mrb[0].mxu0
  %v4172 = vpop.f32.mrb[0].mxu0
  %v4173 = vadd.f32 0.0, %v4172
  %v4174 = vpop.f32.mrb[0].mxu0
  %4175 = vmatprep.mubr.bf16.mxu0 0
  %4176 = vmatmul.mubr.bf16.gmra.mrb[0].mxu0 %v331
  %v4177 = vpop.f32.mrb[0].mxu0
  %v4178 = vadd.f32 0.0, %v4177
  %v4179 = vpop.f32.mrb[0].mxu0
  %v4180 = vpop.f32.mrb[0].mxu0
  %v4181 = vadd.f32 0.0, %v4180
  %v4182 = vpop.f32.mrb[0].mxu0
  %4183 = vmatprep.mubr.bf16.mxu0 0
  %4184 = vmatmul.mubr.bf16.gmra.mrb[0].mxu0 %v334
  %v4185 = vpop.f32.mrb[0].mxu0
  %v4186 = vadd.f32 0.0, %v4185
  %v4187 = vpop.f32.mrb[0].mxu0
  %v4188 = vpop.f32.mrb[0].mxu0
  %v4189 = vpop.f32.mrb[0].mxu0
  %4190 = vdwg.mxu0
  %v4211 = vunpack.c.l.b16 %v3695
  %v4212 = vunpack.c.h.b16 %v3695
  %v4213 = vunpack.c.l.b16 %v3696
  %v4214 = vunpack.c.l.b16 %v3697
  %v4215 = vunpack.c.h.b16 %v3697
  %v4216 = vunpack.c.l.b16 %v3698
  %v4217 = vunpack.c.l.b16 %v3699
  %v4218 = vunpack.c.h.b16 %v3699
  %v4219 = vunpack.c.l.b16 %v3700
  %v4220 = vunpack.c.l.b16 %v3701
  %v4221 = vunpack.c.h.b16 %v3701
  %v4222 = vunpack.c.l.b16 %v3702
  %v4223 = vunpack.c.l.b16 %v3703
  %v4224 = vunpack.c.h.b16 %v3703
  %v4225 = vunpack.c.l.b16 %v3704
  %v4226 = vunpack.c.l.b16 %v3705
  %v4227 = vunpack.c.h.b16 %v3705
  %v4228 = vunpack.c.l.b16 %v3706
  %v4229 = vunpack.c.l.b16 %v3707
  %v4230 = vunpack.c.h.b16 %v3707
  %v4231 = vunpack.c.l.b16 %v3708
  %v4232 = vunpack.c.l.b16 %v3709
  %v4233 = vunpack.c.h.b16 %v3709
  %v4234 = vunpack.c.l.b16 %v3710
  %v4235 = vunpack.c.l.b16 %v3711
  %v4236 = vunpack.c.h.b16 %v3711
  %v4237 = vunpack.c.l.b16 %v3712
  %v4238 = vunpack.c.l.b16 %v3713
  %v4239 = vunpack.c.h.b16 %v3713
  %v4240 = vunpack.c.l.b16 %v3714
  %v4241 = vpack.c.b16 %v4214, %v4211
  %v4242 = vpack.c.b16 %v4215, %v4212
  %v4243 = vpack.c.b16 %v4216, %v4213
  %v4244 = vpack.c.b16 %v4220, %v4217
  %v4245 = vpack.c.b16 %v4221, %v4218
  %v4246 = vpack.c.b16 %v4222, %v4219
  %v4247 = vpack.c.b16 %v4226, %v4223
  %v4248 = vpack.c.b16 %v4227, %v4224
  %v4249 = vpack.c.b16 %v4228, %v4225
  %v4250 = vpack.c.b16 %v4232, %v4229
  %v4251 = vpack.c.b16 %v4233, %v4230
  %v4252 = vpack.c.b16 %v4234, %v4231
  %v4253 = vpack.c.b16 %v4238, %v4235
  %v4254 = vpack.c.b16 %v4239, %v4236
  %v4255 = vpack.c.b16 %v4240, %v4237
  %v4269 = vsel %vm336, %v4253, 0
  %v4272 = vsel %vm336, %v4254, 0
  %v4275 = vsel %vm336, %v4255, 0
  %4277 = vmatprep.subr.bf16.mxu0 %v4242
  %4278 = vmatpush1.bf16.msra.mxu0 %v4241
  %4279 = vmatprep.subr.bf16.mxu0 %v4245
  %4280 = vmatpush1.bf16.msra.mxu0 %v4244
  %4281 = vmatprep.subr.bf16.mxu0 %v4248
  %4282 = vmatpush1.bf16.msra.mxu0 %v4247
  %4283 = vmatprep.subr.bf16.mxu0 %v4251
  %4284 = vmatpush1.bf16.msra.mxu0 %v4250
  %4285 = vmatprep.subr.bf16.mxu0 %v4272
  %4286 = vmatpush1.bf16.msra.mxu0 %v4269
  %4287 = vmatprep.subr.bf16.mxu0 0
  %4288 = vmatpush1.bf16.msra.mxu0 0
  %4289 = vmatprep.subr.bf16.mxu0 0
  %4290 = vmatpush1.bf16.msra.mxu0 0
  %4291 = vmatprep.subr.bf16.mxu0 0
  %4292 = vmatpush1.bf16.msra.mxu0 0
  %4293 = vmatprep.subr.bf16.mxu0 0
  %4294 = vmatpush1.bf16.msra.mxu0 0
  %4295 = vmatprep.subr.bf16.mxu0 0
  %4296 = vmatpush1.bf16.msra.mxu0 0
  %4297 = vmatprep.subr.bf16.mxu0 0
  %4298 = vmatpush1.bf16.msra.mxu0 0
  %4299 = vmatprep.subr.bf16.mxu0 0
  %4300 = vmatpush1.bf16.msra.mxu0 0
  %4301 = vmatprep.subr.bf16.mxu0 0
  %4302 = vmatpush1.bf16.msra.mxu0 0
  %4303 = vmatprep.subr.bf16.mxu0 0
  %4304 = vmatpush1.bf16.msra.mxu0 0
  %4305 = vmatprep.subr.bf16.mxu0 0
  %4306 = vmatpush1.bf16.msra.mxu0 0
  %4307 = vmatprep.subr.bf16.mxu0 0
  %4308 = vmatpush1.bf16.msra.mxu0 0
  %4309 = vmatprep.mubr.bf16.mxu0 0
  %4310 = vmatmul.mubr.bf16.gmra.mrb[0].mxu0 %v832
  %v4311 = vpop.f32.mrb[0].mxu0
  %v4312 = vadd.f32 %v3857, %v4311
  %v4313 = vpop.f32.mrb[0].mxu0
  %v4314 = vadd.f32 %v3859, %v4313
  %v4315 = vpop.f32.mrb[0].mxu0
  %v4316 = vadd.f32 %v3861, %v4315
  %v4317 = vpop.f32.mrb[0].mxu0
  %v4318 = vadd.f32 %v3863, %v4317
  %4319 = vmatprep.mubr.bf16.mxu0 0
  %4320 = vmatmul.mubr.bf16.gmra.mrb[0].mxu0 %v835
  %v4321 = vpop.f32.mrb[0].mxu0
  %v4322 = vadd.f32 %v3867, %v4321
  %v4323 = vpop.f32.mrb[0].mxu0
  %v4324 = vadd.f32 %v3869, %v4323
  %v4325 = vpop.f32.mrb[0].mxu0
  %v4326 = vadd.f32 %v3871, %v4325
  %v4327 = vpop.f32.mrb[0].mxu0
  %v4328 = vadd.f32 %v3873, %v4327
  %4329 = vmatprep.mubr.bf16.mxu0 0
  %4330 = vmatmul.mubr.bf16.gmra.mrb[0].mxu0 %v838
  %v4331 = vpop.f32.mrb[0].mxu0
  %v4332 = vadd.f32 %v3877, %v4331
  %v4333 = vpop.f32.mrb[0].mxu0
  %v4334 = vadd.f32 %v3879, %v4333
  %v4335 = vpop.f32.mrb[0].mxu0
  %v4336 = vadd.f32 %v3881, %v4335
  %v4337 = vpop.f32.mrb[0].mxu0
  %v4338 = vadd.f32 %v3883, %v4337
  %4339 = vmatprep.mubr.bf16.mxu0 0
  %4340 = vmatmul.mubr.bf16.gmra.mrb[0].mxu0 %v841
  %v4341 = vpop.f32.mrb[0].mxu0
  %v4342 = vadd.f32 %v3887, %v4341
  %v4343 = vpop.f32.mrb[0].mxu0
  %v4344 = vadd.f32 %v3889, %v4343
  %v4345 = vpop.f32.mrb[0].mxu0
  %v4346 = vadd.f32 %v3891, %v4345
  %v4347 = vpop.f32.mrb[0].mxu0
  %v4348 = vadd.f32 %v3893, %v4347
  %4349 = vmatprep.mubr.bf16.mxu0 0
  %4350 = vmatmul.mubr.bf16.gmra.mrb[0].mxu0 %v844
  %v4351 = vpop.f32.mrb[0].mxu0
  %v4352 = vadd.f32 %v3897, %v4351
  %v4353 = vpop.f32.mrb[0].mxu0
  %v4354 = vadd.f32 %v3899, %v4353
  %v4355 = vpop.f32.mrb[0].mxu0
  %v4356 = vadd.f32 %v3901, %v4355
  %v4357 = vpop.f32.mrb[0].mxu0
  %v4358 = vadd.f32 %v3903, %v4357
  %4359 = vmatprep.mubr.bf16.mxu0 0
  %4360 = vmatmul.mubr.bf16.gmra.mrb[0].mxu0 %v847
  %v4361 = vpop.f32.mrb[0].mxu0
  %v4362 = vadd.f32 %v3907, %v4361
  %v4363 = vpop.f32.mrb[0].mxu0
  %v4364 = vadd.f32 %v3909, %v4363
  %v4365 = vpop.f32.mrb[0].mxu0
  %v4366 = vadd.f32 %v3911, %v4365
  %v4367 = vpop.f32.mrb[0].mxu0
  %v4368 = vadd.f32 %v3913, %v4367
  %4369 = vmatprep.mubr.bf16.mxu0 0
  %4370 = vmatmul.mubr.bf16.gmra.mrb[0].mxu0 %v850
  %v4371 = vpop.f32.mrb[0].mxu0
  %v4372 = vadd.f32 %v3917, %v4371
  %v4373 = vpop.f32.mrb[0].mxu0
  %v4374 = vadd.f32 %v3919, %v4373
  %v4375 = vpop.f32.mrb[0].mxu0
  %v4376 = vadd.f32 %v3921, %v4375
  %v4377 = vpop.f32.mrb[0].mxu0
  %v4378 = vadd.f32 %v3923, %v4377
  %4379 = vmatprep.mubr.bf16.mxu0 0
  %4380 = vmatmul.mubr.bf16.gmra.mrb[0].mxu0 %v853
  %v4381 = vpop.f32.mrb[0].mxu0
  %v4382 = vadd.f32 %v3927, %v4381
  %v4383 = vpop.f32.mrb[0].mxu0
  %v4384 = vadd.f32 %v3929, %v4383
  %v4385 = vpop.f32.mrb[0].mxu0
  %v4386 = vadd.f32 %v3931, %v4385
  %v4387 = vpop.f32.mrb[0].mxu0
  %v4388 = vadd.f32 %v3933, %v4387
  %4389 = vmatprep.mubr.bf16.mxu0 0
  %4390 = vmatmul.mubr.bf16.gmra.mrb[0].mxu0 %v856
  %v4391 = vpop.f32.mrb[0].mxu0
  %v4392 = vadd.f32 %v3937, %v4391
  %v4393 = vpop.f32.mrb[0].mxu0
  %v4394 = vadd.f32 %v3939, %v4393
  %v4395 = vpop.f32.mrb[0].mxu0
  %v4396 = vadd.f32 %v3941, %v4395
  %v4397 = vpop.f32.mrb[0].mxu0
  %v4398 = vadd.f32 %v3943, %v4397
  %4399 = vmatprep.mubr.bf16.mxu0 0
  %4400 = vmatmul.mubr.bf16.gmra.mrb[0].mxu0 %v859
  %v4401 = vpop.f32.mrb[0].mxu0
  %v4402 = vadd.f32 %v3947, %v4401
  %v4403 = vpop.f32.mrb[0].mxu0
  %v4404 = vadd.f32 %v3949, %v4403
  %v4405 = vpop.f32.mrb[0].mxu0
  %v4406 = vadd.f32 %v3951, %v4405
  %v4407 = vpop.f32.mrb[0].mxu0
  %v4408 = vadd.f32 %v3953, %v4407
  %4409 = vmatprep.mubr.bf16.mxu0 0
  %4410 = vmatmul.mubr.bf16.gmra.mrb[0].mxu0 %v862
  %v4411 = vpop.f32.mrb[0].mxu0
  %v4412 = vadd.f32 %v3957, %v4411
  %v4413 = vpop.f32.mrb[0].mxu0
  %v4414 = vadd.f32 %v3959, %v4413
  %v4415 = vpop.f32.mrb[0].mxu0
  %v4416 = vadd.f32 %v3961, %v4415
  %v4417 = vpop.f32.mrb[0].mxu0
  %v4418 = vadd.f32 %v3963, %v4417
  %4419 = vmatprep.mubr.bf16.mxu0 0
  %4420 = vmatmul.mubr.bf16.gmra.mrb[0].mxu0 %v865
  %v4421 = vpop.f32.mrb[0].mxu0
  %v4422 = vadd.f32 %v3967, %v4421
  %v4423 = vpop.f32.mrb[0].mxu0
  %v4424 = vadd.f32 %v3969, %v4423
  %v4425 = vpop.f32.mrb[0].mxu0
  %v4426 = vadd.f32 %v3971, %v4425
  %v4427 = vpop.f32.mrb[0].mxu0
  %v4428 = vadd.f32 %v3973, %v4427
  %4429 = vmatprep.mubr.bf16.mxu0 0
  %4430 = vmatmul.mubr.bf16.gmra.mrb[0].mxu0 %v868
  %v4431 = vpop.f32.mrb[0].mxu0
  %v4432 = vadd.f32 %v3977, %v4431
  %v4433 = vpop.f32.mrb[0].mxu0
  %v4434 = vadd.f32 %v3979, %v4433
  %v4435 = vpop.f32.mrb[0].mxu0
  %v4436 = vadd.f32 %v3981, %v4435
  %v4437 = vpop.f32.mrb[0].mxu0
  %v4438 = vadd.f32 %v3983, %v4437
  %4439 = vmatprep.mubr.bf16.mxu0 0
  %4440 = vmatmul.mubr.bf16.gmra.mrb[0].mxu0 %v871
  %v4441 = vpop.f32.mrb[0].mxu0
  %v4442 = vadd.f32 %v3987, %v4441
  %v4443 = vpop.f32.mrb[0].mxu0
  %v4444 = vadd.f32 %v3989, %v4443
  %v4445 = vpop.f32.mrb[0].mxu0
  %v4446 = vadd.f32 %v3991, %v4445
  %v4447 = vpop.f32.mrb[0].mxu0
  %v4448 = vadd.f32 %v3993, %v4447
  %4449 = vmatprep.mubr.bf16.mxu0 0
  %4450 = vmatmul.mubr.bf16.gmra.mrb[0].mxu0 %v874
  %v4451 = vpop.f32.mrb[0].mxu0
  %v4452 = vadd.f32 %v3997, %v4451
  %v4453 = vpop.f32.mrb[0].mxu0
  %v4454 = vadd.f32 %v3999, %v4453
  %v4455 = vpop.f32.mrb[0].mxu0
  %v4456 = vadd.f32 %v4001, %v4455
  %v4457 = vpop.f32.mrb[0].mxu0
  %v4458 = vadd.f32 %v4003, %v4457
  %4459 = vmatprep.mubr.bf16.mxu0 0
  %4460 = vmatmul.mubr.bf16.gmra.mrb[0].mxu0 %v877
  %v4461 = vpop.f32.mrb[0].mxu0
  %v4462 = vadd.f32 %v4007, %v4461
  %v4463 = vpop.f32.mrb[0].mxu0
  %v4464 = vadd.f32 %v4009, %v4463
  %v4465 = vpop.f32.mrb[0].mxu0
  %v4466 = vadd.f32 %v4011, %v4465
  %v4467 = vpop.f32.mrb[0].mxu0
  %v4468 = vadd.f32 %v4013, %v4467
  %4469 = vmatprep.mubr.bf16.mxu0 0
  %4470 = vmatmul.mubr.bf16.gmra.mrb[0].mxu0 %v880
  %v4471 = vpop.f32.mrb[0].mxu0
  %v4472 = vadd.f32 %v4017, %v4471
  %v4473 = vpop.f32.mrb[0].mxu0
  %v4474 = vadd.f32 %v4019, %v4473
  %v4475 = vpop.f32.mrb[0].mxu0
  %v4476 = vpop.f32.mrb[0].mxu0
  %4477 = vdwg.mxu0
  %4478 = vmatprep.subr.bf16.mxu0 0
  %4479 = vmatpush1.bf16.msra.mxu0 %v4243
  %4480 = vmatprep.subr.bf16.mxu0 0
  %4481 = vmatpush1.bf16.msra.mxu0 %v4246
  %4482 = vmatprep.subr.bf16.mxu0 0
  %4483 = vmatpush1.bf16.msra.mxu0 %v4249
  %4484 = vmatprep.subr.bf16.mxu0 0
  %4485 = vmatpush1.bf16.msra.mxu0 %v4252
  %4486 = vmatprep.subr.bf16.mxu0 0
  %4487 = vmatpush1.bf16.msra.mxu0 %v4275
  %4488 = vmatprep.subr.bf16.mxu0 0
  %4489 = vmatpush1.bf16.msra.mxu0 0
  %4490 = vmatprep.subr.bf16.mxu0 0
  %4491 = vmatpush1.bf16.msra.mxu0 0
  %4492 = vmatprep.subr.bf16.mxu0 0
  %4493 = vmatpush1.bf16.msra.mxu0 0
  %4494 = vmatprep.subr.bf16.mxu0 0
  %4495 = vmatpush1.bf16.msra.mxu0 0
  %4496 = vmatprep.subr.bf16.mxu0 0
  %4497 = vmatpush1.bf16.msra.mxu0 0
  %4498 = vmatprep.subr.bf16.mxu0 0
  %4499 = vmatpush1.bf16.msra.mxu0 0
  %4500 = vmatprep.subr.bf16.mxu0 0
  %4501 = vmatpush1.bf16.msra.mxu0 0
  %4502 = vmatprep.subr.bf16.mxu0 0
  %4503 = vmatpush1.bf16.msra.mxu0 0
  %4504 = vmatprep.subr.bf16.mxu0 0
  %4505 = vmatpush1.bf16.msra.mxu0 0
  %4506 = vmatprep.subr.bf16.mxu0 0
  %4507 = vmatpush1.bf16.msra.mxu0 0
  %4508 = vmatprep.subr.bf16.mxu0 0
  %4509 = vmatpush1.bf16.msra.mxu0 0
  %4510 = vmatprep.mubr.bf16.mxu0 0
  %4511 = vmatmul.mubr.bf16.gmra.mrb[0].mxu0 %v832
  %v4512 = vpop.f32.mrb[0].mxu0
  %v4513 = vadd.f32 %v4058, %v4512
  %v4514 = vpop.f32.mrb[0].mxu0
  %v4515 = vpop.f32.mrb[0].mxu0
  %v4516 = vadd.f32 %v4061, %v4515
  %v4517 = vpop.f32.mrb[0].mxu0
  %4518 = vmatprep.mubr.bf16.mxu0 0
  %4519 = vmatmul.mubr.bf16.gmra.mrb[0].mxu0 %v835
  %v4520 = vpop.f32.mrb[0].mxu0
  %v4521 = vadd.f32 %v4066, %v4520
  %v4522 = vpop.f32.mrb[0].mxu0
  %v4523 = vpop.f32.mrb[0].mxu0
  %v4524 = vadd.f32 %v4069, %v4523
  %v4525 = vpop.f32.mrb[0].mxu0
  %4526 = vmatprep.mubr.bf16.mxu0 0
  %4527 = vmatmul.mubr.bf16.gmra.mrb[0].mxu0 %v838
  %v4528 = vpop.f32.mrb[0].mxu0
  %v4529 = vadd.f32 %v4074, %v4528
  %v4530 = vpop.f32.mrb[0].mxu0
  %v4531 = vpop.f32.mrb[0].mxu0
  %v4532 = vadd.f32 %v4077, %v4531
  %v4533 = vpop.f32.mrb[0].mxu0
  %4534 = vmatprep.mubr.bf16.mxu0 0
  %4535 = vmatmul.mubr.bf16.gmra.mrb[0].mxu0 %v841
  %v4536 = vpop.f32.mrb[0].mxu0
  %v4537 = vadd.f32 %v4082, %v4536
  %v4538 = vpop.f32.mrb[0].mxu0
  %v4539 = vpop.f32.mrb[0].mxu0
  %v4540 = vadd.f32 %v4085, %v4539
  %v4541 = vpop.f32.mrb[0].mxu0
  %4542 = vmatprep.mubr.bf16.mxu0 0
  %4543 = vmatmul.mubr.bf16.gmra.mrb[0].mxu0 %v844
  %v4544 = vpop.f32.mrb[0].mxu0
  %v4545 = vadd.f32 %v4090, %v4544
  %v4546 = vpop.f32.mrb[0].mxu0
  %v4547 = vpop.f32.mrb[0].mxu0
  %v4548 = vadd.f32 %v4093, %v4547
  %v4549 = vpop.f32.mrb[0].mxu0
  %4550 = vmatprep.mubr.bf16.mxu0 0
  %4551 = vmatmul.mubr.bf16.gmra.mrb[0].mxu0 %v847
  %v4552 = vpop.f32.mrb[0].mxu0
  %v4553 = vadd.f32 %v4098, %v4552
  %v4554 = vpop.f32.mrb[0].mxu0
  %v4555 = vpop.f32.mrb[0].mxu0
  %v4556 = vadd.f32 %v4101, %v4555
  %v4557 = vpop.f32.mrb[0].mxu0
  %4558 = vmatprep.mubr.bf16.mxu0 0
  %4559 = vmatmul.mubr.bf16.gmra.mrb[0].mxu0 %v850
  %v4560 = vpop.f32.mrb[0].mxu0
  %v4561 = vadd.f32 %v4106, %v4560
  %v4562 = vpop.f32.mrb[0].mxu0
  %v4563 = vpop.f32.mrb[0].mxu0
  %v4564 = vadd.f32 %v4109, %v4563
  %v4565 = vpop.f32.mrb[0].mxu0
  %4566 = vmatprep.mubr.bf16.mxu0 0
  %4567 = vmatmul.mubr.bf16.gmra.mrb[0].mxu0 %v853
  %v4568 = vpop.f32.mrb[0].mxu0
  %v4569 = vadd.f32 %v4114, %v4568
  %v4570 = vpop.f32.mrb[0].mxu0
  %v4571 = vpop.f32.mrb[0].mxu0
  %v4572 = vadd.f32 %v4117, %v4571
  %v4573 = vpop.f32.mrb[0].mxu0
  %4574 = vmatprep.mubr.bf16.mxu0 0
  %4575 = vmatmul.mubr.bf16.gmra.mrb[0].mxu0 %v856
  %v4576 = vpop.f32.mrb[0].mxu0
  %v4577 = vadd.f32 %v4122, %v4576
  %v4578 = vpop.f32.mrb[0].mxu0
  %v4579 = vpop.f32.mrb[0].mxu0
  %v4580 = vadd.f32 %v4125, %v4579
  %v4581 = vpop.f32.mrb[0].mxu0
  %4582 = vmatprep.mubr.bf16.mxu0 0
  %4583 = vmatmul.mubr.bf16.gmra.mrb[0].mxu0 %v859
  %v4584 = vpop.f32.mrb[0].mxu0
  %v4585 = vadd.f32 %v4130, %v4584
  %v4586 = vpop.f32.mrb[0].mxu0
  %v4587 = vpop.f32.mrb[0].mxu0
  %v4588 = vadd.f32 %v4133, %v4587
  %v4589 = vpop.f32.mrb[0].mxu0
  %4590 = vmatprep.mubr.bf16.mxu0 0
  %4591 = vmatmul.mubr.bf16.gmra.mrb[0].mxu0 %v862
  %v4592 = vpop.f32.mrb[0].mxu0
  %v4593 = vadd.f32 %v4138, %v4592
  %v4594 = vpop.f32.mrb[0].mxu0
  %v4595 = vpop.f32.mrb[0].mxu0
  %v4596 = vadd.f32 %v4141, %v4595
  %v4597 = vpop.f32.mrb[0].mxu0
  %4598 = vmatprep.mubr.bf16.mxu0 0
  %4599 = vmatmul.mubr.bf16.gmra.mrb[0].mxu0 %v865
  %v4600 = vpop.f32.mrb[0].mxu0
  %v4601 = vadd.f32 %v4146, %v4600
  %v4602 = vpop.f32.mrb[0].mxu0
  %v4603 = vpop.f32.mrb[0].mxu0
  %v4604 = vadd.f32 %v4149, %v4603
  %v4605 = vpop.f32.mrb[0].mxu0
  %4606 = vmatprep.mubr.bf16.mxu0 0
  %4607 = vmatmul.mubr.bf16.gmra.mrb[0].mxu0 %v868
  %v4608 = vpop.f32.mrb[0].mxu0
  %v4609 = vadd.f32 %v4154, %v4608
  %v4610 = vpop.f32.mrb[0].mxu0
  %v4611 = vpop.f32.mrb[0].mxu0
  %v4612 = vadd.f32 %v4157, %v4611
  %v4613 = vpop.f32.mrb[0].mxu0
  %4614 = vmatprep.mubr.bf16.mxu0 0
  %4615 = vmatmul.mubr.bf16.gmra.mrb[0].mxu0 %v871
  %v4616 = vpop.f32.mrb[0].mxu0
  %v4617 = vadd.f32 %v4162, %v4616
  %v4618 = vpop.f32.mrb[0].mxu0
  %v4619 = vpop.f32.mrb[0].mxu0
  %v4620 = vadd.f32 %v4165, %v4619
  %v4621 = vpop.f32.mrb[0].mxu0
  %4622 = vmatprep.mubr.bf16.mxu0 0
  %4623 = vmatmul.mubr.bf16.gmra.mrb[0].mxu0 %v874
  %v4624 = vpop.f32.mrb[0].mxu0
  %v4625 = vadd.f32 %v4170, %v4624
  %v4626 = vpop.f32.mrb[0].mxu0
  %v4627 = vpop.f32.mrb[0].mxu0
  %v4628 = vadd.f32 %v4173, %v4627
  %v4629 = vpop.f32.mrb[0].mxu0
  %4630 = vmatprep.mubr.bf16.mxu0 0
  %4631 = vmatmul.mubr.bf16.gmra.mrb[0].mxu0 %v877
  %v4632 = vpop.f32.mrb[0].mxu0
  %v4633 = vadd.f32 %v4178, %v4632
  %v4634 = vpop.f32.mrb[0].mxu0
  %v4635 = vpop.f32.mrb[0].mxu0
  %v4636 = vadd.f32 %v4181, %v4635
  %v4637 = vpop.f32.mrb[0].mxu0
  %4638 = vmatprep.mubr.bf16.mxu0 0
  %4639 = vmatmul.mubr.bf16.gmra.mrb[0].mxu0 %v880
  %v4640 = vpop.f32.mrb[0].mxu0
  %v4641 = vadd.f32 %v4186, %v4640
  %v4642 = vpop.f32.mrb[0].mxu0
  %v4643 = vpop.f32.mrb[0].mxu0
  %v4644 = vpop.f32.mrb[0].mxu0
  %4645 = vdwg.mxu0
  %s4646 = scalar_lea.vmem %s1, 960
  %v4647 = vld [vmem:[%s4646] sm:$0xff]
  %v4648 = vld [vmem:[%s4646 + $0x8] sm:$0xf]
  %v4649 = vld [vmem:[%s4646 + $0xc] sm:$0xff]
  %v4650 = vld [vmem:[%s4646 + $0x14] sm:$0xf]
  %v4651 = vld [vmem:[%s4646 + $0x18] sm:$0xff]
  %v4652 = vld [vmem:[%s4646 + $0x20] sm:$0xf]
  %v4653 = vld [vmem:[%s4646 + $0x24] sm:$0xff]
  %v4654 = vld [vmem:[%s4646 + $0x2c] sm:$0xf]
  %v4655 = vld [vmem:[%s4646 + $0x30] sm:$0xff]
  %v4656 = vld [vmem:[%s4646 + $0x38] sm:$0xf]
  %v4657 = vld [vmem:[%s4646 + $0x3c] sm:$0xff]
  %v4658 = vld [vmem:[%s4646 + $0x44] sm:$0xf]
  %v4659 = vld [vmem:[%s4646 + $0x48] sm:$0xff]
  %v4660 = vld [vmem:[%s4646 + $0x50] sm:$0xf]
  %v4661 = vld [vmem:[%s4646 + $0x54] sm:$0xff]
  %v4662 = vld [vmem:[%s4646 + $0x5c] sm:$0xf]
  %v4663 = vld [vmem:[%s4646 + $0x60] sm:$0xff]
  %v4664 = vld [vmem:[%s4646 + $0x68] sm:$0xf]
  %v4665 = vld [vmem:[%s4646 + $0x6c] sm:$0x77]
  %v4666 = vld [vmem:[%s4646 + $0x74] sm:$0x7]
  %v4687 = vunpack.c.l.b16 %v4647
  %v4688 = vunpack.c.h.b16 %v4647
  %v4689 = vunpack.c.l.b16 %v4648
  %v4690 = vunpack.c.l.b16 %v4649
  %v4691 = vunpack.c.h.b16 %v4649
  %v4692 = vunpack.c.l.b16 %v4650
  %v4693 = vunpack.c.l.b16 %v4651
  %v4694 = vunpack.c.h.b16 %v4651
  %v4695 = vunpack.c.l.b16 %v4652
  %v4696 = vunpack.c.l.b16 %v4653
  %v4697 = vunpack.c.h.b16 %v4653
  %v4698 = vunpack.c.l.b16 %v4654
  %v4699 = vunpack.c.l.b16 %v4655
  %v4700 = vunpack.c.h.b16 %v4655
  %v4701 = vunpack.c.l.b16 %v4656
  %v4702 = vunpack.c.l.b16 %v4657
  %v4703 = vunpack.c.h.b16 %v4657
  %v4704 = vunpack.c.l.b16 %v4658
  %v4705 = vunpack.c.l.b16 %v4659
  %v4706 = vunpack.c.h.b16 %v4659
  %v4707 = vunpack.c.l.b16 %v4660
  %v4708 = vunpack.c.l.b16 %v4661
  %v4709 = vunpack.c.h.b16 %v4661
  %v4710 = vunpack.c.l.b16 %v4662
  %v4711 = vunpack.c.l.b16 %v4663
  %v4712 = vunpack.c.h.b16 %v4663
  %v4713 = vunpack.c.l.b16 %v4664
  %v4714 = vunpack.c.l.b16 %v4665
  %v4715 = vunpack.c.h.b16 %v4665
  %v4716 = vunpack.c.l.b16 %v4666
  %v4717 = vpack.c.b16 %v4690, %v4687
  %v4718 = vpack.c.b16 %v4691, %v4688
  %v4719 = vpack.c.b16 %v4692, %v4689
  %v4720 = vpack.c.b16 %v4696, %v4693
  %v4721 = vpack.c.b16 %v4697, %v4694
  %v4722 = vpack.c.b16 %v4698, %v4695
  %v4723 = vpack.c.b16 %v4702, %v4699
  %v4724 = vpack.c.b16 %v4703, %v4700
  %v4725 = vpack.c.b16 %v4704, %v4701
  %v4726 = vpack.c.b16 %v4708, %v4705
  %v4727 = vpack.c.b16 %v4709, %v4706
  %v4728 = vpack.c.b16 %v4710, %v4707
  %v4729 = vpack.c.b16 %v4714, %v4711
  %v4730 = vpack.c.b16 %v4715, %v4712
  %v4731 = vpack.c.b16 %v4716, %v4713
  %v4745 = vsel %vm336, %v4729, 0
  %v4748 = vsel %vm336, %v4730, 0
  %v4751 = vsel %vm336, %v4731, 0
  %4753 = vmatprep.subr.bf16.mxu0 %v4718
  %4754 = vmatpush1.bf16.msra.mxu0 %v4717
  %4755 = vmatprep.subr.bf16.mxu0 %v4721
  %4756 = vmatpush1.bf16.msra.mxu0 %v4720
  %4757 = vmatprep.subr.bf16.mxu0 %v4724
  %4758 = vmatpush1.bf16.msra.mxu0 %v4723
  %4759 = vmatprep.subr.bf16.mxu0 %v4727
  %4760 = vmatpush1.bf16.msra.mxu0 %v4726
  %4761 = vmatprep.subr.bf16.mxu0 %v4748
  %4762 = vmatpush1.bf16.msra.mxu0 %v4745
  %4763 = vmatprep.subr.bf16.mxu0 0
  %4764 = vmatpush1.bf16.msra.mxu0 0
  %4765 = vmatprep.subr.bf16.mxu0 0
  %4766 = vmatpush1.bf16.msra.mxu0 0
  %4767 = vmatprep.subr.bf16.mxu0 0
  %4768 = vmatpush1.bf16.msra.mxu0 0
  %4769 = vmatprep.subr.bf16.mxu0 0
  %4770 = vmatpush1.bf16.msra.mxu0 0
  %4771 = vmatprep.subr.bf16.mxu0 0
  %4772 = vmatpush1.bf16.msra.mxu0 0
  %4773 = vmatprep.subr.bf16.mxu0 0
  %4774 = vmatpush1.bf16.msra.mxu0 0
  %4775 = vmatprep.subr.bf16.mxu0 0
  %4776 = vmatpush1.bf16.msra.mxu0 0
  %4777 = vmatprep.subr.bf16.mxu0 0
  %4778 = vmatpush1.bf16.msra.mxu0 0
  %4779 = vmatprep.subr.bf16.mxu0 0
  %4780 = vmatpush1.bf16.msra.mxu0 0
  %4781 = vmatprep.subr.bf16.mxu0 0
  %4782 = vmatpush1.bf16.msra.mxu0 0
  %4783 = vmatprep.subr.bf16.mxu0 0
  %4784 = vmatpush1.bf16.msra.mxu0 0
  %4785 = vmatprep.mubr.bf16.mxu0 0
  %4786 = vmatmul.mubr.bf16.gmra.mrb[0].mxu0 %v1475
  %v4787 = vpop.f32.mrb[0].mxu0
  %v4788 = vadd.f32 0.0, %v4787
  %v4789 = vpop.f32.mrb[0].mxu0
  %v4790 = vadd.f32 0.0, %v4789
  %v4791 = vpop.f32.mrb[0].mxu0
  %v4792 = vadd.f32 0.0, %v4791
  %v4793 = vpop.f32.mrb[0].mxu0
  %v4794 = vadd.f32 0.0, %v4793
  %4795 = vmatprep.mubr.bf16.mxu0 0
  %4796 = vmatmul.mubr.bf16.gmra.mrb[0].mxu0 %v1478
  %v4797 = vpop.f32.mrb[0].mxu0
  %v4798 = vadd.f32 0.0, %v4797
  %v4799 = vpop.f32.mrb[0].mxu0
  %v4800 = vadd.f32 0.0, %v4799
  %v4801 = vpop.f32.mrb[0].mxu0
  %v4802 = vadd.f32 0.0, %v4801
  %v4803 = vpop.f32.mrb[0].mxu0
  %v4804 = vadd.f32 0.0, %v4803
  %4805 = vmatprep.mubr.bf16.mxu0 0
  %4806 = vmatmul.mubr.bf16.gmra.mrb[0].mxu0 %v1481
  %v4807 = vpop.f32.mrb[0].mxu0
  %v4808 = vadd.f32 0.0, %v4807
  %v4809 = vpop.f32.mrb[0].mxu0
  %v4810 = vadd.f32 0.0, %v4809
  %v4811 = vpop.f32.mrb[0].mxu0
  %v4812 = vadd.f32 0.0, %v4811
  %v4813 = vpop.f32.mrb[0].mxu0
  %v4814 = vadd.f32 0.0, %v4813
  %4815 = vmatprep.mubr.bf16.mxu0 0
  %4816 = vmatmul.mubr.bf16.gmra.mrb[0].mxu0 %v1484
  %v4817 = vpop.f32.mrb[0].mxu0
  %v4818 = vadd.f32 0.0, %v4817
  %v4819 = vpop.f32.mrb[0].mxu0
  %v4820 = vadd.f32 0.0, %v4819
  %v4821 = vpop.f32.mrb[0].mxu0
  %v4822 = vadd.f32 0.0, %v4821
  %v4823 = vpop.f32.mrb[0].mxu0
  %v4824 = vadd.f32 0.0, %v4823
  %4825 = vmatprep.mubr.bf16.mxu0 0
  %4826 = vmatmul.mubr.bf16.gmra.mrb[0].mxu0 %v1487
  %v4827 = vpop.f32.mrb[0].mxu0
  %v4828 = vadd.f32 0.0, %v4827
  %v4829 = vpop.f32.mrb[0].mxu0
  %v4830 = vadd.f32 0.0, %v4829
  %v4831 = vpop.f32.mrb[0].mxu0
  %v4832 = vadd.f32 0.0, %v4831
  %v4833 = vpop.f32.mrb[0].mxu0
  %v4834 = vadd.f32 0.0, %v4833
  %4835 = vmatprep.mubr.bf16.mxu0 0
  %4836 = vmatmul.mubr.bf16.gmra.mrb[0].mxu0 %v1490
  %v4837 = vpop.f32.mrb[0].mxu0
  %v4838 = vadd.f32 0.0, %v4837
  %v4839 = vpop.f32.mrb[0].mxu0
  %v4840 = vadd.f32 0.0, %v4839
  %v4841 = vpop.f32.mrb[0].mxu0
  %v4842 = vadd.f32 0.0, %v4841
  %v4843 = vpop.f32.mrb[0].mxu0
  %v4844 = vadd.f32 0.0, %v4843
  %4845 = vmatprep.mubr.bf16.mxu0 0
  %4846 = vmatmul.mubr.bf16.gmra.mrb[0].mxu0 %v1493
  %v4847 = vpop.f32.mrb[0].mxu0
  %v4848 = vadd.f32 0.0, %v4847
  %v4849 = vpop.f32.mrb[0].mxu0
  %v4850 = vadd.f32 0.0, %v4849
  %v4851 = vpop.f32.mrb[0].mxu0
  %v4852 = vadd.f32 0.0, %v4851
  %v4853 = vpop.f32.mrb[0].mxu0
  %v4854 = vadd.f32 0.0, %v4853
  %4855 = vmatprep.mubr.bf16.mxu0 0
  %4856 = vmatmul.mubr.bf16.gmra.mrb[0].mxu0 %v1496
  %v4857 = vpop.f32.mrb[0].mxu0
  %v4858 = vadd.f32 0.0, %v4857
  %v4859 = vpop.f32.mrb[0].mxu0
  %v4860 = vadd.f32 0.0, %v4859
  %v4861 = vpop.f32.mrb[0].mxu0
  %v4862 = vadd.f32 0.0, %v4861
  %v4863 = vpop.f32.mrb[0].mxu0
  %v4864 = vadd.f32 0.0, %v4863
  %4865 = vmatprep.mubr.bf16.mxu0 0
  %4866 = vmatmul.mubr.bf16.gmra.mrb[0].mxu0 %v1499
  %v4867 = vpop.f32.mrb[0].mxu0
  %v4868 = vadd.f32 0.0, %v4867
  %v4869 = vpop.f32.mrb[0].mxu0
  %v4870 = vadd.f32 0.0, %v4869
  %v4871 = vpop.f32.mrb[0].mxu0
  %v4872 = vadd.f32 0.0, %v4871
  %v4873 = vpop.f32.mrb[0].mxu0
  %v4874 = vadd.f32 0.0, %v4873
  %4875 = vmatprep.mubr.bf16.mxu0 0
  %4876 = vmatmul.mubr.bf16.gmra.mrb[0].mxu0 %v1502
  %v4877 = vpop.f32.mrb[0].mxu0
  %v4878 = vadd.f32 0.0, %v4877
  %v4879 = vpop.f32.mrb[0].mxu0
  %v4880 = vadd.f32 0.0, %v4879
  %v4881 = vpop.f32.mrb[0].mxu0
  %v4882 = vadd.f32 0.0, %v4881
  %v4883 = vpop.f32.mrb[0].mxu0
  %v4884 = vadd.f32 0.0, %v4883
  %4885 = vmatprep.mubr.bf16.mxu0 0
  %4886 = vmatmul.mubr.bf16.gmra.mrb[0].mxu0 %v1505
  %v4887 = vpop.f32.mrb[0].mxu0
  %v4888 = vadd.f32 0.0, %v4887
  %v4889 = vpop.f32.mrb[0].mxu0
  %v4890 = vadd.f32 0.0, %v4889
  %v4891 = vpop.f32.mrb[0].mxu0
  %v4892 = vadd.f32 0.0, %v4891
  %v4893 = vpop.f32.mrb[0].mxu0
  %v4894 = vadd.f32 0.0, %v4893
  %4895 = vmatprep.mubr.bf16.mxu0 0
  %4896 = vmatmul.mubr.bf16.gmra.mrb[0].mxu0 %v1508
  %v4897 = vpop.f32.mrb[0].mxu0
  %v4898 = vadd.f32 0.0, %v4897
  %v4899 = vpop.f32.mrb[0].mxu0
  %v4900 = vadd.f32 0.0, %v4899
  %v4901 = vpop.f32.mrb[0].mxu0
  %v4902 = vadd.f32 0.0, %v4901
  %v4903 = vpop.f32.mrb[0].mxu0
  %v4904 = vadd.f32 0.0, %v4903
  %4905 = vmatprep.mubr.bf16.mxu0 0
  %4906 = vmatmul.mubr.bf16.gmra.mrb[0].mxu0 %v1511
  %v4907 = vpop.f32.mrb[0].mxu0
  %v4908 = vadd.f32 0.0, %v4907
  %v4909 = vpop.f32.mrb[0].mxu0
  %v4910 = vadd.f32 0.0, %v4909
  %v4911 = vpop.f32.mrb[0].mxu0
  %v4912 = vadd.f32 0.0, %v4911
  %v4913 = vpop.f32.mrb[0].mxu0
  %v4914 = vadd.f32 0.0, %v4913
  %4915 = vmatprep.mubr.bf16.mxu0 0
  %4916 = vmatmul.mubr.bf16.gmra.mrb[0].mxu0 %v1514
  %v4917 = vpop.f32.mrb[0].mxu0
  %v4918 = vadd.f32 0.0, %v4917
  %v4919 = vpop.f32.mrb[0].mxu0
  %v4920 = vadd.f32 0.0, %v4919
  %v4921 = vpop.f32.mrb[0].mxu0
  %v4922 = vadd.f32 0.0, %v4921
  %v4923 = vpop.f32.mrb[0].mxu0
  %v4924 = vadd.f32 0.0, %v4923
  %4925 = vmatprep.mubr.bf16.mxu0 0
  %4926 = vmatmul.mubr.bf16.gmra.mrb[0].mxu0 %v1517
  %v4927 = vpop.f32.mrb[0].mxu0
  %v4928 = vadd.f32 0.0, %v4927
  %v4929 = vpop.f32.mrb[0].mxu0
  %v4930 = vadd.f32 0.0, %v4929
  %v4931 = vpop.f32.mrb[0].mxu0
  %v4932 = vadd.f32 0.0, %v4931
  %v4933 = vpop.f32.mrb[0].mxu0
  %v4934 = vadd.f32 0.0, %v4933
  %4935 = vmatprep.mubr.bf16.mxu0 0
  %4936 = vmatmul.mubr.bf16.gmra.mrb[0].mxu0 %v1520
  %v4937 = vpop.f32.mrb[0].mxu0
  %v4938 = vadd.f32 0.0, %v4937
  %v4939 = vpop.f32.mrb[0].mxu0
  %v4940 = vadd.f32 0.0, %v4939
  %v4941 = vpop.f32.mrb[0].mxu0
  %v4942 = vadd.f32 0.0, %v4941
  %v4943 = vpop.f32.mrb[0].mxu0
  %v4944 = vadd.f32 0.0, %v4943
  %4945 = vmatprep.mubr.bf16.mxu0 0
  %4946 = vmatmul.mubr.bf16.gmra.mrb[0].mxu0 %v1523
  %v4947 = vpop.f32.mrb[0].mxu0
  %v4948 = vadd.f32 0.0, %v4947
  %v4949 = vpop.f32.mrb[0].mxu0
  %v4950 = vadd.f32 0.0, %v4949
  %v4951 = vpop.f32.mrb[0].mxu0
  %v4952 = vpop.f32.mrb[0].mxu0
  %4953 = vdwg.mxu0
  %4954 = vmatprep.subr.bf16.mxu0 0
  %4955 = vmatpush1.bf16.msra.mxu0 %v4719
  %4956 = vmatprep.subr.bf16.mxu0 0
  %4957 = vmatpush1.bf16.msra.mxu0 %v4722
  %4958 = vmatprep.subr.bf16.mxu0 0
  %4959 = vmatpush1.bf16.msra.mxu0 %v4725
  %4960 = vmatprep.subr.bf16.mxu0 0
  %4961 = vmatpush1.bf16.msra.mxu0 %v4728
  %4962 = vmatprep.subr.bf16.mxu0 0
  %4963 = vmatpush1.bf16.msra.mxu0 %v4751
  %4964 = vmatprep.subr.bf16.mxu0 0
  %4965 = vmatpush1.bf16.msra.mxu0 0
  %4966 = vmatprep.subr.bf16.mxu0 0
  %4967 = vmatpush1.bf16.msra.mxu0 0
  %4968 = vmatprep.subr.bf16.mxu0 0
  %4969 = vmatpush1.bf16.msra.mxu0 0
  %4970 = vmatprep.subr.bf16.mxu0 0
  %4971 = vmatpush1.bf16.msra.mxu0 0
  %4972 = vmatprep.subr.bf16.mxu0 0
  %4973 = vmatpush1.bf16.msra.mxu0 0
  %4974 = vmatprep.subr.bf16.mxu0 0
  %4975 = vmatpush1.bf16.msra.mxu0 0
  %4976 = vmatprep.subr.bf16.mxu0 0
  %4977 = vmatpush1.bf16.msra.mxu0 0
  %4978 = vmatprep.subr.bf16.mxu0 0
  %4979 = vmatpush1.bf16.msra.mxu0 0
  %4980 = vmatprep.subr.bf16.mxu0 0
  %4981 = vmatpush1.bf16.msra.mxu0 0
  %4982 = vmatprep.subr.bf16.mxu0 0
  %4983 = vmatpush1.bf16.msra.mxu0 0
  %4984 = vmatprep.subr.bf16.mxu0 0
  %4985 = vmatpush1.bf16.msra.mxu0 0
  %4986 = vmatprep.mubr.bf16.mxu0 0
  %4987 = vmatmul.mubr.bf16.gmra.mrb[0].mxu0 %v1475
  %v4988 = vpop.f32.mrb[0].mxu0
  %v4989 = vadd.f32 0.0, %v4988
  %v4990 = vpop.f32.mrb[0].mxu0
  %v4991 = vpop.f32.mrb[0].mxu0
  %v4992 = vadd.f32 0.0, %v4991
  %v4993 = vpop.f32.mrb[0].mxu0
  %4994 = vmatprep.mubr.bf16.mxu0 0
  %4995 = vmatmul.mubr.bf16.gmra.mrb[0].mxu0 %v1478
  %v4996 = vpop.f32.mrb[0].mxu0
  %v4997 = vadd.f32 0.0, %v4996
  %v4998 = vpop.f32.mrb[0].mxu0
  %v4999 = vpop.f32.mrb[0].mxu0
  %v5000 = vadd.f32 0.0, %v4999
  %v5001 = vpop.f32.mrb[0].mxu0
  %5002 = vmatprep.mubr.bf16.mxu0 0
  %5003 = vmatmul.mubr.bf16.gmra.mrb[0].mxu0 %v1481
  %v5004 = vpop.f32.mrb[0].mxu0
  %v5005 = vadd.f32 0.0, %v5004
  %v5006 = vpop.f32.mrb[0].mxu0
  %v5007 = vpop.f32.mrb[0].mxu0
  %v5008 = vadd.f32 0.0, %v5007
  %v5009 = vpop.f32.mrb[0].mxu0
  %5010 = vmatprep.mubr.bf16.mxu0 0
  %5011 = vmatmul.mubr.bf16.gmra.mrb[0].mxu0 %v1484
  %v5012 = vpop.f32.mrb[0].mxu0
  %v5013 = vadd.f32 0.0, %v5012
  %v5014 = vpop.f32.mrb[0].mxu0
  %v5015 = vpop.f32.mrb[0].mxu0
  %v5016 = vadd.f32 0.0, %v5015
  %v5017 = vpop.f32.mrb[0].mxu0
  %5018 = vmatprep.mubr.bf16.mxu0 0
  %5019 = vmatmul.mubr.bf16.gmra.mrb[0].mxu0 %v1487
  %v5020 = vpop.f32.mrb[0].mxu0
  %v5021 = vadd.f32 0.0, %v5020
  %v5022 = vpop.f32.mrb[0].mxu0
  %v5023 = vpop.f32.mrb[0].mxu0
  %v5024 = vadd.f32 0.0, %v5023
  %v5025 = vpop.f32.mrb[0].mxu0
  %5026 = vmatprep.mubr.bf16.mxu0 0
  %5027 = vmatmul.mubr.bf16.gmra.mrb[0].mxu0 %v1490
  %v5028 = vpop.f32.mrb[0].mxu0
  %v5029 = vadd.f32 0.0, %v5028
  %v5030 = vpop.f32.mrb[0].mxu0
  %v5031 = vpop.f32.mrb[0].mxu0
  %v5032 = vadd.f32 0.0, %v5031
  %v5033 = vpop.f32.mrb[0].mxu0
  %5034 = vmatprep.mubr.bf16.mxu0 0
  %5035 = vmatmul.mubr.bf16.gmra.mrb[0].mxu0 %v1493
  %v5036 = vpop.f32.mrb[0].mxu0
  %v5037 = vadd.f32 0.0, %v5036
  %v5038 = vpop.f32.mrb[0].mxu0
  %v5039 = vpop.f32.mrb[0].mxu0
  %v5040 = vadd.f32 0.0, %v5039
  %v5041 = vpop.f32.mrb[0].mxu0
  %5042 = vmatprep.mubr.bf16.mxu0 0
  %5043 = vmatmul.mubr.bf16.gmra.mrb[0].mxu0 %v1496
  %v5044 = vpop.f32.mrb[0].mxu0
  %v5045 = vadd.f32 0.0, %v5044
  %v5046 = vpop.f32.mrb[0].mxu0
  %v5047 = vpop.f32.mrb[0].mxu0
  %v5048 = vadd.f32 0.0, %v5047
  %v5049 = vpop.f32.mrb[0].mxu0
  %5050 = vmatprep.mubr.bf16.mxu0 0
  %5051 = vmatmul.mubr.bf16.gmra.mrb[0].mxu0 %v1499
  %v5052 = vpop.f32.mrb[0].mxu0
  %v5053 = vadd.f32 0.0, %v5052
  %v5054 = vpop.f32.mrb[0].mxu0
  %v5055 = vpop.f32.mrb[0].mxu0
  %v5056 = vadd.f32 0.0, %v5055
  %v5057 = vpop.f32.mrb[0].mxu0
  %5058 = vmatprep.mubr.bf16.mxu0 0
  %5059 = vmatmul.mubr.bf16.gmra.mrb[0].mxu0 %v1502
  %v5060 = vpop.f32.mrb[0].mxu0
  %v5061 = vadd.f32 0.0, %v5060
  %v5062 = vpop.f32.mrb[0].mxu0
  %v5063 = vpop.f32.mrb[0].mxu0
  %v5064 = vadd.f32 0.0, %v5063
  %v5065 = vpop.f32.mrb[0].mxu0
  %5066 = vmatprep.mubr.bf16.mxu0 0
  %5067 = vmatmul.mubr.bf16.gmra.mrb[0].mxu0 %v1505
  %v5068 = vpop.f32.mrb[0].mxu0
  %v5069 = vadd.f32 0.0, %v5068
  %v5070 = vpop.f32.mrb[0].mxu0
  %v5071 = vpop.f32.mrb[0].mxu0
  %v5072 = vadd.f32 0.0, %v5071
  %v5073 = vpop.f32.mrb[0].mxu0
  %5074 = vmatprep.mubr.bf16.mxu0 0
  %5075 = vmatmul.mubr.bf16.gmra.mrb[0].mxu0 %v1508
  %v5076 = vpop.f32.mrb[0].mxu0
  %v5077 = vadd.f32 0.0, %v5076
  %v5078 = vpop.f32.mrb[0].mxu0
  %v5079 = vpop.f32.mrb[0].mxu0
  %v5080 = vadd.f32 0.0, %v5079
  %v5081 = vpop.f32.mrb[0].mxu0
  %5082 = vmatprep.mubr.bf16.mxu0 0
  %5083 = vmatmul.mubr.bf16.gmra.mrb[0].mxu0 %v1511
  %v5084 = vpop.f32.mrb[0].mxu0
  %v5085 = vadd.f32 0.0, %v5084
  %v5086 = vpop.f32.mrb[0].mxu0
  %v5087 = vpop.f32.mrb[0].mxu0
  %v5088 = vadd.f32 0.0, %v5087
  %v5089 = vpop.f32.mrb[0].mxu0
  %5090 = vmatprep.mubr.bf16.mxu0 0
  %5091 = vmatmul.mubr.bf16.gmra.mrb[0].mxu0 %v1514
  %v5092 = vpop.f32.mrb[0].mxu0
  %v5093 = vadd.f32 0.0, %v5092
  %v5094 = vpop.f32.mrb[0].mxu0
  %v5095 = vpop.f32.mrb[0].mxu0
  %v5096 = vadd.f32 0.0, %v5095
  %v5097 = vpop.f32.mrb[0].mxu0
  %5098 = vmatprep.mubr.bf16.mxu0 0
  %5099 = vmatmul.mubr.bf16.gmra.mrb[0].mxu0 %v1517
  %v5100 = vpop.f32.mrb[0].mxu0
  %v5101 = vadd.f32 0.0, %v5100
  %v5102 = vpop.f32.mrb[0].mxu0
  %v5103 = vpop.f32.mrb[0].mxu0
  %v5104 = vadd.f32 0.0, %v5103
  %v5105 = vpop.f32.mrb[0].mxu0
  %5106 = vmatprep.mubr.bf16.mxu0 0
  %5107 = vmatmul.mubr.bf16.gmra.mrb[0].mxu0 %v1520
  %v5108 = vpop.f32.mrb[0].mxu0
  %v5109 = vadd.f32 0.0, %v5108
  %v5110 = vpop.f32.mrb[0].mxu0
  %v5111 = vpop.f32.mrb[0].mxu0
  %v5112 = vadd.f32 0.0, %v5111
  %v5113 = vpop.f32.mrb[0].mxu0
  %5114 = vmatprep.mubr.bf16.mxu0 0
  %5115 = vmatmul.mubr.bf16.gmra.mrb[0].mxu0 %v1523
  %v5116 = vpop.f32.mrb[0].mxu0
  %v5117 = vadd.f32 0.0, %v5116
  %v5118 = vpop.f32.mrb[0].mxu0
  %v5119 = vpop.f32.mrb[0].mxu0
  %v5120 = vpop.f32.mrb[0].mxu0
  %5121 = vdwg.mxu0
  %v5122 = vadd.f32 %v4312, %v4788
  %v5123 = vadd.f32 %v4314, %v4790
  %v5124 = vadd.f32 %v4513, %v4989
  %v5125 = vadd.f32 %v4316, %v4792
  %v5126 = vadd.f32 %v4318, %v4794
  %v5127 = vadd.f32 %v4516, %v4992
  %v5128 = vadd.f32 %v4322, %v4798
  %v5129 = vadd.f32 %v4324, %v4800
  %v5130 = vadd.f32 %v4521, %v4997
  %v5131 = vadd.f32 %v4326, %v4802
  %v5132 = vadd.f32 %v4328, %v4804
  %v5133 = vadd.f32 %v4524, %v5000
  %v5134 = vadd.f32 %v4332, %v4808
  %v5135 = vadd.f32 %v4334, %v4810
  %v5136 = vadd.f32 %v4529, %v5005
  %v5137 = vadd.f32 %v4336, %v4812
  %v5138 = vadd.f32 %v4338, %v4814
  %v5139 = vadd.f32 %v4532, %v5008
  %v5140 = vadd.f32 %v4342, %v4818
  %v5141 = vadd.f32 %v4344, %v4820
  %v5142 = vadd.f32 %v4537, %v5013
  %v5143 = vadd.f32 %v4346, %v4822
  %v5144 = vadd.f32 %v4348, %v4824
  %v5145 = vadd.f32 %v4540, %v5016
  %v5146 = vadd.f32 %v4352, %v4828
  %v5147 = vadd.f32 %v4354, %v4830
  %v5148 = vadd.f32 %v4545, %v5021
  %v5149 = vadd.f32 %v4356, %v4832
  %v5150 = vadd.f32 %v4358, %v4834
  %v5151 = vadd.f32 %v4548, %v5024
  %v5152 = vadd.f32 %v4362, %v4838
  %v5153 = vadd.f32 %v4364, %v4840
  %v5154 = vadd.f32 %v4553, %v5029
  %v5155 = vadd.f32 %v4366, %v4842
  %v5156 = vadd.f32 %v4368, %v4844
  %v5157 = vadd.f32 %v4556, %v5032
  %v5158 = vadd.f32 %v4372, %v4848
  %v5159 = vadd.f32 %v4374, %v4850
  %v5160 = vadd.f32 %v4561, %v5037
  %v5161 = vadd.f32 %v4376, %v4852
  %v5162 = vadd.f32 %v4378, %v4854
  %v5163 = vadd.f32 %v4564, %v5040
  %v5164 = vadd.f32 %v4382, %v4858
  %v5165 = vadd.f32 %v4384, %v4860
  %v5166 = vadd.f32 %v4569, %v5045
  %v5167 = vadd.f32 %v4386, %v4862
  %v5168 = vadd.f32 %v4388, %v4864
  %v5169 = vadd.f32 %v4572, %v5048
  %v5170 = vadd.f32 %v4392, %v4868
  %v5171 = vadd.f32 %v4394, %v4870
  %v5172 = vadd.f32 %v4577, %v5053
  %v5173 = vadd.f32 %v4396, %v4872
  %v5174 = vadd.f32 %v4398, %v4874
  %v5175 = vadd.f32 %v4580, %v5056
  %v5176 = vadd.f32 %v4402, %v4878
  %v5177 = vadd.f32 %v4404, %v4880
  %v5178 = vadd.f32 %v4585, %v5061
  %v5179 = vadd.f32 %v4406, %v4882
  %v5180 = vadd.f32 %v4408, %v4884
  %v5181 = vadd.f32 %v4588, %v5064
  %v5182 = vadd.f32 %v4412, %v4888
  %v5183 = vadd.f32 %v4414, %v4890
  %v5184 = vadd.f32 %v4593, %v5069
  %v5185 = vadd.f32 %v4416, %v4892
  %v5186 = vadd.f32 %v4418, %v4894
  %v5187 = vadd.f32 %v4596, %v5072
  %v5188 = vadd.f32 %v4422, %v4898
  %v5189 = vadd.f32 %v4424, %v4900
  %v5190 = vadd.f32 %v4601, %v5077
  %v5191 = vadd.f32 %v4426, %v4902
  %v5192 = vadd.f32 %v4428, %v4904
  %v5193 = vadd.f32 %v4604, %v5080
  %v5194 = vadd.f32 %v4432, %v4908
  %v5195 = vadd.f32 %v4434, %v4910
  %v5196 = vadd.f32 %v4609, %v5085
  %v5197 = vadd.f32 %v4436, %v4912
  %v5198 = vadd.f32 %v4438, %v4914
  %v5199 = vadd.f32 %v4612, %v5088
  %v5200 = vadd.f32 %v4442, %v4918
  %v5201 = vadd.f32 %v4444, %v4920
  %v5202 = vadd.f32 %v4617, %v5093
  %v5203 = vadd.f32 %v4446, %v4922
  %v5204 = vadd.f32 %v4448, %v4924
  %v5205 = vadd.f32 %v4620, %v5096
  %v5206 = vadd.f32 %v4452, %v4928
  %v5207 = vadd.f32 %v4454, %v4930
  %v5208 = vadd.f32 %v4625, %v5101
  %v5209 = vadd.f32 %v4456, %v4932
  %v5210 = vadd.f32 %v4458, %v4934
  %v5211 = vadd.f32 %v4628, %v5104
  %v5212 = vadd.f32 %v4462, %v4938
  %v5213 = vadd.f32 %v4464, %v4940
  %v5214 = vadd.f32 %v4633, %v5109
  %v5215 = vadd.f32 %v4466, %v4942
  %v5216 = vadd.f32 %v4468, %v4944
  %v5217 = vadd.f32 %v4636, %v5112
  %v5218 = vadd.f32 %v4472, %v4948
  %v5219 = vadd.f32 %v4474, %v4950
  %v5220 = vadd.f32 %v4641, %v5117
  %v5221 = vmax.f32 %v5122, %v5155
  %v5222 = vmax.f32 %v5123, %v5156
  %v5223 = vmax.f32 %v5124, %v5157
  %v5224 = vmax.f32 %v5125, %v5158
  %v5225 = vmax.f32 %v5126, %v5159
  %v5226 = vmax.f32 %v5127, %v5160
  %v5227 = vmax.f32 %v5128, %v5161
  %v5228 = vmax.f32 %v5129, %v5162
  %v5229 = vmax.f32 %v5130, %v5163
  %v5230 = vmax.f32 %v5131, %v5164
  %v5231 = vmax.f32 %v5132, %v5165
  %v5232 = vmax.f32 %v5133, %v5166
  %v5233 = vmax.f32 %v5134, %v5167
  %v5234 = vmax.f32 %v5135, %v5168
  %v5235 = vmax.f32 %v5136, %v5169
  %v5236 = vmax.f32 %v5137, %v5170
  %v5237 = vmax.f32 %v5138, %v5171
  %v5238 = vmax.f32 %v5139, %v5172
  %v5239 = vmax.f32 %v5140, %v5173
  %v5240 = vmax.f32 %v5141, %v5174
  %v5241 = vmax.f32 %v5142, %v5175
  %v5242 = vmax.f32 %v5143, %v5176
  %v5243 = vmax.f32 %v5144, %v5177
  %v5244 = vmax.f32 %v5145, %v5178
  %v5245 = vmax.f32 %v5146, %v5179
  %v5246 = vmax.f32 %v5147, %v5180
  %v5247 = vmax.f32 %v5148, %v5181
  %v5248 = vmax.f32 %v5149, %v5182
  %v5249 = vmax.f32 %v5150, %v5183
  %v5250 = vmax.f32 %v5151, %v5184
  %v5251 = vmax.f32 %v5152, %v5185
  %v5252 = vmax.f32 %v5153, %v5186
  %v5253 = vmax.f32 %v5154, %v5187
  %v5254 = vmax.f32 %v5221, %v5188
  %v5255 = vmax.f32 %v5222, %v5189
  %v5256 = vmax.f32 %v5223, %v5190
  %v5257 = vmax.f32 %v5224, %v5191
  %v5258 = vmax.f32 %v5225, %v5192
  %v5259 = vmax.f32 %v5226, %v5193
  %v5260 = vmax.f32 %v5227, %v5194
  %v5261 = vmax.f32 %v5228, %v5195
  %v5262 = vmax.f32 %v5229, %v5196
  %v5263 = vmax.f32 %v5230, %v5197
  %v5264 = vmax.f32 %v5231, %v5198
  %v5265 = vmax.f32 %v5232, %v5199
  %v5266 = vmax.f32 %v5233, %v5200
  %v5267 = vmax.f32 %v5234, %v5201
  %v5268 = vmax.f32 %v5235, %v5202
  %v5269 = vmax.f32 %v5236, %v5203
  %v5270 = vmax.f32 %v5237, %v5204
  %v5271 = vmax.f32 %v5238, %v5205
  %v5272 = vmax.f32 %v5239, %v5206
  %v5273 = vmax.f32 %v5240, %v5207
  %v5274 = vmax.f32 %v5241, %v5208
  %v5275 = vmax.f32 %v5242, %v5209
  %v5276 = vmax.f32 %v5243, %v5210
  %v5277 = vmax.f32 %v5244, %v5211
  %v5278 = vmax.f32 %v5245, %v5212
  %v5279 = vmax.f32 %v5246, %v5213
  %v5280 = vmax.f32 %v5247, %v5214
  %v5281 = vmax.f32 %v5248, %v5215
  %v5282 = vmax.f32 %v5249, %v5216
  %v5283 = vmax.f32 %v5250, %v5217
  %v5284 = vmax.f32 %v5251, %v5218
  %v5285 = vmax.f32 %v5252, %v5219
  %v5286 = vmax.f32 %v5253, %v5220
  %v5287 = vmax.f32 %v3661, %v5254
  %v5288 = vmax.f32 %v3662, %v5255
  %v5289 = vmax.f32 %v3663, %v5256
  %v5290 = vmax.f32 %v3664, %v5257
  %v5291 = vmax.f32 %v3665, %v5258
  %v5292 = vmax.f32 %v3666, %v5259
  %v5293 = vmax.f32 %v3667, %v5260
  %v5294 = vmax.f32 %v3668, %v5261
  %v5295 = vmax.f32 %v3669, %v5262
  %v5296 = vmax.f32 %v3670, %v5263
  %v5297 = vmax.f32 %v3671, %v5264
  %v5298 = vmax.f32 %v3672, %v5265
  %v5299 = vmax.f32 %v3673, %v5266
  %v5300 = vmax.f32 %v3674, %v5267
  %v5301 = vmax.f32 %v3675, %v5268
  %v5302 = vmax.f32 %v3676, %v5269
  %v5303 = vmax.f32 %v3677, %v5270
  %v5304 = vmax.f32 %v3678, %v5271
  %v5305 = vmax.f32 %v3679, %v5272
  %v5306 = vmax.f32 %v3680, %v5273
  %v5307 = vmax.f32 %v3681, %v5274
  %v5308 = vmax.f32 %v3682, %v5275
  %v5309 = vmax.f32 %v3683, %v5276
  %v5310 = vmax.f32 %v3684, %v5277
  %v5311 = vmax.f32 %v3685, %v5278
  %v5312 = vmax.f32 %v3686, %v5279
  %v5313 = vmax.f32 %v3687, %v5280
  %v5314 = vmax.f32 %v3688, %v5281
  %v5315 = vmax.f32 %v3689, %v5282
  %v5316 = vmax.f32 %v3690, %v5283
  %v5317 = vmax.f32 %v3691, %v5284
  %v5318 = vmax.f32 %v3692, %v5285
  %v5319 = vmax.f32 %v3693, %v5286
  %v5320 = vld [vmem:[%s2] sm:$0x7]
  %v5322 = vlaneseq
  %v5323 = vshrl.u32 %v5322, 7
  %v5324 = vsub.s32 0, %v5323
  %v5325 = vrot.slane %v5320, %v5324
  %v5326 = vlaneseq
  %v5327 = vshrl.u32 %v5326, 7
  %v5328 = vsub.s32 1, %v5327
  %v5329 = vrot.slane %v5320, %v5328
  %v5330 = vlaneseq
  %v5331 = vshrl.u32 %v5330, 7
  %v5332 = vsub.s32 2, %v5331
  %v5333 = vrot.slane %v5320, %v5332
  %v5337 = vadd.f32 %v5287, %v5325
  %v5338 = vadd.f32 %v5288, %v5329
  %v5339 = vadd.f32 %v5289, %v5333
  %v5340 = vadd.f32 %v5290, %v5325
  %v5341 = vadd.f32 %v5291, %v5329
  %v5342 = vadd.f32 %v5292, %v5333
  %v5343 = vadd.f32 %v5293, %v5325
  %v5344 = vadd.f32 %v5294, %v5329
  %v5345 = vadd.f32 %v5295, %v5333
  %v5346 = vadd.f32 %v5296, %v5325
  %v5347 = vadd.f32 %v5297, %v5329
  %v5348 = vadd.f32 %v5298, %v5333
  %v5349 = vadd.f32 %v5299, %v5325
  %v5350 = vadd.f32 %v5300, %v5329
  %v5351 = vadd.f32 %v5301, %v5333
  %v5352 = vadd.f32 %v5302, %v5325
  %v5353 = vadd.f32 %v5303, %v5329
  %v5354 = vadd.f32 %v5304, %v5333
  %v5355 = vadd.f32 %v5305, %v5325
  %v5356 = vadd.f32 %v5306, %v5329
  %v5357 = vadd.f32 %v5307, %v5333
  %v5358 = vadd.f32 %v5308, %v5325
  %v5359 = vadd.f32 %v5309, %v5329
  %v5360 = vadd.f32 %v5310, %v5333
  %v5361 = vadd.f32 %v5311, %v5325
  %v5362 = vadd.f32 %v5312, %v5329
  %v5363 = vadd.f32 %v5313, %v5333
  %v5364 = vadd.f32 %v5314, %v5325
  %v5365 = vadd.f32 %v5315, %v5329
  %v5366 = vadd.f32 %v5316, %v5333
  %v5367 = vadd.f32 %v5317, %v5325
  %v5368 = vadd.f32 %v5318, %v5329
  %v5369 = vadd.f32 %v5319, %v5333
  %v5370 = vmax.f32 %v5337, 0.0
  %v5371 = vmax.f32 %v5338, 0.0
  %v5372 = vmax.f32 %v5339, 0.0
  %v5373 = vmax.f32 %v5340, 0.0
  %v5374 = vmax.f32 %v5341, 0.0
  %v5375 = vmax.f32 %v5342, 0.0
  %v5376 = vmax.f32 %v5343, 0.0
  %v5377 = vmax.f32 %v5344, 0.0
  %v5378 = vmax.f32 %v5345, 0.0
  %v5379 = vmax.f32 %v5346, 0.0
  %v5380 = vmax.f32 %v5347, 0.0
  %v5381 = vmax.f32 %v5348, 0.0
  %v5382 = vmax.f32 %v5349, 0.0
  %v5383 = vmax.f32 %v5350, 0.0
  %v5384 = vmax.f32 %v5351, 0.0
  %v5385 = vmax.f32 %v5352, 0.0
  %v5386 = vmax.f32 %v5353, 0.0
  %v5387 = vmax.f32 %v5354, 0.0
  %v5388 = vmax.f32 %v5355, 0.0
  %v5389 = vmax.f32 %v5356, 0.0
  %v5390 = vmax.f32 %v5357, 0.0
  %v5391 = vmax.f32 %v5358, 0.0
  %v5392 = vmax.f32 %v5359, 0.0
  %v5393 = vmax.f32 %v5360, 0.0
  %v5394 = vmax.f32 %v5361, 0.0
  %v5395 = vmax.f32 %v5362, 0.0
  %v5396 = vmax.f32 %v5363, 0.0
  %v5397 = vmax.f32 %v5364, 0.0
  %v5398 = vmax.f32 %v5365, 0.0
  %v5399 = vmax.f32 %v5366, 0.0
  %v5400 = vmax.f32 %v5367, 0.0
  %v5401 = vmax.f32 %v5368, 0.0
  %v5402 = vmax.f32 %v5369, 0.0
  %v5403 = vpack.c.bf16 %v5373, %v5370
  %v5404 = vpack.c.bf16 %v5374, %v5371
  %v5405 = vpack.c.bf16 %v5375, %v5372
  %v5406 = vpack.c.bf16 %v5379, %v5376
  %v5407 = vpack.c.bf16 %v5380, %v5377
  %v5408 = vpack.c.bf16 %v5381, %v5378
  %v5409 = vpack.c.bf16 %v5385, %v5382
  %v5410 = vpack.c.bf16 %v5386, %v5383
  %v5411 = vpack.c.bf16 %v5387, %v5384
  %v5412 = vpack.c.bf16 %v5391, %v5388
  %v5413 = vpack.c.bf16 %v5392, %v5389
  %v5414 = vpack.c.bf16 %v5393, %v5390
  %v5415 = vpack.c.bf16 %v5397, %v5394
  %v5416 = vpack.c.bf16 %v5398, %v5395
  %v5417 = vpack.c.bf16 %v5399, %v5396
  %v5418 = vpack.c.bf16 %v5400, %v5400
  %v5419 = vpack.c.bf16 %v5401, %v5401
  %v5420 = vpack.c.bf16 %v5402, %v5402
  %v5439 = vunpack.c.l.b16 %v5403
  %v5440 = vunpack.c.l.b16 %v5404
  %v5441 = vunpack.c.l.b16 %v5405
  %v5442 = vunpack.c.h.b16 %v5403
  %v5443 = vunpack.c.h.b16 %v5404
  %v5444 = vunpack.c.h.b16 %v5405
  %v5445 = vunpack.c.l.b16 %v5406
  %v5446 = vunpack.c.l.b16 %v5407
  %v5447 = vunpack.c.l.b16 %v5408
  %v5448 = vunpack.c.h.b16 %v5406
  %v5449 = vunpack.c.h.b16 %v5407
  %v5450 = vunpack.c.h.b16 %v5408
  %v5451 = vunpack.c.l.b16 %v5409
  %v5452 = vunpack.c.l.b16 %v5410
  %v5453 = vunpack.c.l.b16 %v5411
  %v5454 = vunpack.c.h.b16 %v5409
  %v5455 = vunpack.c.h.b16 %v5410
  %v5456 = vunpack.c.h.b16 %v5411
  %v5457 = vunpack.c.l.b16 %v5412
  %v5458 = vunpack.c.l.b16 %v5413
  %v5459 = vunpack.c.l.b16 %v5414
  %v5460 = vunpack.c.h.b16 %v5412
  %v5461 = vunpack.c.h.b16 %v5413
  %v5462 = vunpack.c.h.b16 %v5414
  %v5463 = vunpack.c.l.b16 %v5415
  %v5464 = vunpack.c.l.b16 %v5416
  %v5465 = vunpack.c.l.b16 %v5417
  %v5466 = vunpack.c.h.b16 %v5415
  %v5467 = vunpack.c.h.b16 %v5416
  %v5468 = vunpack.c.h.b16 %v5417
  %v5469 = vunpack.c.l.b16 %v5418
  %v5470 = vunpack.c.l.b16 %v5419
  %v5471 = vunpack.c.l.b16 %v5420
  %v5472 = vpack.c.b16 %v5440, %v5439
  %v5473 = vpack.c.b16 %v5441, %v5441
  %v5474 = vpack.c.b16 %v5443, %v5442
  %v5475 = vpack.c.b16 %v5444, %v5444
  %v5476 = vpack.c.b16 %v5446, %v5445
  %v5477 = vpack.c.b16 %v5447, %v5447
  %v5478 = vpack.c.b16 %v5449, %v5448
  %v5479 = vpack.c.b16 %v5450, %v5450
  %v5480 = vpack.c.b16 %v5452, %v5451
  %v5481 = vpack.c.b16 %v5453, %v5453
  %v5482 = vpack.c.b16 %v5455, %v5454
  %v5483 = vpack.c.b16 %v5456, %v5456
  %v5484 = vpack.c.b16 %v5458, %v5457
  %v5485 = vpack.c.b16 %v5459, %v5459
  %v5486 = vpack.c.b16 %v5461, %v5460
  %v5487 = vpack.c.b16 %v5462, %v5462
  %v5488 = vpack.c.b16 %v5464, %v5463
  %v5489 = vpack.c.b16 %v5465, %v5465
  %v5490 = vpack.c.b16 %v5467, %v5466
  %v5491 = vpack.c.b16 %v5468, %v5468
  %v5492 = vpack.c.b16 %v5470, %v5469
  %v5493 = vpack.c.b16 %v5471, %v5471
  %5516 = vst [vmem:[#allocation2] sm:$0xff] %v5472
  %5517 = vst [vmem:[#allocation2 + $0x8] sm:$0xf] %v5473
  %5518 = vst [vmem:[#allocation2 + $0xc] sm:$0xff] %v5474
  %5519 = vst [vmem:[#allocation2 + $0x14] sm:$0xf] %v5475
  %5520 = vst [vmem:[#allocation2 + $0x18] sm:$0xff] %v5476
  %5521 = vst [vmem:[#allocation2 + $0x20] sm:$0xf] %v5477
  %5522 = vst [vmem:[#allocation2 + $0x24] sm:$0xff] %v5478
  %5523 = vst [vmem:[#allocation2 + $0x2c] sm:$0xf] %v5479
  %5524 = vst [vmem:[#allocation2 + $0x30] sm:$0xff] %v5480
  %5525 = vst [vmem:[#allocation2 + $0x38] sm:$0xf] %v5481
  %5526 = vst [vmem:[#allocation2 + $0x3c] sm:$0xff] %v5482
  %5527 = vst [vmem:[#allocation2 + $0x44] sm:$0xf] %v5483
  %5528 = vst [vmem:[#allocation2 + $0x48] sm:$0xff] %v5484
  %5529 = vst [vmem:[#allocation2 + $0x50] sm:$0xf] %v5485
  %5530 = vst [vmem:[#allocation2 + $0x54] sm:$0xff] %v5486
  %5531 = vst [vmem:[#allocation2 + $0x5c] sm:$0xf] %v5487
  %5532 = vst [vmem:[#allocation2 + $0x60] sm:$0xff] %v5488
  %5533 = vst [vmem:[#allocation2 + $0x68] sm:$0xf] %v5489
  %5534 = vst [vmem:[#allocation2 + $0x6c] sm:$0xff] %v5490
  %5535 = vst [vmem:[#allocation2 + $0x74] sm:$0xf] %v5491
  %5536 = vst [vmem:[#allocation2 + $0x78] sm:$0xff] %v5492
  %5537 = vst [vmem:[#allocation2 + $0x80] sm:$0xf] %v5493
  %v5538 = vld [vmem:[#allocation2] sm:$0xff]
  %v5539 = vld [vmem:[#allocation2 + $0x8] sm:$0xf]
  %v5542 = vunpack.c.l.b16 %v5538
  %v5543 = vunpack.c.h.b16 %v5538
  %v5544 = vunpack.c.l.b16 %v5539
  %v5545 = vpack.c.b16 %v5542, %v5542
  %v5546 = vpack.c.b16 %v5543, %v5543
  %v5547 = vpack.c.b16 %v5544, %v5544
  %5551 = vst [vmem:[#allocation3] sm:$0xf] %v5545
  %5552 = vst [vmem:[#allocation3 + $0x8] sm:$0xf] %v5546
  %5553 = vst [vmem:[#allocation3 + $0x10] sm:$0xf] %v5547
  %v5554 = vld [vmem:[#allocation2 + $0x18] sm:$0xff]
  %v5555 = vld [vmem:[#allocation2 + $0x20] sm:$0xf]
  %v5558 = vunpack.c.l.b16 %v5554
  %v5559 = vunpack.c.h.b16 %v5554
  %v5560 = vunpack.c.l.b16 %v5555
  %v5561 = vpack.c.b16 %v5558, %v5558
  %v5562 = vpack.c.b16 %v5559, %v5559
  %v5563 = vpack.c.b16 %v5560, %v5560
  %5567 = vst [vmem:[#allocation3] sm:$0xf0] %v5561
  %5568 = vst [vmem:[#allocation3 + $0x8] sm:$0xf0] %v5562
  %5569 = vst [vmem:[#allocation3 + $0x10] sm:$0xf0] %v5563
  %v5570 = vld [vmem:[#allocation2 + $0x30] sm:$0xff]
  %v5571 = vld [vmem:[#allocation2 + $0x38] sm:$0xf]
  %v5574 = vunpack.c.l.b16 %v5570
  %v5575 = vunpack.c.h.b16 %v5570
  %v5576 = vunpack.c.l.b16 %v5571
  %v5577 = vpack.c.b16 %v5574, %v5574
  %v5578 = vpack.c.b16 %v5575, %v5575
  %v5579 = vpack.c.b16 %v5576, %v5576
  %5583 = vst [vmem:[#allocation3 + $0x18] sm:$0xf] %v5577
  %5584 = vst [vmem:[#allocation3 + $0x20] sm:$0xf] %v5578
  %5585 = vst [vmem:[#allocation3 + $0x28] sm:$0xf] %v5579
  %v5586 = vld [vmem:[#allocation2 + $0x48] sm:$0xff]
  %v5587 = vld [vmem:[#allocation2 + $0x50] sm:$0xf]
  %v5590 = vunpack.c.l.b16 %v5586
  %v5591 = vunpack.c.h.b16 %v5586
  %v5592 = vunpack.c.l.b16 %v5587
  %v5593 = vpack.c.b16 %v5590, %v5590
  %v5594 = vpack.c.b16 %v5591, %v5591
  %v5595 = vpack.c.b16 %v5592, %v5592
  %5599 = vst [vmem:[#allocation3 + $0x18] sm:$0xf0] %v5593
  %5600 = vst [vmem:[#allocation3 + $0x20] sm:$0xf0] %v5594
  %5601 = vst [vmem:[#allocation3 + $0x28] sm:$0xf0] %v5595
  %v5602 = vld [vmem:[#allocation2 + $0xc] sm:$0xff]
  %v5603 = vld [vmem:[#allocation2 + $0x14] sm:$0xf]
  %v5606 = vunpack.c.l.b16 %v5602
  %v5607 = vunpack.c.h.b16 %v5602
  %v5608 = vunpack.c.l.b16 %v5603
  %v5609 = vpack.c.b16 %v5606, %v5606
  %v5610 = vpack.c.b16 %v5607, %v5607
  %v5611 = vpack.c.b16 %v5608, %v5608
  %5615 = vst [vmem:[#allocation3 + $0x30] sm:$0xf] %v5609
  %5616 = vst [vmem:[#allocation3 + $0x38] sm:$0xf] %v5610
  %5617 = vst [vmem:[#allocation3 + $0x40] sm:$0xf] %v5611
  %v5618 = vld [vmem:[#allocation2 + $0x24] sm:$0xff]
  %v5619 = vld [vmem:[#allocation2 + $0x2c] sm:$0xf]
  %v5622 = vunpack.c.l.b16 %v5618
  %v5623 = vunpack.c.h.b16 %v5618
  %v5624 = vunpack.c.l.b16 %v5619
  %v5625 = vpack.c.b16 %v5622, %v5622
  %v5626 = vpack.c.b16 %v5623, %v5623
  %v5627 = vpack.c.b16 %v5624, %v5624
  %5631 = vst [vmem:[#allocation3 + $0x30] sm:$0xf0] %v5625
  %5632 = vst [vmem:[#allocation3 + $0x38] sm:$0xf0] %v5626
  %5633 = vst [vmem:[#allocation3 + $0x40] sm:$0xf0] %v5627
  %v5634 = vld [vmem:[#allocation2 + $0x3c] sm:$0xff]
  %v5635 = vld [vmem:[#allocation2 + $0x44] sm:$0xf]
  %v5638 = vunpack.c.l.b16 %v5634
  %v5639 = vunpack.c.h.b16 %v5634
  %v5640 = vunpack.c.l.b16 %v5635
  %v5641 = vpack.c.b16 %v5638, %v5638
  %v5642 = vpack.c.b16 %v5639, %v5639
  %v5643 = vpack.c.b16 %v5640, %v5640
  %5647 = vst [vmem:[#allocation3 + $0x48] sm:$0xf] %v5641
  %5648 = vst [vmem:[#allocation3 + $0x50] sm:$0xf] %v5642
  %5649 = vst [vmem:[#allocation3 + $0x58] sm:$0xf] %v5643
  %v5650 = vld [vmem:[#allocation2 + $0x54] sm:$0xff]
  %v5651 = vld [vmem:[#allocation2 + $0x5c] sm:$0xf]
  %v5654 = vunpack.c.l.b16 %v5650
  %v5655 = vunpack.c.h.b16 %v5650
  %v5656 = vunpack.c.l.b16 %v5651
  %v5657 = vpack.c.b16 %v5654, %v5654
  %v5658 = vpack.c.b16 %v5655, %v5655
  %v5659 = vpack.c.b16 %v5656, %v5656
  %5663 = vst [vmem:[#allocation3 + $0x48] sm:$0xf0] %v5657
  %5664 = vst [vmem:[#allocation3 + $0x50] sm:$0xf0] %v5658
  %5665 = vst [vmem:[#allocation3 + $0x58] sm:$0xf0] %v5659
  %v5666 = vld [vmem:[#allocation2 + $0x18] sm:$0xff]
  %v5667 = vld [vmem:[#allocation2 + $0x20] sm:$0xf]
  %v5670 = vunpack.c.l.b16 %v5666
  %v5671 = vunpack.c.h.b16 %v5666
  %v5672 = vunpack.c.l.b16 %v5667
  %v5673 = vpack.c.b16 %v5670, %v5670
  %v5674 = vpack.c.b16 %v5671, %v5671
  %v5675 = vpack.c.b16 %v5672, %v5672
  %5679 = vst [vmem:[#allocation3 + $0x60] sm:$0xf] %v5673
  %5680 = vst [vmem:[#allocation3 + $0x68] sm:$0xf] %v5674
  %5681 = vst [vmem:[#allocation3 + $0x70] sm:$0xf] %v5675
  %v5682 = vld [vmem:[#allocation2 + $0x30] sm:$0xff]
  %v5683 = vld [vmem:[#allocation2 + $0x38] sm:$0xf]
  %v5686 = vunpack.c.l.b16 %v5682
  %v5687 = vunpack.c.h.b16 %v5682
  %v5688 = vunpack.c.l.b16 %v5683
  %v5689 = vpack.c.b16 %v5686, %v5686
  %v5690 = vpack.c.b16 %v5687, %v5687
  %v5691 = vpack.c.b16 %v5688, %v5688
  %5695 = vst [vmem:[#allocation3 + $0x60] sm:$0xf0] %v5689
  %5696 = vst [vmem:[#allocation3 + $0x68] sm:$0xf0] %v5690
  %5697 = vst [vmem:[#allocation3 + $0x70] sm:$0xf0] %v5691
  %v5698 = vld [vmem:[#allocation2 + $0x48] sm:$0xff]
  %v5699 = vld [vmem:[#allocation2 + $0x50] sm:$0xf]
  %v5702 = vunpack.c.l.b16 %v5698
  %v5703 = vunpack.c.h.b16 %v5698
  %v5704 = vunpack.c.l.b16 %v5699
  %v5705 = vpack.c.b16 %v5702, %v5702
  %v5706 = vpack.c.b16 %v5703, %v5703
  %v5707 = vpack.c.b16 %v5704, %v5704
  %5711 = vst [vmem:[#allocation3 + $0x78] sm:$0xf] %v5705
  %5712 = vst [vmem:[#allocation3 + $0x80] sm:$0xf] %v5706
  %5713 = vst [vmem:[#allocation3 + $0x88] sm:$0xf] %v5707
  %v5714 = vld [vmem:[#allocation2 + $0x60] sm:$0xff]
  %v5715 = vld [vmem:[#allocation2 + $0x68] sm:$0xf]
  %v5718 = vunpack.c.l.b16 %v5714
  %v5719 = vunpack.c.h.b16 %v5714
  %v5720 = vunpack.c.l.b16 %v5715
  %v5721 = vpack.c.b16 %v5718, %v5718
  %v5722 = vpack.c.b16 %v5719, %v5719
  %v5723 = vpack.c.b16 %v5720, %v5720
  %5727 = vst [vmem:[#allocation3 + $0x78] sm:$0xf0] %v5721
  %5728 = vst [vmem:[#allocation3 + $0x80] sm:$0xf0] %v5722
  %5729 = vst [vmem:[#allocation3 + $0x88] sm:$0xf0] %v5723
  %v5730 = vld [vmem:[#allocation2 + $0x24] sm:$0xff]
  %v5731 = vld [vmem:[#allocation2 + $0x2c] sm:$0xf]
  %v5734 = vunpack.c.l.b16 %v5730
  %v5735 = vunpack.c.h.b16 %v5730
  %v5736 = vunpack.c.l.b16 %v5731
  %v5737 = vpack.c.b16 %v5734, %v5734
  %v5738 = vpack.c.b16 %v5735, %v5735
  %v5739 = vpack.c.b16 %v5736, %v5736
  %5743 = vst [vmem:[#allocation3 + $0x90] sm:$0xf] %v5737
  %5744 = vst [vmem:[#allocation3 + $0x98] sm:$0xf] %v5738
  %5745 = vst [vmem:[#allocation3 + $0xa0] sm:$0xf] %v5739
  %v5746 = vld [vmem:[#allocation2 + $0x3c] sm:$0xff]
  %v5747 = vld [vmem:[#allocation2 + $0x44] sm:$0xf]
  %v5750 = vunpack.c.l.b16 %v5746
  %v5751 = vunpack.c.h.b16 %v5746
  %v5752 = vunpack.c.l.b16 %v5747
  %v5753 = vpack.c.b16 %v5750, %v5750
  %v5754 = vpack.c.b16 %v5751, %v5751
  %v5755 = vpack.c.b16 %v5752, %v5752
  %5759 = vst [vmem:[#allocation3 + $0x90] sm:$0xf0] %v5753
  %5760 = vst [vmem:[#allocation3 + $0x98] sm:$0xf0] %v5754
  %5761 = vst [vmem:[#allocation3 + $0xa0] sm:$0xf0] %v5755
  %v5762 = vld [vmem:[#allocation2 + $0x54] sm:$0xff]
  %v5763 = vld [vmem:[#allocation2 + $0x5c] sm:$0xf]
  %v5766 = vunpack.c.l.b16 %v5762
  %v5767 = vunpack.c.h.b16 %v5762
  %v5768 = vunpack.c.l.b16 %v5763
  %v5769 = vpack.c.b16 %v5766, %v5766
  %v5770 = vpack.c.b16 %v5767, %v5767
  %v5771 = vpack.c.b16 %v5768, %v5768
  %5775 = vst [vmem:[#allocation3 + $0xa8] sm:$0xf] %v5769
  %5776 = vst [vmem:[#allocation3 + $0xb0] sm:$0xf] %v5770
  %5777 = vst [vmem:[#allocation3 + $0xb8] sm:$0xf] %v5771
  %v5778 = vld [vmem:[#allocation2 + $0x6c] sm:$0xff]
  %v5779 = vld [vmem:[#allocation2 + $0x74] sm:$0xf]
  %v5782 = vunpack.c.l.b16 %v5778
  %v5783 = vunpack.c.h.b16 %v5778
  %v5784 = vunpack.c.l.b16 %v5779
  %v5785 = vpack.c.b16 %v5782, %v5782
  %v5786 = vpack.c.b16 %v5783, %v5783
  %v5787 = vpack.c.b16 %v5784, %v5784
  %5791 = vst [vmem:[#allocation3 + $0xa8] sm:$0xf0] %v5785
  %5792 = vst [vmem:[#allocation3 + $0xb0] sm:$0xf0] %v5786
  %5793 = vst [vmem:[#allocation3 + $0xb8] sm:$0xf0] %v5787
  %v5794 = vld [vmem:[#allocation2 + $0x30] sm:$0xff]
  %v5795 = vld [vmem:[#allocation2 + $0x38] sm:$0xf]
  %v5798 = vunpack.c.l.b16 %v5794
  %v5799 = vunpack.c.h.b16 %v5794
  %v5800 = vunpack.c.l.b16 %v5795
  %v5801 = vpack.c.b16 %v5798, %v5798
  %v5802 = vpack.c.b16 %v5799, %v5799
  %v5803 = vpack.c.b16 %v5800, %v5800
  %5807 = vst [vmem:[#allocation3 + $0xc0] sm:$0xf] %v5801
  %5808 = vst [vmem:[#allocation3 + $0xc8] sm:$0xf] %v5802
  %5809 = vst [vmem:[#allocation3 + $0xd0] sm:$0xf] %v5803
  %v5810 = vld [vmem:[#allocation2 + $0x48] sm:$0xff]
  %v5811 = vld [vmem:[#allocation2 + $0x50] sm:$0xf]
  %v5814 = vunpack.c.l.b16 %v5810
  %v5815 = vunpack.c.h.b16 %v5810
  %v5816 = vunpack.c.l.b16 %v5811
  %v5817 = vpack.c.b16 %v5814, %v5814
  %v5818 = vpack.c.b16 %v5815, %v5815
  %v5819 = vpack.c.b16 %v5816, %v5816
  %5823 = vst [vmem:[#allocation3 + $0xc0] sm:$0xf0] %v5817
  %5824 = vst [vmem:[#allocation3 + $0xc8] sm:$0xf0] %v5818
  %5825 = vst [vmem:[#allocation3 + $0xd0] sm:$0xf0] %v5819
  %v5826 = vld [vmem:[#allocation2 + $0x60] sm:$0xff]
  %v5827 = vld [vmem:[#allocation2 + $0x68] sm:$0xf]
  %v5830 = vunpack.c.l.b16 %v5826
  %v5831 = vunpack.c.h.b16 %v5826
  %v5832 = vunpack.c.l.b16 %v5827
  %v5833 = vpack.c.b16 %v5830, %v5830
  %v5834 = vpack.c.b16 %v5831, %v5831
  %v5835 = vpack.c.b16 %v5832, %v5832
  %5839 = vst [vmem:[#allocation3 + $0xd8] sm:$0xf] %v5833
  %5840 = vst [vmem:[#allocation3 + $0xe0] sm:$0xf] %v5834
  %5841 = vst [vmem:[#allocation3 + $0xe8] sm:$0xf] %v5835
  %v5842 = vld [vmem:[#allocation2 + $0x78] sm:$0xff]
  %v5843 = vld [vmem:[#allocation2 + $0x80] sm:$0xf]
  %v5846 = vunpack.c.l.b16 %v5842
  %v5847 = vunpack.c.h.b16 %v5842
  %v5848 = vunpack.c.l.b16 %v5843
  %v5849 = vpack.c.b16 %v5846, %v5846
  %v5850 = vpack.c.b16 %v5847, %v5847
  %v5851 = vpack.c.b16 %v5848, %v5848
  %5855 = vst [vmem:[#allocation3 + $0xd8] sm:$0xf0] %v5849
  %5856 = vst [vmem:[#allocation3 + $0xe0] sm:$0xf0] %v5850
  %5857 = vst [vmem:[#allocation3 + $0xe8] sm:$0xf0] %v5851
  %v5858 = vld [vmem:[#allocation3] sm:$0xff]
  %v5859 = vld [vmem:[#allocation3 + $0x8] sm:$0xff]
  %v5860 = vld [vmem:[#allocation3 + $0x10] sm:$0xff]
  %v5861 = vld [vmem:[#allocation3 + $0x18] sm:$0xff]
  %v5862 = vld [vmem:[#allocation3 + $0x20] sm:$0xff]
  %v5863 = vld [vmem:[#allocation3 + $0x28] sm:$0xff]
  %v5864 = vld [vmem:[#allocation3 + $0x30] sm:$0xff]
  %v5865 = vld [vmem:[#allocation3 + $0x38] sm:$0xff]
  %v5866 = vld [vmem:[#allocation3 + $0x40] sm:$0xff]
  %v5867 = vld [vmem:[#allocation3 + $0x48] sm:$0xff]
  %v5868 = vld [vmem:[#allocation3 + $0x50] sm:$0xff]
  %v5869 = vld [vmem:[#allocation3 + $0x58] sm:$0xff]
  %v5870 = vld [vmem:[#allocation3 + $0x60] sm:$0xff]
  %v5871 = vld [vmem:[#allocation3 + $0x68] sm:$0xff]
  %v5872 = vld [vmem:[#allocation3 + $0x70] sm:$0xff]
  %v5873 = vld [vmem:[#allocation3 + $0x78] sm:$0xff]
  %v5874 = vld [vmem:[#allocation3 + $0x80] sm:$0xff]
  %v5875 = vld [vmem:[#allocation3 + $0x88] sm:$0xff]
  %v5876 = vld [vmem:[%s3] sm:$0xff]
  %v5877 = vld [vmem:[%s3 + $0x8] sm:$0xff]
  %v5878 = vld [vmem:[%s3 + $0x10] sm:$0xff]
  %v5879 = vld [vmem:[%s3 + $0x18] sm:$0xff]
  %v5880 = vld [vmem:[%s3 + $0x20] sm:$0xff]
  %v5881 = vld [vmem:[%s3 + $0x28] sm:$0xff]
  %v5882 = vld [vmem:[%s3 + $0x30] sm:$0xff]
  %v5883 = vld [vmem:[%s3 + $0x38] sm:$0xff]
  %v5884 = vld [vmem:[%s3 + $0x40] sm:$0xff]
  %v5885 = vld [vmem:[%s3 + $0x48] sm:$0xff]
  %v5886 = vld [vmem:[%s3 + $0x50] sm:$0xff]
  %v5887 = vld [vmem:[%s3 + $0x58] sm:$0xff]
  %v5888 = vld [vmem:[%s3 + $0x60] sm:$0xff]
  %v5889 = vld [vmem:[%s3 + $0x68] sm:$0xff]
  %v5890 = vld [vmem:[%s3 + $0x70] sm:$0xff]
  %v5891 = vld [vmem:[%s3 + $0x78] sm:$0xff]
  %v5892 = vld [vmem:[%s3 + $0x80] sm:$0xff]
  %v5893 = vld [vmem:[%s3 + $0x88] sm:$0xff]
  %v5894 = vld [vmem:[%s3 + $0x90] sm:$0xff]
  %v5895 = vld [vmem:[%s3 + $0x98] sm:$0xff]
  %v5896 = vld [vmem:[%s3 + $0xa0] sm:$0xff]
  %v5897 = vld [vmem:[%s3 + $0xa8] sm:$0xff]
  %v5898 = vld [vmem:[%s3 + $0xb0] sm:$0xff]
  %v5899 = vld [vmem:[%s3 + $0xb8] sm:$0xff]
  %v5900 = vld [vmem:[%s3 + $0xc0] sm:$0xff]
  %v5901 = vld [vmem:[%s3 + $0xc8] sm:$0xff]
  %v5902 = vld [vmem:[%s3 + $0xd0] sm:$0xff]
  %v5903 = vld [vmem:[%s3 + $0xd8] sm:$0xff]
  %v5904 = vld [vmem:[%s3 + $0xe0] sm:$0xff]
  %v5905 = vld [vmem:[%s3 + $0xe8] sm:$0xff]
  %v5906 = vld [vmem:[%s3 + $0xf0] sm:$0xff]
  %v5907 = vld [vmem:[%s3 + $0xf8] sm:$0xff]
  %v5908 = vld [vmem:[%s3 + $0x100] sm:$0xff]
  %v5909 = vld [vmem:[%s3 + $0x108] sm:$0xff]
  %v5910 = vld [vmem:[%s3 + $0x110] sm:$0xff]
  %v5911 = vld [vmem:[%s3 + $0x118] sm:$0xff]
  %v5912 = vld [vmem:[%s3 + $0x120] sm:$0xff]
  %v5913 = vld [vmem:[%s3 + $0x128] sm:$0xff]
  %v5914 = vld [vmem:[%s3 + $0x130] sm:$0xff]
  %v5915 = vld [vmem:[%s3 + $0x138] sm:$0xff]
  %v5916 = vld [vmem:[%s3 + $0x140] sm:$0xff]
  %v5917 = vld [vmem:[%s3 + $0x148] sm:$0xff]
  %v5918 = vld [vmem:[%s3 + $0x150] sm:$0xff]
  %v5919 = vld [vmem:[%s3 + $0x158] sm:$0xff]
  %v5920 = vld [vmem:[%s3 + $0x160] sm:$0xff]
  %v5921 = vld [vmem:[%s3 + $0x168] sm:$0xff]
  %v5922 = vld [vmem:[%s3 + $0x170] sm:$0xff]
  %v5923 = vld [vmem:[%s3 + $0x178] sm:$0xff]
  %v5924 = vld [vmem:[#allocation3 + $0x90] sm:$0xff]
  %v5925 = vld [vmem:[#allocation3 + $0x98] sm:$0xff]
  %v5926 = vld [vmem:[#allocation3 + $0xa0] sm:$0xff]
  %v5927 = vld [vmem:[#allocation3 + $0xa8] sm:$0xff]
  %v5928 = vld [vmem:[#allocation3 + $0xb0] sm:$0xff]
  %v5929 = vld [vmem:[#allocation3 + $0xb8] sm:$0xff]
  %s5930 = scalar_lea.vmem %s3, 384
  %v5931 = vld [vmem:[%s5930] sm:$0xff]
  %v5932 = vld [vmem:[%s5930 + $0x8] sm:$0xff]
  %v5933 = vld [vmem:[%s5930 + $0x10] sm:$0xff]
  %v5934 = vld [vmem:[%s5930 + $0x18] sm:$0xff]
  %v5935 = vld [vmem:[%s5930 + $0x20] sm:$0xff]
  %v5936 = vld [vmem:[%s5930 + $0x28] sm:$0xff]
  %v5937 = vld [vmem:[%s5930 + $0x30] sm:$0xff]
  %v5938 = vld [vmem:[%s5930 + $0x38] sm:$0xff]
  %v5939 = vld [vmem:[%s5930 + $0x40] sm:$0xff]
  %v5940 = vld [vmem:[%s5930 + $0x48] sm:$0xff]
  %v5941 = vld [vmem:[%s5930 + $0x50] sm:$0xff]
  %v5942 = vld [vmem:[%s5930 + $0x58] sm:$0xff]
  %v5943 = vld [vmem:[%s5930 + $0x60] sm:$0xff]
  %v5944 = vld [vmem:[%s5930 + $0x68] sm:$0xff]
  %v5945 = vld [vmem:[%s5930 + $0x70] sm:$0xff]
  %v5946 = vld [vmem:[%s5930 + $0x78] sm:$0xff]
  %v5947 = vld [vmem:[%s5930 + $0x80] sm:$0xff]
  %v5948 = vld [vmem:[%s5930 + $0x88] sm:$0xff]
  %v5949 = vld [vmem:[%s5930 + $0x90] sm:$0xff]
  %v5950 = vld [vmem:[%s5930 + $0x98] sm:$0xff]
  %v5951 = vld [vmem:[%s5930 + $0xa0] sm:$0xff]
  %v5952 = vld [vmem:[%s5930 + $0xa8] sm:$0xff]
  %v5953 = vld [vmem:[%s5930 + $0xb0] sm:$0xff]
  %v5954 = vld [vmem:[%s5930 + $0xb8] sm:$0xff]
  %v5955 = vld [vmem:[%s5930 + $0xc0] sm:$0xff]
  %v5956 = vld [vmem:[%s5930 + $0xc8] sm:$0xff]
  %v5957 = vld [vmem:[%s5930 + $0xd0] sm:$0xff]
  %v5958 = vld [vmem:[%s5930 + $0xd8] sm:$0xff]
  %v5959 = vld [vmem:[%s5930 + $0xe0] sm:$0xff]
  %v5960 = vld [vmem:[%s5930 + $0xe8] sm:$0xff]
  %v5961 = vld [vmem:[%s5930 + $0xf0] sm:$0xff]
  %v5962 = vld [vmem:[%s5930 + $0xf8] sm:$0xff]
  %v5963 = vld [vmem:[%s5930 + $0x100] sm:$0xff]
  %v5964 = vld [vmem:[%s5930 + $0x108] sm:$0xff]
  %v5965 = vld [vmem:[%s5930 + $0x110] sm:$0xff]
  %v5966 = vld [vmem:[%s5930 + $0x118] sm:$0xff]
  %v5967 = vld [vmem:[%s5930 + $0x120] sm:$0xff]
  %v5968 = vld [vmem:[%s5930 + $0x128] sm:$0xff]
  %v5969 = vld [vmem:[%s5930 + $0x130] sm:$0xff]
  %v5970 = vld [vmem:[%s5930 + $0x138] sm:$0xff]
  %v5971 = vld [vmem:[%s5930 + $0x140] sm:$0xff]
  %v5972 = vld [vmem:[%s5930 + $0x148] sm:$0xff]
  %v5973 = vld [vmem:[%s5930 + $0x150] sm:$0xff]
  %v5974 = vld [vmem:[%s5930 + $0x158] sm:$0xff]
  %v5975 = vld [vmem:[%s5930 + $0x160] sm:$0xff]
  %v5976 = vld [vmem:[%s5930 + $0x168] sm:$0xff]
  %v5977 = vld [vmem:[%s5930 + $0x170] sm:$0xff]
  %v5978 = vld [vmem:[%s5930 + $0x178] sm:$0xff]
  %v6027 = vunpack.c.l.b16 %v5931
  %v6028 = vunpack.c.h.b16 %v5931
  %v6029 = vunpack.c.l.b16 %v5932
  %v6030 = vunpack.c.h.b16 %v5932
  %v6031 = vunpack.c.l.b16 %v5933
  %v6032 = vunpack.c.h.b16 %v5933
  %v6033 = vunpack.c.l.b16 %v5934
  %v6034 = vunpack.c.h.b16 %v5934
  %v6035 = vunpack.c.l.b16 %v5935
  %v6036 = vunpack.c.h.b16 %v5935
  %v6037 = vunpack.c.l.b16 %v5936
  %v6038 = vunpack.c.h.b16 %v5936
  %v6039 = vunpack.c.l.b16 %v5937
  %v6040 = vunpack.c.h.b16 %v5937
  %v6041 = vunpack.c.l.b16 %v5938
  %v6042 = vunpack.c.h.b16 %v5938
  %v6043 = vunpack.c.l.b16 %v5939
  %v6044 = vunpack.c.h.b16 %v5939
  %v6045 = vunpack.c.l.b16 %v5940
  %v6046 = vunpack.c.h.b16 %v5940
  %v6047 = vunpack.c.l.b16 %v5941
  %v6048 = vunpack.c.h.b16 %v5941
  %v6049 = vunpack.c.l.b16 %v5942
  %v6050 = vunpack.c.h.b16 %v5942
  %v6051 = vunpack.c.l.b16 %v5943
  %v6052 = vunpack.c.h.b16 %v5943
  %v6053 = vunpack.c.l.b16 %v5944
  %v6054 = vunpack.c.h.b16 %v5944
  %v6055 = vunpack.c.l.b16 %v5945
  %v6056 = vunpack.c.h.b16 %v5945
  %v6057 = vunpack.c.l.b16 %v5946
  %v6058 = vunpack.c.h.b16 %v5946
  %v6059 = vunpack.c.l.b16 %v5947
  %v6060 = vunpack.c.h.b16 %v5947
  %v6061 = vunpack.c.l.b16 %v5948
  %v6062 = vunpack.c.h.b16 %v5948
  %v6063 = vunpack.c.l.b16 %v5949
  %v6064 = vunpack.c.h.b16 %v5949
  %v6065 = vunpack.c.l.b16 %v5950
  %v6066 = vunpack.c.h.b16 %v5950
  %v6067 = vunpack.c.l.b16 %v5951
  %v6068 = vunpack.c.h.b16 %v5951
  %v6069 = vunpack.c.l.b16 %v5952
  %v6070 = vunpack.c.h.b16 %v5952
  %v6071 = vunpack.c.l.b16 %v5953
  %v6072 = vunpack.c.h.b16 %v5953
  %v6073 = vunpack.c.l.b16 %v5954
  %v6074 = vunpack.c.h.b16 %v5954
  %v6075 = vunpack.c.l.b16 %v5955
  %v6076 = vunpack.c.h.b16 %v5955
  %v6077 = vunpack.c.l.b16 %v5956
  %v6078 = vunpack.c.h.b16 %v5956
  %v6079 = vunpack.c.l.b16 %v5957
  %v6080 = vunpack.c.h.b16 %v5957
  %v6081 = vunpack.c.l.b16 %v5958
  %v6082 = vunpack.c.h.b16 %v5958
  %v6083 = vunpack.c.l.b16 %v5959
  %v6084 = vunpack.c.h.b16 %v5959
  %v6085 = vunpack.c.l.b16 %v5960
  %v6086 = vunpack.c.h.b16 %v5960
  %v6087 = vunpack.c.l.b16 %v5961
  %v6088 = vunpack.c.h.b16 %v5961
  %v6089 = vunpack.c.l.b16 %v5962
  %v6090 = vunpack.c.h.b16 %v5962
  %v6091 = vunpack.c.l.b16 %v5963
  %v6092 = vunpack.c.h.b16 %v5963
  %v6093 = vunpack.c.l.b16 %v5964
  %v6094 = vunpack.c.h.b16 %v5964
  %v6095 = vunpack.c.l.b16 %v5965
  %v6096 = vunpack.c.h.b16 %v5965
  %v6097 = vunpack.c.l.b16 %v5966
  %v6098 = vunpack.c.h.b16 %v5966
  %v6099 = vunpack.c.l.b16 %v5967
  %v6100 = vunpack.c.h.b16 %v5967
  %v6101 = vunpack.c.l.b16 %v5968
  %v6102 = vunpack.c.h.b16 %v5968
  %v6103 = vunpack.c.l.b16 %v5969
  %v6104 = vunpack.c.h.b16 %v5969
  %v6105 = vunpack.c.l.b16 %v5970
  %v6106 = vunpack.c.h.b16 %v5970
  %v6107 = vunpack.c.l.b16 %v5971
  %v6108 = vunpack.c.h.b16 %v5971
  %v6109 = vunpack.c.l.b16 %v5972
  %v6110 = vunpack.c.h.b16 %v5972
  %v6111 = vunpack.c.l.b16 %v5973
  %v6112 = vunpack.c.h.b16 %v5973
  %v6113 = vunpack.c.l.b16 %v5974
  %v6114 = vunpack.c.h.b16 %v5974
  %v6115 = vunpack.c.l.b16 %v5975
  %v6116 = vunpack.c.h.b16 %v5975
  %v6117 = vunpack.c.l.b16 %v5976
  %v6118 = vunpack.c.h.b16 %v5976
  %v6119 = vunpack.c.l.b16 %v5977
  %v6120 = vunpack.c.h.b16 %v5977
  %v6121 = vunpack.c.l.b16 %v5978
  %v6122 = vunpack.c.h.b16 %v5978
  %v6123 = vpack.c.b16 %v6029, %v6027
  %v6124 = vpack.c.b16 %v6030, %v6028
  %v6125 = vpack.c.b16 %v6033, %v6031
  %v6126 = vpack.c.b16 %v6034, %v6032
  %v6127 = vpack.c.b16 %v6037, %v6035
  %v6128 = vpack.c.b16 %v6038, %v6036
  %v6129 = vpack.c.b16 %v6041, %v6039
  %v6130 = vpack.c.b16 %v6042, %v6040
  %v6131 = vpack.c.b16 %v6045, %v6043
  %v6132 = vpack.c.b16 %v6046, %v6044
  %v6133 = vpack.c.b16 %v6049, %v6047
  %v6134 = vpack.c.b16 %v6050, %v6048
  %v6135 = vpack.c.b16 %v6053, %v6051
  %v6136 = vpack.c.b16 %v6054, %v6052
  %v6137 = vpack.c.b16 %v6057, %v6055
  %v6138 = vpack.c.b16 %v6058, %v6056
  %v6139 = vpack.c.b16 %v6061, %v6059
  %v6140 = vpack.c.b16 %v6062, %v6060
  %v6141 = vpack.c.b16 %v6065, %v6063
  %v6142 = vpack.c.b16 %v6066, %v6064
  %v6143 = vpack.c.b16 %v6069, %v6067
  %v6144 = vpack.c.b16 %v6070, %v6068
  %v6145 = vpack.c.b16 %v6073, %v6071
  %v6146 = vpack.c.b16 %v6074, %v6072
  %v6147 = vpack.c.b16 %v6077, %v6075
  %v6148 = vpack.c.b16 %v6078, %v6076
  %v6149 = vpack.c.b16 %v6081, %v6079
  %v6150 = vpack.c.b16 %v6082, %v6080
  %v6151 = vpack.c.b16 %v6085, %v6083
  %v6152 = vpack.c.b16 %v6086, %v6084
  %v6153 = vpack.c.b16 %v6089, %v6087
  %v6154 = vpack.c.b16 %v6090, %v6088
  %v6155 = vpack.c.b16 %v6093, %v6091
  %v6156 = vpack.c.b16 %v6094, %v6092
  %v6157 = vpack.c.b16 %v6097, %v6095
  %v6158 = vpack.c.b16 %v6098, %v6096
  %v6159 = vpack.c.b16 %v6101, %v6099
  %v6160 = vpack.c.b16 %v6102, %v6100
  %v6161 = vpack.c.b16 %v6105, %v6103
  %v6162 = vpack.c.b16 %v6106, %v6104
  %v6163 = vpack.c.b16 %v6109, %v6107
  %v6164 = vpack.c.b16 %v6110, %v6108
  %v6165 = vpack.c.b16 %v6113, %v6111
  %v6166 = vpack.c.b16 %v6114, %v6112
  %v6167 = vpack.c.b16 %v6117, %v6115
  %v6168 = vpack.c.b16 %v6118, %v6116
  %v6169 = vpack.c.b16 %v6121, %v6119
  %v6170 = vpack.c.b16 %v6122, %v6120
  %6219 = vmatprep.subr.bf16.mxu0 %v6124
  %6220 = vmatpush1.bf16.msra.mxu0 %v6123
  %6221 = vmatprep.subr.bf16.mxu0 %v6126
  %6222 = vmatpush1.bf16.msra.mxu0 %v6125
  %6223 = vmatprep.subr.bf16.mxu0 %v6128
  %6224 = vmatpush1.bf16.msra.mxu0 %v6127
  %6225 = vmatprep.subr.bf16.mxu0 %v6130
  %6226 = vmatpush1.bf16.msra.mxu0 %v6129
  %6227 = vmatprep.subr.bf16.mxu0 %v6132
  %6228 = vmatpush1.bf16.msra.mxu0 %v6131
  %6229 = vmatprep.subr.bf16.mxu0 %v6134
  %6230 = vmatpush1.bf16.msra.mxu0 %v6133
  %6231 = vmatprep.subr.bf16.mxu0 %v6136
  %6232 = vmatpush1.bf16.msra.mxu0 %v6135
  %6233 = vmatprep.subr.bf16.mxu0 %v6138
  %6234 = vmatpush1.bf16.msra.mxu0 %v6137
  %6235 = vmatprep.subr.bf16.mxu0 %v6140
  %6236 = vmatpush1.bf16.msra.mxu0 %v6139
  %6237 = vmatprep.subr.bf16.mxu0 %v6142
  %6238 = vmatpush1.bf16.msra.mxu0 %v6141
  %6239 = vmatprep.subr.bf16.mxu0 %v6144
  %6240 = vmatpush1.bf16.msra.mxu0 %v6143
  %6241 = vmatprep.subr.bf16.mxu0 %v6146
  %6242 = vmatpush1.bf16.msra.mxu0 %v6145
  %6243 = vmatprep.subr.bf16.mxu0 %v6148
  %6244 = vmatpush1.bf16.msra.mxu0 %v6147
  %6245 = vmatprep.subr.bf16.mxu0 %v6150
  %6246 = vmatpush1.bf16.msra.mxu0 %v6149
  %6247 = vmatprep.subr.bf16.mxu0 %v6152
  %6248 = vmatpush1.bf16.msra.mxu0 %v6151
  %6249 = vmatprep.subr.bf16.mxu0 %v6154
  %6250 = vmatpush1.bf16.msra.mxu0 %v6153
  %6251 = vmatprep.mubr.bf16.mxu0 %v5865
  %6252 = vmatmul.mubr.bf16.gmra.mrb[0].mxu0 %v5864
  %v6253 = vpop.f32.mrb[0].mxu0
  %v6254 = vadd.f32 0.0, %v6253
  %v6255 = vpop.f32.mrb[0].mxu0
  %v6256 = vadd.f32 0.0, %v6255
  %v6257 = vpop.f32.mrb[0].mxu0
  %v6258 = vadd.f32 0.0, %v6257
  %v6259 = vpop.f32.mrb[0].mxu0
  %v6260 = vadd.f32 0.0, %v6259
  %6261 = vmatprep.mubr.bf16.mxu0 %v5868
  %6262 = vmatmul.mubr.bf16.gmra.mrb[0].mxu0 %v5867
  %v6263 = vpop.f32.mrb[0].mxu0
  %v6264 = vadd.f32 0.0, %v6263
  %v6265 = vpop.f32.mrb[0].mxu0
  %v6266 = vadd.f32 0.0, %v6265
  %v6267 = vpop.f32.mrb[0].mxu0
  %v6268 = vadd.f32 0.0, %v6267
  %v6269 = vpop.f32.mrb[0].mxu0
  %v6270 = vadd.f32 0.0, %v6269
  %6271 = vmatprep.mubr.bf16.mxu0 %v5871
  %6272 = vmatmul.mubr.bf16.gmra.mrb[0].mxu0 %v5870
  %v6273 = vpop.f32.mrb[0].mxu0
  %v6274 = vadd.f32 0.0, %v6273
  %v6275 = vpop.f32.mrb[0].mxu0
  %v6276 = vadd.f32 0.0, %v6275
  %v6277 = vpop.f32.mrb[0].mxu0
  %v6278 = vadd.f32 0.0, %v6277
  %v6279 = vpop.f32.mrb[0].mxu0
  %v6280 = vadd.f32 0.0, %v6279
  %6281 = vmatprep.mubr.bf16.mxu0 %v5874
  %6282 = vmatmul.mubr.bf16.gmra.mrb[0].mxu0 %v5873
  %v6283 = vpop.f32.mrb[0].mxu0
  %v6284 = vadd.f32 0.0, %v6283
  %v6285 = vpop.f32.mrb[0].mxu0
  %v6286 = vadd.f32 0.0, %v6285
  %v6287 = vpop.f32.mrb[0].mxu0
  %v6288 = vadd.f32 0.0, %v6287
  %v6289 = vpop.f32.mrb[0].mxu0
  %v6290 = vadd.f32 0.0, %v6289
  %6291 = vmatprep.mubr.bf16.mxu0 %v5925
  %6292 = vmatmul.mubr.bf16.gmra.mrb[0].mxu0 %v5924
  %v6293 = vpop.f32.mrb[0].mxu0
  %v6294 = vadd.f32 0.0, %v6293
  %v6295 = vpop.f32.mrb[0].mxu0
  %v6296 = vadd.f32 0.0, %v6295
  %v6297 = vpop.f32.mrb[0].mxu0
  %v6298 = vadd.f32 0.0, %v6297
  %v6299 = vpop.f32.mrb[0].mxu0
  %v6300 = vadd.f32 0.0, %v6299
  %6301 = vmatprep.mubr.bf16.mxu0 %v5928
  %6302 = vmatmul.mubr.bf16.gmra.mrb[0].mxu0 %v5927
  %v6303 = vpop.f32.mrb[0].mxu0
  %v6304 = vadd.f32 0.0, %v6303
  %v6305 = vpop.f32.mrb[0].mxu0
  %v6306 = vadd.f32 0.0, %v6305
  %v6307 = vpop.f32.mrb[0].mxu0
  %v6308 = vadd.f32 0.0, %v6307
  %v6309 = vpop.f32.mrb[0].mxu0
  %v6310 = vadd.f32 0.0, %v6309
  %6311 = vdwg.mxu0
  %6312 = vmatprep.subr.bf16.mxu0 %v6156
  %6313 = vmatpush1.bf16.msra.mxu0 %v6155
  %6314 = vmatprep.subr.bf16.mxu0 %v6158
  %6315 = vmatpush1.bf16.msra.mxu0 %v6157
  %6316 = vmatprep.subr.bf16.mxu0 %v6160
  %6317 = vmatpush1.bf16.msra.mxu0 %v6159
  %6318 = vmatprep.subr.bf16.mxu0 %v6162
  %6319 = vmatpush1.bf16.msra.mxu0 %v6161
  %6320 = vmatprep.subr.bf16.mxu0 %v6164
  %6321 = vmatpush1.bf16.msra.mxu0 %v6163
  %6322 = vmatprep.subr.bf16.mxu0 %v6166
  %6323 = vmatpush1.bf16.msra.mxu0 %v6165
  %6324 = vmatprep.subr.bf16.mxu0 %v6168
  %6325 = vmatpush1.bf16.msra.mxu0 %v6167
  %6326 = vmatprep.subr.bf16.mxu0 %v6170
  %6327 = vmatpush1.bf16.msra.mxu0 %v6169
  %6328 = vmatprep.subr.bf16.mxu0 0
  %6329 = vmatpush1.bf16.msra.mxu0 0
  %6330 = vmatprep.subr.bf16.mxu0 0
  %6331 = vmatpush1.bf16.msra.mxu0 0
  %6332 = vmatprep.subr.bf16.mxu0 0
  %6333 = vmatpush1.bf16.msra.mxu0 0
  %6334 = vmatprep.subr.bf16.mxu0 0
  %6335 = vmatpush1.bf16.msra.mxu0 0
  %6336 = vmatprep.subr.bf16.mxu0 0
  %6337 = vmatpush1.bf16.msra.mxu0 0
  %6338 = vmatprep.subr.bf16.mxu0 0
  %6339 = vmatpush1.bf16.msra.mxu0 0
  %6340 = vmatprep.subr.bf16.mxu0 0
  %6341 = vmatpush1.bf16.msra.mxu0 0
  %6342 = vmatprep.subr.bf16.mxu0 0
  %6343 = vmatpush1.bf16.msra.mxu0 0
  %6344 = vmatprep.mubr.bf16.mxu0 0
  %6345 = vmatmul.mubr.bf16.gmra.mrb[0].mxu0 %v5866
  %v6346 = vpop.f32.mrb[0].mxu0
  %v6347 = vadd.f32 %v6254, %v6346
  %v6348 = vpop.f32.mrb[0].mxu0
  %v6349 = vadd.f32 %v6256, %v6348
  %v6350 = vpop.f32.mrb[0].mxu0
  %v6351 = vadd.f32 %v6258, %v6350
  %v6352 = vpop.f32.mrb[0].mxu0
  %v6353 = vadd.f32 %v6260, %v6352
  %6354 = vmatprep.mubr.bf16.mxu0 0
  %6355 = vmatmul.mubr.bf16.gmra.mrb[0].mxu0 %v5869
  %v6356 = vpop.f32.mrb[0].mxu0
  %v6357 = vadd.f32 %v6264, %v6356
  %v6358 = vpop.f32.mrb[0].mxu0
  %v6359 = vadd.f32 %v6266, %v6358
  %v6360 = vpop.f32.mrb[0].mxu0
  %v6361 = vadd.f32 %v6268, %v6360
  %v6362 = vpop.f32.mrb[0].mxu0
  %v6363 = vadd.f32 %v6270, %v6362
  %6364 = vmatprep.mubr.bf16.mxu0 0
  %6365 = vmatmul.mubr.bf16.gmra.mrb[0].mxu0 %v5872
  %v6366 = vpop.f32.mrb[0].mxu0
  %v6367 = vadd.f32 %v6274, %v6366
  %v6368 = vpop.f32.mrb[0].mxu0
  %v6369 = vadd.f32 %v6276, %v6368
  %v6370 = vpop.f32.mrb[0].mxu0
  %v6371 = vadd.f32 %v6278, %v6370
  %v6372 = vpop.f32.mrb[0].mxu0
  %v6373 = vadd.f32 %v6280, %v6372
  %6374 = vmatprep.mubr.bf16.mxu0 0
  %6375 = vmatmul.mubr.bf16.gmra.mrb[0].mxu0 %v5875
  %v6376 = vpop.f32.mrb[0].mxu0
  %v6377 = vadd.f32 %v6284, %v6376
  %v6378 = vpop.f32.mrb[0].mxu0
  %v6379 = vadd.f32 %v6286, %v6378
  %v6380 = vpop.f32.mrb[0].mxu0
  %v6381 = vadd.f32 %v6288, %v6380
  %v6382 = vpop.f32.mrb[0].mxu0
  %v6383 = vadd.f32 %v6290, %v6382
  %6384 = vmatprep.mubr.bf16.mxu0 0
  %6385 = vmatmul.mubr.bf16.gmra.mrb[0].mxu0 %v5926
  %v6386 = vpop.f32.mrb[0].mxu0
  %v6387 = vadd.f32 %v6294, %v6386
  %v6388 = vpop.f32.mrb[0].mxu0
  %v6389 = vadd.f32 %v6296, %v6388
  %v6390 = vpop.f32.mrb[0].mxu0
  %v6391 = vadd.f32 %v6298, %v6390
  %v6392 = vpop.f32.mrb[0].mxu0
  %v6393 = vadd.f32 %v6300, %v6392
  %6394 = vmatprep.mubr.bf16.mxu0 0
  %6395 = vmatmul.mubr.bf16.gmra.mrb[0].mxu0 %v5929
  %v6396 = vpop.f32.mrb[0].mxu0
  %v6397 = vadd.f32 %v6304, %v6396
  %v6398 = vpop.f32.mrb[0].mxu0
  %v6399 = vadd.f32 %v6306, %v6398
  %v6400 = vpop.f32.mrb[0].mxu0
  %v6401 = vadd.f32 %v6308, %v6400
  %v6402 = vpop.f32.mrb[0].mxu0
  %v6403 = vadd.f32 %v6310, %v6402
  %6404 = vdwg.mxu0
  %v6453 = vunpack.c.l.b16 %v5876
  %v6454 = vunpack.c.h.b16 %v5876
  %v6455 = vunpack.c.l.b16 %v5877
  %v6456 = vunpack.c.h.b16 %v5877
  %v6457 = vunpack.c.l.b16 %v5878
  %v6458 = vunpack.c.h.b16 %v5878
  %v6459 = vunpack.c.l.b16 %v5879
  %v6460 = vunpack.c.h.b16 %v5879
  %v6461 = vunpack.c.l.b16 %v5880
  %v6462 = vunpack.c.h.b16 %v5880
  %v6463 = vunpack.c.l.b16 %v5881
  %v6464 = vunpack.c.h.b16 %v5881
  %v6465 = vunpack.c.l.b16 %v5882
  %v6466 = vunpack.c.h.b16 %v5882
  %v6467 = vunpack.c.l.b16 %v5883
  %v6468 = vunpack.c.h.b16 %v5883
  %v6469 = vunpack.c.l.b16 %v5884
  %v6470 = vunpack.c.h.b16 %v5884
  %v6471 = vunpack.c.l.b16 %v5885
  %v6472 = vunpack.c.h.b16 %v5885
  %v6473 = vunpack.c.l.b16 %v5886
  %v6474 = vunpack.c.h.b16 %v5886
  %v6475 = vunpack.c.l.b16 %v5887
  %v6476 = vunpack.c.h.b16 %v5887
  %v6477 = vunpack.c.l.b16 %v5888
  %v6478 = vunpack.c.h.b16 %v5888
  %v6479 = vunpack.c.l.b16 %v5889
  %v6480 = vunpack.c.h.b16 %v5889
  %v6481 = vunpack.c.l.b16 %v5890
  %v6482 = vunpack.c.h.b16 %v5890
  %v6483 = vunpack.c.l.b16 %v5891
  %v6484 = vunpack.c.h.b16 %v5891
  %v6485 = vunpack.c.l.b16 %v5892
  %v6486 = vunpack.c.h.b16 %v5892
  %v6487 = vunpack.c.l.b16 %v5893
  %v6488 = vunpack.c.h.b16 %v5893
  %v6489 = vunpack.c.l.b16 %v5894
  %v6490 = vunpack.c.h.b16 %v5894
  %v6491 = vunpack.c.l.b16 %v5895
  %v6492 = vunpack.c.h.b16 %v5895
  %v6493 = vunpack.c.l.b16 %v5896
  %v6494 = vunpack.c.h.b16 %v5896
  %v6495 = vunpack.c.l.b16 %v5897
  %v6496 = vunpack.c.h.b16 %v5897
  %v6497 = vunpack.c.l.b16 %v5898
  %v6498 = vunpack.c.h.b16 %v5898
  %v6499 = vunpack.c.l.b16 %v5899
  %v6500 = vunpack.c.h.b16 %v5899
  %v6501 = vunpack.c.l.b16 %v5900
  %v6502 = vunpack.c.h.b16 %v5900
  %v6503 = vunpack.c.l.b16 %v5901
  %v6504 = vunpack.c.h.b16 %v5901
  %v6505 = vunpack.c.l.b16 %v5902
  %v6506 = vunpack.c.h.b16 %v5902
  %v6507 = vunpack.c.l.b16 %v5903
  %v6508 = vunpack.c.h.b16 %v5903
  %v6509 = vunpack.c.l.b16 %v5904
  %v6510 = vunpack.c.h.b16 %v5904
  %v6511 = vunpack.c.l.b16 %v5905
  %v6512 = vunpack.c.h.b16 %v5905
  %v6513 = vunpack.c.l.b16 %v5906
  %v6514 = vunpack.c.h.b16 %v5906
  %v6515 = vunpack.c.l.b16 %v5907
  %v6516 = vunpack.c.h.b16 %v5907
  %v6517 = vunpack.c.l.b16 %v5908
  %v6518 = vunpack.c.h.b16 %v5908
  %v6519 = vunpack.c.l.b16 %v5909
  %v6520 = vunpack.c.h.b16 %v5909
  %v6521 = vunpack.c.l.b16 %v5910
  %v6522 = vunpack.c.h.b16 %v5910
  %v6523 = vunpack.c.l.b16 %v5911
  %v6524 = vunpack.c.h.b16 %v5911
  %v6525 = vunpack.c.l.b16 %v5912
  %v6526 = vunpack.c.h.b16 %v5912
  %v6527 = vunpack.c.l.b16 %v5913
  %v6528 = vunpack.c.h.b16 %v5913
  %v6529 = vunpack.c.l.b16 %v5914
  %v6530 = vunpack.c.h.b16 %v5914
  %v6531 = vunpack.c.l.b16 %v5915
  %v6532 = vunpack.c.h.b16 %v5915
  %v6533 = vunpack.c.l.b16 %v5916
  %v6534 = vunpack.c.h.b16 %v5916
  %v6535 = vunpack.c.l.b16 %v5917
  %v6536 = vunpack.c.h.b16 %v5917
  %v6537 = vunpack.c.l.b16 %v5918
  %v6538 = vunpack.c.h.b16 %v5918
  %v6539 = vunpack.c.l.b16 %v5919
  %v6540 = vunpack.c.h.b16 %v5919
  %v6541 = vunpack.c.l.b16 %v5920
  %v6542 = vunpack.c.h.b16 %v5920
  %v6543 = vunpack.c.l.b16 %v5921
  %v6544 = vunpack.c.h.b16 %v5921
  %v6545 = vunpack.c.l.b16 %v5922
  %v6546 = vunpack.c.h.b16 %v5922
  %v6547 = vunpack.c.l.b16 %v5923
  %v6548 = vunpack.c.h.b16 %v5923
  %v6549 = vpack.c.b16 %v6455, %v6453
  %v6550 = vpack.c.b16 %v6456, %v6454
  %v6551 = vpack.c.b16 %v6459, %v6457
  %v6552 = vpack.c.b16 %v6460, %v6458
  %v6553 = vpack.c.b16 %v6463, %v6461
  %v6554 = vpack.c.b16 %v6464, %v6462
  %v6555 = vpack.c.b16 %v6467, %v6465
  %v6556 = vpack.c.b16 %v6468, %v6466
  %v6557 = vpack.c.b16 %v6471, %v6469
  %v6558 = vpack.c.b16 %v6472, %v6470
  %v6559 = vpack.c.b16 %v6475, %v6473
  %v6560 = vpack.c.b16 %v6476, %v6474
  %v6561 = vpack.c.b16 %v6479, %v6477
  %v6562 = vpack.c.b16 %v6480, %v6478
  %v6563 = vpack.c.b16 %v6483, %v6481
  %v6564 = vpack.c.b16 %v6484, %v6482
  %v6565 = vpack.c.b16 %v6487, %v6485
  %v6566 = vpack.c.b16 %v6488, %v6486
  %v6567 = vpack.c.b16 %v6491, %v6489
  %v6568 = vpack.c.b16 %v6492, %v6490
  %v6569 = vpack.c.b16 %v6495, %v6493
  %v6570 = vpack.c.b16 %v6496, %v6494
  %v6571 = vpack.c.b16 %v6499, %v6497
  %v6572 = vpack.c.b16 %v6500, %v6498
  %v6573 = vpack.c.b16 %v6503, %v6501
  %v6574 = vpack.c.b16 %v6504, %v6502
  %v6575 = vpack.c.b16 %v6507, %v6505
  %v6576 = vpack.c.b16 %v6508, %v6506
  %v6577 = vpack.c.b16 %v6511, %v6509
  %v6578 = vpack.c.b16 %v6512, %v6510
  %v6579 = vpack.c.b16 %v6515, %v6513
  %v6580 = vpack.c.b16 %v6516, %v6514
  %v6581 = vpack.c.b16 %v6519, %v6517
  %v6582 = vpack.c.b16 %v6520, %v6518
  %v6583 = vpack.c.b16 %v6523, %v6521
  %v6584 = vpack.c.b16 %v6524, %v6522
  %v6585 = vpack.c.b16 %v6527, %v6525
  %v6586 = vpack.c.b16 %v6528, %v6526
  %v6587 = vpack.c.b16 %v6531, %v6529
  %v6588 = vpack.c.b16 %v6532, %v6530
  %v6589 = vpack.c.b16 %v6535, %v6533
  %v6590 = vpack.c.b16 %v6536, %v6534
  %v6591 = vpack.c.b16 %v6539, %v6537
  %v6592 = vpack.c.b16 %v6540, %v6538
  %v6593 = vpack.c.b16 %v6543, %v6541
  %v6594 = vpack.c.b16 %v6544, %v6542
  %v6595 = vpack.c.b16 %v6547, %v6545
  %v6596 = vpack.c.b16 %v6548, %v6546
  %6645 = vmatprep.subr.bf16.mxu0 %v6550
  %6646 = vmatpush1.bf16.msra.mxu0 %v6549
  %6647 = vmatprep.subr.bf16.mxu0 %v6552
  %6648 = vmatpush1.bf16.msra.mxu0 %v6551
  %6649 = vmatprep.subr.bf16.mxu0 %v6554
  %6650 = vmatpush1.bf16.msra.mxu0 %v6553
  %6651 = vmatprep.subr.bf16.mxu0 %v6556
  %6652 = vmatpush1.bf16.msra.mxu0 %v6555
  %6653 = vmatprep.subr.bf16.mxu0 %v6558
  %6654 = vmatpush1.bf16.msra.mxu0 %v6557
  %6655 = vmatprep.subr.bf16.mxu0 %v6560
  %6656 = vmatpush1.bf16.msra.mxu0 %v6559
  %6657 = vmatprep.subr.bf16.mxu0 %v6562
  %6658 = vmatpush1.bf16.msra.mxu0 %v6561
  %6659 = vmatprep.subr.bf16.mxu0 %v6564
  %6660 = vmatpush1.bf16.msra.mxu0 %v6563
  %6661 = vmatprep.subr.bf16.mxu0 %v6566
  %6662 = vmatpush1.bf16.msra.mxu0 %v6565
  %6663 = vmatprep.subr.bf16.mxu0 %v6568
  %6664 = vmatpush1.bf16.msra.mxu0 %v6567
  %6665 = vmatprep.subr.bf16.mxu0 %v6570
  %6666 = vmatpush1.bf16.msra.mxu0 %v6569
  %6667 = vmatprep.subr.bf16.mxu0 %v6572
  %6668 = vmatpush1.bf16.msra.mxu0 %v6571
  %6669 = vmatprep.subr.bf16.mxu0 %v6574
  %6670 = vmatpush1.bf16.msra.mxu0 %v6573
  %6671 = vmatprep.subr.bf16.mxu0 %v6576
  %6672 = vmatpush1.bf16.msra.mxu0 %v6575
  %6673 = vmatprep.subr.bf16.mxu0 %v6578
  %6674 = vmatpush1.bf16.msra.mxu0 %v6577
  %6675 = vmatprep.subr.bf16.mxu0 %v6580
  %6676 = vmatpush1.bf16.msra.mxu0 %v6579
  %6677 = vmatprep.mubr.bf16.mxu0 %v5859
  %6678 = vmatmul.mubr.bf16.gmra.mrb[0].mxu0 %v5858
  %v6679 = vpop.f32.mrb[0].mxu0
  %v6680 = vadd.f32 %v6347, %v6679
  %v6681 = vpop.f32.mrb[0].mxu0
  %v6682 = vadd.f32 %v6349, %v6681
  %v6683 = vpop.f32.mrb[0].mxu0
  %v6684 = vadd.f32 %v6351, %v6683
  %v6685 = vpop.f32.mrb[0].mxu0
  %v6686 = vadd.f32 %v6353, %v6685
  %6687 = vmatprep.mubr.bf16.mxu0 %v5862
  %6688 = vmatmul.mubr.bf16.gmra.mrb[0].mxu0 %v5861
  %v6689 = vpop.f32.mrb[0].mxu0
  %v6690 = vadd.f32 %v6357, %v6689
  %v6691 = vpop.f32.mrb[0].mxu0
  %v6692 = vadd.f32 %v6359, %v6691
  %v6693 = vpop.f32.mrb[0].mxu0
  %v6694 = vadd.f32 %v6361, %v6693
  %v6695 = vpop.f32.mrb[0].mxu0
  %v6696 = vadd.f32 %v6363, %v6695
  %6697 = vmatprep.mubr.bf16.mxu0 %v5865
  %6698 = vmatmul.mubr.bf16.gmra.mrb[0].mxu0 %v5864
  %v6699 = vpop.f32.mrb[0].mxu0
  %v6700 = vadd.f32 %v6367, %v6699
  %v6701 = vpop.f32.mrb[0].mxu0
  %v6702 = vadd.f32 %v6369, %v6701
  %v6703 = vpop.f32.mrb[0].mxu0
  %v6704 = vadd.f32 %v6371, %v6703
  %v6705 = vpop.f32.mrb[0].mxu0
  %v6706 = vadd.f32 %v6373, %v6705
  %6707 = vmatprep.mubr.bf16.mxu0 %v5868
  %6708 = vmatmul.mubr.bf16.gmra.mrb[0].mxu0 %v5867
  %v6709 = vpop.f32.mrb[0].mxu0
  %v6710 = vadd.f32 %v6377, %v6709
  %v6711 = vpop.f32.mrb[0].mxu0
  %v6712 = vadd.f32 %v6379, %v6711
  %v6713 = vpop.f32.mrb[0].mxu0
  %v6714 = vadd.f32 %v6381, %v6713
  %v6715 = vpop.f32.mrb[0].mxu0
  %v6716 = vadd.f32 %v6383, %v6715
  %6717 = vmatprep.mubr.bf16.mxu0 %v5871
  %6718 = vmatmul.mubr.bf16.gmra.mrb[0].mxu0 %v5870
  %v6719 = vpop.f32.mrb[0].mxu0
  %v6720 = vadd.f32 %v6387, %v6719
  %v6721 = vpop.f32.mrb[0].mxu0
  %v6722 = vadd.f32 %v6389, %v6721
  %v6723 = vpop.f32.mrb[0].mxu0
  %v6724 = vadd.f32 %v6391, %v6723
  %v6725 = vpop.f32.mrb[0].mxu0
  %v6726 = vadd.f32 %v6393, %v6725
  %6727 = vmatprep.mubr.bf16.mxu0 %v5874
  %6728 = vmatmul.mubr.bf16.gmra.mrb[0].mxu0 %v5873
  %v6729 = vpop.f32.mrb[0].mxu0
  %v6730 = vadd.f32 %v6397, %v6729
  %v6731 = vpop.f32.mrb[0].mxu0
  %v6732 = vadd.f32 %v6399, %v6731
  %v6733 = vpop.f32.mrb[0].mxu0
  %v6734 = vadd.f32 %v6401, %v6733
  %v6735 = vpop.f32.mrb[0].mxu0
  %v6736 = vadd.f32 %v6403, %v6735
  %6737 = vdwg.mxu0
  %6738 = vmatprep.subr.bf16.mxu0 %v6582
  %6739 = vmatpush1.bf16.msra.mxu0 %v6581
  %6740 = vmatprep.subr.bf16.mxu0 %v6584
  %6741 = vmatpush1.bf16.msra.mxu0 %v6583
  %6742 = vmatprep.subr.bf16.mxu0 %v6586
  %6743 = vmatpush1.bf16.msra.mxu0 %v6585
  %6744 = vmatprep.subr.bf16.mxu0 %v6588
  %6745 = vmatpush1.bf16.msra.mxu0 %v6587
  %6746 = vmatprep.subr.bf16.mxu0 %v6590
  %6747 = vmatpush1.bf16.msra.mxu0 %v6589
  %6748 = vmatprep.subr.bf16.mxu0 %v6592
  %6749 = vmatpush1.bf16.msra.mxu0 %v6591
  %6750 = vmatprep.subr.bf16.mxu0 %v6594
  %6751 = vmatpush1.bf16.msra.mxu0 %v6593
  %6752 = vmatprep.subr.bf16.mxu0 %v6596
  %6753 = vmatpush1.bf16.msra.mxu0 %v6595
  %6754 = vmatprep.subr.bf16.mxu0 0
  %6755 = vmatpush1.bf16.msra.mxu0 0
  %6756 = vmatprep.subr.bf16.mxu0 0
  %6757 = vmatpush1.bf16.msra.mxu0 0
  %6758 = vmatprep.subr.bf16.mxu0 0
  %6759 = vmatpush1.bf16.msra.mxu0 0
  %6760 = vmatprep.subr.bf16.mxu0 0
  %6761 = vmatpush1.bf16.msra.mxu0 0
  %6762 = vmatprep.subr.bf16.mxu0 0
  %6763 = vmatpush1.bf16.msra.mxu0 0
  %6764 = vmatprep.subr.bf16.mxu0 0
  %6765 = vmatpush1.bf16.msra.mxu0 0
  %6766 = vmatprep.subr.bf16.mxu0 0
  %6767 = vmatpush1.bf16.msra.mxu0 0
  %6768 = vmatprep.subr.bf16.mxu0 0
  %6769 = vmatpush1.bf16.msra.mxu0 0
  %6770 = vmatprep.mubr.bf16.mxu0 0
  %6771 = vmatmul.mubr.bf16.gmra.mrb[0].mxu0 %v5860
  %v6772 = vpop.f32.mrb[0].mxu0
  %v6773 = vadd.f32 %v6680, %v6772
  %v6774 = vpop.f32.mrb[0].mxu0
  %v6775 = vadd.f32 %v6682, %v6774
  %v6776 = vpop.f32.mrb[0].mxu0
  %v6777 = vadd.f32 %v6684, %v6776
  %v6778 = vpop.f32.mrb[0].mxu0
  %v6779 = vadd.f32 %v6686, %v6778
  %6780 = vmatprep.mubr.bf16.mxu0 0
  %6781 = vmatmul.mubr.bf16.gmra.mrb[0].mxu0 %v5863
  %v6782 = vpop.f32.mrb[0].mxu0
  %v6783 = vadd.f32 %v6690, %v6782
  %v6784 = vpop.f32.mrb[0].mxu0
  %v6785 = vadd.f32 %v6692, %v6784
  %v6786 = vpop.f32.mrb[0].mxu0
  %v6787 = vadd.f32 %v6694, %v6786
  %v6788 = vpop.f32.mrb[0].mxu0
  %v6789 = vadd.f32 %v6696, %v6788
  %6790 = vmatprep.mubr.bf16.mxu0 0
  %6791 = vmatmul.mubr.bf16.gmra.mrb[0].mxu0 %v5866
  %v6792 = vpop.f32.mrb[0].mxu0
  %v6793 = vadd.f32 %v6700, %v6792
  %v6794 = vpop.f32.mrb[0].mxu0
  %v6795 = vadd.f32 %v6702, %v6794
  %v6796 = vpop.f32.mrb[0].mxu0
  %v6797 = vadd.f32 %v6704, %v6796
  %v6798 = vpop.f32.mrb[0].mxu0
  %v6799 = vadd.f32 %v6706, %v6798
  %6800 = vmatprep.mubr.bf16.mxu0 0
  %6801 = vmatmul.mubr.bf16.gmra.mrb[0].mxu0 %v5869
  %v6802 = vpop.f32.mrb[0].mxu0
  %v6803 = vadd.f32 %v6710, %v6802
  %v6804 = vpop.f32.mrb[0].mxu0
  %v6805 = vadd.f32 %v6712, %v6804
  %v6806 = vpop.f32.mrb[0].mxu0
  %v6807 = vadd.f32 %v6714, %v6806
  %v6808 = vpop.f32.mrb[0].mxu0
  %v6809 = vadd.f32 %v6716, %v6808
  %6810 = vmatprep.mubr.bf16.mxu0 0
  %6811 = vmatmul.mubr.bf16.gmra.mrb[0].mxu0 %v5872
  %v6812 = vpop.f32.mrb[0].mxu0
  %v6813 = vadd.f32 %v6720, %v6812
  %v6814 = vpop.f32.mrb[0].mxu0
  %v6815 = vadd.f32 %v6722, %v6814
  %v6816 = vpop.f32.mrb[0].mxu0
  %v6817 = vadd.f32 %v6724, %v6816
  %v6818 = vpop.f32.mrb[0].mxu0
  %v6819 = vadd.f32 %v6726, %v6818
  %6820 = vmatprep.mubr.bf16.mxu0 0
  %6821 = vmatmul.mubr.bf16.gmra.mrb[0].mxu0 %v5875
  %v6822 = vpop.f32.mrb[0].mxu0
  %v6823 = vadd.f32 %v6730, %v6822
  %v6824 = vpop.f32.mrb[0].mxu0
  %v6825 = vadd.f32 %v6732, %v6824
  %v6826 = vpop.f32.mrb[0].mxu0
  %v6827 = vadd.f32 %v6734, %v6826
  %v6828 = vpop.f32.mrb[0].mxu0
  %v6829 = vadd.f32 %v6736, %v6828
  %6830 = vdwg.mxu0
  %v6831 = vld [vmem:[#allocation3 + $0x60] sm:$0xff]
  %v6832 = vld [vmem:[#allocation3 + $0x68] sm:$0xff]
  %v6833 = vld [vmem:[#allocation3 + $0x70] sm:$0xff]
  %v6834 = vld [vmem:[#allocation3 + $0x78] sm:$0xff]
  %v6835 = vld [vmem:[#allocation3 + $0x80] sm:$0xff]
  %v6836 = vld [vmem:[#allocation3 + $0x88] sm:$0xff]
  %v6837 = vld [vmem:[#allocation3 + $0x90] sm:$0xff]
  %v6838 = vld [vmem:[#allocation3 + $0x98] sm:$0xff]
  %v6839 = vld [vmem:[#allocation3 + $0xa0] sm:$0xff]
  %v6840 = vld [vmem:[#allocation3 + $0xa8] sm:$0xff]
  %v6841 = vld [vmem:[#allocation3 + $0xb0] sm:$0xff]
  %v6842 = vld [vmem:[#allocation3 + $0xb8] sm:$0xff]
  %v6843 = vld [vmem:[#allocation3 + $0xc0] sm:$0xff]
  %v6844 = vld [vmem:[#allocation3 + $0xc8] sm:$0xff]
  %v6845 = vld [vmem:[#allocation3 + $0xd0] sm:$0xff]
  %v6846 = vld [vmem:[#allocation3 + $0xd8] sm:$0xff]
  %v6847 = vld [vmem:[#allocation3 + $0xe0] sm:$0xff]
  %v6848 = vld [vmem:[#allocation3 + $0xe8] sm:$0xff]
  %s6849 = scalar_lea.vmem %s3, 768
  %v6850 = vld [vmem:[%s6849] sm:$0xff]
  %v6851 = vld [vmem:[%s6849 + $0x8] sm:$0xff]
  %v6852 = vld [vmem:[%s6849 + $0x10] sm:$0xff]
  %v6853 = vld [vmem:[%s6849 + $0x18] sm:$0xff]
  %v6854 = vld [vmem:[%s6849 + $0x20] sm:$0xff]
  %v6855 = vld [vmem:[%s6849 + $0x28] sm:$0xff]
  %v6856 = vld [vmem:[%s6849 + $0x30] sm:$0xff]
  %v6857 = vld [vmem:[%s6849 + $0x38] sm:$0xff]
  %v6858 = vld [vmem:[%s6849 + $0x40] sm:$0xff]
  %v6859 = vld [vmem:[%s6849 + $0x48] sm:$0xff]
  %v6860 = vld [vmem:[%s6849 + $0x50] sm:$0xff]
  %v6861 = vld [vmem:[%s6849 + $0x58] sm:$0xff]
  %v6862 = vld [vmem:[%s6849 + $0x60] sm:$0xff]
  %v6863 = vld [vmem:[%s6849 + $0x68] sm:$0xff]
  %v6864 = vld [vmem:[%s6849 + $0x70] sm:$0xff]
  %v6865 = vld [vmem:[%s6849 + $0x78] sm:$0xff]
  %v6866 = vld [vmem:[%s6849 + $0x80] sm:$0xff]
  %v6867 = vld [vmem:[%s6849 + $0x88] sm:$0xff]
  %v6868 = vld [vmem:[%s6849 + $0x90] sm:$0xff]
  %v6869 = vld [vmem:[%s6849 + $0x98] sm:$0xff]
  %v6870 = vld [vmem:[%s6849 + $0xa0] sm:$0xff]
  %v6871 = vld [vmem:[%s6849 + $0xa8] sm:$0xff]
  %v6872 = vld [vmem:[%s6849 + $0xb0] sm:$0xff]
  %v6873 = vld [vmem:[%s6849 + $0xb8] sm:$0xff]
  %v6874 = vld [vmem:[%s6849 + $0xc0] sm:$0xff]
  %v6875 = vld [vmem:[%s6849 + $0xc8] sm:$0xff]
  %v6876 = vld [vmem:[%s6849 + $0xd0] sm:$0xff]
  %v6877 = vld [vmem:[%s6849 + $0xd8] sm:$0xff]
  %v6878 = vld [vmem:[%s6849 + $0xe0] sm:$0xff]
  %v6879 = vld [vmem:[%s6849 + $0xe8] sm:$0xff]
  %v6880 = vld [vmem:[%s6849 + $0xf0] sm:$0xff]
  %v6881 = vld [vmem:[%s6849 + $0xf8] sm:$0xff]
  %v6882 = vld [vmem:[%s6849 + $0x100] sm:$0xff]
  %v6883 = vld [vmem:[%s6849 + $0x108] sm:$0xff]
  %v6884 = vld [vmem:[%s6849 + $0x110] sm:$0xff]
  %v6885 = vld [vmem:[%s6849 + $0x118] sm:$0xff]
  %v6886 = vld [vmem:[%s6849 + $0x120] sm:$0xff]
  %v6887 = vld [vmem:[%s6849 + $0x128] sm:$0xff]
  %v6888 = vld [vmem:[%s6849 + $0x130] sm:$0xff]
  %v6889 = vld [vmem:[%s6849 + $0x138] sm:$0xff]
  %v6890 = vld [vmem:[%s6849 + $0x140] sm:$0xff]
  %v6891 = vld [vmem:[%s6849 + $0x148] sm:$0xff]
  %v6892 = vld [vmem:[%s6849 + $0x150] sm:$0xff]
  %v6893 = vld [vmem:[%s6849 + $0x158] sm:$0xff]
  %v6894 = vld [vmem:[%s6849 + $0x160] sm:$0xff]
  %v6895 = vld [vmem:[%s6849 + $0x168] sm:$0xff]
  %v6896 = vld [vmem:[%s6849 + $0x170] sm:$0xff]
  %v6897 = vld [vmem:[%s6849 + $0x178] sm:$0xff]
  %v6946 = vunpack.c.l.b16 %v6850
  %v6947 = vunpack.c.h.b16 %v6850
  %v6948 = vunpack.c.l.b16 %v6851
  %v6949 = vunpack.c.h.b16 %v6851
  %v6950 = vunpack.c.l.b16 %v6852
  %v6951 = vunpack.c.h.b16 %v6852
  %v6952 = vunpack.c.l.b16 %v6853
  %v6953 = vunpack.c.h.b16 %v6853
  %v6954 = vunpack.c.l.b16 %v6854
  %v6955 = vunpack.c.h.b16 %v6854
  %v6956 = vunpack.c.l.b16 %v6855
  %v6957 = vunpack.c.h.b16 %v6855
  %v6958 = vunpack.c.l.b16 %v6856
  %v6959 = vunpack.c.h.b16 %v6856
  %v6960 = vunpack.c.l.b16 %v6857
  %v6961 = vunpack.c.h.b16 %v6857
  %v6962 = vunpack.c.l.b16 %v6858
  %v6963 = vunpack.c.h.b16 %v6858
  %v6964 = vunpack.c.l.b16 %v6859
  %v6965 = vunpack.c.h.b16 %v6859
  %v6966 = vunpack.c.l.b16 %v6860
  %v6967 = vunpack.c.h.b16 %v6860
  %v6968 = vunpack.c.l.b16 %v6861
  %v6969 = vunpack.c.h.b16 %v6861
  %v6970 = vunpack.c.l.b16 %v6862
  %v6971 = vunpack.c.h.b16 %v6862
  %v6972 = vunpack.c.l.b16 %v6863
  %v6973 = vunpack.c.h.b16 %v6863
  %v6974 = vunpack.c.l.b16 %v6864
  %v6975 = vunpack.c.h.b16 %v6864
  %v6976 = vunpack.c.l.b16 %v6865
  %v6977 = vunpack.c.h.b16 %v6865
  %v6978 = vunpack.c.l.b16 %v6866
  %v6979 = vunpack.c.h.b16 %v6866
  %v6980 = vunpack.c.l.b16 %v6867
  %v6981 = vunpack.c.h.b16 %v6867
  %v6982 = vunpack.c.l.b16 %v6868
  %v6983 = vunpack.c.h.b16 %v6868
  %v6984 = vunpack.c.l.b16 %v6869
  %v6985 = vunpack.c.h.b16 %v6869
  %v6986 = vunpack.c.l.b16 %v6870
  %v6987 = vunpack.c.h.b16 %v6870
  %v6988 = vunpack.c.l.b16 %v6871
  %v6989 = vunpack.c.h.b16 %v6871
  %v6990 = vunpack.c.l.b16 %v6872
  %v6991 = vunpack.c.h.b16 %v6872
  %v6992 = vunpack.c.l.b16 %v6873
  %v6993 = vunpack.c.h.b16 %v6873
  %v6994 = vunpack.c.l.b16 %v6874
  %v6995 = vunpack.c.h.b16 %v6874
  %v6996 = vunpack.c.l.b16 %v6875
  %v6997 = vunpack.c.h.b16 %v6875
  %v6998 = vunpack.c.l.b16 %v6876
  %v6999 = vunpack.c.h.b16 %v6876
  %v7000 = vunpack.c.l.b16 %v6877
  %v7001 = vunpack.c.h.b16 %v6877
  %v7002 = vunpack.c.l.b16 %v6878
  %v7003 = vunpack.c.h.b16 %v6878
  %v7004 = vunpack.c.l.b16 %v6879
  %v7005 = vunpack.c.h.b16 %v6879
  %v7006 = vunpack.c.l.b16 %v6880
  %v7007 = vunpack.c.h.b16 %v6880
  %v7008 = vunpack.c.l.b16 %v6881
  %v7009 = vunpack.c.h.b16 %v6881
  %v7010 = vunpack.c.l.b16 %v6882
  %v7011 = vunpack.c.h.b16 %v6882
  %v7012 = vunpack.c.l.b16 %v6883
  %v7013 = vunpack.c.h.b16 %v6883
  %v7014 = vunpack.c.l.b16 %v6884
  %v7015 = vunpack.c.h.b16 %v6884
  %v7016 = vunpack.c.l.b16 %v6885
  %v7017 = vunpack.c.h.b16 %v6885
  %v7018 = vunpack.c.l.b16 %v6886
  %v7019 = vunpack.c.h.b16 %v6886
  %v7020 = vunpack.c.l.b16 %v6887
  %v7021 = vunpack.c.h.b16 %v6887
  %v7022 = vunpack.c.l.b16 %v6888
  %v7023 = vunpack.c.h.b16 %v6888
  %v7024 = vunpack.c.l.b16 %v6889
  %v7025 = vunpack.c.h.b16 %v6889
  %v7026 = vunpack.c.l.b16 %v6890
  %v7027 = vunpack.c.h.b16 %v6890
  %v7028 = vunpack.c.l.b16 %v6891
  %v7029 = vunpack.c.h.b16 %v6891
  %v7030 = vunpack.c.l.b16 %v6892
  %v7031 = vunpack.c.h.b16 %v6892
  %v7032 = vunpack.c.l.b16 %v6893
  %v7033 = vunpack.c.h.b16 %v6893
  %v7034 = vunpack.c.l.b16 %v6894
  %v7035 = vunpack.c.h.b16 %v6894
  %v7036 = vunpack.c.l.b16 %v6895
  %v7037 = vunpack.c.h.b16 %v6895
  %v7038 = vunpack.c.l.b16 %v6896
  %v7039 = vunpack.c.h.b16 %v6896
  %v7040 = vunpack.c.l.b16 %v6897
  %v7041 = vunpack.c.h.b16 %v6897
  %v7042 = vpack.c.b16 %v6948, %v6946
  %v7043 = vpack.c.b16 %v6949, %v6947
  %v7044 = vpack.c.b16 %v6952, %v6950
  %v7045 = vpack.c.b16 %v6953, %v6951
  %v7046 = vpack.c.b16 %v6956, %v6954
  %v7047 = vpack.c.b16 %v6957, %v6955
  %v7048 = vpack.c.b16 %v6960, %v6958
  %v7049 = vpack.c.b16 %v6961, %v6959
  %v7050 = vpack.c.b16 %v6964, %v6962
  %v7051 = vpack.c.b16 %v6965, %v6963
  %v7052 = vpack.c.b16 %v6968, %v6966
  %v7053 = vpack.c.b16 %v6969, %v6967
  %v7054 = vpack.c.b16 %v6972, %v6970
  %v7055 = vpack.c.b16 %v6973, %v6971
  %v7056 = vpack.c.b16 %v6976, %v6974
  %v7057 = vpack.c.b16 %v6977, %v6975
  %v7058 = vpack.c.b16 %v6980, %v6978
  %v7059 = vpack.c.b16 %v6981, %v6979
  %v7060 = vpack.c.b16 %v6984, %v6982
  %v7061 = vpack.c.b16 %v6985, %v6983
  %v7062 = vpack.c.b16 %v6988, %v6986
  %v7063 = vpack.c.b16 %v6989, %v6987
  %v7064 = vpack.c.b16 %v6992, %v6990
  %v7065 = vpack.c.b16 %v6993, %v6991
  %v7066 = vpack.c.b16 %v6996, %v6994
  %v7067 = vpack.c.b16 %v6997, %v6995
  %v7068 = vpack.c.b16 %v7000, %v6998
  %v7069 = vpack.c.b16 %v7001, %v6999
  %v7070 = vpack.c.b16 %v7004, %v7002
  %v7071 = vpack.c.b16 %v7005, %v7003
  %v7072 = vpack.c.b16 %v7008, %v7006
  %v7073 = vpack.c.b16 %v7009, %v7007
  %v7074 = vpack.c.b16 %v7012, %v7010
  %v7075 = vpack.c.b16 %v7013, %v7011
  %v7076 = vpack.c.b16 %v7016, %v7014
  %v7077 = vpack.c.b16 %v7017, %v7015
  %v7078 = vpack.c.b16 %v7020, %v7018
  %v7079 = vpack.c.b16 %v7021, %v7019
  %v7080 = vpack.c.b16 %v7024, %v7022
  %v7081 = vpack.c.b16 %v7025, %v7023
  %v7082 = vpack.c.b16 %v7028, %v7026
  %v7083 = vpack.c.b16 %v7029, %v7027
  %v7084 = vpack.c.b16 %v7032, %v7030
  %v7085 = vpack.c.b16 %v7033, %v7031
  %v7086 = vpack.c.b16 %v7036, %v7034
  %v7087 = vpack.c.b16 %v7037, %v7035
  %v7088 = vpack.c.b16 %v7040, %v7038
  %v7089 = vpack.c.b16 %v7041, %v7039
  %7138 = vmatprep.subr.bf16.mxu0 %v7043
  %7139 = vmatpush1.bf16.msra.mxu0 %v7042
  %7140 = vmatprep.subr.bf16.mxu0 %v7045
  %7141 = vmatpush1.bf16.msra.mxu0 %v7044
  %7142 = vmatprep.subr.bf16.mxu0 %v7047
  %7143 = vmatpush1.bf16.msra.mxu0 %v7046
  %7144 = vmatprep.subr.bf16.mxu0 %v7049
  %7145 = vmatpush1.bf16.msra.mxu0 %v7048
  %7146 = vmatprep.subr.bf16.mxu0 %v7051
  %7147 = vmatpush1.bf16.msra.mxu0 %v7050
  %7148 = vmatprep.subr.bf16.mxu0 %v7053
  %7149 = vmatpush1.bf16.msra.mxu0 %v7052
  %7150 = vmatprep.subr.bf16.mxu0 %v7055
  %7151 = vmatpush1.bf16.msra.mxu0 %v7054
  %7152 = vmatprep.subr.bf16.mxu0 %v7057
  %7153 = vmatpush1.bf16.msra.mxu0 %v7056
  %7154 = vmatprep.subr.bf16.mxu0 %v7059
  %7155 = vmatpush1.bf16.msra.mxu0 %v7058
  %7156 = vmatprep.subr.bf16.mxu0 %v7061
  %7157 = vmatpush1.bf16.msra.mxu0 %v7060
  %7158 = vmatprep.subr.bf16.mxu0 %v7063
  %7159 = vmatpush1.bf16.msra.mxu0 %v7062
  %7160 = vmatprep.subr.bf16.mxu0 %v7065
  %7161 = vmatpush1.bf16.msra.mxu0 %v7064
  %7162 = vmatprep.subr.bf16.mxu0 %v7067
  %7163 = vmatpush1.bf16.msra.mxu0 %v7066
  %7164 = vmatprep.subr.bf16.mxu0 %v7069
  %7165 = vmatpush1.bf16.msra.mxu0 %v7068
  %7166 = vmatprep.subr.bf16.mxu0 %v7071
  %7167 = vmatpush1.bf16.msra.mxu0 %v7070
  %7168 = vmatprep.subr.bf16.mxu0 %v7073
  %7169 = vmatpush1.bf16.msra.mxu0 %v7072
  %7170 = vmatprep.mubr.bf16.mxu0 %v6832
  %7171 = vmatmul.mubr.bf16.gmra.mrb[0].mxu0 %v6831
  %v7172 = vpop.f32.mrb[0].mxu0
  %v7173 = vadd.f32 0.0, %v7172
  %v7174 = vpop.f32.mrb[0].mxu0
  %v7175 = vadd.f32 0.0, %v7174
  %v7176 = vpop.f32.mrb[0].mxu0
  %v7177 = vadd.f32 0.0, %v7176
  %v7178 = vpop.f32.mrb[0].mxu0
  %v7179 = vadd.f32 0.0, %v7178
  %7180 = vmatprep.mubr.bf16.mxu0 %v6835
  %7181 = vmatmul.mubr.bf16.gmra.mrb[0].mxu0 %v6834
  %v7182 = vpop.f32.mrb[0].mxu0
  %v7183 = vadd.f32 0.0, %v7182
  %v7184 = vpop.f32.mrb[0].mxu0
  %v7185 = vadd.f32 0.0, %v7184
  %v7186 = vpop.f32.mrb[0].mxu0
  %v7187 = vadd.f32 0.0, %v7186
  %v7188 = vpop.f32.mrb[0].mxu0
  %v7189 = vadd.f32 0.0, %v7188
  %7190 = vmatprep.mubr.bf16.mxu0 %v6838
  %7191 = vmatmul.mubr.bf16.gmra.mrb[0].mxu0 %v6837
  %v7192 = vpop.f32.mrb[0].mxu0
  %v7193 = vadd.f32 0.0, %v7192
  %v7194 = vpop.f32.mrb[0].mxu0
  %v7195 = vadd.f32 0.0, %v7194
  %v7196 = vpop.f32.mrb[0].mxu0
  %v7197 = vadd.f32 0.0, %v7196
  %v7198 = vpop.f32.mrb[0].mxu0
  %v7199 = vadd.f32 0.0, %v7198
  %7200 = vmatprep.mubr.bf16.mxu0 %v6841
  %7201 = vmatmul.mubr.bf16.gmra.mrb[0].mxu0 %v6840
  %v7202 = vpop.f32.mrb[0].mxu0
  %v7203 = vadd.f32 0.0, %v7202
  %v7204 = vpop.f32.mrb[0].mxu0
  %v7205 = vadd.f32 0.0, %v7204
  %v7206 = vpop.f32.mrb[0].mxu0
  %v7207 = vadd.f32 0.0, %v7206
  %v7208 = vpop.f32.mrb[0].mxu0
  %v7209 = vadd.f32 0.0, %v7208
  %7210 = vmatprep.mubr.bf16.mxu0 %v6844
  %7211 = vmatmul.mubr.bf16.gmra.mrb[0].mxu0 %v6843
  %v7212 = vpop.f32.mrb[0].mxu0
  %v7213 = vadd.f32 0.0, %v7212
  %v7214 = vpop.f32.mrb[0].mxu0
  %v7215 = vadd.f32 0.0, %v7214
  %v7216 = vpop.f32.mrb[0].mxu0
  %v7217 = vadd.f32 0.0, %v7216
  %v7218 = vpop.f32.mrb[0].mxu0
  %v7219 = vadd.f32 0.0, %v7218
  %7220 = vmatprep.mubr.bf16.mxu0 %v6847
  %7221 = vmatmul.mubr.bf16.gmra.mrb[0].mxu0 %v6846
  %v7222 = vpop.f32.mrb[0].mxu0
  %v7223 = vadd.f32 0.0, %v7222
  %v7224 = vpop.f32.mrb[0].mxu0
  %v7225 = vadd.f32 0.0, %v7224
  %v7226 = vpop.f32.mrb[0].mxu0
  %v7227 = vadd.f32 0.0, %v7226
  %v7228 = vpop.f32.mrb[0].mxu0
  %v7229 = vadd.f32 0.0, %v7228
  %7230 = vdwg.mxu0
  %7231 = vmatprep.subr.bf16.mxu0 %v7075
  %7232 = vmatpush1.bf16.msra.mxu0 %v7074
  %7233 = vmatprep.subr.bf16.mxu0 %v7077
  %7234 = vmatpush1.bf16.msra.mxu0 %v7076
  %7235 = vmatprep.subr.bf16.mxu0 %v7079
  %7236 = vmatpush1.bf16.msra.mxu0 %v7078
  %7237 = vmatprep.subr.bf16.mxu0 %v7081
  %7238 = vmatpush1.bf16.msra.mxu0 %v7080
  %7239 = vmatprep.subr.bf16.mxu0 %v7083
  %7240 = vmatpush1.bf16.msra.mxu0 %v7082
  %7241 = vmatprep.subr.bf16.mxu0 %v7085
  %7242 = vmatpush1.bf16.msra.mxu0 %v7084
  %7243 = vmatprep.subr.bf16.mxu0 %v7087
  %7244 = vmatpush1.bf16.msra.mxu0 %v7086
  %7245 = vmatprep.subr.bf16.mxu0 %v7089
  %7246 = vmatpush1.bf16.msra.mxu0 %v7088
  %7247 = vmatprep.subr.bf16.mxu0 0
  %7248 = vmatpush1.bf16.msra.mxu0 0
  %7249 = vmatprep.subr.bf16.mxu0 0
  %7250 = vmatpush1.bf16.msra.mxu0 0
  %7251 = vmatprep.subr.bf16.mxu0 0
  %7252 = vmatpush1.bf16.msra.mxu0 0
  %7253 = vmatprep.subr.bf16.mxu0 0
  %7254 = vmatpush1.bf16.msra.mxu0 0
  %7255 = vmatprep.subr.bf16.mxu0 0
  %7256 = vmatpush1.bf16.msra.mxu0 0
  %7257 = vmatprep.subr.bf16.mxu0 0
  %7258 = vmatpush1.bf16.msra.mxu0 0
  %7259 = vmatprep.subr.bf16.mxu0 0
  %7260 = vmatpush1.bf16.msra.mxu0 0
  %7261 = vmatprep.subr.bf16.mxu0 0
  %7262 = vmatpush1.bf16.msra.mxu0 0
  %7263 = vmatprep.mubr.bf16.mxu0 0
  %7264 = vmatmul.mubr.bf16.gmra.mrb[0].mxu0 %v6833
  %v7265 = vpop.f32.mrb[0].mxu0
  %v7266 = vadd.f32 %v7173, %v7265
  %v7267 = vpop.f32.mrb[0].mxu0
  %v7268 = vadd.f32 %v7175, %v7267
  %v7269 = vpop.f32.mrb[0].mxu0
  %v7270 = vadd.f32 %v7177, %v7269
  %v7271 = vpop.f32.mrb[0].mxu0
  %v7272 = vadd.f32 %v7179, %v7271
  %7273 = vmatprep.mubr.bf16.mxu0 0
  %7274 = vmatmul.mubr.bf16.gmra.mrb[0].mxu0 %v6836
  %v7275 = vpop.f32.mrb[0].mxu0
  %v7276 = vadd.f32 %v7183, %v7275
  %v7277 = vpop.f32.mrb[0].mxu0
  %v7278 = vadd.f32 %v7185, %v7277
  %v7279 = vpop.f32.mrb[0].mxu0
  %v7280 = vadd.f32 %v7187, %v7279
  %v7281 = vpop.f32.mrb[0].mxu0
  %v7282 = vadd.f32 %v7189, %v7281
  %7283 = vmatprep.mubr.bf16.mxu0 0
  %7284 = vmatmul.mubr.bf16.gmra.mrb[0].mxu0 %v6839
  %v7285 = vpop.f32.mrb[0].mxu0
  %v7286 = vadd.f32 %v7193, %v7285
  %v7287 = vpop.f32.mrb[0].mxu0
  %v7288 = vadd.f32 %v7195, %v7287
  %v7289 = vpop.f32.mrb[0].mxu0
  %v7290 = vadd.f32 %v7197, %v7289
  %v7291 = vpop.f32.mrb[0].mxu0
  %v7292 = vadd.f32 %v7199, %v7291
  %7293 = vmatprep.mubr.bf16.mxu0 0
  %7294 = vmatmul.mubr.bf16.gmra.mrb[0].mxu0 %v6842
  %v7295 = vpop.f32.mrb[0].mxu0
  %v7296 = vadd.f32 %v7203, %v7295
  %v7297 = vpop.f32.mrb[0].mxu0
  %v7298 = vadd.f32 %v7205, %v7297
  %v7299 = vpop.f32.mrb[0].mxu0
  %v7300 = vadd.f32 %v7207, %v7299
  %v7301 = vpop.f32.mrb[0].mxu0
  %v7302 = vadd.f32 %v7209, %v7301
  %7303 = vmatprep.mubr.bf16.mxu0 0
  %7304 = vmatmul.mubr.bf16.gmra.mrb[0].mxu0 %v6845
  %v7305 = vpop.f32.mrb[0].mxu0
  %v7306 = vadd.f32 %v7213, %v7305
  %v7307 = vpop.f32.mrb[0].mxu0
  %v7308 = vadd.f32 %v7215, %v7307
  %v7309 = vpop.f32.mrb[0].mxu0
  %v7310 = vadd.f32 %v7217, %v7309
  %v7311 = vpop.f32.mrb[0].mxu0
  %v7312 = vadd.f32 %v7219, %v7311
  %7313 = vmatprep.mubr.bf16.mxu0 0
  %7314 = vmatmul.mubr.bf16.gmra.mrb[0].mxu0 %v6848
  %v7315 = vpop.f32.mrb[0].mxu0
  %v7316 = vadd.f32 %v7223, %v7315
  %v7317 = vpop.f32.mrb[0].mxu0
  %v7318 = vadd.f32 %v7225, %v7317
  %v7319 = vpop.f32.mrb[0].mxu0
  %v7320 = vadd.f32 %v7227, %v7319
  %v7321 = vpop.f32.mrb[0].mxu0
  %v7322 = vadd.f32 %v7229, %v7321
  %7323 = vdwg.mxu0
  %v7324 = vadd.f32 %v6773, %v7266
  %v7325 = vadd.f32 %v6775, %v7268
  %v7326 = vadd.f32 %v6777, %v7270
  %v7327 = vadd.f32 %v6779, %v7272
  %v7328 = vadd.f32 %v6783, %v7276
  %v7329 = vadd.f32 %v6785, %v7278
  %v7330 = vadd.f32 %v6787, %v7280
  %v7331 = vadd.f32 %v6789, %v7282
  %v7332 = vadd.f32 %v6793, %v7286
  %v7333 = vadd.f32 %v6795, %v7288
  %v7334 = vadd.f32 %v6797, %v7290
  %v7335 = vadd.f32 %v6799, %v7292
  %v7336 = vadd.f32 %v6803, %v7296
  %v7337 = vadd.f32 %v6805, %v7298
  %v7338 = vadd.f32 %v6807, %v7300
  %v7339 = vadd.f32 %v6809, %v7302
  %v7340 = vadd.f32 %v6813, %v7306
  %v7341 = vadd.f32 %v6815, %v7308
  %v7342 = vadd.f32 %v6817, %v7310
  %v7343 = vadd.f32 %v6819, %v7312
  %v7344 = vadd.f32 %v6823, %v7316
  %v7345 = vadd.f32 %v6825, %v7318
  %v7346 = vadd.f32 %v6827, %v7320
  %v7347 = vadd.f32 %v6829, %v7322
  %v7348 = vmax.f32 %v7324, %v7332
  %v7349 = vmax.f32 %v7325, %v7333
  %v7350 = vmax.f32 %v7326, %v7334
  %v7351 = vmax.f32 %v7327, %v7335
  %v7352 = vmax.f32 %v7328, %v7336
  %v7353 = vmax.f32 %v7329, %v7337
  %v7354 = vmax.f32 %v7330, %v7338
  %v7355 = vmax.f32 %v7331, %v7339
  %v7356 = vmax.f32 %v7348, %v7340
  %v7357 = vmax.f32 %v7349, %v7341
  %v7358 = vmax.f32 %v7350, %v7342
  %v7359 = vmax.f32 %v7351, %v7343
  %v7360 = vmax.f32 %v7352, %v7344
  %v7361 = vmax.f32 %v7353, %v7345
  %v7362 = vmax.f32 %v7354, %v7346
  %v7363 = vmax.f32 %v7355, %v7347
  %s7364 = scalar_lea.vmem %s3, 1152
  %v7365 = vld [vmem:[%s7364] sm:$0xff]
  %v7366 = vld [vmem:[%s7364 + $0x8] sm:$0xff]
  %v7367 = vld [vmem:[%s7364 + $0x10] sm:$0xff]
  %v7368 = vld [vmem:[%s7364 + $0x18] sm:$0xff]
  %v7369 = vld [vmem:[%s7364 + $0x20] sm:$0xff]
  %v7370 = vld [vmem:[%s7364 + $0x28] sm:$0xff]
  %v7371 = vld [vmem:[%s7364 + $0x30] sm:$0xff]
  %v7372 = vld [vmem:[%s7364 + $0x38] sm:$0xff]
  %v7373 = vld [vmem:[%s7364 + $0x40] sm:$0xff]
  %v7374 = vld [vmem:[%s7364 + $0x48] sm:$0xff]
  %v7375 = vld [vmem:[%s7364 + $0x50] sm:$0xff]
  %v7376 = vld [vmem:[%s7364 + $0x58] sm:$0xff]
  %v7377 = vld [vmem:[%s7364 + $0x60] sm:$0xff]
  %v7378 = vld [vmem:[%s7364 + $0x68] sm:$0xff]
  %v7379 = vld [vmem:[%s7364 + $0x70] sm:$0xff]
  %v7380 = vld [vmem:[%s7364 + $0x78] sm:$0xff]
  %v7381 = vld [vmem:[%s7364 + $0x80] sm:$0xff]
  %v7382 = vld [vmem:[%s7364 + $0x88] sm:$0xff]
  %v7383 = vld [vmem:[%s7364 + $0x90] sm:$0xff]
  %v7384 = vld [vmem:[%s7364 + $0x98] sm:$0xff]
  %v7385 = vld [vmem:[%s7364 + $0xa0] sm:$0xff]
  %v7386 = vld [vmem:[%s7364 + $0xa8] sm:$0xff]
  %v7387 = vld [vmem:[%s7364 + $0xb0] sm:$0xff]
  %v7388 = vld [vmem:[%s7364 + $0xb8] sm:$0xff]
  %v7389 = vld [vmem:[%s7364 + $0xc0] sm:$0xff]
  %v7390 = vld [vmem:[%s7364 + $0xc8] sm:$0xff]
  %v7391 = vld [vmem:[%s7364 + $0xd0] sm:$0xff]
  %v7392 = vld [vmem:[%s7364 + $0xd8] sm:$0xff]
  %v7393 = vld [vmem:[%s7364 + $0xe0] sm:$0xff]
  %v7394 = vld [vmem:[%s7364 + $0xe8] sm:$0xff]
  %v7395 = vld [vmem:[%s7364 + $0xf0] sm:$0xff]
  %v7396 = vld [vmem:[%s7364 + $0xf8] sm:$0xff]
  %v7397 = vld [vmem:[%s7364 + $0x100] sm:$0xff]
  %v7398 = vld [vmem:[%s7364 + $0x108] sm:$0xff]
  %v7399 = vld [vmem:[%s7364 + $0x110] sm:$0xff]
  %v7400 = vld [vmem:[%s7364 + $0x118] sm:$0xff]
  %v7401 = vld [vmem:[%s7364 + $0x120] sm:$0xff]
  %v7402 = vld [vmem:[%s7364 + $0x128] sm:$0xff]
  %v7403 = vld [vmem:[%s7364 + $0x130] sm:$0xff]
  %v7404 = vld [vmem:[%s7364 + $0x138] sm:$0xff]
  %v7405 = vld [vmem:[%s7364 + $0x140] sm:$0xff]
  %v7406 = vld [vmem:[%s7364 + $0x148] sm:$0xff]
  %v7407 = vld [vmem:[%s7364 + $0x150] sm:$0xff]
  %v7408 = vld [vmem:[%s7364 + $0x158] sm:$0xff]
  %v7409 = vld [vmem:[%s7364 + $0x160] sm:$0xff]
  %v7410 = vld [vmem:[%s7364 + $0x168] sm:$0xff]
  %v7411 = vld [vmem:[%s7364 + $0x170] sm:$0xff]
  %v7412 = vld [vmem:[%s7364 + $0x178] sm:$0xff]
  %s7413 = scalar_lea.vmem %s3, 1536
  %v7414 = vld [vmem:[%s7413] sm:$0xff]
  %v7415 = vld [vmem:[%s7413 + $0x8] sm:$0xff]
  %v7416 = vld [vmem:[%s7413 + $0x10] sm:$0xff]
  %v7417 = vld [vmem:[%s7413 + $0x18] sm:$0xff]
  %v7418 = vld [vmem:[%s7413 + $0x20] sm:$0xff]
  %v7419 = vld [vmem:[%s7413 + $0x28] sm:$0xff]
  %v7420 = vld [vmem:[%s7413 + $0x30] sm:$0xff]
  %v7421 = vld [vmem:[%s7413 + $0x38] sm:$0xff]
  %v7422 = vld [vmem:[%s7413 + $0x40] sm:$0xff]
  %v7423 = vld [vmem:[%s7413 + $0x48] sm:$0xff]
  %v7424 = vld [vmem:[%s7413 + $0x50] sm:$0xff]
  %v7425 = vld [vmem:[%s7413 + $0x58] sm:$0xff]
  %v7426 = vld [vmem:[%s7413 + $0x60] sm:$0xff]
  %v7427 = vld [vmem:[%s7413 + $0x68] sm:$0xff]
  %v7428 = vld [vmem:[%s7413 + $0x70] sm:$0xff]
  %v7429 = vld [vmem:[%s7413 + $0x78] sm:$0xff]
  %v7430 = vld [vmem:[%s7413 + $0x80] sm:$0xff]
  %v7431 = vld [vmem:[%s7413 + $0x88] sm:$0xff]
  %v7432 = vld [vmem:[%s7413 + $0x90] sm:$0xff]
  %v7433 = vld [vmem:[%s7413 + $0x98] sm:$0xff]
  %v7434 = vld [vmem:[%s7413 + $0xa0] sm:$0xff]
  %v7435 = vld [vmem:[%s7413 + $0xa8] sm:$0xff]
  %v7436 = vld [vmem:[%s7413 + $0xb0] sm:$0xff]
  %v7437 = vld [vmem:[%s7413 + $0xb8] sm:$0xff]
  %v7438 = vld [vmem:[%s7413 + $0xc0] sm:$0xff]
  %v7439 = vld [vmem:[%s7413 + $0xc8] sm:$0xff]
  %v7440 = vld [vmem:[%s7413 + $0xd0] sm:$0xff]
  %v7441 = vld [vmem:[%s7413 + $0xd8] sm:$0xff]
  %v7442 = vld [vmem:[%s7413 + $0xe0] sm:$0xff]
  %v7443 = vld [vmem:[%s7413 + $0xe8] sm:$0xff]
  %v7444 = vld [vmem:[%s7413 + $0xf0] sm:$0xff]
  %v7445 = vld [vmem:[%s7413 + $0xf8] sm:$0xff]
  %v7446 = vld [vmem:[%s7413 + $0x100] sm:$0xff]
  %v7447 = vld [vmem:[%s7413 + $0x108] sm:$0xff]
  %v7448 = vld [vmem:[%s7413 + $0x110] sm:$0xff]
  %v7449 = vld [vmem:[%s7413 + $0x118] sm:$0xff]
  %v7450 = vld [vmem:[%s7413 + $0x120] sm:$0xff]
  %v7451 = vld [vmem:[%s7413 + $0x128] sm:$0xff]
  %v7452 = vld [vmem:[%s7413 + $0x130] sm:$0xff]
  %v7453 = vld [vmem:[%s7413 + $0x138] sm:$0xff]
  %v7454 = vld [vmem:[%s7413 + $0x140] sm:$0xff]
  %v7455 = vld [vmem:[%s7413 + $0x148] sm:$0xff]
  %v7456 = vld [vmem:[%s7413 + $0x150] sm:$0xff]
  %v7457 = vld [vmem:[%s7413 + $0x158] sm:$0xff]
  %v7458 = vld [vmem:[%s7413 + $0x160] sm:$0xff]
  %v7459 = vld [vmem:[%s7413 + $0x168] sm:$0xff]
  %v7460 = vld [vmem:[%s7413 + $0x170] sm:$0xff]
  %v7461 = vld [vmem:[%s7413 + $0x178] sm:$0xff]
  %v7510 = vunpack.c.l.b16 %v7414
  %v7511 = vunpack.c.h.b16 %v7414
  %v7512 = vunpack.c.l.b16 %v7415
  %v7513 = vunpack.c.h.b16 %v7415
  %v7514 = vunpack.c.l.b16 %v7416
  %v7515 = vunpack.c.h.b16 %v7416
  %v7516 = vunpack.c.l.b16 %v7417
  %v7517 = vunpack.c.h.b16 %v7417
  %v7518 = vunpack.c.l.b16 %v7418
  %v7519 = vunpack.c.h.b16 %v7418
  %v7520 = vunpack.c.l.b16 %v7419
  %v7521 = vunpack.c.h.b16 %v7419
  %v7522 = vunpack.c.l.b16 %v7420
  %v7523 = vunpack.c.h.b16 %v7420
  %v7524 = vunpack.c.l.b16 %v7421
  %v7525 = vunpack.c.h.b16 %v7421
  %v7526 = vunpack.c.l.b16 %v7422
  %v7527 = vunpack.c.h.b16 %v7422
  %v7528 = vunpack.c.l.b16 %v7423
  %v7529 = vunpack.c.h.b16 %v7423
  %v7530 = vunpack.c.l.b16 %v7424
  %v7531 = vunpack.c.h.b16 %v7424
  %v7532 = vunpack.c.l.b16 %v7425
  %v7533 = vunpack.c.h.b16 %v7425
  %v7534 = vunpack.c.l.b16 %v7426
  %v7535 = vunpack.c.h.b16 %v7426
  %v7536 = vunpack.c.l.b16 %v7427
  %v7537 = vunpack.c.h.b16 %v7427
  %v7538 = vunpack.c.l.b16 %v7428
  %v7539 = vunpack.c.h.b16 %v7428
  %v7540 = vunpack.c.l.b16 %v7429
  %v7541 = vunpack.c.h.b16 %v7429
  %v7542 = vunpack.c.l.b16 %v7430
  %v7543 = vunpack.c.h.b16 %v7430
  %v7544 = vunpack.c.l.b16 %v7431
  %v7545 = vunpack.c.h.b16 %v7431
  %v7546 = vunpack.c.l.b16 %v7432
  %v7547 = vunpack.c.h.b16 %v7432
  %v7548 = vunpack.c.l.b16 %v7433
  %v7549 = vunpack.c.h.b16 %v7433
  %v7550 = vunpack.c.l.b16 %v7434
  %v7551 = vunpack.c.h.b16 %v7434
  %v7552 = vunpack.c.l.b16 %v7435
  %v7553 = vunpack.c.h.b16 %v7435
  %v7554 = vunpack.c.l.b16 %v7436
  %v7555 = vunpack.c.h.b16 %v7436
  %v7556 = vunpack.c.l.b16 %v7437
  %v7557 = vunpack.c.h.b16 %v7437
  %v7558 = vunpack.c.l.b16 %v7438
  %v7559 = vunpack.c.h.b16 %v7438
  %v7560 = vunpack.c.l.b16 %v7439
  %v7561 = vunpack.c.h.b16 %v7439
  %v7562 = vunpack.c.l.b16 %v7440
  %v7563 = vunpack.c.h.b16 %v7440
  %v7564 = vunpack.c.l.b16 %v7441
  %v7565 = vunpack.c.h.b16 %v7441
  %v7566 = vunpack.c.l.b16 %v7442
  %v7567 = vunpack.c.h.b16 %v7442
  %v7568 = vunpack.c.l.b16 %v7443
  %v7569 = vunpack.c.h.b16 %v7443
  %v7570 = vunpack.c.l.b16 %v7444
  %v7571 = vunpack.c.h.b16 %v7444
  %v7572 = vunpack.c.l.b16 %v7445
  %v7573 = vunpack.c.h.b16 %v7445
  %v7574 = vunpack.c.l.b16 %v7446
  %v7575 = vunpack.c.h.b16 %v7446
  %v7576 = vunpack.c.l.b16 %v7447
  %v7577 = vunpack.c.h.b16 %v7447
  %v7578 = vunpack.c.l.b16 %v7448
  %v7579 = vunpack.c.h.b16 %v7448
  %v7580 = vunpack.c.l.b16 %v7449
  %v7581 = vunpack.c.h.b16 %v7449
  %v7582 = vunpack.c.l.b16 %v7450
  %v7583 = vunpack.c.h.b16 %v7450
  %v7584 = vunpack.c.l.b16 %v7451
  %v7585 = vunpack.c.h.b16 %v7451
  %v7586 = vunpack.c.l.b16 %v7452
  %v7587 = vunpack.c.h.b16 %v7452
  %v7588 = vunpack.c.l.b16 %v7453
  %v7589 = vunpack.c.h.b16 %v7453
  %v7590 = vunpack.c.l.b16 %v7454
  %v7591 = vunpack.c.h.b16 %v7454
  %v7592 = vunpack.c.l.b16 %v7455
  %v7593 = vunpack.c.h.b16 %v7455
  %v7594 = vunpack.c.l.b16 %v7456
  %v7595 = vunpack.c.h.b16 %v7456
  %v7596 = vunpack.c.l.b16 %v7457
  %v7597 = vunpack.c.h.b16 %v7457
  %v7598 = vunpack.c.l.b16 %v7458
  %v7599 = vunpack.c.h.b16 %v7458
  %v7600 = vunpack.c.l.b16 %v7459
  %v7601 = vunpack.c.h.b16 %v7459
  %v7602 = vunpack.c.l.b16 %v7460
  %v7603 = vunpack.c.h.b16 %v7460
  %v7604 = vunpack.c.l.b16 %v7461
  %v7605 = vunpack.c.h.b16 %v7461
  %v7606 = vpack.c.b16 %v7512, %v7510
  %v7607 = vpack.c.b16 %v7513, %v7511
  %v7608 = vpack.c.b16 %v7516, %v7514
  %v7609 = vpack.c.b16 %v7517, %v7515
  %v7610 = vpack.c.b16 %v7520, %v7518
  %v7611 = vpack.c.b16 %v7521, %v7519
  %v7612 = vpack.c.b16 %v7524, %v7522
  %v7613 = vpack.c.b16 %v7525, %v7523
  %v7614 = vpack.c.b16 %v7528, %v7526
  %v7615 = vpack.c.b16 %v7529, %v7527
  %v7616 = vpack.c.b16 %v7532, %v7530
  %v7617 = vpack.c.b16 %v7533, %v7531
  %v7618 = vpack.c.b16 %v7536, %v7534
  %v7619 = vpack.c.b16 %v7537, %v7535
  %v7620 = vpack.c.b16 %v7540, %v7538
  %v7621 = vpack.c.b16 %v7541, %v7539
  %v7622 = vpack.c.b16 %v7544, %v7542
  %v7623 = vpack.c.b16 %v7545, %v7543
  %v7624 = vpack.c.b16 %v7548, %v7546
  %v7625 = vpack.c.b16 %v7549, %v7547
  %v7626 = vpack.c.b16 %v7552, %v7550
  %v7627 = vpack.c.b16 %v7553, %v7551
  %v7628 = vpack.c.b16 %v7556, %v7554
  %v7629 = vpack.c.b16 %v7557, %v7555
  %v7630 = vpack.c.b16 %v7560, %v7558
  %v7631 = vpack.c.b16 %v7561, %v7559
  %v7632 = vpack.c.b16 %v7564, %v7562
  %v7633 = vpack.c.b16 %v7565, %v7563
  %v7634 = vpack.c.b16 %v7568, %v7566
  %v7635 = vpack.c.b16 %v7569, %v7567
  %v7636 = vpack.c.b16 %v7572, %v7570
  %v7637 = vpack.c.b16 %v7573, %v7571
  %v7638 = vpack.c.b16 %v7576, %v7574
  %v7639 = vpack.c.b16 %v7577, %v7575
  %v7640 = vpack.c.b16 %v7580, %v7578
  %v7641 = vpack.c.b16 %v7581, %v7579
  %v7642 = vpack.c.b16 %v7584, %v7582
  %v7643 = vpack.c.b16 %v7585, %v7583
  %v7644 = vpack.c.b16 %v7588, %v7586
  %v7645 = vpack.c.b16 %v7589, %v7587
  %v7646 = vpack.c.b16 %v7592, %v7590
  %v7647 = vpack.c.b16 %v7593, %v7591
  %v7648 = vpack.c.b16 %v7596, %v7594
  %v7649 = vpack.c.b16 %v7597, %v7595
  %v7650 = vpack.c.b16 %v7600, %v7598
  %v7651 = vpack.c.b16 %v7601, %v7599
  %v7652 = vpack.c.b16 %v7604, %v7602
  %v7653 = vpack.c.b16 %v7605, %v7603
  %7702 = vmatprep.subr.bf16.mxu0 %v7607
  %7703 = vmatpush1.bf16.msra.mxu0 %v7606
  %7704 = vmatprep.subr.bf16.mxu0 %v7609
  %7705 = vmatpush1.bf16.msra.mxu0 %v7608
  %7706 = vmatprep.subr.bf16.mxu0 %v7611
  %7707 = vmatpush1.bf16.msra.mxu0 %v7610
  %7708 = vmatprep.subr.bf16.mxu0 %v7613
  %7709 = vmatpush1.bf16.msra.mxu0 %v7612
  %7710 = vmatprep.subr.bf16.mxu0 %v7615
  %7711 = vmatpush1.bf16.msra.mxu0 %v7614
  %7712 = vmatprep.subr.bf16.mxu0 %v7617
  %7713 = vmatpush1.bf16.msra.mxu0 %v7616
  %7714 = vmatprep.subr.bf16.mxu0 %v7619
  %7715 = vmatpush1.bf16.msra.mxu0 %v7618
  %7716 = vmatprep.subr.bf16.mxu0 %v7621
  %7717 = vmatpush1.bf16.msra.mxu0 %v7620
  %7718 = vmatprep.subr.bf16.mxu0 %v7623
  %7719 = vmatpush1.bf16.msra.mxu0 %v7622
  %7720 = vmatprep.subr.bf16.mxu0 %v7625
  %7721 = vmatpush1.bf16.msra.mxu0 %v7624
  %7722 = vmatprep.subr.bf16.mxu0 %v7627
  %7723 = vmatpush1.bf16.msra.mxu0 %v7626
  %7724 = vmatprep.subr.bf16.mxu0 %v7629
  %7725 = vmatpush1.bf16.msra.mxu0 %v7628
  %7726 = vmatprep.subr.bf16.mxu0 %v7631
  %7727 = vmatpush1.bf16.msra.mxu0 %v7630
  %7728 = vmatprep.subr.bf16.mxu0 %v7633
  %7729 = vmatpush1.bf16.msra.mxu0 %v7632
  %7730 = vmatprep.subr.bf16.mxu0 %v7635
  %7731 = vmatpush1.bf16.msra.mxu0 %v7634
  %7732 = vmatprep.subr.bf16.mxu0 %v7637
  %7733 = vmatpush1.bf16.msra.mxu0 %v7636
  %7734 = vmatprep.mubr.bf16.mxu0 %v5865
  %7735 = vmatmul.mubr.bf16.gmra.mrb[0].mxu0 %v5864
  %v7736 = vpop.f32.mrb[0].mxu0
  %v7737 = vadd.f32 0.0, %v7736
  %v7738 = vpop.f32.mrb[0].mxu0
  %v7739 = vadd.f32 0.0, %v7738
  %v7740 = vpop.f32.mrb[0].mxu0
  %v7741 = vadd.f32 0.0, %v7740
  %v7742 = vpop.f32.mrb[0].mxu0
  %v7743 = vadd.f32 0.0, %v7742
  %7744 = vmatprep.mubr.bf16.mxu0 %v5868
  %7745 = vmatmul.mubr.bf16.gmra.mrb[0].mxu0 %v5867
  %v7746 = vpop.f32.mrb[0].mxu0
  %v7747 = vadd.f32 0.0, %v7746
  %v7748 = vpop.f32.mrb[0].mxu0
  %v7749 = vadd.f32 0.0, %v7748
  %v7750 = vpop.f32.mrb[0].mxu0
  %v7751 = vadd.f32 0.0, %v7750
  %v7752 = vpop.f32.mrb[0].mxu0
  %v7753 = vadd.f32 0.0, %v7752
  %7754 = vmatprep.mubr.bf16.mxu0 %v5871
  %7755 = vmatmul.mubr.bf16.gmra.mrb[0].mxu0 %v5870
  %v7756 = vpop.f32.mrb[0].mxu0
  %v7757 = vadd.f32 0.0, %v7756
  %v7758 = vpop.f32.mrb[0].mxu0
  %v7759 = vadd.f32 0.0, %v7758
  %v7760 = vpop.f32.mrb[0].mxu0
  %v7761 = vadd.f32 0.0, %v7760
  %v7762 = vpop.f32.mrb[0].mxu0
  %v7763 = vadd.f32 0.0, %v7762
  %7764 = vmatprep.mubr.bf16.mxu0 %v5874
  %7765 = vmatmul.mubr.bf16.gmra.mrb[0].mxu0 %v5873
  %v7766 = vpop.f32.mrb[0].mxu0
  %v7767 = vadd.f32 0.0, %v7766
  %v7768 = vpop.f32.mrb[0].mxu0
  %v7769 = vadd.f32 0.0, %v7768
  %v7770 = vpop.f32.mrb[0].mxu0
  %v7771 = vadd.f32 0.0, %v7770
  %v7772 = vpop.f32.mrb[0].mxu0
  %v7773 = vadd.f32 0.0, %v7772
  %7774 = vmatprep.mubr.bf16.mxu0 %v5925
  %7775 = vmatmul.mubr.bf16.gmra.mrb[0].mxu0 %v5924
  %v7776 = vpop.f32.mrb[0].mxu0
  %v7777 = vadd.f32 0.0, %v7776
  %v7778 = vpop.f32.mrb[0].mxu0
  %v7779 = vadd.f32 0.0, %v7778
  %v7780 = vpop.f32.mrb[0].mxu0
  %v7781 = vadd.f32 0.0, %v7780
  %v7782 = vpop.f32.mrb[0].mxu0
  %v7783 = vadd.f32 0.0, %v7782
  %7784 = vmatprep.mubr.bf16.mxu0 %v5928
  %7785 = vmatmul.mubr.bf16.gmra.mrb[0].mxu0 %v5927
  %v7786 = vpop.f32.mrb[0].mxu0
  %v7787 = vadd.f32 0.0, %v7786
  %v7788 = vpop.f32.mrb[0].mxu0
  %v7789 = vadd.f32 0.0, %v7788
  %v7790 = vpop.f32.mrb[0].mxu0
  %v7791 = vadd.f32 0.0, %v7790
  %v7792 = vpop.f32.mrb[0].mxu0
  %v7793 = vadd.f32 0.0, %v7792
  %7794 = vdwg.mxu0
  %7795 = vmatprep.subr.bf16.mxu0 %v7639
  %7796 = vmatpush1.bf16.msra.mxu0 %v7638
  %7797 = vmatprep.subr.bf16.mxu0 %v7641
  %7798 = vmatpush1.bf16.msra.mxu0 %v7640
  %7799 = vmatprep.subr.bf16.mxu0 %v7643
  %7800 = vmatpush1.bf16.msra.mxu0 %v7642
  %7801 = vmatprep.subr.bf16.mxu0 %v7645
  %7802 = vmatpush1.bf16.msra.mxu0 %v7644
  %7803 = vmatprep.subr.bf16.mxu0 %v7647
  %7804 = vmatpush1.bf16.msra.mxu0 %v7646
  %7805 = vmatprep.subr.bf16.mxu0 %v7649
  %7806 = vmatpush1.bf16.msra.mxu0 %v7648
  %7807 = vmatprep.subr.bf16.mxu0 %v7651
  %7808 = vmatpush1.bf16.msra.mxu0 %v7650
  %7809 = vmatprep.subr.bf16.mxu0 %v7653
  %7810 = vmatpush1.bf16.msra.mxu0 %v7652
  %7811 = vmatprep.subr.bf16.mxu0 0
  %7812 = vmatpush1.bf16.msra.mxu0 0
  %7813 = vmatprep.subr.bf16.mxu0 0
  %7814 = vmatpush1.bf16.msra.mxu0 0
  %7815 = vmatprep.subr.bf16.mxu0 0
  %7816 = vmatpush1.bf16.msra.mxu0 0
  %7817 = vmatprep.subr.bf16.mxu0 0
  %7818 = vmatpush1.bf16.msra.mxu0 0
  %7819 = vmatprep.subr.bf16.mxu0 0
  %7820 = vmatpush1.bf16.msra.mxu0 0
  %7821 = vmatprep.subr.bf16.mxu0 0
  %7822 = vmatpush1.bf16.msra.mxu0 0
  %7823 = vmatprep.subr.bf16.mxu0 0
  %7824 = vmatpush1.bf16.msra.mxu0 0
  %7825 = vmatprep.subr.bf16.mxu0 0
  %7826 = vmatpush1.bf16.msra.mxu0 0
  %7827 = vmatprep.mubr.bf16.mxu0 0
  %7828 = vmatmul.mubr.bf16.gmra.mrb[0].mxu0 %v5866
  %v7829 = vpop.f32.mrb[0].mxu0
  %v7830 = vadd.f32 %v7737, %v7829
  %v7831 = vpop.f32.mrb[0].mxu0
  %v7832 = vadd.f32 %v7739, %v7831
  %v7833 = vpop.f32.mrb[0].mxu0
  %v7834 = vadd.f32 %v7741, %v7833
  %v7835 = vpop.f32.mrb[0].mxu0
  %v7836 = vadd.f32 %v7743, %v7835
  %7837 = vmatprep.mubr.bf16.mxu0 0
  %7838 = vmatmul.mubr.bf16.gmra.mrb[0].mxu0 %v5869
  %v7839 = vpop.f32.mrb[0].mxu0
  %v7840 = vadd.f32 %v7747, %v7839
  %v7841 = vpop.f32.mrb[0].mxu0
  %v7842 = vadd.f32 %v7749, %v7841
  %v7843 = vpop.f32.mrb[0].mxu0
  %v7844 = vadd.f32 %v7751, %v7843
  %v7845 = vpop.f32.mrb[0].mxu0
  %v7846 = vadd.f32 %v7753, %v7845
  %7847 = vmatprep.mubr.bf16.mxu0 0
  %7848 = vmatmul.mubr.bf16.gmra.mrb[0].mxu0 %v5872
  %v7849 = vpop.f32.mrb[0].mxu0
  %v7850 = vadd.f32 %v7757, %v7849
  %v7851 = vpop.f32.mrb[0].mxu0
  %v7852 = vadd.f32 %v7759, %v7851
  %v7853 = vpop.f32.mrb[0].mxu0
  %v7854 = vadd.f32 %v7761, %v7853
  %v7855 = vpop.f32.mrb[0].mxu0
  %v7856 = vadd.f32 %v7763, %v7855
  %7857 = vmatprep.mubr.bf16.mxu0 0
  %7858 = vmatmul.mubr.bf16.gmra.mrb[0].mxu0 %v5875
  %v7859 = vpop.f32.mrb[0].mxu0
  %v7860 = vadd.f32 %v7767, %v7859
  %v7861 = vpop.f32.mrb[0].mxu0
  %v7862 = vadd.f32 %v7769, %v7861
  %v7863 = vpop.f32.mrb[0].mxu0
  %v7864 = vadd.f32 %v7771, %v7863
  %v7865 = vpop.f32.mrb[0].mxu0
  %v7866 = vadd.f32 %v7773, %v7865
  %7867 = vmatprep.mubr.bf16.mxu0 0
  %7868 = vmatmul.mubr.bf16.gmra.mrb[0].mxu0 %v5926
  %v7869 = vpop.f32.mrb[0].mxu0
  %v7870 = vadd.f32 %v7777, %v7869
  %v7871 = vpop.f32.mrb[0].mxu0
  %v7872 = vadd.f32 %v7779, %v7871
  %v7873 = vpop.f32.mrb[0].mxu0
  %v7874 = vadd.f32 %v7781, %v7873
  %v7875 = vpop.f32.mrb[0].mxu0
  %v7876 = vadd.f32 %v7783, %v7875
  %7877 = vmatprep.mubr.bf16.mxu0 0
  %7878 = vmatmul.mubr.bf16.gmra.mrb[0].mxu0 %v5929
  %v7879 = vpop.f32.mrb[0].mxu0
  %v7880 = vadd.f32 %v7787, %v7879
  %v7881 = vpop.f32.mrb[0].mxu0
  %v7882 = vadd.f32 %v7789, %v7881
  %v7883 = vpop.f32.mrb[0].mxu0
  %v7884 = vadd.f32 %v7791, %v7883
  %v7885 = vpop.f32.mrb[0].mxu0
  %v7886 = vadd.f32 %v7793, %v7885
  %7887 = vdwg.mxu0
  %v7936 = vunpack.c.l.b16 %v7365
  %v7937 = vunpack.c.h.b16 %v7365
  %v7938 = vunpack.c.l.b16 %v7366
  %v7939 = vunpack.c.h.b16 %v7366
  %v7940 = vunpack.c.l.b16 %v7367
  %v7941 = vunpack.c.h.b16 %v7367
  %v7942 = vunpack.c.l.b16 %v7368
  %v7943 = vunpack.c.h.b16 %v7368
  %v7944 = vunpack.c.l.b16 %v7369
  %v7945 = vunpack.c.h.b16 %v7369
  %v7946 = vunpack.c.l.b16 %v7370
  %v7947 = vunpack.c.h.b16 %v7370
  %v7948 = vunpack.c.l.b16 %v7371
  %v7949 = vunpack.c.h.b16 %v7371
  %v7950 = vunpack.c.l.b16 %v7372
  %v7951 = vunpack.c.h.b16 %v7372
  %v7952 = vunpack.c.l.b16 %v7373
  %v7953 = vunpack.c.h.b16 %v7373
  %v7954 = vunpack.c.l.b16 %v7374
  %v7955 = vunpack.c.h.b16 %v7374
  %v7956 = vunpack.c.l.b16 %v7375
  %v7957 = vunpack.c.h.b16 %v7375
  %v7958 = vunpack.c.l.b16 %v7376
  %v7959 = vunpack.c.h.b16 %v7376
  %v7960 = vunpack.c.l.b16 %v7377
  %v7961 = vunpack.c.h.b16 %v7377
  %v7962 = vunpack.c.l.b16 %v7378
  %v7963 = vunpack.c.h.b16 %v7378
  %v7964 = vunpack.c.l.b16 %v7379
  %v7965 = vunpack.c.h.b16 %v7379
  %v7966 = vunpack.c.l.b16 %v7380
  %v7967 = vunpack.c.h.b16 %v7380
  %v7968 = vunpack.c.l.b16 %v7381
  %v7969 = vunpack.c.h.b16 %v7381
  %v7970 = vunpack.c.l.b16 %v7382
  %v7971 = vunpack.c.h.b16 %v7382
  %v7972 = vunpack.c.l.b16 %v7383
  %v7973 = vunpack.c.h.b16 %v7383
  %v7974 = vunpack.c.l.b16 %v7384
  %v7975 = vunpack.c.h.b16 %v7384
  %v7976 = vunpack.c.l.b16 %v7385
  %v7977 = vunpack.c.h.b16 %v7385
  %v7978 = vunpack.c.l.b16 %v7386
  %v7979 = vunpack.c.h.b16 %v7386
  %v7980 = vunpack.c.l.b16 %v7387
  %v7981 = vunpack.c.h.b16 %v7387
  %v7982 = vunpack.c.l.b16 %v7388
  %v7983 = vunpack.c.h.b16 %v7388
  %v7984 = vunpack.c.l.b16 %v7389
  %v7985 = vunpack.c.h.b16 %v7389
  %v7986 = vunpack.c.l.b16 %v7390
  %v7987 = vunpack.c.h.b16 %v7390
  %v7988 = vunpack.c.l.b16 %v7391
  %v7989 = vunpack.c.h.b16 %v7391
  %v7990 = vunpack.c.l.b16 %v7392
  %v7991 = vunpack.c.h.b16 %v7392
  %v7992 = vunpack.c.l.b16 %v7393
  %v7993 = vunpack.c.h.b16 %v7393
  %v7994 = vunpack.c.l.b16 %v7394
  %v7995 = vunpack.c.h.b16 %v7394
  %v7996 = vunpack.c.l.b16 %v7395
  %v7997 = vunpack.c.h.b16 %v7395
  %v7998 = vunpack.c.l.b16 %v7396
  %v7999 = vunpack.c.h.b16 %v7396
  %v8000 = vunpack.c.l.b16 %v7397
  %v8001 = vunpack.c.h.b16 %v7397
  %v8002 = vunpack.c.l.b16 %v7398
  %v8003 = vunpack.c.h.b16 %v7398
  %v8004 = vunpack.c.l.b16 %v7399
  %v8005 = vunpack.c.h.b16 %v7399
  %v8006 = vunpack.c.l.b16 %v7400
  %v8007 = vunpack.c.h.b16 %v7400
  %v8008 = vunpack.c.l.b16 %v7401
  %v8009 = vunpack.c.h.b16 %v7401
  %v8010 = vunpack.c.l.b16 %v7402
  %v8011 = vunpack.c.h.b16 %v7402
  %v8012 = vunpack.c.l.b16 %v7403
  %v8013 = vunpack.c.h.b16 %v7403
  %v8014 = vunpack.c.l.b16 %v7404
  %v8015 = vunpack.c.h.b16 %v7404
  %v8016 = vunpack.c.l.b16 %v7405
  %v8017 = vunpack.c.h.b16 %v7405
  %v8018 = vunpack.c.l.b16 %v7406
  %v8019 = vunpack.c.h.b16 %v7406
  %v8020 = vunpack.c.l.b16 %v7407
  %v8021 = vunpack.c.h.b16 %v7407
  %v8022 = vunpack.c.l.b16 %v7408
  %v8023 = vunpack.c.h.b16 %v7408
  %v8024 = vunpack.c.l.b16 %v7409
  %v8025 = vunpack.c.h.b16 %v7409
  %v8026 = vunpack.c.l.b16 %v7410
  %v8027 = vunpack.c.h.b16 %v7410
  %v8028 = vunpack.c.l.b16 %v7411
  %v8029 = vunpack.c.h.b16 %v7411
  %v8030 = vunpack.c.l.b16 %v7412
  %v8031 = vunpack.c.h.b16 %v7412
  %v8032 = vpack.c.b16 %v7938, %v7936
  %v8033 = vpack.c.b16 %v7939, %v7937
  %v8034 = vpack.c.b16 %v7942, %v7940
  %v8035 = vpack.c.b16 %v7943, %v7941
  %v8036 = vpack.c.b16 %v7946, %v7944
  %v8037 = vpack.c.b16 %v7947, %v7945
  %v8038 = vpack.c.b16 %v7950, %v7948
  %v8039 = vpack.c.b16 %v7951, %v7949
  %v8040 = vpack.c.b16 %v7954, %v7952
  %v8041 = vpack.c.b16 %v7955, %v7953
  %v8042 = vpack.c.b16 %v7958, %v7956
  %v8043 = vpack.c.b16 %v7959, %v7957
  %v8044 = vpack.c.b16 %v7962, %v7960
  %v8045 = vpack.c.b16 %v7963, %v7961
  %v8046 = vpack.c.b16 %v7966, %v7964
  %v8047 = vpack.c.b16 %v7967, %v7965
  %v8048 = vpack.c.b16 %v7970, %v7968
  %v8049 = vpack.c.b16 %v7971, %v7969
  %v8050 = vpack.c.b16 %v7974, %v7972
  %v8051 = vpack.c.b16 %v7975, %v7973
  %v8052 = vpack.c.b16 %v7978, %v7976
  %v8053 = vpack.c.b16 %v7979, %v7977
  %v8054 = vpack.c.b16 %v7982, %v7980
  %v8055 = vpack.c.b16 %v7983, %v7981
  %v8056 = vpack.c.b16 %v7986, %v7984
  %v8057 = vpack.c.b16 %v7987, %v7985
  %v8058 = vpack.c.b16 %v7990, %v7988
  %v8059 = vpack.c.b16 %v7991, %v7989
  %v8060 = vpack.c.b16 %v7994, %v7992
  %v8061 = vpack.c.b16 %v7995, %v7993
  %v8062 = vpack.c.b16 %v7998, %v7996
  %v8063 = vpack.c.b16 %v7999, %v7997
  %v8064 = vpack.c.b16 %v8002, %v8000
  %v8065 = vpack.c.b16 %v8003, %v8001
  %v8066 = vpack.c.b16 %v8006, %v8004
  %v8067 = vpack.c.b16 %v8007, %v8005
  %v8068 = vpack.c.b16 %v8010, %v8008
  %v8069 = vpack.c.b16 %v8011, %v8009
  %v8070 = vpack.c.b16 %v8014, %v8012
  %v8071 = vpack.c.b16 %v8015, %v8013
  %v8072 = vpack.c.b16 %v8018, %v8016
  %v8073 = vpack.c.b16 %v8019, %v8017
  %v8074 = vpack.c.b16 %v8022, %v8020
  %v8075 = vpack.c.b16 %v8023, %v8021
  %v8076 = vpack.c.b16 %v8026, %v8024
  %v8077 = vpack.c.b16 %v8027, %v8025
  %v8078 = vpack.c.b16 %v8030, %v8028
  %v8079 = vpack.c.b16 %v8031, %v8029
  %8128 = vmatprep.subr.bf16.mxu0 %v8033
  %8129 = vmatpush1.bf16.msra.mxu0 %v8032
  %8130 = vmatprep.subr.bf16.mxu0 %v8035
  %8131 = vmatpush1.bf16.msra.mxu0 %v8034
  %8132 = vmatprep.subr.bf16.mxu0 %v8037
  %8133 = vmatpush1.bf16.msra.mxu0 %v8036
  %8134 = vmatprep.subr.bf16.mxu0 %v8039
  %8135 = vmatpush1.bf16.msra.mxu0 %v8038
  %8136 = vmatprep.subr.bf16.mxu0 %v8041
  %8137 = vmatpush1.bf16.msra.mxu0 %v8040
  %8138 = vmatprep.subr.bf16.mxu0 %v8043
  %8139 = vmatpush1.bf16.msra.mxu0 %v8042
  %8140 = vmatprep.subr.bf16.mxu0 %v8045
  %8141 = vmatpush1.bf16.msra.mxu0 %v8044
  %8142 = vmatprep.subr.bf16.mxu0 %v8047
  %8143 = vmatpush1.bf16.msra.mxu0 %v8046
  %8144 = vmatprep.subr.bf16.mxu0 %v8049
  %8145 = vmatpush1.bf16.msra.mxu0 %v8048
  %8146 = vmatprep.subr.bf16.mxu0 %v8051
  %8147 = vmatpush1.bf16.msra.mxu0 %v8050
  %8148 = vmatprep.subr.bf16.mxu0 %v8053
  %8149 = vmatpush1.bf16.msra.mxu0 %v8052
  %8150 = vmatprep.subr.bf16.mxu0 %v8055
  %8151 = vmatpush1.bf16.msra.mxu0 %v8054
  %8152 = vmatprep.subr.bf16.mxu0 %v8057
  %8153 = vmatpush1.bf16.msra.mxu0 %v8056
  %8154 = vmatprep.subr.bf16.mxu0 %v8059
  %8155 = vmatpush1.bf16.msra.mxu0 %v8058
  %8156 = vmatprep.subr.bf16.mxu0 %v8061
  %8157 = vmatpush1.bf16.msra.mxu0 %v8060
  %8158 = vmatprep.subr.bf16.mxu0 %v8063
  %8159 = vmatpush1.bf16.msra.mxu0 %v8062
  %8160 = vmatprep.mubr.bf16.mxu0 %v5859
  %8161 = vmatmul.mubr.bf16.gmra.mrb[0].mxu0 %v5858
  %v8162 = vpop.f32.mrb[0].mxu0
  %v8163 = vadd.f32 %v7830, %v8162
  %v8164 = vpop.f32.mrb[0].mxu0
  %v8165 = vadd.f32 %v7832, %v8164
  %v8166 = vpop.f32.mrb[0].mxu0
  %v8167 = vadd.f32 %v7834, %v8166
  %v8168 = vpop.f32.mrb[0].mxu0
  %v8169 = vadd.f32 %v7836, %v8168
  %8170 = vmatprep.mubr.bf16.mxu0 %v5862
  %8171 = vmatmul.mubr.bf16.gmra.mrb[0].mxu0 %v5861
  %v8172 = vpop.f32.mrb[0].mxu0
  %v8173 = vadd.f32 %v7840, %v8172
  %v8174 = vpop.f32.mrb[0].mxu0
  %v8175 = vadd.f32 %v7842, %v8174
  %v8176 = vpop.f32.mrb[0].mxu0
  %v8177 = vadd.f32 %v7844, %v8176
  %v8178 = vpop.f32.mrb[0].mxu0
  %v8179 = vadd.f32 %v7846, %v8178
  %8180 = vmatprep.mubr.bf16.mxu0 %v5865
  %8181 = vmatmul.mubr.bf16.gmra.mrb[0].mxu0 %v5864
  %v8182 = vpop.f32.mrb[0].mxu0
  %v8183 = vadd.f32 %v7850, %v8182
  %v8184 = vpop.f32.mrb[0].mxu0
  %v8185 = vadd.f32 %v7852, %v8184
  %v8186 = vpop.f32.mrb[0].mxu0
  %v8187 = vadd.f32 %v7854, %v8186
  %v8188 = vpop.f32.mrb[0].mxu0
  %v8189 = vadd.f32 %v7856, %v8188
  %8190 = vmatprep.mubr.bf16.mxu0 %v5868
  %8191 = vmatmul.mubr.bf16.gmra.mrb[0].mxu0 %v5867
  %v8192 = vpop.f32.mrb[0].mxu0
  %v8193 = vadd.f32 %v7860, %v8192
  %v8194 = vpop.f32.mrb[0].mxu0
  %v8195 = vadd.f32 %v7862, %v8194
  %v8196 = vpop.f32.mrb[0].mxu0
  %v8197 = vadd.f32 %v7864, %v8196
  %v8198 = vpop.f32.mrb[0].mxu0
  %v8199 = vadd.f32 %v7866, %v8198
  %8200 = vmatprep.mubr.bf16.mxu0 %v5871
  %8201 = vmatmul.mubr.bf16.gmra.mrb[0].mxu0 %v5870
  %v8202 = vpop.f32.mrb[0].mxu0
  %v8203 = vadd.f32 %v7870, %v8202
  %v8204 = vpop.f32.mrb[0].mxu0
  %v8205 = vadd.f32 %v7872, %v8204
  %v8206 = vpop.f32.mrb[0].mxu0
  %v8207 = vadd.f32 %v7874, %v8206
  %v8208 = vpop.f32.mrb[0].mxu0
  %v8209 = vadd.f32 %v7876, %v8208
  %8210 = vmatprep.mubr.bf16.mxu0 %v5874
  %8211 = vmatmul.mubr.bf16.gmra.mrb[0].mxu0 %v5873
  %v8212 = vpop.f32.mrb[0].mxu0
  %v8213 = vadd.f32 %v7880, %v8212
  %v8214 = vpop.f32.mrb[0].mxu0
  %v8215 = vadd.f32 %v7882, %v8214
  %v8216 = vpop.f32.mrb[0].mxu0
  %v8217 = vadd.f32 %v7884, %v8216
  %v8218 = vpop.f32.mrb[0].mxu0
  %v8219 = vadd.f32 %v7886, %v8218
  %8220 = vdwg.mxu0
  %8221 = vmatprep.subr.bf16.mxu0 %v8065
  %8222 = vmatpush1.bf16.msra.mxu0 %v8064
  %8223 = vmatprep.subr.bf16.mxu0 %v8067
  %8224 = vmatpush1.bf16.msra.mxu0 %v8066
  %8225 = vmatprep.subr.bf16.mxu0 %v8069
  %8226 = vmatpush1.bf16.msra.mxu0 %v8068
  %8227 = vmatprep.subr.bf16.mxu0 %v8071
  %8228 = vmatpush1.bf16.msra.mxu0 %v8070
  %8229 = vmatprep.subr.bf16.mxu0 %v8073
  %8230 = vmatpush1.bf16.msra.mxu0 %v8072
  %8231 = vmatprep.subr.bf16.mxu0 %v8075
  %8232 = vmatpush1.bf16.msra.mxu0 %v8074
  %8233 = vmatprep.subr.bf16.mxu0 %v8077
  %8234 = vmatpush1.bf16.msra.mxu0 %v8076
  %8235 = vmatprep.subr.bf16.mxu0 %v8079
  %8236 = vmatpush1.bf16.msra.mxu0 %v8078
  %8237 = vmatprep.subr.bf16.mxu0 0
  %8238 = vmatpush1.bf16.msra.mxu0 0
  %8239 = vmatprep.subr.bf16.mxu0 0
  %8240 = vmatpush1.bf16.msra.mxu0 0
  %8241 = vmatprep.subr.bf16.mxu0 0
  %8242 = vmatpush1.bf16.msra.mxu0 0
  %8243 = vmatprep.subr.bf16.mxu0 0
  %8244 = vmatpush1.bf16.msra.mxu0 0
  %8245 = vmatprep.subr.bf16.mxu0 0
  %8246 = vmatpush1.bf16.msra.mxu0 0
  %8247 = vmatprep.subr.bf16.mxu0 0
  %8248 = vmatpush1.bf16.msra.mxu0 0
  %8249 = vmatprep.subr.bf16.mxu0 0
  %8250 = vmatpush1.bf16.msra.mxu0 0
  %8251 = vmatprep.subr.bf16.mxu0 0
  %8252 = vmatpush1.bf16.msra.mxu0 0
  %8253 = vmatprep.mubr.bf16.mxu0 0
  %8254 = vmatmul.mubr.bf16.gmra.mrb[0].mxu0 %v5860
  %v8255 = vpop.f32.mrb[0].mxu0
  %v8256 = vadd.f32 %v8163, %v8255
  %v8257 = vpop.f32.mrb[0].mxu0
  %v8258 = vadd.f32 %v8165, %v8257
  %v8259 = vpop.f32.mrb[0].mxu0
  %v8260 = vadd.f32 %v8167, %v8259
  %v8261 = vpop.f32.mrb[0].mxu0
  %v8262 = vadd.f32 %v8169, %v8261
  %8263 = vmatprep.mubr.bf16.mxu0 0
  %8264 = vmatmul.mubr.bf16.gmra.mrb[0].mxu0 %v5863
  %v8265 = vpop.f32.mrb[0].mxu0
  %v8266 = vadd.f32 %v8173, %v8265
  %v8267 = vpop.f32.mrb[0].mxu0
  %v8268 = vadd.f32 %v8175, %v8267
  %v8269 = vpop.f32.mrb[0].mxu0
  %v8270 = vadd.f32 %v8177, %v8269
  %v8271 = vpop.f32.mrb[0].mxu0
  %v8272 = vadd.f32 %v8179, %v8271
  %8273 = vmatprep.mubr.bf16.mxu0 0
  %8274 = vmatmul.mubr.bf16.gmra.mrb[0].mxu0 %v5866
  %v8275 = vpop.f32.mrb[0].mxu0
  %v8276 = vadd.f32 %v8183, %v8275
  %v8277 = vpop.f32.mrb[0].mxu0
  %v8278 = vadd.f32 %v8185, %v8277
  %v8279 = vpop.f32.mrb[0].mxu0
  %v8280 = vadd.f32 %v8187, %v8279
  %v8281 = vpop.f32.mrb[0].mxu0
  %v8282 = vadd.f32 %v8189, %v8281
  %8283 = vmatprep.mubr.bf16.mxu0 0
  %8284 = vmatmul.mubr.bf16.gmra.mrb[0].mxu0 %v5869
  %v8285 = vpop.f32.mrb[0].mxu0
  %v8286 = vadd.f32 %v8193, %v8285
  %v8287 = vpop.f32.mrb[0].mxu0
  %v8288 = vadd.f32 %v8195, %v8287
  %v8289 = vpop.f32.mrb[0].mxu0
  %v8290 = vadd.f32 %v8197, %v8289
  %v8291 = vpop.f32.mrb[0].mxu0
  %v8292 = vadd.f32 %v8199, %v8291
  %8293 = vmatprep.mubr.bf16.mxu0 0
  %8294 = vmatmul.mubr.bf16.gmra.mrb[0].mxu0 %v5872
  %v8295 = vpop.f32.mrb[0].mxu0
  %v8296 = vadd.f32 %v8203, %v8295
  %v8297 = vpop.f32.mrb[0].mxu0
  %v8298 = vadd.f32 %v8205, %v8297
  %v8299 = vpop.f32.mrb[0].mxu0
  %v8300 = vadd.f32 %v8207, %v8299
  %v8301 = vpop.f32.mrb[0].mxu0
  %v8302 = vadd.f32 %v8209, %v8301
  %8303 = vmatprep.mubr.bf16.mxu0 0
  %8304 = vmatmul.mubr.bf16.gmra.mrb[0].mxu0 %v5875
  %v8305 = vpop.f32.mrb[0].mxu0
  %v8306 = vadd.f32 %v8213, %v8305
  %v8307 = vpop.f32.mrb[0].mxu0
  %v8308 = vadd.f32 %v8215, %v8307
  %v8309 = vpop.f32.mrb[0].mxu0
  %v8310 = vadd.f32 %v8217, %v8309
  %v8311 = vpop.f32.mrb[0].mxu0
  %v8312 = vadd.f32 %v8219, %v8311
  %8313 = vdwg.mxu0
  %s8314 = scalar_lea.vmem %s3, 1920
  %v8315 = vld [vmem:[%s8314] sm:$0xff]
  %v8316 = vld [vmem:[%s8314 + $0x8] sm:$0xff]
  %v8317 = vld [vmem:[%s8314 + $0x10] sm:$0xff]
  %v8318 = vld [vmem:[%s8314 + $0x18] sm:$0xff]
  %v8319 = vld [vmem:[%s8314 + $0x20] sm:$0xff]
  %v8320 = vld [vmem:[%s8314 + $0x28] sm:$0xff]
  %v8321 = vld [vmem:[%s8314 + $0x30] sm:$0xff]
  %v8322 = vld [vmem:[%s8314 + $0x38] sm:$0xff]
  %v8323 = vld [vmem:[%s8314 + $0x40] sm:$0xff]
  %v8324 = vld [vmem:[%s8314 + $0x48] sm:$0xff]
  %v8325 = vld [vmem:[%s8314 + $0x50] sm:$0xff]
  %v8326 = vld [vmem:[%s8314 + $0x58] sm:$0xff]
  %v8327 = vld [vmem:[%s8314 + $0x60] sm:$0xff]
  %v8328 = vld [vmem:[%s8314 + $0x68] sm:$0xff]
  %v8329 = vld [vmem:[%s8314 + $0x70] sm:$0xff]
  %v8330 = vld [vmem:[%s8314 + $0x78] sm:$0xff]
  %v8331 = vld [vmem:[%s8314 + $0x80] sm:$0xff]
  %v8332 = vld [vmem:[%s8314 + $0x88] sm:$0xff]
  %v8333 = vld [vmem:[%s8314 + $0x90] sm:$0xff]
  %v8334 = vld [vmem:[%s8314 + $0x98] sm:$0xff]
  %v8335 = vld [vmem:[%s8314 + $0xa0] sm:$0xff]
  %v8336 = vld [vmem:[%s8314 + $0xa8] sm:$0xff]
  %v8337 = vld [vmem:[%s8314 + $0xb0] sm:$0xff]
  %v8338 = vld [vmem:[%s8314 + $0xb8] sm:$0xff]
  %v8339 = vld [vmem:[%s8314 + $0xc0] sm:$0xff]
  %v8340 = vld [vmem:[%s8314 + $0xc8] sm:$0xff]
  %v8341 = vld [vmem:[%s8314 + $0xd0] sm:$0xff]
  %v8342 = vld [vmem:[%s8314 + $0xd8] sm:$0xff]
  %v8343 = vld [vmem:[%s8314 + $0xe0] sm:$0xff]
  %v8344 = vld [vmem:[%s8314 + $0xe8] sm:$0xff]
  %v8345 = vld [vmem:[%s8314 + $0xf0] sm:$0xff]
  %v8346 = vld [vmem:[%s8314 + $0xf8] sm:$0xff]
  %v8347 = vld [vmem:[%s8314 + $0x100] sm:$0xff]
  %v8348 = vld [vmem:[%s8314 + $0x108] sm:$0xff]
  %v8349 = vld [vmem:[%s8314 + $0x110] sm:$0xff]
  %v8350 = vld [vmem:[%s8314 + $0x118] sm:$0xff]
  %v8351 = vld [vmem:[%s8314 + $0x120] sm:$0xff]
  %v8352 = vld [vmem:[%s8314 + $0x128] sm:$0xff]
  %v8353 = vld [vmem:[%s8314 + $0x130] sm:$0xff]
  %v8354 = vld [vmem:[%s8314 + $0x138] sm:$0xff]
  %v8355 = vld [vmem:[%s8314 + $0x140] sm:$0xff]
  %v8356 = vld [vmem:[%s8314 + $0x148] sm:$0xff]
  %v8357 = vld [vmem:[%s8314 + $0x150] sm:$0xff]
  %v8358 = vld [vmem:[%s8314 + $0x158] sm:$0xff]
  %v8359 = vld [vmem:[%s8314 + $0x160] sm:$0xff]
  %v8360 = vld [vmem:[%s8314 + $0x168] sm:$0xff]
  %v8361 = vld [vmem:[%s8314 + $0x170] sm:$0xff]
  %v8362 = vld [vmem:[%s8314 + $0x178] sm:$0xff]
  %v8411 = vunpack.c.l.b16 %v8315
  %v8412 = vunpack.c.h.b16 %v8315
  %v8413 = vunpack.c.l.b16 %v8316
  %v8414 = vunpack.c.h.b16 %v8316
  %v8415 = vunpack.c.l.b16 %v8317
  %v8416 = vunpack.c.h.b16 %v8317
  %v8417 = vunpack.c.l.b16 %v8318
  %v8418 = vunpack.c.h.b16 %v8318
  %v8419 = vunpack.c.l.b16 %v8319
  %v8420 = vunpack.c.h.b16 %v8319
  %v8421 = vunpack.c.l.b16 %v8320
  %v8422 = vunpack.c.h.b16 %v8320
  %v8423 = vunpack.c.l.b16 %v8321
  %v8424 = vunpack.c.h.b16 %v8321
  %v8425 = vunpack.c.l.b16 %v8322
  %v8426 = vunpack.c.h.b16 %v8322
  %v8427 = vunpack.c.l.b16 %v8323
  %v8428 = vunpack.c.h.b16 %v8323
  %v8429 = vunpack.c.l.b16 %v8324
  %v8430 = vunpack.c.h.b16 %v8324
  %v8431 = vunpack.c.l.b16 %v8325
  %v8432 = vunpack.c.h.b16 %v8325
  %v8433 = vunpack.c.l.b16 %v8326
  %v8434 = vunpack.c.h.b16 %v8326
  %v8435 = vunpack.c.l.b16 %v8327
  %v8436 = vunpack.c.h.b16 %v8327
  %v8437 = vunpack.c.l.b16 %v8328
  %v8438 = vunpack.c.h.b16 %v8328
  %v8439 = vunpack.c.l.b16 %v8329
  %v8440 = vunpack.c.h.b16 %v8329
  %v8441 = vunpack.c.l.b16 %v8330
  %v8442 = vunpack.c.h.b16 %v8330
  %v8443 = vunpack.c.l.b16 %v8331
  %v8444 = vunpack.c.h.b16 %v8331
  %v8445 = vunpack.c.l.b16 %v8332
  %v8446 = vunpack.c.h.b16 %v8332
  %v8447 = vunpack.c.l.b16 %v8333
  %v8448 = vunpack.c.h.b16 %v8333
  %v8449 = vunpack.c.l.b16 %v8334
  %v8450 = vunpack.c.h.b16 %v8334
  %v8451 = vunpack.c.l.b16 %v8335
  %v8452 = vunpack.c.h.b16 %v8335
  %v8453 = vunpack.c.l.b16 %v8336
  %v8454 = vunpack.c.h.b16 %v8336
  %v8455 = vunpack.c.l.b16 %v8337
  %v8456 = vunpack.c.h.b16 %v8337
  %v8457 = vunpack.c.l.b16 %v8338
  %v8458 = vunpack.c.h.b16 %v8338
  %v8459 = vunpack.c.l.b16 %v8339
  %v8460 = vunpack.c.h.b16 %v8339
  %v8461 = vunpack.c.l.b16 %v8340
  %v8462 = vunpack.c.h.b16 %v8340
  %v8463 = vunpack.c.l.b16 %v8341
  %v8464 = vunpack.c.h.b16 %v8341
  %v8465 = vunpack.c.l.b16 %v8342
  %v8466 = vunpack.c.h.b16 %v8342
  %v8467 = vunpack.c.l.b16 %v8343
  %v8468 = vunpack.c.h.b16 %v8343
  %v8469 = vunpack.c.l.b16 %v8344
  %v8470 = vunpack.c.h.b16 %v8344
  %v8471 = vunpack.c.l.b16 %v8345
  %v8472 = vunpack.c.h.b16 %v8345
  %v8473 = vunpack.c.l.b16 %v8346
  %v8474 = vunpack.c.h.b16 %v8346
  %v8475 = vunpack.c.l.b16 %v8347
  %v8476 = vunpack.c.h.b16 %v8347
  %v8477 = vunpack.c.l.b16 %v8348
  %v8478 = vunpack.c.h.b16 %v8348
  %v8479 = vunpack.c.l.b16 %v8349
  %v8480 = vunpack.c.h.b16 %v8349
  %v8481 = vunpack.c.l.b16 %v8350
  %v8482 = vunpack.c.h.b16 %v8350
  %v8483 = vunpack.c.l.b16 %v8351
  %v8484 = vunpack.c.h.b16 %v8351
  %v8485 = vunpack.c.l.b16 %v8352
  %v8486 = vunpack.c.h.b16 %v8352
  %v8487 = vunpack.c.l.b16 %v8353
  %v8488 = vunpack.c.h.b16 %v8353
  %v8489 = vunpack.c.l.b16 %v8354
  %v8490 = vunpack.c.h.b16 %v8354
  %v8491 = vunpack.c.l.b16 %v8355
  %v8492 = vunpack.c.h.b16 %v8355
  %v8493 = vunpack.c.l.b16 %v8356
  %v8494 = vunpack.c.h.b16 %v8356
  %v8495 = vunpack.c.l.b16 %v8357
  %v8496 = vunpack.c.h.b16 %v8357
  %v8497 = vunpack.c.l.b16 %v8358
  %v8498 = vunpack.c.h.b16 %v8358
  %v8499 = vunpack.c.l.b16 %v8359
  %v8500 = vunpack.c.h.b16 %v8359
  %v8501 = vunpack.c.l.b16 %v8360
  %v8502 = vunpack.c.h.b16 %v8360
  %v8503 = vunpack.c.l.b16 %v8361
  %v8504 = vunpack.c.h.b16 %v8361
  %v8505 = vunpack.c.l.b16 %v8362
  %v8506 = vunpack.c.h.b16 %v8362
  %v8507 = vpack.c.b16 %v8413, %v8411
  %v8508 = vpack.c.b16 %v8414, %v8412
  %v8509 = vpack.c.b16 %v8417, %v8415
  %v8510 = vpack.c.b16 %v8418, %v8416
  %v8511 = vpack.c.b16 %v8421, %v8419
  %v8512 = vpack.c.b16 %v8422, %v8420
  %v8513 = vpack.c.b16 %v8425, %v8423
  %v8514 = vpack.c.b16 %v8426, %v8424
  %v8515 = vpack.c.b16 %v8429, %v8427
  %v8516 = vpack.c.b16 %v8430, %v8428
  %v8517 = vpack.c.b16 %v8433, %v8431
  %v8518 = vpack.c.b16 %v8434, %v8432
  %v8519 = vpack.c.b16 %v8437, %v8435
  %v8520 = vpack.c.b16 %v8438, %v8436
  %v8521 = vpack.c.b16 %v8441, %v8439
  %v8522 = vpack.c.b16 %v8442, %v8440
  %v8523 = vpack.c.b16 %v8445, %v8443
  %v8524 = vpack.c.b16 %v8446, %v8444
  %v8525 = vpack.c.b16 %v8449, %v8447
  %v8526 = vpack.c.b16 %v8450, %v8448
  %v8527 = vpack.c.b16 %v8453, %v8451
  %v8528 = vpack.c.b16 %v8454, %v8452
  %v8529 = vpack.c.b16 %v8457, %v8455
  %v8530 = vpack.c.b16 %v8458, %v8456
  %v8531 = vpack.c.b16 %v8461, %v8459
  %v8532 = vpack.c.b16 %v8462, %v8460
  %v8533 = vpack.c.b16 %v8465, %v8463
  %v8534 = vpack.c.b16 %v8466, %v8464
  %v8535 = vpack.c.b16 %v8469, %v8467
  %v8536 = vpack.c.b16 %v8470, %v8468
  %v8537 = vpack.c.b16 %v8473, %v8471
  %v8538 = vpack.c.b16 %v8474, %v8472
  %v8539 = vpack.c.b16 %v8477, %v8475
  %v8540 = vpack.c.b16 %v8478, %v8476
  %v8541 = vpack.c.b16 %v8481, %v8479
  %v8542 = vpack.c.b16 %v8482, %v8480
  %v8543 = vpack.c.b16 %v8485, %v8483
  %v8544 = vpack.c.b16 %v8486, %v8484
  %v8545 = vpack.c.b16 %v8489, %v8487
  %v8546 = vpack.c.b16 %v8490, %v8488
  %v8547 = vpack.c.b16 %v8493, %v8491
  %v8548 = vpack.c.b16 %v8494, %v8492
  %v8549 = vpack.c.b16 %v8497, %v8495
  %v8550 = vpack.c.b16 %v8498, %v8496
  %v8551 = vpack.c.b16 %v8501, %v8499
  %v8552 = vpack.c.b16 %v8502, %v8500
  %v8553 = vpack.c.b16 %v8505, %v8503
  %v8554 = vpack.c.b16 %v8506, %v8504
  %8603 = vmatprep.subr.bf16.mxu0 %v8508
  %8604 = vmatpush1.bf16.msra.mxu0 %v8507
  %8605 = vmatprep.subr.bf16.mxu0 %v8510
  %8606 = vmatpush1.bf16.msra.mxu0 %v8509
  %8607 = vmatprep.subr.bf16.mxu0 %v8512
  %8608 = vmatpush1.bf16.msra.mxu0 %v8511
  %8609 = vmatprep.subr.bf16.mxu0 %v8514
  %8610 = vmatpush1.bf16.msra.mxu0 %v8513
  %8611 = vmatprep.subr.bf16.mxu0 %v8516
  %8612 = vmatpush1.bf16.msra.mxu0 %v8515
  %8613 = vmatprep.subr.bf16.mxu0 %v8518
  %8614 = vmatpush1.bf16.msra.mxu0 %v8517
  %8615 = vmatprep.subr.bf16.mxu0 %v8520
  %8616 = vmatpush1.bf16.msra.mxu0 %v8519
  %8617 = vmatprep.subr.bf16.mxu0 %v8522
  %8618 = vmatpush1.bf16.msra.mxu0 %v8521
  %8619 = vmatprep.subr.bf16.mxu0 %v8524
  %8620 = vmatpush1.bf16.msra.mxu0 %v8523
  %8621 = vmatprep.subr.bf16.mxu0 %v8526
  %8622 = vmatpush1.bf16.msra.mxu0 %v8525
  %8623 = vmatprep.subr.bf16.mxu0 %v8528
  %8624 = vmatpush1.bf16.msra.mxu0 %v8527
  %8625 = vmatprep.subr.bf16.mxu0 %v8530
  %8626 = vmatpush1.bf16.msra.mxu0 %v8529
  %8627 = vmatprep.subr.bf16.mxu0 %v8532
  %8628 = vmatpush1.bf16.msra.mxu0 %v8531
  %8629 = vmatprep.subr.bf16.mxu0 %v8534
  %8630 = vmatpush1.bf16.msra.mxu0 %v8533
  %8631 = vmatprep.subr.bf16.mxu0 %v8536
  %8632 = vmatpush1.bf16.msra.mxu0 %v8535
  %8633 = vmatprep.subr.bf16.mxu0 %v8538
  %8634 = vmatpush1.bf16.msra.mxu0 %v8537
  %8635 = vmatprep.mubr.bf16.mxu0 %v6832
  %8636 = vmatmul.mubr.bf16.gmra.mrb[0].mxu0 %v6831
  %v8637 = vpop.f32.mrb[0].mxu0
  %v8638 = vadd.f32 0.0, %v8637
  %v8639 = vpop.f32.mrb[0].mxu0
  %v8640 = vadd.f32 0.0, %v8639
  %v8641 = vpop.f32.mrb[0].mxu0
  %v8642 = vadd.f32 0.0, %v8641
  %v8643 = vpop.f32.mrb[0].mxu0
  %v8644 = vadd.f32 0.0, %v8643
  %8645 = vmatprep.mubr.bf16.mxu0 %v6835
  %8646 = vmatmul.mubr.bf16.gmra.mrb[0].mxu0 %v6834
  %v8647 = vpop.f32.mrb[0].mxu0
  %v8648 = vadd.f32 0.0, %v8647
  %v8649 = vpop.f32.mrb[0].mxu0
  %v8650 = vadd.f32 0.0, %v8649
  %v8651 = vpop.f32.mrb[0].mxu0
  %v8652 = vadd.f32 0.0, %v8651
  %v8653 = vpop.f32.mrb[0].mxu0
  %v8654 = vadd.f32 0.0, %v8653
  %8655 = vmatprep.mubr.bf16.mxu0 %v6838
  %8656 = vmatmul.mubr.bf16.gmra.mrb[0].mxu0 %v6837
  %v8657 = vpop.f32.mrb[0].mxu0
  %v8658 = vadd.f32 0.0, %v8657
  %v8659 = vpop.f32.mrb[0].mxu0
  %v8660 = vadd.f32 0.0, %v8659
  %v8661 = vpop.f32.mrb[0].mxu0
  %v8662 = vadd.f32 0.0, %v8661
  %v8663 = vpop.f32.mrb[0].mxu0
  %v8664 = vadd.f32 0.0, %v8663
  %8665 = vmatprep.mubr.bf16.mxu0 %v6841
  %8666 = vmatmul.mubr.bf16.gmra.mrb[0].mxu0 %v6840
  %v8667 = vpop.f32.mrb[0].mxu0
  %v8668 = vadd.f32 0.0, %v8667
  %v8669 = vpop.f32.mrb[0].mxu0
  %v8670 = vadd.f32 0.0, %v8669
  %v8671 = vpop.f32.mrb[0].mxu0
  %v8672 = vadd.f32 0.0, %v8671
  %v8673 = vpop.f32.mrb[0].mxu0
  %v8674 = vadd.f32 0.0, %v8673
  %8675 = vmatprep.mubr.bf16.mxu0 %v6844
  %8676 = vmatmul.mubr.bf16.gmra.mrb[0].mxu0 %v6843
  %v8677 = vpop.f32.mrb[0].mxu0
  %v8678 = vadd.f32 0.0, %v8677
  %v8679 = vpop.f32.mrb[0].mxu0
  %v8680 = vadd.f32 0.0, %v8679
  %v8681 = vpop.f32.mrb[0].mxu0
  %v8682 = vadd.f32 0.0, %v8681
  %v8683 = vpop.f32.mrb[0].mxu0
  %v8684 = vadd.f32 0.0, %v8683
  %8685 = vmatprep.mubr.bf16.mxu0 %v6847
  %8686 = vmatmul.mubr.bf16.gmra.mrb[0].mxu0 %v6846
  %v8687 = vpop.f32.mrb[0].mxu0
  %v8688 = vadd.f32 0.0, %v8687
  %v8689 = vpop.f32.mrb[0].mxu0
  %v8690 = vadd.f32 0.0, %v8689
  %v8691 = vpop.f32.mrb[0].mxu0
  %v8692 = vadd.f32 0.0, %v8691
  %v8693 = vpop.f32.mrb[0].mxu0
  %v8694 = vadd.f32 0.0, %v8693
  %8695 = vdwg.mxu0
  %8696 = vmatprep.subr.bf16.mxu0 %v8540
  %8697 = vmatpush1.bf16.msra.mxu0 %v8539
  %8698 = vmatprep.subr.bf16.mxu0 %v8542
  %8699 = vmatpush1.bf16.msra.mxu0 %v8541
  %8700 = vmatprep.subr.bf16.mxu0 %v8544
  %8701 = vmatpush1.bf16.msra.mxu0 %v8543
  %8702 = vmatprep.subr.bf16.mxu0 %v8546
  %8703 = vmatpush1.bf16.msra.mxu0 %v8545
  %8704 = vmatprep.subr.bf16.mxu0 %v8548
  %8705 = vmatpush1.bf16.msra.mxu0 %v8547
  %8706 = vmatprep.subr.bf16.mxu0 %v8550
  %8707 = vmatpush1.bf16.msra.mxu0 %v8549
  %8708 = vmatprep.subr.bf16.mxu0 %v8552
  %8709 = vmatpush1.bf16.msra.mxu0 %v8551
  %8710 = vmatprep.subr.bf16.mxu0 %v8554
  %8711 = vmatpush1.bf16.msra.mxu0 %v8553
  %8712 = vmatprep.subr.bf16.mxu0 0
  %8713 = vmatpush1.bf16.msra.mxu0 0
  %8714 = vmatprep.subr.bf16.mxu0 0
  %8715 = vmatpush1.bf16.msra.mxu0 0
  %8716 = vmatprep.subr.bf16.mxu0 0
  %8717 = vmatpush1.bf16.msra.mxu0 0
  %8718 = vmatprep.subr.bf16.mxu0 0
  %8719 = vmatpush1.bf16.msra.mxu0 0
  %8720 = vmatprep.subr.bf16.mxu0 0
  %8721 = vmatpush1.bf16.msra.mxu0 0
  %8722 = vmatprep.subr.bf16.mxu0 0
  %8723 = vmatpush1.bf16.msra.mxu0 0
  %8724 = vmatprep.subr.bf16.mxu0 0
  %8725 = vmatpush1.bf16.msra.mxu0 0
  %8726 = vmatprep.subr.bf16.mxu0 0
  %8727 = vmatpush1.bf16.msra.mxu0 0
  %8728 = vmatprep.mubr.bf16.mxu0 0
  %8729 = vmatmul.mubr.bf16.gmra.mrb[0].mxu0 %v6833
  %v8730 = vpop.f32.mrb[0].mxu0
  %v8731 = vadd.f32 %v8638, %v8730
  %v8732 = vpop.f32.mrb[0].mxu0
  %v8733 = vadd.f32 %v8640, %v8732
  %v8734 = vpop.f32.mrb[0].mxu0
  %v8735 = vadd.f32 %v8642, %v8734
  %v8736 = vpop.f32.mrb[0].mxu0
  %v8737 = vadd.f32 %v8644, %v8736
  %8738 = vmatprep.mubr.bf16.mxu0 0
  %8739 = vmatmul.mubr.bf16.gmra.mrb[0].mxu0 %v6836
  %v8740 = vpop.f32.mrb[0].mxu0
  %v8741 = vadd.f32 %v8648, %v8740
  %v8742 = vpop.f32.mrb[0].mxu0
  %v8743 = vadd.f32 %v8650, %v8742
  %v8744 = vpop.f32.mrb[0].mxu0
  %v8745 = vadd.f32 %v8652, %v8744
  %v8746 = vpop.f32.mrb[0].mxu0
  %v8747 = vadd.f32 %v8654, %v8746
  %8748 = vmatprep.mubr.bf16.mxu0 0
  %8749 = vmatmul.mubr.bf16.gmra.mrb[0].mxu0 %v6839
  %v8750 = vpop.f32.mrb[0].mxu0
  %v8751 = vadd.f32 %v8658, %v8750
  %v8752 = vpop.f32.mrb[0].mxu0
  %v8753 = vadd.f32 %v8660, %v8752
  %v8754 = vpop.f32.mrb[0].mxu0
  %v8755 = vadd.f32 %v8662, %v8754
  %v8756 = vpop.f32.mrb[0].mxu0
  %v8757 = vadd.f32 %v8664, %v8756
  %8758 = vmatprep.mubr.bf16.mxu0 0
  %8759 = vmatmul.mubr.bf16.gmra.mrb[0].mxu0 %v6842
  %v8760 = vpop.f32.mrb[0].mxu0
  %v8761 = vadd.f32 %v8668, %v8760
  %v8762 = vpop.f32.mrb[0].mxu0
  %v8763 = vadd.f32 %v8670, %v8762
  %v8764 = vpop.f32.mrb[0].mxu0
  %v8765 = vadd.f32 %v8672, %v8764
  %v8766 = vpop.f32.mrb[0].mxu0
  %v8767 = vadd.f32 %v8674, %v8766
  %8768 = vmatprep.mubr.bf16.mxu0 0
  %8769 = vmatmul.mubr.bf16.gmra.mrb[0].mxu0 %v6845
  %v8770 = vpop.f32.mrb[0].mxu0
  %v8771 = vadd.f32 %v8678, %v8770
  %v8772 = vpop.f32.mrb[0].mxu0
  %v8773 = vadd.f32 %v8680, %v8772
  %v8774 = vpop.f32.mrb[0].mxu0
  %v8775 = vadd.f32 %v8682, %v8774
  %v8776 = vpop.f32.mrb[0].mxu0
  %v8777 = vadd.f32 %v8684, %v8776
  %8778 = vmatprep.mubr.bf16.mxu0 0
  %8779 = vmatmul.mubr.bf16.gmra.mrb[0].mxu0 %v6848
  %v8780 = vpop.f32.mrb[0].mxu0
  %v8781 = vadd.f32 %v8688, %v8780
  %v8782 = vpop.f32.mrb[0].mxu0
  %v8783 = vadd.f32 %v8690, %v8782
  %v8784 = vpop.f32.mrb[0].mxu0
  %v8785 = vadd.f32 %v8692, %v8784
  %v8786 = vpop.f32.mrb[0].mxu0
  %v8787 = vadd.f32 %v8694, %v8786
  %8788 = vdwg.mxu0
  %v8789 = vadd.f32 %v8256, %v8731
  %v8790 = vadd.f32 %v8258, %v8733
  %v8791 = vadd.f32 %v8260, %v8735
  %v8792 = vadd.f32 %v8262, %v8737
  %v8793 = vadd.f32 %v8266, %v8741
  %v8794 = vadd.f32 %v8268, %v8743
  %v8795 = vadd.f32 %v8270, %v8745
  %v8796 = vadd.f32 %v8272, %v8747
  %v8797 = vadd.f32 %v8276, %v8751
  %v8798 = vadd.f32 %v8278, %v8753
  %v8799 = vadd.f32 %v8280, %v8755
  %v8800 = vadd.f32 %v8282, %v8757
  %v8801 = vadd.f32 %v8286, %v8761
  %v8802 = vadd.f32 %v8288, %v8763
  %v8803 = vadd.f32 %v8290, %v8765
  %v8804 = vadd.f32 %v8292, %v8767
  %v8805 = vadd.f32 %v8296, %v8771
  %v8806 = vadd.f32 %v8298, %v8773
  %v8807 = vadd.f32 %v8300, %v8775
  %v8808 = vadd.f32 %v8302, %v8777
  %v8809 = vadd.f32 %v8306, %v8781
  %v8810 = vadd.f32 %v8308, %v8783
  %v8811 = vadd.f32 %v8310, %v8785
  %v8812 = vadd.f32 %v8312, %v8787
  %v8813 = vmax.f32 %v8789, %v8797
  %v8814 = vmax.f32 %v8790, %v8798
  %v8815 = vmax.f32 %v8791, %v8799
  %v8816 = vmax.f32 %v8792, %v8800
  %v8817 = vmax.f32 %v8793, %v8801
  %v8818 = vmax.f32 %v8794, %v8802
  %v8819 = vmax.f32 %v8795, %v8803
  %v8820 = vmax.f32 %v8796, %v8804
  %v8821 = vmax.f32 %v8813, %v8805
  %v8822 = vmax.f32 %v8814, %v8806
  %v8823 = vmax.f32 %v8815, %v8807
  %v8824 = vmax.f32 %v8816, %v8808
  %v8825 = vmax.f32 %v8817, %v8809
  %v8826 = vmax.f32 %v8818, %v8810
  %v8827 = vmax.f32 %v8819, %v8811
  %v8828 = vmax.f32 %v8820, %v8812
  %v8829 = vmax.f32 %v7356, %v8821
  %v8830 = vmax.f32 %v7357, %v8822
  %v8831 = vmax.f32 %v7358, %v8823
  %v8832 = vmax.f32 %v7359, %v8824
  %v8833 = vmax.f32 %v7360, %v8825
  %v8834 = vmax.f32 %v7361, %v8826
  %v8835 = vmax.f32 %v7362, %v8827
  %v8836 = vmax.f32 %v7363, %v8828
  %s8837 = scalar_lea.vmem %s3, 2304
  %v8838 = vld [vmem:[%s8837] sm:$0xff]
  %v8839 = vld [vmem:[%s8837 + $0x8] sm:$0xff]
  %v8840 = vld [vmem:[%s8837 + $0x10] sm:$0xff]
  %v8841 = vld [vmem:[%s8837 + $0x18] sm:$0xff]
  %v8842 = vld [vmem:[%s8837 + $0x20] sm:$0xff]
  %v8843 = vld [vmem:[%s8837 + $0x28] sm:$0xff]
  %v8844 = vld [vmem:[%s8837 + $0x30] sm:$0xff]
  %v8845 = vld [vmem:[%s8837 + $0x38] sm:$0xff]
  %v8846 = vld [vmem:[%s8837 + $0x40] sm:$0xff]
  %v8847 = vld [vmem:[%s8837 + $0x48] sm:$0xff]
  %v8848 = vld [vmem:[%s8837 + $0x50] sm:$0xff]
  %v8849 = vld [vmem:[%s8837 + $0x58] sm:$0xff]
  %v8850 = vld [vmem:[%s8837 + $0x60] sm:$0xff]
  %v8851 = vld [vmem:[%s8837 + $0x68] sm:$0xff]
  %v8852 = vld [vmem:[%s8837 + $0x70] sm:$0xff]
  %v8853 = vld [vmem:[%s8837 + $0x78] sm:$0xff]
  %v8854 = vld [vmem:[%s8837 + $0x80] sm:$0xff]
  %v8855 = vld [vmem:[%s8837 + $0x88] sm:$0xff]
  %v8856 = vld [vmem:[%s8837 + $0x90] sm:$0xff]
  %v8857 = vld [vmem:[%s8837 + $0x98] sm:$0xff]
  %v8858 = vld [vmem:[%s8837 + $0xa0] sm:$0xff]
  %v8859 = vld [vmem:[%s8837 + $0xa8] sm:$0xff]
  %v8860 = vld [vmem:[%s8837 + $0xb0] sm:$0xff]
  %v8861 = vld [vmem:[%s8837 + $0xb8] sm:$0xff]
  %v8862 = vld [vmem:[%s8837 + $0xc0] sm:$0xff]
  %v8863 = vld [vmem:[%s8837 + $0xc8] sm:$0xff]
  %v8864 = vld [vmem:[%s8837 + $0xd0] sm:$0xff]
  %v8865 = vld [vmem:[%s8837 + $0xd8] sm:$0xff]
  %v8866 = vld [vmem:[%s8837 + $0xe0] sm:$0xff]
  %v8867 = vld [vmem:[%s8837 + $0xe8] sm:$0xff]
  %v8868 = vld [vmem:[%s8837 + $0xf0] sm:$0xff]
  %v8869 = vld [vmem:[%s8837 + $0xf8] sm:$0xff]
  %v8870 = vld [vmem:[%s8837 + $0x100] sm:$0xff]
  %v8871 = vld [vmem:[%s8837 + $0x108] sm:$0xff]
  %v8872 = vld [vmem:[%s8837 + $0x110] sm:$0xff]
  %v8873 = vld [vmem:[%s8837 + $0x118] sm:$0xff]
  %v8874 = vld [vmem:[%s8837 + $0x120] sm:$0xff]
  %v8875 = vld [vmem:[%s8837 + $0x128] sm:$0xff]
  %v8876 = vld [vmem:[%s8837 + $0x130] sm:$0xff]
  %v8877 = vld [vmem:[%s8837 + $0x138] sm:$0xff]
  %v8878 = vld [vmem:[%s8837 + $0x140] sm:$0xff]
  %v8879 = vld [vmem:[%s8837 + $0x148] sm:$0xff]
  %v8880 = vld [vmem:[%s8837 + $0x150] sm:$0xff]
  %v8881 = vld [vmem:[%s8837 + $0x158] sm:$0xff]
  %v8882 = vld [vmem:[%s8837 + $0x160] sm:$0xff]
  %v8883 = vld [vmem:[%s8837 + $0x168] sm:$0xff]
  %v8884 = vld [vmem:[%s8837 + $0x170] sm:$0xff]
  %v8885 = vld [vmem:[%s8837 + $0x178] sm:$0xff]
  %s8886 = scalar_lea.vmem %s3, 2688
  %v8887 = vld [vmem:[%s8886] sm:$0xff]
  %v8888 = vld [vmem:[%s8886 + $0x8] sm:$0xff]
  %v8889 = vld [vmem:[%s8886 + $0x10] sm:$0xff]
  %v8890 = vld [vmem:[%s8886 + $0x18] sm:$0xff]
  %v8891 = vld [vmem:[%s8886 + $0x20] sm:$0xff]
  %v8892 = vld [vmem:[%s8886 + $0x28] sm:$0xff]
  %v8893 = vld [vmem:[%s8886 + $0x30] sm:$0xff]
  %v8894 = vld [vmem:[%s8886 + $0x38] sm:$0xff]
  %v8895 = vld [vmem:[%s8886 + $0x40] sm:$0xff]
  %v8896 = vld [vmem:[%s8886 + $0x48] sm:$0xff]
  %v8897 = vld [vmem:[%s8886 + $0x50] sm:$0xff]
  %v8898 = vld [vmem:[%s8886 + $0x58] sm:$0xff]
  %v8899 = vld [vmem:[%s8886 + $0x60] sm:$0xff]
  %v8900 = vld [vmem:[%s8886 + $0x68] sm:$0xff]
  %v8901 = vld [vmem:[%s8886 + $0x70] sm:$0xff]
  %v8902 = vld [vmem:[%s8886 + $0x78] sm:$0xff]
  %v8903 = vld [vmem:[%s8886 + $0x80] sm:$0xff]
  %v8904 = vld [vmem:[%s8886 + $0x88] sm:$0xff]
  %v8905 = vld [vmem:[%s8886 + $0x90] sm:$0xff]
  %v8906 = vld [vmem:[%s8886 + $0x98] sm:$0xff]
  %v8907 = vld [vmem:[%s8886 + $0xa0] sm:$0xff]
  %v8908 = vld [vmem:[%s8886 + $0xa8] sm:$0xff]
  %v8909 = vld [vmem:[%s8886 + $0xb0] sm:$0xff]
  %v8910 = vld [vmem:[%s8886 + $0xb8] sm:$0xff]
  %v8911 = vld [vmem:[%s8886 + $0xc0] sm:$0xff]
  %v8912 = vld [vmem:[%s8886 + $0xc8] sm:$0xff]
  %v8913 = vld [vmem:[%s8886 + $0xd0] sm:$0xff]
  %v8914 = vld [vmem:[%s8886 + $0xd8] sm:$0xff]
  %v8915 = vld [vmem:[%s8886 + $0xe0] sm:$0xff]
  %v8916 = vld [vmem:[%s8886 + $0xe8] sm:$0xff]
  %v8917 = vld [vmem:[%s8886 + $0xf0] sm:$0xff]
  %v8918 = vld [vmem:[%s8886 + $0xf8] sm:$0xff]
  %v8919 = vld [vmem:[%s8886 + $0x100] sm:$0xff]
  %v8920 = vld [vmem:[%s8886 + $0x108] sm:$0xff]
  %v8921 = vld [vmem:[%s8886 + $0x110] sm:$0xff]
  %v8922 = vld [vmem:[%s8886 + $0x118] sm:$0xff]
  %v8923 = vld [vmem:[%s8886 + $0x120] sm:$0xff]
  %v8924 = vld [vmem:[%s8886 + $0x128] sm:$0xff]
  %v8925 = vld [vmem:[%s8886 + $0x130] sm:$0xff]
  %v8926 = vld [vmem:[%s8886 + $0x138] sm:$0xff]
  %v8927 = vld [vmem:[%s8886 + $0x140] sm:$0xff]
  %v8928 = vld [vmem:[%s8886 + $0x148] sm:$0xff]
  %v8929 = vld [vmem:[%s8886 + $0x150] sm:$0xff]
  %v8930 = vld [vmem:[%s8886 + $0x158] sm:$0xff]
  %v8931 = vld [vmem:[%s8886 + $0x160] sm:$0xff]
  %v8932 = vld [vmem:[%s8886 + $0x168] sm:$0xff]
  %v8933 = vld [vmem:[%s8886 + $0x170] sm:$0xff]
  %v8934 = vld [vmem:[%s8886 + $0x178] sm:$0xff]
  %v8983 = vunpack.c.l.b16 %v8887
  %v8984 = vunpack.c.h.b16 %v8887
  %v8985 = vunpack.c.l.b16 %v8888
  %v8986 = vunpack.c.h.b16 %v8888
  %v8987 = vunpack.c.l.b16 %v8889
  %v8988 = vunpack.c.h.b16 %v8889
  %v8989 = vunpack.c.l.b16 %v8890
  %v8990 = vunpack.c.h.b16 %v8890
  %v8991 = vunpack.c.l.b16 %v8891
  %v8992 = vunpack.c.h.b16 %v8891
  %v8993 = vunpack.c.l.b16 %v8892
  %v8994 = vunpack.c.h.b16 %v8892
  %v8995 = vunpack.c.l.b16 %v8893
  %v8996 = vunpack.c.h.b16 %v8893
  %v8997 = vunpack.c.l.b16 %v8894
  %v8998 = vunpack.c.h.b16 %v8894
  %v8999 = vunpack.c.l.b16 %v8895
  %v9000 = vunpack.c.h.b16 %v8895
  %v9001 = vunpack.c.l.b16 %v8896
  %v9002 = vunpack.c.h.b16 %v8896
  %v9003 = vunpack.c.l.b16 %v8897
  %v9004 = vunpack.c.h.b16 %v8897
  %v9005 = vunpack.c.l.b16 %v8898
  %v9006 = vunpack.c.h.b16 %v8898
  %v9007 = vunpack.c.l.b16 %v8899
  %v9008 = vunpack.c.h.b16 %v8899
  %v9009 = vunpack.c.l.b16 %v8900
  %v9010 = vunpack.c.h.b16 %v8900
  %v9011 = vunpack.c.l.b16 %v8901
  %v9012 = vunpack.c.h.b16 %v8901
  %v9013 = vunpack.c.l.b16 %v8902
  %v9014 = vunpack.c.h.b16 %v8902
  %v9015 = vunpack.c.l.b16 %v8903
  %v9016 = vunpack.c.h.b16 %v8903
  %v9017 = vunpack.c.l.b16 %v8904
  %v9018 = vunpack.c.h.b16 %v8904
  %v9019 = vunpack.c.l.b16 %v8905
  %v9020 = vunpack.c.h.b16 %v8905
  %v9021 = vunpack.c.l.b16 %v8906
  %v9022 = vunpack.c.h.b16 %v8906
  %v9023 = vunpack.c.l.b16 %v8907
  %v9024 = vunpack.c.h.b16 %v8907
  %v9025 = vunpack.c.l.b16 %v8908
  %v9026 = vunpack.c.h.b16 %v8908
  %v9027 = vunpack.c.l.b16 %v8909
  %v9028 = vunpack.c.h.b16 %v8909
  %v9029 = vunpack.c.l.b16 %v8910
  %v9030 = vunpack.c.h.b16 %v8910
  %v9031 = vunpack.c.l.b16 %v8911
  %v9032 = vunpack.c.h.b16 %v8911
  %v9033 = vunpack.c.l.b16 %v8912
  %v9034 = vunpack.c.h.b16 %v8912
  %v9035 = vunpack.c.l.b16 %v8913
  %v9036 = vunpack.c.h.b16 %v8913
  %v9037 = vunpack.c.l.b16 %v8914
  %v9038 = vunpack.c.h.b16 %v8914
  %v9039 = vunpack.c.l.b16 %v8915
  %v9040 = vunpack.c.h.b16 %v8915
  %v9041 = vunpack.c.l.b16 %v8916
  %v9042 = vunpack.c.h.b16 %v8916
  %v9043 = vunpack.c.l.b16 %v8917
  %v9044 = vunpack.c.h.b16 %v8917
  %v9045 = vunpack.c.l.b16 %v8918
  %v9046 = vunpack.c.h.b16 %v8918
  %v9047 = vunpack.c.l.b16 %v8919
  %v9048 = vunpack.c.h.b16 %v8919
  %v9049 = vunpack.c.l.b16 %v8920
  %v9050 = vunpack.c.h.b16 %v8920
  %v9051 = vunpack.c.l.b16 %v8921
  %v9052 = vunpack.c.h.b16 %v8921
  %v9053 = vunpack.c.l.b16 %v8922
  %v9054 = vunpack.c.h.b16 %v8922
  %v9055 = vunpack.c.l.b16 %v8923
  %v9056 = vunpack.c.h.b16 %v8923
  %v9057 = vunpack.c.l.b16 %v8924
  %v9058 = vunpack.c.h.b16 %v8924
  %v9059 = vunpack.c.l.b16 %v8925
  %v9060 = vunpack.c.h.b16 %v8925
  %v9061 = vunpack.c.l.b16 %v8926
  %v9062 = vunpack.c.h.b16 %v8926
  %v9063 = vunpack.c.l.b16 %v8927
  %v9064 = vunpack.c.h.b16 %v8927
  %v9065 = vunpack.c.l.b16 %v8928
  %v9066 = vunpack.c.h.b16 %v8928
  %v9067 = vunpack.c.l.b16 %v8929
  %v9068 = vunpack.c.h.b16 %v8929
  %v9069 = vunpack.c.l.b16 %v8930
  %v9070 = vunpack.c.h.b16 %v8930
  %v9071 = vunpack.c.l.b16 %v8931
  %v9072 = vunpack.c.h.b16 %v8931
  %v9073 = vunpack.c.l.b16 %v8932
  %v9074 = vunpack.c.h.b16 %v8932
  %v9075 = vunpack.c.l.b16 %v8933
  %v9076 = vunpack.c.h.b16 %v8933
  %v9077 = vunpack.c.l.b16 %v8934
  %v9078 = vunpack.c.h.b16 %v8934
  %v9079 = vpack.c.b16 %v8985, %v8983
  %v9080 = vpack.c.b16 %v8986, %v8984
  %v9081 = vpack.c.b16 %v8989, %v8987
  %v9082 = vpack.c.b16 %v8990, %v8988
  %v9083 = vpack.c.b16 %v8993, %v8991
  %v9084 = vpack.c.b16 %v8994, %v8992
  %v9085 = vpack.c.b16 %v8997, %v8995
  %v9086 = vpack.c.b16 %v8998, %v8996
  %v9087 = vpack.c.b16 %v9001, %v8999
  %v9088 = vpack.c.b16 %v9002, %v9000
  %v9089 = vpack.c.b16 %v9005, %v9003
  %v9090 = vpack.c.b16 %v9006, %v9004
  %v9091 = vpack.c.b16 %v9009, %v9007
  %v9092 = vpack.c.b16 %v9010, %v9008
  %v9093 = vpack.c.b16 %v9013, %v9011
  %v9094 = vpack.c.b16 %v9014, %v9012
  %v9095 = vpack.c.b16 %v9017, %v9015
  %v9096 = vpack.c.b16 %v9018, %v9016
  %v9097 = vpack.c.b16 %v9021, %v9019
  %v9098 = vpack.c.b16 %v9022, %v9020
  %v9099 = vpack.c.b16 %v9025, %v9023
  %v9100 = vpack.c.b16 %v9026, %v9024
  %v9101 = vpack.c.b16 %v9029, %v9027
  %v9102 = vpack.c.b16 %v9030, %v9028
  %v9103 = vpack.c.b16 %v9033, %v9031
  %v9104 = vpack.c.b16 %v9034, %v9032
  %v9105 = vpack.c.b16 %v9037, %v9035
  %v9106 = vpack.c.b16 %v9038, %v9036
  %v9107 = vpack.c.b16 %v9041, %v9039
  %v9108 = vpack.c.b16 %v9042, %v9040
  %v9109 = vpack.c.b16 %v9045, %v9043
  %v9110 = vpack.c.b16 %v9046, %v9044
  %v9111 = vpack.c.b16 %v9049, %v9047
  %v9112 = vpack.c.b16 %v9050, %v9048
  %v9113 = vpack.c.b16 %v9053, %v9051
  %v9114 = vpack.c.b16 %v9054, %v9052
  %v9115 = vpack.c.b16 %v9057, %v9055
  %v9116 = vpack.c.b16 %v9058, %v9056
  %v9117 = vpack.c.b16 %v9061, %v9059
  %v9118 = vpack.c.b16 %v9062, %v9060
  %v9119 = vpack.c.b16 %v9065, %v9063
  %v9120 = vpack.c.b16 %v9066, %v9064
  %v9121 = vpack.c.b16 %v9069, %v9067
  %v9122 = vpack.c.b16 %v9070, %v9068
  %v9123 = vpack.c.b16 %v9073, %v9071
  %v9124 = vpack.c.b16 %v9074, %v9072
  %v9125 = vpack.c.b16 %v9077, %v9075
  %v9126 = vpack.c.b16 %v9078, %v9076
  %9175 = vmatprep.subr.bf16.mxu0 %v9080
  %9176 = vmatpush1.bf16.msra.mxu0 %v9079
  %9177 = vmatprep.subr.bf16.mxu0 %v9082
  %9178 = vmatpush1.bf16.msra.mxu0 %v9081
  %9179 = vmatprep.subr.bf16.mxu0 %v9084
  %9180 = vmatpush1.bf16.msra.mxu0 %v9083
  %9181 = vmatprep.subr.bf16.mxu0 %v9086
  %9182 = vmatpush1.bf16.msra.mxu0 %v9085
  %9183 = vmatprep.subr.bf16.mxu0 %v9088
  %9184 = vmatpush1.bf16.msra.mxu0 %v9087
  %9185 = vmatprep.subr.bf16.mxu0 %v9090
  %9186 = vmatpush1.bf16.msra.mxu0 %v9089
  %9187 = vmatprep.subr.bf16.mxu0 %v9092
  %9188 = vmatpush1.bf16.msra.mxu0 %v9091
  %9189 = vmatprep.subr.bf16.mxu0 %v9094
  %9190 = vmatpush1.bf16.msra.mxu0 %v9093
  %9191 = vmatprep.subr.bf16.mxu0 %v9096
  %9192 = vmatpush1.bf16.msra.mxu0 %v9095
  %9193 = vmatprep.subr.bf16.mxu0 %v9098
  %9194 = vmatpush1.bf16.msra.mxu0 %v9097
  %9195 = vmatprep.subr.bf16.mxu0 %v9100
  %9196 = vmatpush1.bf16.msra.mxu0 %v9099
  %9197 = vmatprep.subr.bf16.mxu0 %v9102
  %9198 = vmatpush1.bf16.msra.mxu0 %v9101
  %9199 = vmatprep.subr.bf16.mxu0 %v9104
  %9200 = vmatpush1.bf16.msra.mxu0 %v9103
  %9201 = vmatprep.subr.bf16.mxu0 %v9106
  %9202 = vmatpush1.bf16.msra.mxu0 %v9105
  %9203 = vmatprep.subr.bf16.mxu0 %v9108
  %9204 = vmatpush1.bf16.msra.mxu0 %v9107
  %9205 = vmatprep.subr.bf16.mxu0 %v9110
  %9206 = vmatpush1.bf16.msra.mxu0 %v9109
  %9207 = vmatprep.mubr.bf16.mxu0 %v5865
  %9208 = vmatmul.mubr.bf16.gmra.mrb[0].mxu0 %v5864
  %v9209 = vpop.f32.mrb[0].mxu0
  %v9210 = vadd.f32 0.0, %v9209
  %v9211 = vpop.f32.mrb[0].mxu0
  %v9212 = vadd.f32 0.0, %v9211
  %v9213 = vpop.f32.mrb[0].mxu0
  %v9214 = vadd.f32 0.0, %v9213
  %v9215 = vpop.f32.mrb[0].mxu0
  %v9216 = vadd.f32 0.0, %v9215
  %9217 = vmatprep.mubr.bf16.mxu0 %v5868
  %9218 = vmatmul.mubr.bf16.gmra.mrb[0].mxu0 %v5867
  %v9219 = vpop.f32.mrb[0].mxu0
  %v9220 = vadd.f32 0.0, %v9219
  %v9221 = vpop.f32.mrb[0].mxu0
  %v9222 = vadd.f32 0.0, %v9221
  %v9223 = vpop.f32.mrb[0].mxu0
  %v9224 = vadd.f32 0.0, %v9223
  %v9225 = vpop.f32.mrb[0].mxu0
  %v9226 = vadd.f32 0.0, %v9225
  %9227 = vmatprep.mubr.bf16.mxu0 %v5871
  %9228 = vmatmul.mubr.bf16.gmra.mrb[0].mxu0 %v5870
  %v9229 = vpop.f32.mrb[0].mxu0
  %v9230 = vadd.f32 0.0, %v9229
  %v9231 = vpop.f32.mrb[0].mxu0
  %v9232 = vadd.f32 0.0, %v9231
  %v9233 = vpop.f32.mrb[0].mxu0
  %v9234 = vadd.f32 0.0, %v9233
  %v9235 = vpop.f32.mrb[0].mxu0
  %v9236 = vadd.f32 0.0, %v9235
  %9237 = vmatprep.mubr.bf16.mxu0 %v5874
  %9238 = vmatmul.mubr.bf16.gmra.mrb[0].mxu0 %v5873
  %v9239 = vpop.f32.mrb[0].mxu0
  %v9240 = vadd.f32 0.0, %v9239
  %v9241 = vpop.f32.mrb[0].mxu0
  %v9242 = vadd.f32 0.0, %v9241
  %v9243 = vpop.f32.mrb[0].mxu0
  %v9244 = vadd.f32 0.0, %v9243
  %v9245 = vpop.f32.mrb[0].mxu0
  %v9246 = vadd.f32 0.0, %v9245
  %9247 = vmatprep.mubr.bf16.mxu0 %v5925
  %9248 = vmatmul.mubr.bf16.gmra.mrb[0].mxu0 %v5924
  %v9249 = vpop.f32.mrb[0].mxu0
  %v9250 = vadd.f32 0.0, %v9249
  %v9251 = vpop.f32.mrb[0].mxu0
  %v9252 = vadd.f32 0.0, %v9251
  %v9253 = vpop.f32.mrb[0].mxu0
  %v9254 = vadd.f32 0.0, %v9253
  %v9255 = vpop.f32.mrb[0].mxu0
  %v9256 = vadd.f32 0.0, %v9255
  %9257 = vmatprep.mubr.bf16.mxu0 %v5928
  %9258 = vmatmul.mubr.bf16.gmra.mrb[0].mxu0 %v5927
  %v9259 = vpop.f32.mrb[0].mxu0
  %v9260 = vadd.f32 0.0, %v9259
  %v9261 = vpop.f32.mrb[0].mxu0
  %v9262 = vadd.f32 0.0, %v9261
  %v9263 = vpop.f32.mrb[0].mxu0
  %v9264 = vadd.f32 0.0, %v9263
  %v9265 = vpop.f32.mrb[0].mxu0
  %v9266 = vadd.f32 0.0, %v9265
  %9267 = vdwg.mxu0
  %9268 = vmatprep.subr.bf16.mxu0 %v9112
  %9269 = vmatpush1.bf16.msra.mxu0 %v9111
  %9270 = vmatprep.subr.bf16.mxu0 %v9114
  %9271 = vmatpush1.bf16.msra.mxu0 %v9113
  %9272 = vmatprep.subr.bf16.mxu0 %v9116
  %9273 = vmatpush1.bf16.msra.mxu0 %v9115
  %9274 = vmatprep.subr.bf16.mxu0 %v9118
  %9275 = vmatpush1.bf16.msra.mxu0 %v9117
  %9276 = vmatprep.subr.bf16.mxu0 %v9120
  %9277 = vmatpush1.bf16.msra.mxu0 %v9119
  %9278 = vmatprep.subr.bf16.mxu0 %v9122
  %9279 = vmatpush1.bf16.msra.mxu0 %v9121
  %9280 = vmatprep.subr.bf16.mxu0 %v9124
  %9281 = vmatpush1.bf16.msra.mxu0 %v9123
  %9282 = vmatprep.subr.bf16.mxu0 %v9126
  %9283 = vmatpush1.bf16.msra.mxu0 %v9125
  %9284 = vmatprep.subr.bf16.mxu0 0
  %9285 = vmatpush1.bf16.msra.mxu0 0
  %9286 = vmatprep.subr.bf16.mxu0 0
  %9287 = vmatpush1.bf16.msra.mxu0 0
  %9288 = vmatprep.subr.bf16.mxu0 0
  %9289 = vmatpush1.bf16.msra.mxu0 0
  %9290 = vmatprep.subr.bf16.mxu0 0
  %9291 = vmatpush1.bf16.msra.mxu0 0
  %9292 = vmatprep.subr.bf16.mxu0 0
  %9293 = vmatpush1.bf16.msra.mxu0 0
  %9294 = vmatprep.subr.bf16.mxu0 0
  %9295 = vmatpush1.bf16.msra.mxu0 0
  %9296 = vmatprep.subr.bf16.mxu0 0
  %9297 = vmatpush1.bf16.msra.mxu0 0
  %9298 = vmatprep.subr.bf16.mxu0 0
  %9299 = vmatpush1.bf16.msra.mxu0 0
  %9300 = vmatprep.mubr.bf16.mxu0 0
  %9301 = vmatmul.mubr.bf16.gmra.mrb[0].mxu0 %v5866
  %v9302 = vpop.f32.mrb[0].mxu0
  %v9303 = vadd.f32 %v9210, %v9302
  %v9304 = vpop.f32.mrb[0].mxu0
  %v9305 = vadd.f32 %v9212, %v9304
  %v9306 = vpop.f32.mrb[0].mxu0
  %v9307 = vadd.f32 %v9214, %v9306
  %v9308 = vpop.f32.mrb[0].mxu0
  %v9309 = vadd.f32 %v9216, %v9308
  %9310 = vmatprep.mubr.bf16.mxu0 0
  %9311 = vmatmul.mubr.bf16.gmra.mrb[0].mxu0 %v5869
  %v9312 = vpop.f32.mrb[0].mxu0
  %v9313 = vadd.f32 %v9220, %v9312
  %v9314 = vpop.f32.mrb[0].mxu0
  %v9315 = vadd.f32 %v9222, %v9314
  %v9316 = vpop.f32.mrb[0].mxu0
  %v9317 = vadd.f32 %v9224, %v9316
  %v9318 = vpop.f32.mrb[0].mxu0
  %v9319 = vadd.f32 %v9226, %v9318
  %9320 = vmatprep.mubr.bf16.mxu0 0
  %9321 = vmatmul.mubr.bf16.gmra.mrb[0].mxu0 %v5872
  %v9322 = vpop.f32.mrb[0].mxu0
  %v9323 = vadd.f32 %v9230, %v9322
  %v9324 = vpop.f32.mrb[0].mxu0
  %v9325 = vadd.f32 %v9232, %v9324
  %v9326 = vpop.f32.mrb[0].mxu0
  %v9327 = vadd.f32 %v9234, %v9326
  %v9328 = vpop.f32.mrb[0].mxu0
  %v9329 = vadd.f32 %v9236, %v9328
  %9330 = vmatprep.mubr.bf16.mxu0 0
  %9331 = vmatmul.mubr.bf16.gmra.mrb[0].mxu0 %v5875
  %v9332 = vpop.f32.mrb[0].mxu0
  %v9333 = vadd.f32 %v9240, %v9332
  %v9334 = vpop.f32.mrb[0].mxu0
  %v9335 = vadd.f32 %v9242, %v9334
  %v9336 = vpop.f32.mrb[0].mxu0
  %v9337 = vadd.f32 %v9244, %v9336
  %v9338 = vpop.f32.mrb[0].mxu0
  %v9339 = vadd.f32 %v9246, %v9338
  %9340 = vmatprep.mubr.bf16.mxu0 0
  %9341 = vmatmul.mubr.bf16.gmra.mrb[0].mxu0 %v5926
  %v9342 = vpop.f32.mrb[0].mxu0
  %v9343 = vadd.f32 %v9250, %v9342
  %v9344 = vpop.f32.mrb[0].mxu0
  %v9345 = vadd.f32 %v9252, %v9344
  %v9346 = vpop.f32.mrb[0].mxu0
  %v9347 = vadd.f32 %v9254, %v9346
  %v9348 = vpop.f32.mrb[0].mxu0
  %v9349 = vadd.f32 %v9256, %v9348
  %9350 = vmatprep.mubr.bf16.mxu0 0
  %9351 = vmatmul.mubr.bf16.gmra.mrb[0].mxu0 %v5929
  %v9352 = vpop.f32.mrb[0].mxu0
  %v9353 = vadd.f32 %v9260, %v9352
  %v9354 = vpop.f32.mrb[0].mxu0
  %v9355 = vadd.f32 %v9262, %v9354
  %v9356 = vpop.f32.mrb[0].mxu0
  %v9357 = vadd.f32 %v9264, %v9356
  %v9358 = vpop.f32.mrb[0].mxu0
  %v9359 = vadd.f32 %v9266, %v9358
  %9360 = vdwg.mxu0
  %v9409 = vunpack.c.l.b16 %v8838
  %v9410 = vunpack.c.h.b16 %v8838
  %v9411 = vunpack.c.l.b16 %v8839
  %v9412 = vunpack.c.h.b16 %v8839
  %v9413 = vunpack.c.l.b16 %v8840
  %v9414 = vunpack.c.h.b16 %v8840
  %v9415 = vunpack.c.l.b16 %v8841
  %v9416 = vunpack.c.h.b16 %v8841
  %v9417 = vunpack.c.l.b16 %v8842
  %v9418 = vunpack.c.h.b16 %v8842
  %v9419 = vunpack.c.l.b16 %v8843
  %v9420 = vunpack.c.h.b16 %v8843
  %v9421 = vunpack.c.l.b16 %v8844
  %v9422 = vunpack.c.h.b16 %v8844
  %v9423 = vunpack.c.l.b16 %v8845
  %v9424 = vunpack.c.h.b16 %v8845
  %v9425 = vunpack.c.l.b16 %v8846
  %v9426 = vunpack.c.h.b16 %v8846
  %v9427 = vunpack.c.l.b16 %v8847
  %v9428 = vunpack.c.h.b16 %v8847
  %v9429 = vunpack.c.l.b16 %v8848
  %v9430 = vunpack.c.h.b16 %v8848
  %v9431 = vunpack.c.l.b16 %v8849
  %v9432 = vunpack.c.h.b16 %v8849
  %v9433 = vunpack.c.l.b16 %v8850
  %v9434 = vunpack.c.h.b16 %v8850
  %v9435 = vunpack.c.l.b16 %v8851
  %v9436 = vunpack.c.h.b16 %v8851
  %v9437 = vunpack.c.l.b16 %v8852
  %v9438 = vunpack.c.h.b16 %v8852
  %v9439 = vunpack.c.l.b16 %v8853
  %v9440 = vunpack.c.h.b16 %v8853
  %v9441 = vunpack.c.l.b16 %v8854
  %v9442 = vunpack.c.h.b16 %v8854
  %v9443 = vunpack.c.l.b16 %v8855
  %v9444 = vunpack.c.h.b16 %v8855
  %v9445 = vunpack.c.l.b16 %v8856
  %v9446 = vunpack.c.h.b16 %v8856
  %v9447 = vunpack.c.l.b16 %v8857
  %v9448 = vunpack.c.h.b16 %v8857
  %v9449 = vunpack.c.l.b16 %v8858
  %v9450 = vunpack.c.h.b16 %v8858
  %v9451 = vunpack.c.l.b16 %v8859
  %v9452 = vunpack.c.h.b16 %v8859
  %v9453 = vunpack.c.l.b16 %v8860
  %v9454 = vunpack.c.h.b16 %v8860
  %v9455 = vunpack.c.l.b16 %v8861
  %v9456 = vunpack.c.h.b16 %v8861
  %v9457 = vunpack.c.l.b16 %v8862
  %v9458 = vunpack.c.h.b16 %v8862
  %v9459 = vunpack.c.l.b16 %v8863
  %v9460 = vunpack.c.h.b16 %v8863
  %v9461 = vunpack.c.l.b16 %v8864
  %v9462 = vunpack.c.h.b16 %v8864
  %v9463 = vunpack.c.l.b16 %v8865
  %v9464 = vunpack.c.h.b16 %v8865
  %v9465 = vunpack.c.l.b16 %v8866
  %v9466 = vunpack.c.h.b16 %v8866
  %v9467 = vunpack.c.l.b16 %v8867
  %v9468 = vunpack.c.h.b16 %v8867
  %v9469 = vunpack.c.l.b16 %v8868
  %v9470 = vunpack.c.h.b16 %v8868
  %v9471 = vunpack.c.l.b16 %v8869
  %v9472 = vunpack.c.h.b16 %v8869
  %v9473 = vunpack.c.l.b16 %v8870
  %v9474 = vunpack.c.h.b16 %v8870
  %v9475 = vunpack.c.l.b16 %v8871
  %v9476 = vunpack.c.h.b16 %v8871
  %v9477 = vunpack.c.l.b16 %v8872
  %v9478 = vunpack.c.h.b16 %v8872
  %v9479 = vunpack.c.l.b16 %v8873
  %v9480 = vunpack.c.h.b16 %v8873
  %v9481 = vunpack.c.l.b16 %v8874
  %v9482 = vunpack.c.h.b16 %v8874
  %v9483 = vunpack.c.l.b16 %v8875
  %v9484 = vunpack.c.h.b16 %v8875
  %v9485 = vunpack.c.l.b16 %v8876
  %v9486 = vunpack.c.h.b16 %v8876
  %v9487 = vunpack.c.l.b16 %v8877
  %v9488 = vunpack.c.h.b16 %v8877
  %v9489 = vunpack.c.l.b16 %v8878
  %v9490 = vunpack.c.h.b16 %v8878
  %v9491 = vunpack.c.l.b16 %v8879
  %v9492 = vunpack.c.h.b16 %v8879
  %v9493 = vunpack.c.l.b16 %v8880
  %v9494 = vunpack.c.h.b16 %v8880
  %v9495 = vunpack.c.l.b16 %v8881
  %v9496 = vunpack.c.h.b16 %v8881
  %v9497 = vunpack.c.l.b16 %v8882
  %v9498 = vunpack.c.h.b16 %v8882
  %v9499 = vunpack.c.l.b16 %v8883
  %v9500 = vunpack.c.h.b16 %v8883
  %v9501 = vunpack.c.l.b16 %v8884
  %v9502 = vunpack.c.h.b16 %v8884
  %v9503 = vunpack.c.l.b16 %v8885
  %v9504 = vunpack.c.h.b16 %v8885
  %v9505 = vpack.c.b16 %v9411, %v9409
  %v9506 = vpack.c.b16 %v9412, %v9410
  %v9507 = vpack.c.b16 %v9415, %v9413
  %v9508 = vpack.c.b16 %v9416, %v9414
  %v9509 = vpack.c.b16 %v9419, %v9417
  %v9510 = vpack.c.b16 %v9420, %v9418
  %v9511 = vpack.c.b16 %v9423, %v9421
  %v9512 = vpack.c.b16 %v9424, %v9422
  %v9513 = vpack.c.b16 %v9427, %v9425
  %v9514 = vpack.c.b16 %v9428, %v9426
  %v9515 = vpack.c.b16 %v9431, %v9429
  %v9516 = vpack.c.b16 %v9432, %v9430
  %v9517 = vpack.c.b16 %v9435, %v9433
  %v9518 = vpack.c.b16 %v9436, %v9434
  %v9519 = vpack.c.b16 %v9439, %v9437
  %v9520 = vpack.c.b16 %v9440, %v9438
  %v9521 = vpack.c.b16 %v9443, %v9441
  %v9522 = vpack.c.b16 %v9444, %v9442
  %v9523 = vpack.c.b16 %v9447, %v9445
  %v9524 = vpack.c.b16 %v9448, %v9446
  %v9525 = vpack.c.b16 %v9451, %v9449
  %v9526 = vpack.c.b16 %v9452, %v9450
  %v9527 = vpack.c.b16 %v9455, %v9453
  %v9528 = vpack.c.b16 %v9456, %v9454
  %v9529 = vpack.c.b16 %v9459, %v9457
  %v9530 = vpack.c.b16 %v9460, %v9458
  %v9531 = vpack.c.b16 %v9463, %v9461
  %v9532 = vpack.c.b16 %v9464, %v9462
  %v9533 = vpack.c.b16 %v9467, %v9465
  %v9534 = vpack.c.b16 %v9468, %v9466
  %v9535 = vpack.c.b16 %v9471, %v9469
  %v9536 = vpack.c.b16 %v9472, %v9470
  %v9537 = vpack.c.b16 %v9475, %v9473
  %v9538 = vpack.c.b16 %v9476, %v9474
  %v9539 = vpack.c.b16 %v9479, %v9477
  %v9540 = vpack.c.b16 %v9480, %v9478
  %v9541 = vpack.c.b16 %v9483, %v9481
  %v9542 = vpack.c.b16 %v9484, %v9482
  %v9543 = vpack.c.b16 %v9487, %v9485
  %v9544 = vpack.c.b16 %v9488, %v9486
  %v9545 = vpack.c.b16 %v9491, %v9489
  %v9546 = vpack.c.b16 %v9492, %v9490
  %v9547 = vpack.c.b16 %v9495, %v9493
  %v9548 = vpack.c.b16 %v9496, %v9494
  %v9549 = vpack.c.b16 %v9499, %v9497
  %v9550 = vpack.c.b16 %v9500, %v9498
  %v9551 = vpack.c.b16 %v9503, %v9501
  %v9552 = vpack.c.b16 %v9504, %v9502
  %9601 = vmatprep.subr.bf16.mxu0 %v9506
  %9602 = vmatpush1.bf16.msra.mxu0 %v9505
  %9603 = vmatprep.subr.bf16.mxu0 %v9508
  %9604 = vmatpush1.bf16.msra.mxu0 %v9507
  %9605 = vmatprep.subr.bf16.mxu0 %v9510
  %9606 = vmatpush1.bf16.msra.mxu0 %v9509
  %9607 = vmatprep.subr.bf16.mxu0 %v9512
  %9608 = vmatpush1.bf16.msra.mxu0 %v9511
  %9609 = vmatprep.subr.bf16.mxu0 %v9514
  %9610 = vmatpush1.bf16.msra.mxu0 %v9513
  %9611 = vmatprep.subr.bf16.mxu0 %v9516
  %9612 = vmatpush1.bf16.msra.mxu0 %v9515
  %9613 = vmatprep.subr.bf16.mxu0 %v9518
  %9614 = vmatpush1.bf16.msra.mxu0 %v9517
  %9615 = vmatprep.subr.bf16.mxu0 %v9520
  %9616 = vmatpush1.bf16.msra.mxu0 %v9519
  %9617 = vmatprep.subr.bf16.mxu0 %v9522
  %9618 = vmatpush1.bf16.msra.mxu0 %v9521
  %9619 = vmatprep.subr.bf16.mxu0 %v9524
  %9620 = vmatpush1.bf16.msra.mxu0 %v9523
  %9621 = vmatprep.subr.bf16.mxu0 %v9526
  %9622 = vmatpush1.bf16.msra.mxu0 %v9525
  %9623 = vmatprep.subr.bf16.mxu0 %v9528
  %9624 = vmatpush1.bf16.msra.mxu0 %v9527
  %9625 = vmatprep.subr.bf16.mxu0 %v9530
  %9626 = vmatpush1.bf16.msra.mxu0 %v9529
  %9627 = vmatprep.subr.bf16.mxu0 %v9532
  %9628 = vmatpush1.bf16.msra.mxu0 %v9531
  %9629 = vmatprep.subr.bf16.mxu0 %v9534
  %9630 = vmatpush1.bf16.msra.mxu0 %v9533
  %9631 = vmatprep.subr.bf16.mxu0 %v9536
  %9632 = vmatpush1.bf16.msra.mxu0 %v9535
  %9633 = vmatprep.mubr.bf16.mxu0 %v5859
  %9634 = vmatmul.mubr.bf16.gmra.mrb[0].mxu0 %v5858
  %v9635 = vpop.f32.mrb[0].mxu0
  %v9636 = vadd.f32 %v9303, %v9635
  %v9637 = vpop.f32.mrb[0].mxu0
  %v9638 = vadd.f32 %v9305, %v9637
  %v9639 = vpop.f32.mrb[0].mxu0
  %v9640 = vadd.f32 %v9307, %v9639
  %v9641 = vpop.f32.mrb[0].mxu0
  %v9642 = vadd.f32 %v9309, %v9641
  %9643 = vmatprep.mubr.bf16.mxu0 %v5862
  %9644 = vmatmul.mubr.bf16.gmra.mrb[0].mxu0 %v5861
  %v9645 = vpop.f32.mrb[0].mxu0
  %v9646 = vadd.f32 %v9313, %v9645
  %v9647 = vpop.f32.mrb[0].mxu0
  %v9648 = vadd.f32 %v9315, %v9647
  %v9649 = vpop.f32.mrb[0].mxu0
  %v9650 = vadd.f32 %v9317, %v9649
  %v9651 = vpop.f32.mrb[0].mxu0
  %v9652 = vadd.f32 %v9319, %v9651
  %9653 = vmatprep.mubr.bf16.mxu0 %v5865
  %9654 = vmatmul.mubr.bf16.gmra.mrb[0].mxu0 %v5864
  %v9655 = vpop.f32.mrb[0].mxu0
  %v9656 = vadd.f32 %v9323, %v9655
  %v9657 = vpop.f32.mrb[0].mxu0
  %v9658 = vadd.f32 %v9325, %v9657
  %v9659 = vpop.f32.mrb[0].mxu0
  %v9660 = vadd.f32 %v9327, %v9659
  %v9661 = vpop.f32.mrb[0].mxu0
  %v9662 = vadd.f32 %v9329, %v9661
  %9663 = vmatprep.mubr.bf16.mxu0 %v5868
  %9664 = vmatmul.mubr.bf16.gmra.mrb[0].mxu0 %v5867
  %v9665 = vpop.f32.mrb[0].mxu0
  %v9666 = vadd.f32 %v9333, %v9665
  %v9667 = vpop.f32.mrb[0].mxu0
  %v9668 = vadd.f32 %v9335, %v9667
  %v9669 = vpop.f32.mrb[0].mxu0
  %v9670 = vadd.f32 %v9337, %v9669
  %v9671 = vpop.f32.mrb[0].mxu0
  %v9672 = vadd.f32 %v9339, %v9671
  %9673 = vmatprep.mubr.bf16.mxu0 %v5871
  %9674 = vmatmul.mubr.bf16.gmra.mrb[0].mxu0 %v5870
  %v9675 = vpop.f32.mrb[0].mxu0
  %v9676 = vadd.f32 %v9343, %v9675
  %v9677 = vpop.f32.mrb[0].mxu0
  %v9678 = vadd.f32 %v9345, %v9677
  %v9679 = vpop.f32.mrb[0].mxu0
  %v9680 = vadd.f32 %v9347, %v9679
  %v9681 = vpop.f32.mrb[0].mxu0
  %v9682 = vadd.f32 %v9349, %v9681
  %9683 = vmatprep.mubr.bf16.mxu0 %v5874
  %9684 = vmatmul.mubr.bf16.gmra.mrb[0].mxu0 %v5873
  %v9685 = vpop.f32.mrb[0].mxu0
  %v9686 = vadd.f32 %v9353, %v9685
  %v9687 = vpop.f32.mrb[0].mxu0
  %v9688 = vadd.f32 %v9355, %v9687
  %v9689 = vpop.f32.mrb[0].mxu0
  %v9690 = vadd.f32 %v9357, %v9689
  %v9691 = vpop.f32.mrb[0].mxu0
  %v9692 = vadd.f32 %v9359, %v9691
  %9693 = vdwg.mxu0
  %9694 = vmatprep.subr.bf16.mxu0 %v9538
  %9695 = vmatpush1.bf16.msra.mxu0 %v9537
  %9696 = vmatprep.subr.bf16.mxu0 %v9540
  %9697 = vmatpush1.bf16.msra.mxu0 %v9539
  %9698 = vmatprep.subr.bf16.mxu0 %v9542
  %9699 = vmatpush1.bf16.msra.mxu0 %v9541
  %9700 = vmatprep.subr.bf16.mxu0 %v9544
  %9701 = vmatpush1.bf16.msra.mxu0 %v9543
  %9702 = vmatprep.subr.bf16.mxu0 %v9546
  %9703 = vmatpush1.bf16.msra.mxu0 %v9545
  %9704 = vmatprep.subr.bf16.mxu0 %v9548
  %9705 = vmatpush1.bf16.msra.mxu0 %v9547
  %9706 = vmatprep.subr.bf16.mxu0 %v9550
  %9707 = vmatpush1.bf16.msra.mxu0 %v9549
  %9708 = vmatprep.subr.bf16.mxu0 %v9552
  %9709 = vmatpush1.bf16.msra.mxu0 %v9551
  %9710 = vmatprep.subr.bf16.mxu0 0
  %9711 = vmatpush1.bf16.msra.mxu0 0
  %9712 = vmatprep.subr.bf16.mxu0 0
  %9713 = vmatpush1.bf16.msra.mxu0 0
  %9714 = vmatprep.subr.bf16.mxu0 0
  %9715 = vmatpush1.bf16.msra.mxu0 0
  %9716 = vmatprep.subr.bf16.mxu0 0
  %9717 = vmatpush1.bf16.msra.mxu0 0
  %9718 = vmatprep.subr.bf16.mxu0 0
  %9719 = vmatpush1.bf16.msra.mxu0 0
  %9720 = vmatprep.subr.bf16.mxu0 0
  %9721 = vmatpush1.bf16.msra.mxu0 0
  %9722 = vmatprep.subr.bf16.mxu0 0
  %9723 = vmatpush1.bf16.msra.mxu0 0
  %9724 = vmatprep.subr.bf16.mxu0 0
  %9725 = vmatpush1.bf16.msra.mxu0 0
  %9726 = vmatprep.mubr.bf16.mxu0 0
  %9727 = vmatmul.mubr.bf16.gmra.mrb[0].mxu0 %v5860
  %v9728 = vpop.f32.mrb[0].mxu0
  %v9729 = vadd.f32 %v9636, %v9728
  %v9730 = vpop.f32.mrb[0].mxu0
  %v9731 = vadd.f32 %v9638, %v9730
  %v9732 = vpop.f32.mrb[0].mxu0
  %v9733 = vadd.f32 %v9640, %v9732
  %v9734 = vpop.f32.mrb[0].mxu0
  %v9735 = vadd.f32 %v9642, %v9734
  %9736 = vmatprep.mubr.bf16.mxu0 0
  %9737 = vmatmul.mubr.bf16.gmra.mrb[0].mxu0 %v5863
  %v9738 = vpop.f32.mrb[0].mxu0
  %v9739 = vadd.f32 %v9646, %v9738
  %v9740 = vpop.f32.mrb[0].mxu0
  %v9741 = vadd.f32 %v9648, %v9740
  %v9742 = vpop.f32.mrb[0].mxu0
  %v9743 = vadd.f32 %v9650, %v9742
  %v9744 = vpop.f32.mrb[0].mxu0
  %v9745 = vadd.f32 %v9652, %v9744
  %9746 = vmatprep.mubr.bf16.mxu0 0
  %9747 = vmatmul.mubr.bf16.gmra.mrb[0].mxu0 %v5866
  %v9748 = vpop.f32.mrb[0].mxu0
  %v9749 = vadd.f32 %v9656, %v9748
  %v9750 = vpop.f32.mrb[0].mxu0
  %v9751 = vadd.f32 %v9658, %v9750
  %v9752 = vpop.f32.mrb[0].mxu0
  %v9753 = vadd.f32 %v9660, %v9752
  %v9754 = vpop.f32.mrb[0].mxu0
  %v9755 = vadd.f32 %v9662, %v9754
  %9756 = vmatprep.mubr.bf16.mxu0 0
  %9757 = vmatmul.mubr.bf16.gmra.mrb[0].mxu0 %v5869
  %v9758 = vpop.f32.mrb[0].mxu0
  %v9759 = vadd.f32 %v9666, %v9758
  %v9760 = vpop.f32.mrb[0].mxu0
  %v9761 = vadd.f32 %v9668, %v9760
  %v9762 = vpop.f32.mrb[0].mxu0
  %v9763 = vadd.f32 %v9670, %v9762
  %v9764 = vpop.f32.mrb[0].mxu0
  %v9765 = vadd.f32 %v9672, %v9764
  %9766 = vmatprep.mubr.bf16.mxu0 0
  %9767 = vmatmul.mubr.bf16.gmra.mrb[0].mxu0 %v5872
  %v9768 = vpop.f32.mrb[0].mxu0
  %v9769 = vadd.f32 %v9676, %v9768
  %v9770 = vpop.f32.mrb[0].mxu0
  %v9771 = vadd.f32 %v9678, %v9770
  %v9772 = vpop.f32.mrb[0].mxu0
  %v9773 = vadd.f32 %v9680, %v9772
  %v9774 = vpop.f32.mrb[0].mxu0
  %v9775 = vadd.f32 %v9682, %v9774
  %9776 = vmatprep.mubr.bf16.mxu0 0
  %9777 = vmatmul.mubr.bf16.gmra.mrb[0].mxu0 %v5875
  %v9778 = vpop.f32.mrb[0].mxu0
  %v9779 = vadd.f32 %v9686, %v9778
  %v9780 = vpop.f32.mrb[0].mxu0
  %v9781 = vadd.f32 %v9688, %v9780
  %v9782 = vpop.f32.mrb[0].mxu0
  %v9783 = vadd.f32 %v9690, %v9782
  %v9784 = vpop.f32.mrb[0].mxu0
  %v9785 = vadd.f32 %v9692, %v9784
  %9786 = vdwg.mxu0
  %s9787 = scalar_lea.vmem %s3, 3072
  %v9788 = vld [vmem:[%s9787] sm:$0xff]
  %v9789 = vld [vmem:[%s9787 + $0x8] sm:$0xff]
  %v9790 = vld [vmem:[%s9787 + $0x10] sm:$0xff]
  %v9791 = vld [vmem:[%s9787 + $0x18] sm:$0xff]
  %v9792 = vld [vmem:[%s9787 + $0x20] sm:$0xff]
  %v9793 = vld [vmem:[%s9787 + $0x28] sm:$0xff]
  %v9794 = vld [vmem:[%s9787 + $0x30] sm:$0xff]
  %v9795 = vld [vmem:[%s9787 + $0x38] sm:$0xff]
  %v9796 = vld [vmem:[%s9787 + $0x40] sm:$0xff]
  %v9797 = vld [vmem:[%s9787 + $0x48] sm:$0xff]
  %v9798 = vld [vmem:[%s9787 + $0x50] sm:$0xff]
  %v9799 = vld [vmem:[%s9787 + $0x58] sm:$0xff]
  %v9800 = vld [vmem:[%s9787 + $0x60] sm:$0xff]
  %v9801 = vld [vmem:[%s9787 + $0x68] sm:$0xff]
  %v9802 = vld [vmem:[%s9787 + $0x70] sm:$0xff]
  %v9803 = vld [vmem:[%s9787 + $0x78] sm:$0xff]
  %v9804 = vld [vmem:[%s9787 + $0x80] sm:$0xff]
  %v9805 = vld [vmem:[%s9787 + $0x88] sm:$0xff]
  %v9806 = vld [vmem:[%s9787 + $0x90] sm:$0xff]
  %v9807 = vld [vmem:[%s9787 + $0x98] sm:$0xff]
  %v9808 = vld [vmem:[%s9787 + $0xa0] sm:$0xff]
  %v9809 = vld [vmem:[%s9787 + $0xa8] sm:$0xff]
  %v9810 = vld [vmem:[%s9787 + $0xb0] sm:$0xff]
  %v9811 = vld [vmem:[%s9787 + $0xb8] sm:$0xff]
  %v9812 = vld [vmem:[%s9787 + $0xc0] sm:$0xff]
  %v9813 = vld [vmem:[%s9787 + $0xc8] sm:$0xff]
  %v9814 = vld [vmem:[%s9787 + $0xd0] sm:$0xff]
  %v9815 = vld [vmem:[%s9787 + $0xd8] sm:$0xff]
  %v9816 = vld [vmem:[%s9787 + $0xe0] sm:$0xff]
  %v9817 = vld [vmem:[%s9787 + $0xe8] sm:$0xff]
  %v9818 = vld [vmem:[%s9787 + $0xf0] sm:$0xff]
  %v9819 = vld [vmem:[%s9787 + $0xf8] sm:$0xff]
  %v9820 = vld [vmem:[%s9787 + $0x100] sm:$0xff]
  %v9821 = vld [vmem:[%s9787 + $0x108] sm:$0xff]
  %v9822 = vld [vmem:[%s9787 + $0x110] sm:$0xff]
  %v9823 = vld [vmem:[%s9787 + $0x118] sm:$0xff]
  %v9824 = vld [vmem:[%s9787 + $0x120] sm:$0xff]
  %v9825 = vld [vmem:[%s9787 + $0x128] sm:$0xff]
  %v9826 = vld [vmem:[%s9787 + $0x130] sm:$0xff]
  %v9827 = vld [vmem:[%s9787 + $0x138] sm:$0xff]
  %v9828 = vld [vmem:[%s9787 + $0x140] sm:$0xff]
  %v9829 = vld [vmem:[%s9787 + $0x148] sm:$0xff]
  %v9830 = vld [vmem:[%s9787 + $0x150] sm:$0xff]
  %v9831 = vld [vmem:[%s9787 + $0x158] sm:$0xff]
  %v9832 = vld [vmem:[%s9787 + $0x160] sm:$0xff]
  %v9833 = vld [vmem:[%s9787 + $0x168] sm:$0xff]
  %v9834 = vld [vmem:[%s9787 + $0x170] sm:$0xff]
  %v9835 = vld [vmem:[%s9787 + $0x178] sm:$0xff]
  %v9884 = vunpack.c.l.b16 %v9788
  %v9885 = vunpack.c.h.b16 %v9788
  %v9886 = vunpack.c.l.b16 %v9789
  %v9887 = vunpack.c.h.b16 %v9789
  %v9888 = vunpack.c.l.b16 %v9790
  %v9889 = vunpack.c.h.b16 %v9790
  %v9890 = vunpack.c.l.b16 %v9791
  %v9891 = vunpack.c.h.b16 %v9791
  %v9892 = vunpack.c.l.b16 %v9792
  %v9893 = vunpack.c.h.b16 %v9792
  %v9894 = vunpack.c.l.b16 %v9793
  %v9895 = vunpack.c.h.b16 %v9793
  %v9896 = vunpack.c.l.b16 %v9794
  %v9897 = vunpack.c.h.b16 %v9794
  %v9898 = vunpack.c.l.b16 %v9795
  %v9899 = vunpack.c.h.b16 %v9795
  %v9900 = vunpack.c.l.b16 %v9796
  %v9901 = vunpack.c.h.b16 %v9796
  %v9902 = vunpack.c.l.b16 %v9797
  %v9903 = vunpack.c.h.b16 %v9797
  %v9904 = vunpack.c.l.b16 %v9798
  %v9905 = vunpack.c.h.b16 %v9798
  %v9906 = vunpack.c.l.b16 %v9799
  %v9907 = vunpack.c.h.b16 %v9799
  %v9908 = vunpack.c.l.b16 %v9800
  %v9909 = vunpack.c.h.b16 %v9800
  %v9910 = vunpack.c.l.b16 %v9801
  %v9911 = vunpack.c.h.b16 %v9801
  %v9912 = vunpack.c.l.b16 %v9802
  %v9913 = vunpack.c.h.b16 %v9802
  %v9914 = vunpack.c.l.b16 %v9803
  %v9915 = vunpack.c.h.b16 %v9803
  %v9916 = vunpack.c.l.b16 %v9804
  %v9917 = vunpack.c.h.b16 %v9804
  %v9918 = vunpack.c.l.b16 %v9805
  %v9919 = vunpack.c.h.b16 %v9805
  %v9920 = vunpack.c.l.b16 %v9806
  %v9921 = vunpack.c.h.b16 %v9806
  %v9922 = vunpack.c.l.b16 %v9807
  %v9923 = vunpack.c.h.b16 %v9807
  %v9924 = vunpack.c.l.b16 %v9808
  %v9925 = vunpack.c.h.b16 %v9808
  %v9926 = vunpack.c.l.b16 %v9809
  %v9927 = vunpack.c.h.b16 %v9809
  %v9928 = vunpack.c.l.b16 %v9810
  %v9929 = vunpack.c.h.b16 %v9810
  %v9930 = vunpack.c.l.b16 %v9811
  %v9931 = vunpack.c.h.b16 %v9811
  %v9932 = vunpack.c.l.b16 %v9812
  %v9933 = vunpack.c.h.b16 %v9812
  %v9934 = vunpack.c.l.b16 %v9813
  %v9935 = vunpack.c.h.b16 %v9813
  %v9936 = vunpack.c.l.b16 %v9814
  %v9937 = vunpack.c.h.b16 %v9814
  %v9938 = vunpack.c.l.b16 %v9815
  %v9939 = vunpack.c.h.b16 %v9815
  %v9940 = vunpack.c.l.b16 %v9816
  %v9941 = vunpack.c.h.b16 %v9816
  %v9942 = vunpack.c.l.b16 %v9817
  %v9943 = vunpack.c.h.b16 %v9817
  %v9944 = vunpack.c.l.b16 %v9818
  %v9945 = vunpack.c.h.b16 %v9818
  %v9946 = vunpack.c.l.b16 %v9819
  %v9947 = vunpack.c.h.b16 %v9819
  %v9948 = vunpack.c.l.b16 %v9820
  %v9949 = vunpack.c.h.b16 %v9820
  %v9950 = vunpack.c.l.b16 %v9821
  %v9951 = vunpack.c.h.b16 %v9821
  %v9952 = vunpack.c.l.b16 %v9822
  %v9953 = vunpack.c.h.b16 %v9822
  %v9954 = vunpack.c.l.b16 %v9823
  %v9955 = vunpack.c.h.b16 %v9823
  %v9956 = vunpack.c.l.b16 %v9824
  %v9957 = vunpack.c.h.b16 %v9824
  %v9958 = vunpack.c.l.b16 %v9825
  %v9959 = vunpack.c.h.b16 %v9825
  %v9960 = vunpack.c.l.b16 %v9826
  %v9961 = vunpack.c.h.b16 %v9826
  %v9962 = vunpack.c.l.b16 %v9827
  %v9963 = vunpack.c.h.b16 %v9827
  %v9964 = vunpack.c.l.b16 %v9828
  %v9965 = vunpack.c.h.b16 %v9828
  %v9966 = vunpack.c.l.b16 %v9829
  %v9967 = vunpack.c.h.b16 %v9829
  %v9968 = vunpack.c.l.b16 %v9830
  %v9969 = vunpack.c.h.b16 %v9830
  %v9970 = vunpack.c.l.b16 %v9831
  %v9971 = vunpack.c.h.b16 %v9831
  %v9972 = vunpack.c.l.b16 %v9832
  %v9973 = vunpack.c.h.b16 %v9832
  %v9974 = vunpack.c.l.b16 %v9833
  %v9975 = vunpack.c.h.b16 %v9833
  %v9976 = vunpack.c.l.b16 %v9834
  %v9977 = vunpack.c.h.b16 %v9834
  %v9978 = vunpack.c.l.b16 %v9835
  %v9979 = vunpack.c.h.b16 %v9835
  %v9980 = vpack.c.b16 %v9886, %v9884
  %v9981 = vpack.c.b16 %v9887, %v9885
  %v9982 = vpack.c.b16 %v9890, %v9888
  %v9983 = vpack.c.b16 %v9891, %v9889
  %v9984 = vpack.c.b16 %v9894, %v9892
  %v9985 = vpack.c.b16 %v9895, %v9893
  %v9986 = vpack.c.b16 %v9898, %v9896
  %v9987 = vpack.c.b16 %v9899, %v9897
  %v9988 = vpack.c.b16 %v9902, %v9900
  %v9989 = vpack.c.b16 %v9903, %v9901
  %v9990 = vpack.c.b16 %v9906, %v9904
  %v9991 = vpack.c.b16 %v9907, %v9905
  %v9992 = vpack.c.b16 %v9910, %v9908
  %v9993 = vpack.c.b16 %v9911, %v9909
  %v9994 = vpack.c.b16 %v9914, %v9912
  %v9995 = vpack.c.b16 %v9915, %v9913
  %v9996 = vpack.c.b16 %v9918, %v9916
  %v9997 = vpack.c.b16 %v9919, %v9917
  %v9998 = vpack.c.b16 %v9922, %v9920
  %v9999 = vpack.c.b16 %v9923, %v9921
  %v10000 = vpack.c.b16 %v9926, %v9924
  %v10001 = vpack.c.b16 %v9927, %v9925
  %v10002 = vpack.c.b16 %v9930, %v9928
  %v10003 = vpack.c.b16 %v9931, %v9929
  %v10004 = vpack.c.b16 %v9934, %v9932
  %v10005 = vpack.c.b16 %v9935, %v9933
  %v10006 = vpack.c.b16 %v9938, %v9936
  %v10007 = vpack.c.b16 %v9939, %v9937
  %v10008 = vpack.c.b16 %v9942, %v9940
  %v10009 = vpack.c.b16 %v9943, %v9941
  %v10010 = vpack.c.b16 %v9946, %v9944
  %v10011 = vpack.c.b16 %v9947, %v9945
  %v10012 = vpack.c.b16 %v9950, %v9948
  %v10013 = vpack.c.b16 %v9951, %v9949
  %v10014 = vpack.c.b16 %v9954, %v9952
  %v10015 = vpack.c.b16 %v9955, %v9953
  %v10016 = vpack.c.b16 %v9958, %v9956
  %v10017 = vpack.c.b16 %v9959, %v9957
  %v10018 = vpack.c.b16 %v9962, %v9960
  %v10019 = vpack.c.b16 %v9963, %v9961
  %v10020 = vpack.c.b16 %v9966, %v9964
  %v10021 = vpack.c.b16 %v9967, %v9965
  %v10022 = vpack.c.b16 %v9970, %v9968
  %v10023 = vpack.c.b16 %v9971, %v9969
  %v10024 = vpack.c.b16 %v9974, %v9972
  %v10025 = vpack.c.b16 %v9975, %v9973
  %v10026 = vpack.c.b16 %v9978, %v9976
  %v10027 = vpack.c.b16 %v9979, %v9977
  %10076 = vmatprep.subr.bf16.mxu0 %v9981
  %10077 = vmatpush1.bf16.msra.mxu0 %v9980
  %10078 = vmatprep.subr.bf16.mxu0 %v9983
  %10079 = vmatpush1.bf16.msra.mxu0 %v9982
  %10080 = vmatprep.subr.bf16.mxu0 %v9985
  %10081 = vmatpush1.bf16.msra.mxu0 %v9984
  %10082 = vmatprep.subr.bf16.mxu0 %v9987
  %10083 = vmatpush1.bf16.msra.mxu0 %v9986
  %10084 = vmatprep.subr.bf16.mxu0 %v9989
  %10085 = vmatpush1.bf16.msra.mxu0 %v9988
  %10086 = vmatprep.subr.bf16.mxu0 %v9991
  %10087 = vmatpush1.bf16.msra.mxu0 %v9990
  %10088 = vmatprep.subr.bf16.mxu0 %v9993
  %10089 = vmatpush1.bf16.msra.mxu0 %v9992
  %10090 = vmatprep.subr.bf16.mxu0 %v9995
  %10091 = vmatpush1.bf16.msra.mxu0 %v9994
  %10092 = vmatprep.subr.bf16.mxu0 %v9997
  %10093 = vmatpush1.bf16.msra.mxu0 %v9996
  %10094 = vmatprep.subr.bf16.mxu0 %v9999
  %10095 = vmatpush1.bf16.msra.mxu0 %v9998
  %10096 = vmatprep.subr.bf16.mxu0 %v10001
  %10097 = vmatpush1.bf16.msra.mxu0 %v10000
  %10098 = vmatprep.subr.bf16.mxu0 %v10003
  %10099 = vmatpush1.bf16.msra.mxu0 %v10002
  %10100 = vmatprep.subr.bf16.mxu0 %v10005
  %10101 = vmatpush1.bf16.msra.mxu0 %v10004
  %10102 = vmatprep.subr.bf16.mxu0 %v10007
  %10103 = vmatpush1.bf16.msra.mxu0 %v10006
  %10104 = vmatprep.subr.bf16.mxu0 %v10009
  %10105 = vmatpush1.bf16.msra.mxu0 %v10008
  %10106 = vmatprep.subr.bf16.mxu0 %v10011
  %10107 = vmatpush1.bf16.msra.mxu0 %v10010
  %10108 = vmatprep.mubr.bf16.mxu0 %v6832
  %10109 = vmatmul.mubr.bf16.gmra.mrb[0].mxu0 %v6831
  %v10110 = vpop.f32.mrb[0].mxu0
  %v10111 = vadd.f32 0.0, %v10110
  %v10112 = vpop.f32.mrb[0].mxu0
  %v10113 = vadd.f32 0.0, %v10112
  %v10114 = vpop.f32.mrb[0].mxu0
  %v10115 = vadd.f32 0.0, %v10114
  %v10116 = vpop.f32.mrb[0].mxu0
  %v10117 = vadd.f32 0.0, %v10116
  %10118 = vmatprep.mubr.bf16.mxu0 %v6835
  %10119 = vmatmul.mubr.bf16.gmra.mrb[0].mxu0 %v6834
  %v10120 = vpop.f32.mrb[0].mxu0
  %v10121 = vadd.f32 0.0, %v10120
  %v10122 = vpop.f32.mrb[0].mxu0
  %v10123 = vadd.f32 0.0, %v10122
  %v10124 = vpop.f32.mrb[0].mxu0
  %v10125 = vadd.f32 0.0, %v10124
  %v10126 = vpop.f32.mrb[0].mxu0
  %v10127 = vadd.f32 0.0, %v10126
  %10128 = vmatprep.mubr.bf16.mxu0 %v6838
  %10129 = vmatmul.mubr.bf16.gmra.mrb[0].mxu0 %v6837
  %v10130 = vpop.f32.mrb[0].mxu0
  %v10131 = vadd.f32 0.0, %v10130
  %v10132 = vpop.f32.mrb[0].mxu0
  %v10133 = vadd.f32 0.0, %v10132
  %v10134 = vpop.f32.mrb[0].mxu0
  %v10135 = vadd.f32 0.0, %v10134
  %v10136 = vpop.f32.mrb[0].mxu0
  %v10137 = vadd.f32 0.0, %v10136
  %10138 = vmatprep.mubr.bf16.mxu0 %v6841
  %10139 = vmatmul.mubr.bf16.gmra.mrb[0].mxu0 %v6840
  %v10140 = vpop.f32.mrb[0].mxu0
  %v10141 = vadd.f32 0.0, %v10140
  %v10142 = vpop.f32.mrb[0].mxu0
  %v10143 = vadd.f32 0.0, %v10142
  %v10144 = vpop.f32.mrb[0].mxu0
  %v10145 = vadd.f32 0.0, %v10144
  %v10146 = vpop.f32.mrb[0].mxu0
  %v10147 = vadd.f32 0.0, %v10146
  %10148 = vmatprep.mubr.bf16.mxu0 %v6844
  %10149 = vmatmul.mubr.bf16.gmra.mrb[0].mxu0 %v6843
  %v10150 = vpop.f32.mrb[0].mxu0
  %v10151 = vadd.f32 0.0, %v10150
  %v10152 = vpop.f32.mrb[0].mxu0
  %v10153 = vadd.f32 0.0, %v10152
  %v10154 = vpop.f32.mrb[0].mxu0
  %v10155 = vadd.f32 0.0, %v10154
  %v10156 = vpop.f32.mrb[0].mxu0
  %v10157 = vadd.f32 0.0, %v10156
  %10158 = vmatprep.mubr.bf16.mxu0 %v6847
  %10159 = vmatmul.mubr.bf16.gmra.mrb[0].mxu0 %v6846
  %v10160 = vpop.f32.mrb[0].mxu0
  %v10161 = vadd.f32 0.0, %v10160
  %v10162 = vpop.f32.mrb[0].mxu0
  %v10163 = vadd.f32 0.0, %v10162
  %v10164 = vpop.f32.mrb[0].mxu0
  %v10165 = vadd.f32 0.0, %v10164
  %v10166 = vpop.f32.mrb[0].mxu0
  %v10167 = vadd.f32 0.0, %v10166
  %10168 = vdwg.mxu0
  %10169 = vmatprep.subr.bf16.mxu0 %v10013
  %10170 = vmatpush1.bf16.msra.mxu0 %v10012
  %10171 = vmatprep.subr.bf16.mxu0 %v10015
  %10172 = vmatpush1.bf16.msra.mxu0 %v10014
  %10173 = vmatprep.subr.bf16.mxu0 %v10017
  %10174 = vmatpush1.bf16.msra.mxu0 %v10016
  %10175 = vmatprep.subr.bf16.mxu0 %v10019
  %10176 = vmatpush1.bf16.msra.mxu0 %v10018
  %10177 = vmatprep.subr.bf16.mxu0 %v10021
  %10178 = vmatpush1.bf16.msra.mxu0 %v10020
  %10179 = vmatprep.subr.bf16.mxu0 %v10023
  %10180 = vmatpush1.bf16.msra.mxu0 %v10022
  %10181 = vmatprep.subr.bf16.mxu0 %v10025
  %10182 = vmatpush1.bf16.msra.mxu0 %v10024
  %10183 = vmatprep.subr.bf16.mxu0 %v10027
  %10184 = vmatpush1.bf16.msra.mxu0 %v10026
  %10185 = vmatprep.subr.bf16.mxu0 0
  %10186 = vmatpush1.bf16.msra.mxu0 0
  %10187 = vmatprep.subr.bf16.mxu0 0
  %10188 = vmatpush1.bf16.msra.mxu0 0
  %10189 = vmatprep.subr.bf16.mxu0 0
  %10190 = vmatpush1.bf16.msra.mxu0 0
  %10191 = vmatprep.subr.bf16.mxu0 0
  %10192 = vmatpush1.bf16.msra.mxu0 0
  %10193 = vmatprep.subr.bf16.mxu0 0
  %10194 = vmatpush1.bf16.msra.mxu0 0
  %10195 = vmatprep.subr.bf16.mxu0 0
  %10196 = vmatpush1.bf16.msra.mxu0 0
  %10197 = vmatprep.subr.bf16.mxu0 0
  %10198 = vmatpush1.bf16.msra.mxu0 0
  %10199 = vmatprep.subr.bf16.mxu0 0
  %10200 = vmatpush1.bf16.msra.mxu0 0
  %10201 = vmatprep.mubr.bf16.mxu0 0
  %10202 = vmatmul.mubr.bf16.gmra.mrb[0].mxu0 %v6833
  %v10203 = vpop.f32.mrb[0].mxu0
  %v10204 = vadd.f32 %v10111, %v10203
  %v10205 = vpop.f32.mrb[0].mxu0
  %v10206 = vadd.f32 %v10113, %v10205
  %v10207 = vpop.f32.mrb[0].mxu0
  %v10208 = vadd.f32 %v10115, %v10207
  %v10209 = vpop.f32.mrb[0].mxu0
  %v10210 = vadd.f32 %v10117, %v10209
  %10211 = vmatprep.mubr.bf16.mxu0 0
  %10212 = vmatmul.mubr.bf16.gmra.mrb[0].mxu0 %v6836
  %v10213 = vpop.f32.mrb[0].mxu0
  %v10214 = vadd.f32 %v10121, %v10213
  %v10215 = vpop.f32.mrb[0].mxu0
  %v10216 = vadd.f32 %v10123, %v10215
  %v10217 = vpop.f32.mrb[0].mxu0
  %v10218 = vadd.f32 %v10125, %v10217
  %v10219 = vpop.f32.mrb[0].mxu0
  %v10220 = vadd.f32 %v10127, %v10219
  %10221 = vmatprep.mubr.bf16.mxu0 0
  %10222 = vmatmul.mubr.bf16.gmra.mrb[0].mxu0 %v6839
  %v10223 = vpop.f32.mrb[0].mxu0
  %v10224 = vadd.f32 %v10131, %v10223
  %v10225 = vpop.f32.mrb[0].mxu0
  %v10226 = vadd.f32 %v10133, %v10225
  %v10227 = vpop.f32.mrb[0].mxu0
  %v10228 = vadd.f32 %v10135, %v10227
  %v10229 = vpop.f32.mrb[0].mxu0
  %v10230 = vadd.f32 %v10137, %v10229
  %10231 = vmatprep.mubr.bf16.mxu0 0
  %10232 = vmatmul.mubr.bf16.gmra.mrb[0].mxu0 %v6842
  %v10233 = vpop.f32.mrb[0].mxu0
  %v10234 = vadd.f32 %v10141, %v10233
  %v10235 = vpop.f32.mrb[0].mxu0
  %v10236 = vadd.f32 %v10143, %v10235
  %v10237 = vpop.f32.mrb[0].mxu0
  %v10238 = vadd.f32 %v10145, %v10237
  %v10239 = vpop.f32.mrb[0].mxu0
  %v10240 = vadd.f32 %v10147, %v10239
  %10241 = vmatprep.mubr.bf16.mxu0 0
  %10242 = vmatmul.mubr.bf16.gmra.mrb[0].mxu0 %v6845
  %v10243 = vpop.f32.mrb[0].mxu0
  %v10244 = vadd.f32 %v10151, %v10243
  %v10245 = vpop.f32.mrb[0].mxu0
  %v10246 = vadd.f32 %v10153, %v10245
  %v10247 = vpop.f32.mrb[0].mxu0
  %v10248 = vadd.f32 %v10155, %v10247
  %v10249 = vpop.f32.mrb[0].mxu0
  %v10250 = vadd.f32 %v10157, %v10249
  %10251 = vmatprep.mubr.bf16.mxu0 0
  %10252 = vmatmul.mubr.bf16.gmra.mrb[0].mxu0 %v6848
  %v10253 = vpop.f32.mrb[0].mxu0
  %v10254 = vadd.f32 %v10161, %v10253
  %v10255 = vpop.f32.mrb[0].mxu0
  %v10256 = vadd.f32 %v10163, %v10255
  %v10257 = vpop.f32.mrb[0].mxu0
  %v10258 = vadd.f32 %v10165, %v10257
  %v10259 = vpop.f32.mrb[0].mxu0
  %v10260 = vadd.f32 %v10167, %v10259
  %10261 = vdwg.mxu0
  %v10262 = vadd.f32 %v9729, %v10204
  %v10263 = vadd.f32 %v9731, %v10206
  %v10264 = vadd.f32 %v9733, %v10208
  %v10265 = vadd.f32 %v9735, %v10210
  %v10266 = vadd.f32 %v9739, %v10214
  %v10267 = vadd.f32 %v9741, %v10216
  %v10268 = vadd.f32 %v9743, %v10218
  %v10269 = vadd.f32 %v9745, %v10220
  %v10270 = vadd.f32 %v9749, %v10224
  %v10271 = vadd.f32 %v9751, %v10226
  %v10272 = vadd.f32 %v9753, %v10228
  %v10273 = vadd.f32 %v9755, %v10230
  %v10274 = vadd.f32 %v9759, %v10234
  %v10275 = vadd.f32 %v9761, %v10236
  %v10276 = vadd.f32 %v9763, %v10238
  %v10277 = vadd.f32 %v9765, %v10240
  %v10278 = vadd.f32 %v9769, %v10244
  %v10279 = vadd.f32 %v9771, %v10246
  %v10280 = vadd.f32 %v9773, %v10248
  %v10281 = vadd.f32 %v9775, %v10250
  %v10282 = vadd.f32 %v9779, %v10254
  %v10283 = vadd.f32 %v9781, %v10256
  %v10284 = vadd.f32 %v9783, %v10258
  %v10285 = vadd.f32 %v9785, %v10260
  %v10286 = vmax.f32 %v10262, %v10270
  %v10287 = vmax.f32 %v10263, %v10271
  %v10288 = vmax.f32 %v10264, %v10272
  %v10289 = vmax.f32 %v10265, %v10273
  %v10290 = vmax.f32 %v10266, %v10274
  %v10291 = vmax.f32 %v10267, %v10275
  %v10292 = vmax.f32 %v10268, %v10276
  %v10293 = vmax.f32 %v10269, %v10277
  %v10294 = vmax.f32 %v10286, %v10278
  %v10295 = vmax.f32 %v10287, %v10279
  %v10296 = vmax.f32 %v10288, %v10280
  %v10297 = vmax.f32 %v10289, %v10281
  %v10298 = vmax.f32 %v10290, %v10282
  %v10299 = vmax.f32 %v10291, %v10283
  %v10300 = vmax.f32 %v10292, %v10284
  %v10301 = vmax.f32 %v10293, %v10285
  %v10302 = vmax.f32 %v8829, %v10294
  %v10303 = vmax.f32 %v8830, %v10295
  %v10304 = vmax.f32 %v8831, %v10296
  %v10305 = vmax.f32 %v8832, %v10297
  %v10306 = vmax.f32 %v8833, %v10298
  %v10307 = vmax.f32 %v8834, %v10299
  %v10308 = vmax.f32 %v8835, %v10300
  %v10309 = vmax.f32 %v8836, %v10301
  %v10310 = vld [vmem:[%s4] sm:$0x3]
  %v10312 = vlaneseq
  %v10313 = vshrl.u32 %v10312, 7
  %v10314 = vsub.s32 0, %v10313
  %v10315 = vrot.slane %v10310, %v10314
  %v10316 = vlaneseq
  %v10317 = vshrl.u32 %v10316, 7
  %v10318 = vsub.s32 1, %v10317
  %v10319 = vrot.slane %v10310, %v10318
  %v10322 = vadd.f32 %v10302, %v10315
  %v10323 = vadd.f32 %v10303, %v10319
  %v10324 = vadd.f32 %v10304, %v10315
  %v10325 = vadd.f32 %v10305, %v10319
  %v10326 = vadd.f32 %v10306, %v10315
  %v10327 = vadd.f32 %v10307, %v10319
  %v10328 = vadd.f32 %v10308, %v10315
  %v10329 = vadd.f32 %v10309, %v10319
  %v10330 = vmax.f32 %v10322, 0.0
  %v10331 = vmax.f32 %v10323, 0.0
  %v10332 = vmax.f32 %v10324, 0.0
  %v10333 = vmax.f32 %v10325, 0.0
  %v10334 = vmax.f32 %v10326, 0.0
  %v10335 = vmax.f32 %v10327, 0.0
  %v10336 = vmax.f32 %v10328, 0.0
  %v10337 = vmax.f32 %v10329, 0.0
  %v10338 = vpack.c.bf16 %v10332, %v10330
  %v10339 = vpack.c.bf16 %v10333, %v10331
  %v10340 = vpack.c.bf16 %v10336, %v10334
  %v10341 = vpack.c.bf16 %v10337, %v10335
  %10342 = vst [vmem:[#allocation4] sm:$0xff] %v10338
  %10343 = vst [vmem:[#allocation4 + $0x8] sm:$0xff] %v10339
  %10344 = vst [vmem:[#allocation4 + $0x10] sm:$0xff] %v10340
  %10345 = vst [vmem:[#allocation4 + $0x18] sm:$0xff] %v10341
  %v10346 = vld [vmem:[#allocation4] sm:$0xff]
  %v10347 = vld [vmem:[#allocation4 + $0x8] sm:$0xff]
  %v10348 = vld [vmem:[#allocation4 + $0x10] sm:$0xf]
  %v10349 = vld [vmem:[#allocation4 + $0x18] sm:$0xf]
  %v10350 = vld [vmem:[%s5] sm:$0xff]
  %v10351 = vld [vmem:[%s5 + $0x8] sm:$0xff]
  %v10352 = vld [vmem:[%s5 + $0x10] sm:$0xff]
  %v10353 = vld [vmem:[%s5 + $0x18] sm:$0xff]
  %v10354 = vld [vmem:[%s5 + $0x20] sm:$0xff]
  %v10355 = vld [vmem:[%s5 + $0x28] sm:$0xff]
  %v10356 = vld [vmem:[%s5 + $0x30] sm:$0xff]
  %v10357 = vld [vmem:[%s5 + $0x38] sm:$0xff]
  %v10358 = vld [vmem:[%s5 + $0x40] sm:$0xff]
  %v10359 = vld [vmem:[%s5 + $0x48] sm:$0xff]
  %v10360 = vld [vmem:[%s5 + $0x50] sm:$0xff]
  %v10361 = vld [vmem:[%s5 + $0x58] sm:$0xff]
  %v10362 = vld [vmem:[%s5 + $0x60] sm:$0xff]
  %v10363 = vld [vmem:[%s5 + $0x68] sm:$0xff]
  %v10364 = vld [vmem:[%s5 + $0x70] sm:$0xff]
  %v10365 = vld [vmem:[%s5 + $0x78] sm:$0xff]
  %v10366 = vld [vmem:[%s5 + $0x80] sm:$0xff]
  %v10367 = vld [vmem:[%s5 + $0x88] sm:$0xff]
  %v10368 = vld [vmem:[%s5 + $0x90] sm:$0xff]
  %v10369 = vld [vmem:[%s5 + $0x98] sm:$0xff]
  %v10370 = vld [vmem:[%s5 + $0xa0] sm:$0xff]
  %v10371 = vld [vmem:[%s5 + $0xa8] sm:$0xff]
  %v10372 = vld [vmem:[%s5 + $0xb0] sm:$0xff]
  %v10373 = vld [vmem:[%s5 + $0xb8] sm:$0xff]
  %v10374 = vld [vmem:[%s5 + $0xc0] sm:$0xff]
  %v10375 = vld [vmem:[%s5 + $0xc8] sm:$0xff]
  %v10376 = vld [vmem:[%s5 + $0xd0] sm:$0xff]
  %v10377 = vld [vmem:[%s5 + $0xd8] sm:$0xff]
  %v10378 = vld [vmem:[%s5 + $0xe0] sm:$0xff]
  %v10379 = vld [vmem:[%s5 + $0xe8] sm:$0xff]
  %v10380 = vld [vmem:[%s5 + $0xf0] sm:$0xff]
  %v10381 = vld [vmem:[%s5 + $0xf8] sm:$0xff]
  %v10382 = vld [vmem:[#allocation4] sm:$0xf0]
  %v10383 = vld [vmem:[#allocation4 + $0x8] sm:$0xf0]
  %v10384 = vld [vmem:[#allocation4 + $0x10] sm:$0xff]
  %v10385 = vld [vmem:[#allocation4 + $0x18] sm:$0xff]
  %s10386 = scalar_lea.vmem %s5, 256
  %v10387 = vld [vmem:[%s10386] sm:$0xff]
  %v10388 = vld [vmem:[%s10386 + $0x8] sm:$0xff]
  %v10389 = vld [vmem:[%s10386 + $0x10] sm:$0xff]
  %v10390 = vld [vmem:[%s10386 + $0x18] sm:$0xff]
  %v10391 = vld [vmem:[%s10386 + $0x20] sm:$0xff]
  %v10392 = vld [vmem:[%s10386 + $0x28] sm:$0xff]
  %v10393 = vld [vmem:[%s10386 + $0x30] sm:$0xff]
  %v10394 = vld [vmem:[%s10386 + $0x38] sm:$0xff]
  %v10395 = vld [vmem:[%s10386 + $0x40] sm:$0xff]
  %v10396 = vld [vmem:[%s10386 + $0x48] sm:$0xff]
  %v10397 = vld [vmem:[%s10386 + $0x50] sm:$0xff]
  %v10398 = vld [vmem:[%s10386 + $0x58] sm:$0xff]
  %v10399 = vld [vmem:[%s10386 + $0x60] sm:$0xff]
  %v10400 = vld [vmem:[%s10386 + $0x68] sm:$0xff]
  %v10401 = vld [vmem:[%s10386 + $0x70] sm:$0xff]
  %v10402 = vld [vmem:[%s10386 + $0x78] sm:$0xff]
  %v10403 = vld [vmem:[%s10386 + $0x80] sm:$0xff]
  %v10404 = vld [vmem:[%s10386 + $0x88] sm:$0xff]
  %v10405 = vld [vmem:[%s10386 + $0x90] sm:$0xff]
  %v10406 = vld [vmem:[%s10386 + $0x98] sm:$0xff]
  %v10407 = vld [vmem:[%s10386 + $0xa0] sm:$0xff]
  %v10408 = vld [vmem:[%s10386 + $0xa8] sm:$0xff]
  %v10409 = vld [vmem:[%s10386 + $0xb0] sm:$0xff]
  %v10410 = vld [vmem:[%s10386 + $0xb8] sm:$0xff]
  %v10411 = vld [vmem:[%s10386 + $0xc0] sm:$0xff]
  %v10412 = vld [vmem:[%s10386 + $0xc8] sm:$0xff]
  %v10413 = vld [vmem:[%s10386 + $0xd0] sm:$0xff]
  %v10414 = vld [vmem:[%s10386 + $0xd8] sm:$0xff]
  %v10415 = vld [vmem:[%s10386 + $0xe0] sm:$0xff]
  %v10416 = vld [vmem:[%s10386 + $0xe8] sm:$0xff]
  %v10417 = vld [vmem:[%s10386 + $0xf0] sm:$0xff]
  %v10418 = vld [vmem:[%s10386 + $0xf8] sm:$0xff]
  %vm10423 = vcmask 1043456
  %v10424 = vrot.slane %v10382, 4
  %v10425 = vrot.slane %v10384, 4
  %v10426 = vsel %vm10423, %v10424, %v10425
  %v10427 = vrot.slane %v10383, 4
  %v10428 = vrot.slane %v10385, 4
  %v10429 = vsel %vm10423, %v10427, %v10428
  %v10466 = vunpack.c.l.b16 %v10387
  %v10467 = vunpack.c.h.b16 %v10387
  %v10468 = vunpack.c.l.b16 %v10388
  %v10469 = vunpack.c.h.b16 %v10388
  %v10470 = vunpack.c.l.b16 %v10389
  %v10471 = vunpack.c.h.b16 %v10389
  %v10472 = vunpack.c.l.b16 %v10390
  %v10473 = vunpack.c.h.b16 %v10390
  %v10474 = vunpack.c.l.b16 %v10391
  %v10475 = vunpack.c.h.b16 %v10391
  %v10476 = vunpack.c.l.b16 %v10392
  %v10477 = vunpack.c.h.b16 %v10392
  %v10478 = vunpack.c.l.b16 %v10393
  %v10479 = vunpack.c.h.b16 %v10393
  %v10480 = vunpack.c.l.b16 %v10394
  %v10481 = vunpack.c.h.b16 %v10394
  %v10482 = vunpack.c.l.b16 %v10395
  %v10483 = vunpack.c.h.b16 %v10395
  %v10484 = vunpack.c.l.b16 %v10396
  %v10485 = vunpack.c.h.b16 %v10396
  %v10486 = vunpack.c.l.b16 %v10397
  %v10487 = vunpack.c.h.b16 %v10397
  %v10488 = vunpack.c.l.b16 %v10398
  %v10489 = vunpack.c.h.b16 %v10398
  %v10490 = vunpack.c.l.b16 %v10399
  %v10491 = vunpack.c.h.b16 %v10399
  %v10492 = vunpack.c.l.b16 %v10400
  %v10493 = vunpack.c.h.b16 %v10400
  %v10494 = vunpack.c.l.b16 %v10401
  %v10495 = vunpack.c.h.b16 %v10401
  %v10496 = vunpack.c.l.b16 %v10402
  %v10497 = vunpack.c.h.b16 %v10402
  %v10498 = vunpack.c.l.b16 %v10403
  %v10499 = vunpack.c.h.b16 %v10403
  %v10500 = vunpack.c.l.b16 %v10404
  %v10501 = vunpack.c.h.b16 %v10404
  %v10502 = vunpack.c.l.b16 %v10405
  %v10503 = vunpack.c.h.b16 %v10405
  %v10504 = vunpack.c.l.b16 %v10406
  %v10505 = vunpack.c.h.b16 %v10406
  %v10506 = vunpack.c.l.b16 %v10407
  %v10507 = vunpack.c.h.b16 %v10407
  %v10508 = vunpack.c.l.b16 %v10408
  %v10509 = vunpack.c.h.b16 %v10408
  %v10510 = vunpack.c.l.b16 %v10409
  %v10511 = vunpack.c.h.b16 %v10409
  %v10512 = vunpack.c.l.b16 %v10410
  %v10513 = vunpack.c.h.b16 %v10410
  %v10514 = vunpack.c.l.b16 %v10411
  %v10515 = vunpack.c.h.b16 %v10411
  %v10516 = vunpack.c.l.b16 %v10412
  %v10517 = vunpack.c.h.b16 %v10412
  %v10518 = vunpack.c.l.b16 %v10413
  %v10519 = vunpack.c.h.b16 %v10413
  %v10520 = vunpack.c.l.b16 %v10414
  %v10521 = vunpack.c.h.b16 %v10414
  %v10522 = vunpack.c.l.b16 %v10415
  %v10523 = vunpack.c.h.b16 %v10415
  %v10524 = vunpack.c.l.b16 %v10416
  %v10525 = vunpack.c.h.b16 %v10416
  %v10526 = vunpack.c.l.b16 %v10417
  %v10527 = vunpack.c.h.b16 %v10417
  %v10528 = vunpack.c.l.b16 %v10418
  %v10529 = vunpack.c.h.b16 %v10418
  %v10530 = vpack.c.b16 %v10468, %v10466
  %v10531 = vpack.c.b16 %v10469, %v10467
  %v10532 = vpack.c.b16 %v10472, %v10470
  %v10533 = vpack.c.b16 %v10473, %v10471
  %v10534 = vpack.c.b16 %v10476, %v10474
  %v10535 = vpack.c.b16 %v10477, %v10475
  %v10536 = vpack.c.b16 %v10480, %v10478
  %v10537 = vpack.c.b16 %v10481, %v10479
  %v10538 = vpack.c.b16 %v10484, %v10482
  %v10539 = vpack.c.b16 %v10485, %v10483
  %v10540 = vpack.c.b16 %v10488, %v10486
  %v10541 = vpack.c.b16 %v10489, %v10487
  %v10542 = vpack.c.b16 %v10492, %v10490
  %v10543 = vpack.c.b16 %v10493, %v10491
  %v10544 = vpack.c.b16 %v10496, %v10494
  %v10545 = vpack.c.b16 %v10497, %v10495
  %v10546 = vpack.c.b16 %v10500, %v10498
  %v10547 = vpack.c.b16 %v10501, %v10499
  %v10548 = vpack.c.b16 %v10504, %v10502
  %v10549 = vpack.c.b16 %v10505, %v10503
  %v10550 = vpack.c.b16 %v10508, %v10506
  %v10551 = vpack.c.b16 %v10509, %v10507
  %v10552 = vpack.c.b16 %v10512, %v10510
  %v10553 = vpack.c.b16 %v10513, %v10511
  %v10554 = vpack.c.b16 %v10516, %v10514
  %v10555 = vpack.c.b16 %v10517, %v10515
  %v10556 = vpack.c.b16 %v10520, %v10518
  %v10557 = vpack.c.b16 %v10521, %v10519
  %v10558 = vpack.c.b16 %v10524, %v10522
  %v10559 = vpack.c.b16 %v10525, %v10523
  %v10560 = vpack.c.b16 %v10528, %v10526
  %v10561 = vpack.c.b16 %v10529, %v10527
  %10594 = vmatprep.subr.bf16.mxu0 %v10531
  %10595 = vmatpush1.bf16.msra.mxu0 %v10530
  %10596 = vmatprep.subr.bf16.mxu0 %v10533
  %10597 = vmatpush1.bf16.msra.mxu0 %v10532
  %10598 = vmatprep.subr.bf16.mxu0 %v10535
  %10599 = vmatpush1.bf16.msra.mxu0 %v10534
  %10600 = vmatprep.subr.bf16.mxu0 %v10537
  %10601 = vmatpush1.bf16.msra.mxu0 %v10536
  %10602 = vmatprep.subr.bf16.mxu0 %v10539
  %10603 = vmatpush1.bf16.msra.mxu0 %v10538
  %10604 = vmatprep.subr.bf16.mxu0 %v10541
  %10605 = vmatpush1.bf16.msra.mxu0 %v10540
  %10606 = vmatprep.subr.bf16.mxu0 %v10543
  %10607 = vmatpush1.bf16.msra.mxu0 %v10542
  %10608 = vmatprep.subr.bf16.mxu0 %v10545
  %10609 = vmatpush1.bf16.msra.mxu0 %v10544
  %10610 = vmatprep.subr.bf16.mxu0 %v10547
  %10611 = vmatpush1.bf16.msra.mxu0 %v10546
  %10612 = vmatprep.subr.bf16.mxu0 %v10549
  %10613 = vmatpush1.bf16.msra.mxu0 %v10548
  %10614 = vmatprep.subr.bf16.mxu0 %v10551
  %10615 = vmatpush1.bf16.msra.mxu0 %v10550
  %10616 = vmatprep.subr.bf16.mxu0 %v10553
  %10617 = vmatpush1.bf16.msra.mxu0 %v10552
  %10618 = vmatprep.subr.bf16.mxu0 %v10555
  %10619 = vmatpush1.bf16.msra.mxu0 %v10554
  %10620 = vmatprep.subr.bf16.mxu0 %v10557
  %10621 = vmatpush1.bf16.msra.mxu0 %v10556
  %10622 = vmatprep.subr.bf16.mxu0 %v10559
  %10623 = vmatpush1.bf16.msra.mxu0 %v10558
  %10624 = vmatprep.subr.bf16.mxu0 %v10561
  %10625 = vmatpush1.bf16.msra.mxu0 %v10560
  %10626 = vmatprep.mubr.bf16.mxu0 %v10429
  %10627 = vmatmul.mubr.bf16.gmra.mrb[0].mxu0 %v10426
  %v10628 = vpop.f32.mrb[0].mxu0
  %v10629 = vadd.f32 0.0, %v10628
  %v10630 = vpop.f32.mrb[0].mxu0
  %v10631 = vadd.f32 0.0, %v10630
  %v10632 = vpop.f32.mrb[0].mxu0
  %v10633 = vadd.f32 0.0, %v10632
  %v10634 = vpop.f32.mrb[0].mxu0
  %v10635 = vadd.f32 0.0, %v10634
  %10636 = vmatprep.mubr.bf16.mxu0 %v10428
  %10637 = vmatmul.mubr.bf16.gmra.mrb[0].mxu0 %v10425
  %v10638 = vpop.f32.mrb[0].mxu0
  %v10639 = vadd.f32 0.0, %v10638
  %v10640 = vpop.f32.mrb[0].mxu0
  %v10641 = vadd.f32 0.0, %v10640
  %v10642 = vpop.f32.mrb[0].mxu0
  %v10643 = vpop.f32.mrb[0].mxu0
  %10644 = vdwg.mxu0
  %v10677 = vunpack.c.l.b16 %v10350
  %v10678 = vunpack.c.h.b16 %v10350
  %v10679 = vunpack.c.l.b16 %v10351
  %v10680 = vunpack.c.h.b16 %v10351
  %v10681 = vunpack.c.l.b16 %v10352
  %v10682 = vunpack.c.h.b16 %v10352
  %v10683 = vunpack.c.l.b16 %v10353
  %v10684 = vunpack.c.h.b16 %v10353
  %v10685 = vunpack.c.l.b16 %v10354
  %v10686 = vunpack.c.h.b16 %v10354
  %v10687 = vunpack.c.l.b16 %v10355
  %v10688 = vunpack.c.h.b16 %v10355
  %v10689 = vunpack.c.l.b16 %v10356
  %v10690 = vunpack.c.h.b16 %v10356
  %v10691 = vunpack.c.l.b16 %v10357
  %v10692 = vunpack.c.h.b16 %v10357
  %v10693 = vunpack.c.l.b16 %v10358
  %v10694 = vunpack.c.h.b16 %v10358
  %v10695 = vunpack.c.l.b16 %v10359
  %v10696 = vunpack.c.h.b16 %v10359
  %v10697 = vunpack.c.l.b16 %v10360
  %v10698 = vunpack.c.h.b16 %v10360
  %v10699 = vunpack.c.l.b16 %v10361
  %v10700 = vunpack.c.h.b16 %v10361
  %v10701 = vunpack.c.l.b16 %v10362
  %v10702 = vunpack.c.h.b16 %v10362
  %v10703 = vunpack.c.l.b16 %v10363
  %v10704 = vunpack.c.h.b16 %v10363
  %v10705 = vunpack.c.l.b16 %v10364
  %v10706 = vunpack.c.h.b16 %v10364
  %v10707 = vunpack.c.l.b16 %v10365
  %v10708 = vunpack.c.h.b16 %v10365
  %v10709 = vunpack.c.l.b16 %v10366
  %v10710 = vunpack.c.h.b16 %v10366
  %v10711 = vunpack.c.l.b16 %v10367
  %v10712 = vunpack.c.h.b16 %v10367
  %v10713 = vunpack.c.l.b16 %v10368
  %v10714 = vunpack.c.h.b16 %v10368
  %v10715 = vunpack.c.l.b16 %v10369
  %v10716 = vunpack.c.h.b16 %v10369
  %v10717 = vunpack.c.l.b16 %v10370
  %v10718 = vunpack.c.h.b16 %v10370
  %v10719 = vunpack.c.l.b16 %v10371
  %v10720 = vunpack.c.h.b16 %v10371
  %v10721 = vunpack.c.l.b16 %v10372
  %v10722 = vunpack.c.h.b16 %v10372
  %v10723 = vunpack.c.l.b16 %v10373
  %v10724 = vunpack.c.h.b16 %v10373
  %v10725 = vunpack.c.l.b16 %v10374
  %v10726 = vunpack.c.h.b16 %v10374
  %v10727 = vunpack.c.l.b16 %v10375
  %v10728 = vunpack.c.h.b16 %v10375
  %v10729 = vunpack.c.l.b16 %v10376
  %v10730 = vunpack.c.h.b16 %v10376
  %v10731 = vunpack.c.l.b16 %v10377
  %v10732 = vunpack.c.h.b16 %v10377
  %v10733 = vunpack.c.l.b16 %v10378
  %v10734 = vunpack.c.h.b16 %v10378
  %v10735 = vunpack.c.l.b16 %v10379
  %v10736 = vunpack.c.h.b16 %v10379
  %v10737 = vunpack.c.l.b16 %v10380
  %v10738 = vunpack.c.h.b16 %v10380
  %v10739 = vunpack.c.l.b16 %v10381
  %v10740 = vunpack.c.h.b16 %v10381
  %v10741 = vpack.c.b16 %v10679, %v10677
  %v10742 = vpack.c.b16 %v10680, %v10678
  %v10743 = vpack.c.b16 %v10683, %v10681
  %v10744 = vpack.c.b16 %v10684, %v10682
  %v10745 = vpack.c.b16 %v10687, %v10685
  %v10746 = vpack.c.b16 %v10688, %v10686
  %v10747 = vpack.c.b16 %v10691, %v10689
  %v10748 = vpack.c.b16 %v10692, %v10690
  %v10749 = vpack.c.b16 %v10695, %v10693
  %v10750 = vpack.c.b16 %v10696, %v10694
  %v10751 = vpack.c.b16 %v10699, %v10697
  %v10752 = vpack.c.b16 %v10700, %v10698
  %v10753 = vpack.c.b16 %v10703, %v10701
  %v10754 = vpack.c.b16 %v10704, %v10702
  %v10755 = vpack.c.b16 %v10707, %v10705
  %v10756 = vpack.c.b16 %v10708, %v10706
  %v10757 = vpack.c.b16 %v10711, %v10709
  %v10758 = vpack.c.b16 %v10712, %v10710
  %v10759 = vpack.c.b16 %v10715, %v10713
  %v10760 = vpack.c.b16 %v10716, %v10714
  %v10761 = vpack.c.b16 %v10719, %v10717
  %v10762 = vpack.c.b16 %v10720, %v10718
  %v10763 = vpack.c.b16 %v10723, %v10721
  %v10764 = vpack.c.b16 %v10724, %v10722
  %v10765 = vpack.c.b16 %v10727, %v10725
  %v10766 = vpack.c.b16 %v10728, %v10726
  %v10767 = vpack.c.b16 %v10731, %v10729
  %v10768 = vpack.c.b16 %v10732, %v10730
  %v10769 = vpack.c.b16 %v10735, %v10733
  %v10770 = vpack.c.b16 %v10736, %v10734
  %v10771 = vpack.c.b16 %v10739, %v10737
  %v10772 = vpack.c.b16 %v10740, %v10738
  %10805 = vmatprep.subr.bf16.mxu0 %v10742
  %10806 = vmatpush1.bf16.msra.mxu0 %v10741
  %10807 = vmatprep.subr.bf16.mxu0 %v10744
  %10808 = vmatpush1.bf16.msra.mxu0 %v10743
  %10809 = vmatprep.subr.bf16.mxu0 %v10746
  %10810 = vmatpush1.bf16.msra.mxu0 %v10745
  %10811 = vmatprep.subr.bf16.mxu0 %v10748
  %10812 = vmatpush1.bf16.msra.mxu0 %v10747
  %10813 = vmatprep.subr.bf16.mxu0 %v10750
  %10814 = vmatpush1.bf16.msra.mxu0 %v10749
  %10815 = vmatprep.subr.bf16.mxu0 %v10752
  %10816 = vmatpush1.bf16.msra.mxu0 %v10751
  %10817 = vmatprep.subr.bf16.mxu0 %v10754
  %10818 = vmatpush1.bf16.msra.mxu0 %v10753
  %10819 = vmatprep.subr.bf16.mxu0 %v10756
  %10820 = vmatpush1.bf16.msra.mxu0 %v10755
  %10821 = vmatprep.subr.bf16.mxu0 %v10758
  %10822 = vmatpush1.bf16.msra.mxu0 %v10757
  %10823 = vmatprep.subr.bf16.mxu0 %v10760
  %10824 = vmatpush1.bf16.msra.mxu0 %v10759
  %10825 = vmatprep.subr.bf16.mxu0 %v10762
  %10826 = vmatpush1.bf16.msra.mxu0 %v10761
  %10827 = vmatprep.subr.bf16.mxu0 %v10764
  %10828 = vmatpush1.bf16.msra.mxu0 %v10763
  %10829 = vmatprep.subr.bf16.mxu0 %v10766
  %10830 = vmatpush1.bf16.msra.mxu0 %v10765
  %10831 = vmatprep.subr.bf16.mxu0 %v10768
  %10832 = vmatpush1.bf16.msra.mxu0 %v10767
  %10833 = vmatprep.subr.bf16.mxu0 %v10770
  %10834 = vmatpush1.bf16.msra.mxu0 %v10769
  %10835 = vmatprep.subr.bf16.mxu0 %v10772
  %10836 = vmatpush1.bf16.msra.mxu0 %v10771
  %10837 = vmatprep.mubr.bf16.mxu0 %v10347
  %10838 = vmatmul.mubr.bf16.gmra.mrb[0].mxu0 %v10346
  %v10839 = vpop.f32.mrb[0].mxu0
  %v10840 = vadd.f32 %v10629, %v10839
  %v10841 = vpop.f32.mrb[0].mxu0
  %v10842 = vadd.f32 %v10631, %v10841
  %v10843 = vpop.f32.mrb[0].mxu0
  %v10844 = vadd.f32 %v10633, %v10843
  %v10845 = vpop.f32.mrb[0].mxu0
  %v10846 = vadd.f32 %v10635, %v10845
  %10847 = vmatprep.mubr.bf16.mxu0 %v10349
  %10848 = vmatmul.mubr.bf16.gmra.mrb[0].mxu0 %v10348
  %v10849 = vpop.f32.mrb[0].mxu0
  %v10850 = vadd.f32 %v10639, %v10849
  %v10851 = vpop.f32.mrb[0].mxu0
  %v10852 = vadd.f32 %v10641, %v10851
  %v10853 = vpop.f32.mrb[0].mxu0
  %v10854 = vpop.f32.mrb[0].mxu0
  %10855 = vdwg.mxu0
  %v10856 = vld [vmem:[%s6] sm:$0x3]
  %v10858 = vlaneseq
  %v10859 = vshrl.u32 %v10858, 7
  %v10860 = vsub.s32 0, %v10859
  %v10861 = vrot.slane %v10856, %v10860
  %v10862 = vlaneseq
  %v10863 = vshrl.u32 %v10862, 7
  %v10864 = vsub.s32 1, %v10863
  %v10865 = vrot.slane %v10856, %v10864
  %v10868 = vadd.f32 %v10840, %v10861
  %v10869 = vadd.f32 %v10842, %v10865
  %v10870 = vadd.f32 %v10844, %v10861
  %v10871 = vadd.f32 %v10846, %v10865
  %v10872 = vadd.f32 %v10850, %v10861
  %v10873 = vadd.f32 %v10852, %v10865
  %v10874 = vmax.f32 %v10868, 0.0
  %v10875 = vmax.f32 %v10869, 0.0
  %v10876 = vmax.f32 %v10870, 0.0
  %v10877 = vmax.f32 %v10871, 0.0
  %v10878 = vmax.f32 %v10872, 0.0
  %v10879 = vmax.f32 %v10873, 0.0
  %v10880 = vpack.c.bf16 %v10876, %v10874
  %v10881 = vpack.c.bf16 %v10877, %v10875
  %v10882 = vpack.c.bf16 %v10878, %v10878
  %v10883 = vpack.c.bf16 %v10879, %v10879
  %v10888 = vunpack.c.l.b16 %v10880
  %v10889 = vunpack.c.l.b16 %v10881
  %v10890 = vunpack.c.h.b16 %v10880
  %v10891 = vunpack.c.h.b16 %v10881
  %v10892 = vunpack.c.l.b16 %v10882
  %v10893 = vunpack.c.l.b16 %v10883
  %v10894 = vpack.c.b16 %v10889, %v10888
  %v10895 = vpack.c.b16 %v10891, %v10890
  %v10896 = vpack.c.b16 %v10893, %v10892
  %vm10900 = vcmask 1043456
  %vm10901 = vcmask 523268
  %vm10902 = vmor %vm10901, %vm10900
  %10903 = vst.msk [vmem:[#allocation5] sm:$0xff] %vm10902, %v10894
  %10904 = vst.msk [vmem:[#allocation5 + $0x8] sm:$0xff] %vm10902, %v10895
  %10905 = vst.msk [vmem:[#allocation5 + $0x10] sm:$0xff] %vm10902, %v10896
  %v10906 = vld [vmem:[#allocation5] sm:$0xff]
  %v10907 = vld [vmem:[%s7] sm:$0xf]
  %v10908 = vld [vmem:[%s7 + $0x4] sm:$0xf]
  %v10909 = vld [vmem:[%s7 + $0x8] sm:$0xf]
  %v10910 = vld [vmem:[%s7 + $0xc] sm:$0xf]
  %v10911 = vld [vmem:[%s7 + $0x10] sm:$0xf]
  %v10912 = vld [vmem:[%s7 + $0x14] sm:$0xf]
  %v10913 = vld [vmem:[%s7 + $0x18] sm:$0xf]
  %v10914 = vld [vmem:[%s7 + $0x1c] sm:$0xf]
  %v10915 = vld [vmem:[%s7 + $0x20] sm:$0xf]
  %v10916 = vld [vmem:[%s7 + $0x24] sm:$0xf]
  %v10917 = vld [vmem:[%s7 + $0x28] sm:$0xf]
  %v10918 = vld [vmem:[%s7 + $0x2c] sm:$0xf]
  %v10919 = vld [vmem:[%s7 + $0x30] sm:$0xf]
  %v10920 = vld [vmem:[%s7 + $0x34] sm:$0xf]
  %v10921 = vld [vmem:[%s7 + $0x38] sm:$0xf]
  %v10922 = vld [vmem:[%s7 + $0x3c] sm:$0xf]
  %v10923 = vld [vmem:[%s7 + $0x40] sm:$0xf]
  %v10924 = vld [vmem:[%s7 + $0x44] sm:$0xf]
  %v10925 = vld [vmem:[%s7 + $0x48] sm:$0xf]
  %v10926 = vld [vmem:[%s7 + $0x4c] sm:$0xf]
  %v10927 = vld [vmem:[%s7 + $0x50] sm:$0xf]
  %v10928 = vld [vmem:[%s7 + $0x54] sm:$0xf]
  %v10929 = vld [vmem:[%s7 + $0x58] sm:$0xf]
  %v10930 = vld [vmem:[%s7 + $0x5c] sm:$0xf]
  %v10931 = vld [vmem:[#allocation5 + $0x8] sm:$0xff]
  %s10932 = scalar_lea.vmem %s7, 96
  %v10933 = vld [vmem:[%s10932] sm:$0xf]
  %v10934 = vld [vmem:[%s10932 + $0x4] sm:$0xf]
  %v10935 = vld [vmem:[%s10932 + $0x8] sm:$0xf]
  %v10936 = vld [vmem:[%s10932 + $0xc] sm:$0xf]
  %v10937 = vld [vmem:[%s10932 + $0x10] sm:$0xf]
  %v10938 = vld [vmem:[%s10932 + $0x14] sm:$0xf]
  %v10939 = vld [vmem:[%s10932 + $0x18] sm:$0xf]
  %v10940 = vld [vmem:[%s10932 + $0x1c] sm:$0xf]
  %v10941 = vld [vmem:[%s10932 + $0x20] sm:$0xf]
  %v10942 = vld [vmem:[%s10932 + $0x24] sm:$0xf]
  %v10943 = vld [vmem:[%s10932 + $0x28] sm:$0xf]
  %v10944 = vld [vmem:[%s10932 + $0x2c] sm:$0xf]
  %v10945 = vld [vmem:[%s10932 + $0x30] sm:$0xf]
  %v10946 = vld [vmem:[%s10932 + $0x34] sm:$0xf]
  %v10947 = vld [vmem:[%s10932 + $0x38] sm:$0xf]
  %v10948 = vld [vmem:[%s10932 + $0x3c] sm:$0xf]
  %v10949 = vld [vmem:[%s10932 + $0x40] sm:$0xf]
  %v10950 = vld [vmem:[%s10932 + $0x44] sm:$0xf]
  %v10951 = vld [vmem:[%s10932 + $0x48] sm:$0xf]
  %v10952 = vld [vmem:[%s10932 + $0x4c] sm:$0xf]
  %v10953 = vld [vmem:[%s10932 + $0x50] sm:$0xf]
  %v10954 = vld [vmem:[%s10932 + $0x54] sm:$0xf]
  %v10955 = vld [vmem:[%s10932 + $0x58] sm:$0xf]
  %v10956 = vld [vmem:[%s10932 + $0x5c] sm:$0xf]
  %v10958 = vunpack.c.l.b16 %v10931
  %v10959 = vunpack.c.h.b16 %v10931
  %v10960 = vpack.c.b16 %v10958, %v10958
  %v10961 = vpack.c.b16 %v10959, %v10959
  %v10987 = vunpack.c.l.b16 %v10933
  %v10988 = vunpack.c.l.b16 %v10934
  %v10989 = vunpack.c.l.b16 %v10935
  %v10990 = vunpack.c.l.b16 %v10936
  %v10991 = vunpack.c.l.b16 %v10937
  %v10992 = vunpack.c.l.b16 %v10938
  %v10993 = vunpack.c.l.b16 %v10939
  %v10994 = vunpack.c.l.b16 %v10940
  %v10995 = vunpack.c.l.b16 %v10941
  %v10996 = vunpack.c.l.b16 %v10942
  %v10997 = vunpack.c.l.b16 %v10943
  %v10998 = vunpack.c.l.b16 %v10944
  %v10999 = vunpack.c.l.b16 %v10945
  %v11000 = vunpack.c.l.b16 %v10946
  %v11001 = vunpack.c.l.b16 %v10947
  %v11002 = vunpack.c.l.b16 %v10948
  %v11003 = vunpack.c.l.b16 %v10949
  %v11004 = vunpack.c.l.b16 %v10950
  %v11005 = vunpack.c.l.b16 %v10951
  %v11006 = vunpack.c.l.b16 %v10952
  %v11007 = vunpack.c.l.b16 %v10953
  %v11008 = vunpack.c.l.b16 %v10954
  %v11009 = vunpack.c.l.b16 %v10955
  %v11010 = vunpack.c.l.b16 %v10956
  %v11011 = vpack.c.b16 %v10988, %v10987
  %v11012 = vpack.c.b16 %v10990, %v10989
  %v11013 = vpack.c.b16 %v10992, %v10991
  %v11014 = vpack.c.b16 %v10994, %v10993
  %v11015 = vpack.c.b16 %v10996, %v10995
  %v11016 = vpack.c.b16 %v10998, %v10997
  %v11017 = vpack.c.b16 %v11000, %v10999
  %v11018 = vpack.c.b16 %v11002, %v11001
  %v11019 = vpack.c.b16 %v11004, %v11003
  %v11020 = vpack.c.b16 %v11006, %v11005
  %v11021 = vpack.c.b16 %v11008, %v11007
  %v11022 = vpack.c.b16 %v11010, %v11009
  %vm11035 = vcmask 523264
  %v11037 = vsel %vm11035, %v10961, 0
  %11039 = vmatprep.subr.bf16.mxu0 0
  %11040 = vmatpush1.bf16.msra.mxu0 %v11011
  %11041 = vmatprep.subr.bf16.mxu0 0
  %11042 = vmatpush1.bf16.msra.mxu0 %v11012
  %11043 = vmatprep.subr.bf16.mxu0 0
  %11044 = vmatpush1.bf16.msra.mxu0 %v11013
  %11045 = vmatprep.subr.bf16.mxu0 0
  %11046 = vmatpush1.bf16.msra.mxu0 %v11014
  %11047 = vmatprep.subr.bf16.mxu0 0
  %11048 = vmatpush1.bf16.msra.mxu0 %v11015
  %11049 = vmatprep.subr.bf16.mxu0 0
  %11050 = vmatpush1.bf16.msra.mxu0 %v11016
  %11051 = vmatprep.subr.bf16.mxu0 0
  %11052 = vmatpush1.bf16.msra.mxu0 %v11017
  %11053 = vmatprep.subr.bf16.mxu0 0
  %11054 = vmatpush1.bf16.msra.mxu0 %v11018
  %11055 = vmatprep.subr.bf16.mxu0 0
  %11056 = vmatpush1.bf16.msra.mxu0 %v11019
  %11057 = vmatprep.subr.bf16.mxu0 0
  %11058 = vmatpush1.bf16.msra.mxu0 %v11020
  %11059 = vmatprep.subr.bf16.mxu0 0
  %11060 = vmatpush1.bf16.msra.mxu0 %v11021
  %11061 = vmatprep.subr.bf16.mxu0 0
  %11062 = vmatpush1.bf16.msra.mxu0 %v11022
  %11063 = vmatprep.subr.bf16.mxu0 0
  %11064 = vmatpush1.bf16.msra.mxu0 0
  %11065 = vmatprep.subr.bf16.mxu0 0
  %11066 = vmatpush1.bf16.msra.mxu0 0
  %11067 = vmatprep.subr.bf16.mxu0 0
  %11068 = vmatpush1.bf16.msra.mxu0 0
  %11069 = vmatprep.subr.bf16.mxu0 0
  %11070 = vmatpush1.bf16.msra.mxu0 0
  %11071 = vmatprep.mubr.bf16.mxu0 %v11037
  %11072 = vmatmul.mubr.bf16.gmra.mrb[0].mxu0 %v10960
  %v11073 = vpop.f32.mrb[0].mxu0
  %v11074 = vadd.f32 0.0, %v11073
  %v11075 = vpop.f32.mrb[0].mxu0
  %v11076 = vpop.f32.mrb[0].mxu0
  %v11077 = vpop.f32.mrb[0].mxu0
  %11078 = vdwg.mxu0
  %v11080 = vunpack.c.l.b16 %v10906
  %v11081 = vunpack.c.h.b16 %v10906
  %v11082 = vpack.c.b16 %v11080, %v11080
  %v11083 = vpack.c.b16 %v11081, %v11081
  %v11109 = vunpack.c.l.b16 %v10907
  %v11110 = vunpack.c.l.b16 %v10908
  %v11111 = vunpack.c.l.b16 %v10909
  %v11112 = vunpack.c.l.b16 %v10910
  %v11113 = vunpack.c.l.b16 %v10911
  %v11114 = vunpack.c.l.b16 %v10912
  %v11115 = vunpack.c.l.b16 %v10913
  %v11116 = vunpack.c.l.b16 %v10914
  %v11117 = vunpack.c.l.b16 %v10915
  %v11118 = vunpack.c.l.b16 %v10916
  %v11119 = vunpack.c.l.b16 %v10917
  %v11120 = vunpack.c.l.b16 %v10918
  %v11121 = vunpack.c.l.b16 %v10919
  %v11122 = vunpack.c.l.b16 %v10920
  %v11123 = vunpack.c.l.b16 %v10921
  %v11124 = vunpack.c.l.b16 %v10922
  %v11125 = vunpack.c.l.b16 %v10923
  %v11126 = vunpack.c.l.b16 %v10924
  %v11127 = vunpack.c.l.b16 %v10925
  %v11128 = vunpack.c.l.b16 %v10926
  %v11129 = vunpack.c.l.b16 %v10927
  %v11130 = vunpack.c.l.b16 %v10928
  %v11131 = vunpack.c.l.b16 %v10929
  %v11132 = vunpack.c.l.b16 %v10930
  %v11133 = vpack.c.b16 %v11110, %v11109
  %v11134 = vpack.c.b16 %v11112, %v11111
  %v11135 = vpack.c.b16 %v11114, %v11113
  %v11136 = vpack.c.b16 %v11116, %v11115
  %v11137 = vpack.c.b16 %v11118, %v11117
  %v11138 = vpack.c.b16 %v11120, %v11119
  %v11139 = vpack.c.b16 %v11122, %v11121
  %v11140 = vpack.c.b16 %v11124, %v11123
  %v11141 = vpack.c.b16 %v11126, %v11125
  %v11142 = vpack.c.b16 %v11128, %v11127
  %v11143 = vpack.c.b16 %v11130, %v11129
  %v11144 = vpack.c.b16 %v11132, %v11131
  %v11158 = vsel %vm11035, %v11083, 0
  %11160 = vmatprep.subr.bf16.mxu0 0
  %11161 = vmatpush1.bf16.msra.mxu0 %v11133
  %11162 = vmatprep.subr.bf16.mxu0 0
  %11163 = vmatpush1.bf16.msra.mxu0 %v11134
  %11164 = vmatprep.subr.bf16.mxu0 0
  %11165 = vmatpush1.bf16.msra.mxu0 %v11135
  %11166 = vmatprep.subr.bf16.mxu0 0
  %11167 = vmatpush1.bf16.msra.mxu0 %v11136
  %11168 = vmatprep.subr.bf16.mxu0 0
  %11169 = vmatpush1.bf16.msra.mxu0 %v11137
  %11170 = vmatprep.subr.bf16.mxu0 0
  %11171 = vmatpush1.bf16.msra.mxu0 %v11138
  %11172 = vmatprep.subr.bf16.mxu0 0
  %11173 = vmatpush1.bf16.msra.mxu0 %v11139
  %11174 = vmatprep.subr.bf16.mxu0 0
  %11175 = vmatpush1.bf16.msra.mxu0 %v11140
  %11176 = vmatprep.subr.bf16.mxu0 0
  %11177 = vmatpush1.bf16.msra.mxu0 %v11141
  %11178 = vmatprep.subr.bf16.mxu0 0
  %11179 = vmatpush1.bf16.msra.mxu0 %v11142
  %11180 = vmatprep.subr.bf16.mxu0 0
  %11181 = vmatpush1.bf16.msra.mxu0 %v11143
  %11182 = vmatprep.subr.bf16.mxu0 0
  %11183 = vmatpush1.bf16.msra.mxu0 %v11144
  %11184 = vmatprep.subr.bf16.mxu0 0
  %11185 = vmatpush1.bf16.msra.mxu0 0
  %11186 = vmatprep.subr.bf16.mxu0 0
  %11187 = vmatpush1.bf16.msra.mxu0 0
  %11188 = vmatprep.subr.bf16.mxu0 0
  %11189 = vmatpush1.bf16.msra.mxu0 0
  %11190 = vmatprep.subr.bf16.mxu0 0
  %11191 = vmatpush1.bf16.msra.mxu0 0
  %11192 = vmatprep.mubr.bf16.mxu0 %v11158
  %11193 = vmatmul.mubr.bf16.gmra.mrb[0].mxu0 %v11082
  %v11194 = vpop.f32.mrb[0].mxu0
  %v11195 = vadd.f32 %v11074, %v11194
  %v11196 = vpop.f32.mrb[0].mxu0
  %v11197 = vpop.f32.mrb[0].mxu0
  %v11198 = vpop.f32.mrb[0].mxu0
  %11199 = vdwg.mxu0
  %v11200 = vld [vmem:[#allocation5 + $0x10] sm:$0xff]
  %s11201 = scalar_lea.vmem %s7, 192
  %v11202 = vld [vmem:[%s11201] sm:$0xf]
  %v11203 = vld [vmem:[%s11201 + $0x4] sm:$0xf]
  %v11204 = vld [vmem:[%s11201 + $0x8] sm:$0xf]
  %v11205 = vld [vmem:[%s11201 + $0xc] sm:$0xf]
  %v11206 = vld [vmem:[%s11201 + $0x10] sm:$0xf]
  %v11207 = vld [vmem:[%s11201 + $0x14] sm:$0xf]
  %v11208 = vld [vmem:[%s11201 + $0x18] sm:$0xf]
  %v11209 = vld [vmem:[%s11201 + $0x1c] sm:$0xf]
  %v11210 = vld [vmem:[%s11201 + $0x20] sm:$0xf]
  %v11211 = vld [vmem:[%s11201 + $0x24] sm:$0xf]
  %v11212 = vld [vmem:[%s11201 + $0x28] sm:$0xf]
  %v11213 = vld [vmem:[%s11201 + $0x2c] sm:$0xf]
  %v11214 = vld [vmem:[%s11201 + $0x30] sm:$0xf]
  %v11215 = vld [vmem:[%s11201 + $0x34] sm:$0xf]
  %v11216 = vld [vmem:[%s11201 + $0x38] sm:$0xf]
  %v11217 = vld [vmem:[%s11201 + $0x3c] sm:$0xf]
  %v11218 = vld [vmem:[%s11201 + $0x40] sm:$0xf]
  %v11219 = vld [vmem:[%s11201 + $0x44] sm:$0xf]
  %v11220 = vld [vmem:[%s11201 + $0x48] sm:$0xf]
  %v11221 = vld [vmem:[%s11201 + $0x4c] sm:$0xf]
  %v11222 = vld [vmem:[%s11201 + $0x50] sm:$0xf]
  %v11223 = vld [vmem:[%s11201 + $0x54] sm:$0xf]
  %v11224 = vld [vmem:[%s11201 + $0x58] sm:$0xf]
  %v11225 = vld [vmem:[%s11201 + $0x5c] sm:$0xf]
  %v11227 = vunpack.c.l.b16 %v11200
  %v11228 = vunpack.c.h.b16 %v11200
  %v11229 = vpack.c.b16 %v11227, %v11227
  %v11230 = vpack.c.b16 %v11228, %v11228
  %v11256 = vunpack.c.l.b16 %v11202
  %v11257 = vunpack.c.l.b16 %v11203
  %v11258 = vunpack.c.l.b16 %v11204
  %v11259 = vunpack.c.l.b16 %v11205
  %v11260 = vunpack.c.l.b16 %v11206
  %v11261 = vunpack.c.l.b16 %v11207
  %v11262 = vunpack.c.l.b16 %v11208
  %v11263 = vunpack.c.l.b16 %v11209
  %v11264 = vunpack.c.l.b16 %v11210
  %v11265 = vunpack.c.l.b16 %v11211
  %v11266 = vunpack.c.l.b16 %v11212
  %v11267 = vunpack.c.l.b16 %v11213
  %v11268 = vunpack.c.l.b16 %v11214
  %v11269 = vunpack.c.l.b16 %v11215
  %v11270 = vunpack.c.l.b16 %v11216
  %v11271 = vunpack.c.l.b16 %v11217
  %v11272 = vunpack.c.l.b16 %v11218
  %v11273 = vunpack.c.l.b16 %v11219
  %v11274 = vunpack.c.l.b16 %v11220
  %v11275 = vunpack.c.l.b16 %v11221
  %v11276 = vunpack.c.l.b16 %v11222
  %v11277 = vunpack.c.l.b16 %v11223
  %v11278 = vunpack.c.l.b16 %v11224
  %v11279 = vunpack.c.l.b16 %v11225
  %v11280 = vpack.c.b16 %v11257, %v11256
  %v11281 = vpack.c.b16 %v11259, %v11258
  %v11282 = vpack.c.b16 %v11261, %v11260
  %v11283 = vpack.c.b16 %v11263, %v11262
  %v11284 = vpack.c.b16 %v11265, %v11264
  %v11285 = vpack.c.b16 %v11267, %v11266
  %v11286 = vpack.c.b16 %v11269, %v11268
  %v11287 = vpack.c.b16 %v11271, %v11270
  %v11288 = vpack.c.b16 %v11273, %v11272
  %v11289 = vpack.c.b16 %v11275, %v11274
  %v11290 = vpack.c.b16 %v11277, %v11276
  %v11291 = vpack.c.b16 %v11279, %v11278
  %v11305 = vsel %vm11035, %v11230, 0
  %11307 = vmatprep.subr.bf16.mxu0 0
  %11308 = vmatpush1.bf16.msra.mxu0 %v11280
  %11309 = vmatprep.subr.bf16.mxu0 0
  %11310 = vmatpush1.bf16.msra.mxu0 %v11281
  %11311 = vmatprep.subr.bf16.mxu0 0
  %11312 = vmatpush1.bf16.msra.mxu0 %v11282
  %11313 = vmatprep.subr.bf16.mxu0 0
  %11314 = vmatpush1.bf16.msra.mxu0 %v11283
  %11315 = vmatprep.subr.bf16.mxu0 0
  %11316 = vmatpush1.bf16.msra.mxu0 %v11284
  %11317 = vmatprep.subr.bf16.mxu0 0
  %11318 = vmatpush1.bf16.msra.mxu0 %v11285
  %11319 = vmatprep.subr.bf16.mxu0 0
  %11320 = vmatpush1.bf16.msra.mxu0 %v11286
  %11321 = vmatprep.subr.bf16.mxu0 0
  %11322 = vmatpush1.bf16.msra.mxu0 %v11287
  %11323 = vmatprep.subr.bf16.mxu0 0
  %11324 = vmatpush1.bf16.msra.mxu0 %v11288
  %11325 = vmatprep.subr.bf16.mxu0 0
  %11326 = vmatpush1.bf16.msra.mxu0 %v11289
  %11327 = vmatprep.subr.bf16.mxu0 0
  %11328 = vmatpush1.bf16.msra.mxu0 %v11290
  %11329 = vmatprep.subr.bf16.mxu0 0
  %11330 = vmatpush1.bf16.msra.mxu0 %v11291
  %11331 = vmatprep.subr.bf16.mxu0 0
  %11332 = vmatpush1.bf16.msra.mxu0 0
  %11333 = vmatprep.subr.bf16.mxu0 0
  %11334 = vmatpush1.bf16.msra.mxu0 0
  %11335 = vmatprep.subr.bf16.mxu0 0
  %11336 = vmatpush1.bf16.msra.mxu0 0
  %11337 = vmatprep.subr.bf16.mxu0 0
  %11338 = vmatpush1.bf16.msra.mxu0 0
  %11339 = vmatprep.mubr.bf16.mxu0 %v11305
  %11340 = vmatmul.mubr.bf16.gmra.mrb[0].mxu0 %v11229
  %v11341 = vpop.f32.mrb[0].mxu0
  %v11342 = vadd.f32 0.0, %v11341
  %v11343 = vpop.f32.mrb[0].mxu0
  %v11344 = vpop.f32.mrb[0].mxu0
  %v11345 = vpop.f32.mrb[0].mxu0
  %11346 = vdwg.mxu0
  %v11347 = vadd.f32 %v11195, %v11342
  %v11348 = vld [vmem:[%s8] sm:$0x1]
  %v11350 = vlaneseq
  %v11351 = vshrl.u32 %v11350, 7
  %v11352 = vsub.s32 0, %v11351
  %v11353 = vrot.slane %v11348, %v11352
  %v11355 = vadd.f32 %v11347, %v11353
  %v11356 = vmax.f32 %v11355, 0.0
  %v11357 = vpack.c.bf16 %v11356, %v11356
  %v11358 = vld [vmem:[%s9] sm:$0xf]
  %v11359 = vld [vmem:[%s9 + $0x4] sm:$0xf]
  %v11360 = vld [vmem:[%s9 + $0x8] sm:$0xf]
  %v11361 = vld [vmem:[%s9 + $0xc] sm:$0xf]
  %v11362 = vld [vmem:[%s9 + $0x10] sm:$0xf]
  %v11363 = vld [vmem:[%s9 + $0x14] sm:$0xf]
  %v11364 = vld [vmem:[%s9 + $0x18] sm:$0xf]
  %v11365 = vld [vmem:[%s9 + $0x1c] sm:$0xf]
  %v11366 = vld [vmem:[%s9 + $0x20] sm:$0xf]
  %v11367 = vld [vmem:[%s9 + $0x24] sm:$0xf]
  %v11368 = vld [vmem:[%s9 + $0x28] sm:$0xf]
  %v11369 = vld [vmem:[%s9 + $0x2c] sm:$0xf]
  %v11370 = vld [vmem:[%s9 + $0x30] sm:$0xf]
  %v11371 = vld [vmem:[%s9 + $0x34] sm:$0xf]
  %v11372 = vld [vmem:[%s9 + $0x38] sm:$0xf]
  %v11373 = vld [vmem:[%s9 + $0x3c] sm:$0xf]
  %v11374 = vld [vmem:[%s10] sm:$0x1]
  %v11376 = vlaneseq
  %v11377 = vshrl.u32 %v11376, 7
  %v11378 = vsub.s32 0, %v11377
  %v11379 = vrot.slane %v11374, %v11378
  %v11397 = vunpack.c.l.b16 %v11358
  %v11398 = vunpack.c.l.b16 %v11359
  %v11399 = vunpack.c.l.b16 %v11360
  %v11400 = vunpack.c.l.b16 %v11361
  %v11401 = vunpack.c.l.b16 %v11362
  %v11402 = vunpack.c.l.b16 %v11363
  %v11403 = vunpack.c.l.b16 %v11364
  %v11404 = vunpack.c.l.b16 %v11365
  %v11405 = vunpack.c.l.b16 %v11366
  %v11406 = vunpack.c.l.b16 %v11367
  %v11407 = vunpack.c.l.b16 %v11368
  %v11408 = vunpack.c.l.b16 %v11369
  %v11409 = vunpack.c.l.b16 %v11370
  %v11410 = vunpack.c.l.b16 %v11371
  %v11411 = vunpack.c.l.b16 %v11372
  %v11412 = vunpack.c.l.b16 %v11373
  %v11413 = vpack.c.b16 %v11398, %v11397
  %v11414 = vpack.c.b16 %v11400, %v11399
  %v11415 = vpack.c.b16 %v11402, %v11401
  %v11416 = vpack.c.b16 %v11404, %v11403
  %v11417 = vpack.c.b16 %v11406, %v11405
  %v11418 = vpack.c.b16 %v11408, %v11407
  %v11419 = vpack.c.b16 %v11410, %v11409
  %v11420 = vpack.c.b16 %v11412, %v11411
  %11429 = vmatprep.subr.bf16.mxu0 0
  %11430 = vmatpush1.bf16.msra.mxu0 %v11413
  %11431 = vmatprep.subr.bf16.mxu0 0
  %11432 = vmatpush1.bf16.msra.mxu0 %v11414
  %11433 = vmatprep.subr.bf16.mxu0 0
  %11434 = vmatpush1.bf16.msra.mxu0 %v11415
  %11435 = vmatprep.subr.bf16.mxu0 0
  %11436 = vmatpush1.bf16.msra.mxu0 %v11416
  %11437 = vmatprep.subr.bf16.mxu0 0
  %11438 = vmatpush1.bf16.msra.mxu0 %v11417
  %11439 = vmatprep.subr.bf16.mxu0 0
  %11440 = vmatpush1.bf16.msra.mxu0 %v11418
  %11441 = vmatprep.subr.bf16.mxu0 0
  %11442 = vmatpush1.bf16.msra.mxu0 %v11419
  %11443 = vmatprep.subr.bf16.mxu0 0
  %11444 = vmatpush1.bf16.msra.mxu0 %v11420
  %11445 = vmatprep.subr.bf16.mxu0 0
  %11446 = vmatpush1.bf16.msra.mxu0 0
  %11447 = vmatprep.subr.bf16.mxu0 0
  %11448 = vmatpush1.bf16.msra.mxu0 0
  %11449 = vmatprep.subr.bf16.mxu0 0
  %11450 = vmatpush1.bf16.msra.mxu0 0
  %11451 = vmatprep.subr.bf16.mxu0 0
  %11452 = vmatpush1.bf16.msra.mxu0 0
  %11453 = vmatprep.subr.bf16.mxu0 0
  %11454 = vmatpush1.bf16.msra.mxu0 0
  %11455 = vmatprep.subr.bf16.mxu0 0
  %11456 = vmatpush1.bf16.msra.mxu0 0
  %11457 = vmatprep.subr.bf16.mxu0 0
  %11458 = vmatpush1.bf16.msra.mxu0 0
  %11459 = vmatprep.subr.bf16.mxu0 0
  %11460 = vmatpush1.bf16.msra.mxu0 0
  %11461 = vmatprep.mubr.bf16.mxu0 0
  %11462 = vmatmul.mubr.bf16.gmra.mrb[0].mxu0 %v11357
  %v11463 = vpop.f32.mrb[0].mxu0
  %v11464 = vadd.f32 %v11379, %v11463
  %v11465 = vpop.f32.mrb[0].mxu0
  %v11466 = vpop.f32.mrb[0].mxu0
  %v11467 = vpop.f32.mrb[0].mxu0
  %11468 = vdwg.mxu0
  %v11469 = vlaneseq
  %v11470 = vand.u32 %v11469, 127
  %vm11471 = vcmp.eq.s32.totalorder %v11470, 0
  %v11472 = vxor.u32 %v11464, 2147483648
  %v11473 = vmul.f32 %v11472, 1.442695
  %v11474 = vpow.pop %v11473
  %v11475 = vadd.f32 %v11474, 1.0
  %v11476 = vrcp.pop %v11475
  %v11477 = vmul.f32 1.0, %v11476
  %v11478 = vsel %vm11471, %v11477, %v11464
  %11479 = vst [vmem:[%s11] sm:$0xff] %v11478
  // Predicated region
  $region46: #{r_net_forward.1} parent=0 // pred_check
    _
  $region47: #{r_net_forward.1} parent=0 // pred_check_branch
    %11481 = sbr.rel (0) target = $region49
  $region48: #{r_net_forward.1} parent=0 // pred_region
    _
  $region49: #{r_net_forward.1} parent=0 // pred_fallthru
    _
  // Predicated region
  $region50: #{r_net_forward.1} parent=0 // pred_check
    _
  $region51: #{r_net_forward.1} parent=0 // pred_check_branch
    %11483 = sbr.rel (0) target = $region53
  $region52: #{r_net_forward.1} parent=0 // pred_region
    _
  $region53: #{r_net_forward.1} parent=0 // pred_fallthru
    _

</llo_original>
